<compile_context>
chip_gen: v6e
topology: v6e:2x2x1
jax: 0.10.0
libtpu: 0.0.40
codegen_flags: <defaults>
</compile_context>

<pallas_src>
import jax
import jax.numpy as jnp
from jax.experimental import pallas as pl
from jax.experimental.pallas import tpu as pltpu

# ------------------------- model hyper-parameters (small) -------------------------
D_IN = 2560        # hard-coded input feature dim of grid_proj in the PyTorch module
D_MODEL = 128
D_K = 32
D_V = 32
H = 4
D_FF = 256
N_LAYERS = 2
PREFIX = 8         # prefix_length (number of object queries)
EPS = 1e-5         # nn.LayerNorm default


# ------------------------------- in-kernel helpers ---------------------------------
def _layernorm(x, gamma, beta):
    mu = jnp.mean(x, axis=-1, keepdims=True)
    xc = x - mu
    var = jnp.mean(xc * xc, axis=-1, keepdims=True)
    return xc * jax.lax.rsqrt(var + EPS) * gamma + beta


def _mha(q_in, kv_in, wq, bq, wkv, bkv, wo, bo, g, be):
    """Post-norm multi-head attention.  q_in:(Lq,D) kv_in:(Lk,D).

    wq:(D, H*dk) bf16 (scale pre-folded), wkv:(D, H*dk + H*dv) bf16,
    wo:(H*dv, D) bf16.  Biases / LN params are f32 (128,) / (256,) vectors.
    """
    # Two wide projections instead of 12 narrow per-head ones.
    q_all = jnp.dot(q_in.astype(jnp.bfloat16), wq,
                    preferred_element_type=jnp.float32) + bq          # (Lq, H*dk)
    kv_all = jnp.dot(kv_in.astype(jnp.bfloat16), wkv,
                     preferred_element_type=jnp.float32) + bkv        # (Lk, H*dk + H*dv)
    v_all = kv_all[:, H * D_K:].astype(jnp.bfloat16)                  # (Lk, H*dv)

    heads = []
    for h in range(H):                                                # static unroll
        q_h = q_all[:, h * D_K:(h + 1) * D_K]                         # (Lq, dk) f32
        k_h = kv_all[:, h * D_K:(h + 1) * D_K]                        # (Lk, dk) f32
        v_h = v_all[:, h * D_V:(h + 1) * D_V]                         # (Lk, dv) bf16
        # scores: contract last dims of both operands (no .T / XLU transpose)
        s = jax.lax.dot_general(q_h, k_h, (((1,), (1,)), ((), ())),
                                preferred_element_type=jnp.float32)   # (Lq, Lk)
        s = s - jnp.max(s, axis=-1, keepdims=True)
        e = jnp.exp(s)
        p_att = e * pl.reciprocal(jnp.sum(e, axis=-1, keepdims=True), approx=True)
        heads.append(jnp.dot(p_att.astype(jnp.bfloat16), v_h,
                             preferred_element_type=jnp.float32))     # (Lq, dv)

    # Lane-concatenate heads (0/32/64/96) and do ONE (Lq,128)x(128,128) output proj.
    cat = jnp.concatenate(heads, axis=-1).astype(jnp.bfloat16)        # (Lq, H*dv)
    out = jnp.dot(cat, wo, preferred_element_type=jnp.float32) + bo
    # Dropout = identity; post-norm residual on the queries.
    return _layernorm(q_in + out, g, be)


def _ffn(x, w1, b1, w2, b2, g, be):
    h = jnp.dot(x.astype(jnp.bfloat16), w1, preferred_element_type=jnp.float32) + b1
    h = jnp.maximum(h, 0.0)
    out = jnp.dot(h.astype(jnp.bfloat16), w2, preferred_element_type=jnp.float32) + b2
    return _layernorm(x + out, g, be)


# --------------------------------- fused kernel -------------------------------------
# Packed-parameter layout (must match pack_params below):
#   w128  : (4*N_LAYERS, 128, 128) bf16  per layer [self.wq*, self.wo, cross.wq*, cross.wo]
#   w256a : (4*N_LAYERS, 128, 256) bf16  per layer [self.wkv, cross.wkv, self_ffn.w1, cross_ffn.w1]
#   w256b : (2*N_LAYERS, 256, 128) bf16  per layer [self_ffn.w2, cross_ffn.w2]
#   v128  : (3+14*N_LAYERS, 128) f32  [gp_b, gp_g, gp_be] + per layer
#           [s.bq*, s.bo, s.g, s.be, c.bq*, c.bo, c.g, c.be,
#            sf.b2, sf.g, sf.be, cf.b2, cf.g, cf.be]
#   v256  : (4*N_LAYERS, 256) f32  per layer [s.bkv, c.bkv, sf.b1, cf.b1]
#   (* = 1/sqrt(d_k) scale folded in)
def encoder_kernel(x_ref, obj_ref, gp_w_ref, w128_ref, w256a_ref, w256b_ref,
                   v128_ref, v256_ref, grid_out_ref, obj_out_ref):
    v128 = v128_ref[...]                                              # (Nv, 128) f32
    v256 = v256_ref[...]                                              # (Mv, 256) f32

    # grid_proj: Linear(2560 -> d_model) -> ReLU -> (Dropout = id) -> LayerNorm
    y = jnp.dot(x_ref[...].astype(jnp.bfloat16), gp_w_ref[...],
                preferred_element_type=jnp.float32) + v128[0]
    x = _layernorm(jnp.maximum(y, 0.0), v128[1], v128[2])             # (S, D_MODEL) f32

    obj = obj_ref[...]                                                # (PREFIX, D_MODEL)

    for l in range(N_LAYERS):                                         # static unroll
        w_off, a_off, b_off = 4 * l, 4 * l, 2 * l
        v_off, c_off = 3 + 14 * l, 4 * l

        grid_att = _mha(x, x,                                         # self attention
                        w128_ref[w_off + 0], v128[v_off + 0],
                        w256a_ref[a_off + 0], v256[c_off + 0],
                        w128_ref[w_off + 1], v128[v_off + 1],
                        v128[v_off + 2], v128[v_off + 3])
        obj_att = _mha(obj, x,                                        # cross attention
                       w128_ref[w_off + 2], v128[v_off + 4],
                       w256a_ref[a_off + 1], v256[c_off + 1],
                       w128_ref[w_off + 3], v128[v_off + 5],
                       v128[v_off + 6], v128[v_off + 7])
        x = _ffn(grid_att,
                 w256a_ref[a_off + 2], v256[c_off + 2],
                 w256b_ref[b_off + 0], v128[v_off + 8],
                 v128[v_off + 9], v128[v_off + 10])
        obj = _ffn(obj_att,
                   w256a_ref[a_off + 3], v256[c_off + 3],
                   w256b_ref[b_off + 1], v128[v_off + 11],
                   v128[v_off + 12], v128[v_off + 13])

    grid_out_ref[...] = x
    obj_out_ref[...] = obj


# ------------------------------ parameter construction ------------------------------
def _linear(key, din, dout):
    k1, k2 = jax.random.split(key)
    w = jax.random.normal(k1, (din, dout), jnp.float32) * (1.0 / float(din) ** 0.5)
    b = jax.random.normal(k2, (dout,), jnp.float32) * 0.01
    return w, b


def _ln():
    return jnp.ones((D_MODEL,), jnp.float32), jnp.zeros((D_MODEL,), jnp.float32)


def _mha_params(key):
    ks = jax.random.split(key, 4)
    wq, bq = _linear(ks[0], D_MODEL, H * D_K)
    wk, bk = _linear(ks[1], D_MODEL, H * D_K)
    wv, bv = _linear(ks[2], D_MODEL, H * D_V)
    wo, bo = _linear(ks[3], H * D_V, D_MODEL)
    g, be = _ln()
    return dict(wq=wq, bq=bq, wk=wk, bk=bk, wv=wv, bv=bv, wo=wo, bo=bo, g=g, be=be)


def _ffn_params(key):
    ks = jax.random.split(key, 2)
    w1, b1 = _linear(ks[0], D_MODEL, D_FF)
    w2, b2 = _linear(ks[1], D_FF, D_MODEL)
    g, be = _ln()
    return dict(w1=w1, b1=b1, w2=w2, b2=b2, g=g, be=be)


def init_params(key):
    ks = jax.random.split(key, 2 + N_LAYERS)
    gp_w, gp_b = _linear(ks[0], D_IN, D_MODEL)
    gp_g, gp_be = _ln()
    obj_q = jax.random.normal(ks[1], (PREFIX, D_MODEL), jnp.float32)
    layers = []
    for n in range(N_LAYERS):
        lk = jax.random.split(ks[2 + n], 4)
        layers.append(dict(self_att=_mha_params(lk[0]),
                           cross_att=_mha_params(lk[1]),
                           self_pwff=_ffn_params(lk[2]),
                           cross_pwff=_ffn_params(lk[3])))
    return dict(grid_proj=dict(w=gp_w, b=gp_b, g=gp_g, be=gp_be),
                object_queries=obj_q, layers=layers)


def pack_params(params):
    """Pack PyTorch-style params into the stacked kernel layout (done once, offline)."""
    scale = 1.0 / float(D_K) ** 0.5
    gp = params["grid_proj"]
    w128, w256a, w256b = [], [], []
    v128 = [gp["b"], gp["g"], gp["be"]]
    v256 = []
    for lp in params["layers"]:
        for att in (lp["self_att"], lp["cross_att"]):
            w128 += [att["wq"] * scale, att["wo"]]
            w256a += [jnp.concatenate([att["wk"], att["wv"]], axis=1)]
            v128 += [att["bq"] * scale, att["bo"], att["g"], att["be"]]
            v256 += [jnp.concatenate([att["bk"], att["bv"]])]
        for ff in (lp["self_pwff"], lp["cross_pwff"]):
            w256a += [ff["w1"]]
            w256b += [ff["w2"]]
            v128 += [ff["b2"], ff["g"], ff["be"]]
            v256 += [ff["b1"]]
    return dict(
        gp_w=gp["w"].astype(jnp.bfloat16),
        w128=jnp.stack(w128).astype(jnp.bfloat16),
        w256a=jnp.stack(w256a).astype(jnp.bfloat16),
        w256b=jnp.stack(w256b).astype(jnp.bfloat16),
        v128=jnp.stack(v128).astype(jnp.float32),
        v256=jnp.stack(v256).astype(jnp.float32),
        object_queries=params["object_queries"].astype(jnp.float32),
    )


# ---------------------------------- full forward ------------------------------------
def transformer_encoder(packed, grid_features):
    B, S, _ = grid_features.shape
    full = lambda shape: pl.BlockSpec(shape, lambda b: (0,) * len(shape))

    grid_out, obj_out = pl.pallas_call(
        encoder_kernel,
        grid=(B,),
        in_specs=[
            pl.BlockSpec((None, S, D_IN), lambda b: (b, 0, 0)),       # per-batch x
            full((PREFIX, D_MODEL)),                                  # object queries
            full((D_IN, D_MODEL)),                                    # grid_proj weight
            full(packed["w128"].shape),
            full(packed["w256a"].shape),
            full(packed["w256b"].shape),
            full(packed["v128"].shape),
            full(packed["v256"].shape),
        ],
        out_specs=[
            pl.BlockSpec((None, S, D_MODEL), lambda b: (b, 0, 0)),
            pl.BlockSpec((None, PREFIX, D_MODEL), lambda b: (b, 0, 0)),
        ],
        out_shape=(jax.ShapeDtypeStruct((B, S, D_MODEL), jnp.float32),
                   jax.ShapeDtypeStruct((B, PREFIX, D_MODEL), jnp.float32)),
        compiler_params=pltpu.CompilerParams(
            dimension_semantics=("parallel",),
            vmem_limit_bytes=32 * 1024 * 1024),
    )(grid_features, packed["object_queries"], packed["gp_w"],
      packed["w128"], packed["w256a"], packed["w256b"],
      packed["v128"], packed["v256"])
    return grid_out, obj_out


# ---------------------------------------- main ---------------------------------------
if __name__ == "__main__":
    key = jax.random.PRNGKey(0)
    pkey, xkey = jax.random.split(key)
    params = init_params(pkey)
    packed = pack_params(params)

    B, S = 2, 16
    grid_features = jax.random.normal(xkey, (B, S, D_IN), jnp.float32)

    fwd = jax.jit(transformer_encoder)
    grid_out, obj_out = fwd(packed, grid_features)
    jax.block_until_ready((grid_out, obj_out))

    assert grid_out.shape == (B, S, D_MODEL)
    assert obj_out.shape == (B, PREFIX, D_MODEL)
    assert bool(jnp.all(jnp.isfinite(grid_out))) and bool(jnp.all(jnp.isfinite(obj_out)))
    print("KERNEL_OK")
</pallas_src>

<mosaic_0001>
module attributes {stable_mosaic.version = 11 : i64} {
  func.func @encoder_kernel(%arg0: i32, %arg1: memref<1x16x2560xf32, #tpu.memory_space<vmem>>, %arg2: memref<8x128xf32, #tpu.memory_space<vmem>>, %arg3: memref<2560x128xbf16, #tpu.memory_space<vmem>>, %arg4: memref<8x128x128xbf16, #tpu.memory_space<vmem>>, %arg5: memref<8x128x256xbf16, #tpu.memory_space<vmem>>, %arg6: memref<4x256x128xbf16, #tpu.memory_space<vmem>>, %arg7: memref<31x128xf32, #tpu.memory_space<vmem>>, %arg8: memref<8x256xf32, #tpu.memory_space<vmem>>, %arg9: memref<1x16x128xf32, #tpu.memory_space<vmem>>, %arg10: memref<1x8x128xf32, #tpu.memory_space<vmem>>) attributes {dimension_semantics = [#tpu.dimension_semantics<parallel>], iteration_bounds = array<i64: 2>, scalar_prefetch = 0 : i64, scratch_operands = 0 : i64, tpu.core_type = #tpu.core_type<tc>, window_params = [{transform_indices = @transform_0, window_bounds = array<i64: 1, 16, 2560>}, {pipeline_mode = #tpu.pipeline_mode<synchronous>, transform_indices = @transform_1, window_bounds = array<i64: 8, 128>}, {pipeline_mode = #tpu.pipeline_mode<synchronous>, transform_indices = @transform_2, window_bounds = array<i64: 2560, 128>}, {pipeline_mode = #tpu.pipeline_mode<synchronous>, transform_indices = @transform_3, window_bounds = array<i64: 8, 128, 128>}, {pipeline_mode = #tpu.pipeline_mode<synchronous>, transform_indices = @transform_4, window_bounds = array<i64: 8, 128, 256>}, {pipeline_mode = #tpu.pipeline_mode<synchronous>, transform_indices = @transform_5, window_bounds = array<i64: 4, 256, 128>}, {pipeline_mode = #tpu.pipeline_mode<synchronous>, transform_indices = @transform_6, window_bounds = array<i64: 31, 128>}, {pipeline_mode = #tpu.pipeline_mode<synchronous>, transform_indices = @transform_7, window_bounds = array<i64: 8, 256>}, {transform_indices = @transform_8, window_bounds = array<i64: 1, 16, 128>}, {transform_indices = @transform_9, window_bounds = array<i64: 1, 8, 128>}]} {
    %c0 = arith.constant 0 : index
    %c0_0 = arith.constant 0 : index
    %0 = vector.load %arg7[%c0, %c0_0] : memref<31x128xf32, #tpu.memory_space<vmem>>, vector<31x128xf32>
    %c0_1 = arith.constant 0 : index
    %c0_2 = arith.constant 0 : index
    %1 = vector.load %arg8[%c0_1, %c0_2] : memref<8x256xf32, #tpu.memory_space<vmem>>, vector<8x256xf32>
    %c0_3 = arith.constant 0 : index
    %c0_4 = arith.constant 0 : index
    %c0_5 = arith.constant 0 : index
    %2 = vector.load %arg1[%c0_3, %c0_4, %c0_5] : memref<1x16x2560xf32, #tpu.memory_space<vmem>>, vector<1x16x2560xf32>
    %3 = vector.shape_cast %2 : vector<1x16x2560xf32> to vector<16x2560xf32>
    %4 = arith.truncf %3 : vector<16x2560xf32> to vector<16x2560xbf16>
    %c0_6 = arith.constant 0 : index
    %c0_7 = arith.constant 0 : index
    %5 = vector.load %arg3[%c0_6, %c0_7] : memref<2560x128xbf16, #tpu.memory_space<vmem>>, vector<2560x128xbf16>
    %cst = arith.constant dense<0.000000e+00> : vector<16x128xf32>
    %6 = tpu.matmul %4, %5, %cst {dimension_numbers = #tpu.dot_dimension_numbers<[1], [0], [0], [1], [0, 0, 1, 1], [], []>} : vector<16x2560xbf16>, vector<2560x128xbf16>, vector<16x128xf32> -> vector<16x128xf32>
    %7 = vector.extract_strided_slice %0 {offsets = [0, 0], sizes = [1, 128], strides = [1, 1]} : vector<31x128xf32> to vector<1x128xf32>
    %8 = vector.shape_cast %7 : vector<1x128xf32> to vector<128xf32>
    %9 = vector.shape_cast %8 : vector<128xf32> to vector<1x128xf32>
    %10 = vector.broadcast %9 : vector<1x128xf32> to vector<16x128xf32>
    %11 = arith.addf %6, %10 : vector<16x128xf32>
    %cst_8 = arith.constant 0.000000e+00 : f32
    %12 = vector.broadcast %cst_8 : f32 to vector<16x128xf32>
    %13 = arith.maximumf %11, %12 : vector<16x128xf32>
    %14 = vector.extract_strided_slice %0 {offsets = [1, 0], sizes = [1, 128], strides = [1, 1]} : vector<31x128xf32> to vector<1x128xf32>
    %15 = vector.shape_cast %14 : vector<1x128xf32> to vector<128xf32>
    %16 = vector.extract_strided_slice %0 {offsets = [2, 0], sizes = [1, 128], strides = [1, 1]} : vector<31x128xf32> to vector<1x128xf32>
    %17 = vector.shape_cast %16 : vector<1x128xf32> to vector<128xf32>
    %cst_9 = arith.constant dense<0.000000e+00> : vector<16xf32>
    %18 = vector.multi_reduction <add>, %13, %cst_9 [1] : vector<16x128xf32> to vector<16xf32>
    %19 = vector.shape_cast %18 : vector<16xf32> to vector<16x1xf32>
    %cst_10 = arith.constant 1.280000e+02 : f32
    %20 = vector.broadcast %cst_10 : f32 to vector<16x1xf32>
    %21 = arith.divf %19, %20 : vector<16x1xf32>
    %22 = vector.broadcast %21 : vector<16x1xf32> to vector<16x128xf32>
    %23 = arith.subf %13, %22 : vector<16x128xf32>
    %24 = arith.mulf %23, %23 : vector<16x128xf32>
    %cst_11 = arith.constant dense<0.000000e+00> : vector<16xf32>
    %25 = vector.multi_reduction <add>, %24, %cst_11 [1] : vector<16x128xf32> to vector<16xf32>
    %26 = vector.shape_cast %25 : vector<16xf32> to vector<16x1xf32>
    %cst_12 = arith.constant 1.280000e+02 : f32
    %27 = vector.broadcast %cst_12 : f32 to vector<16x1xf32>
    %28 = arith.divf %26, %27 : vector<16x1xf32>
    %cst_13 = arith.constant 9.99999974E-6 : f32
    %29 = vector.broadcast %cst_13 : f32 to vector<16x1xf32>
    %30 = arith.addf %28, %29 : vector<16x1xf32>
    %31 = math.rsqrt %30 : vector<16x1xf32>
    %32 = vector.broadcast %31 : vector<16x1xf32> to vector<16x128xf32>
    %33 = arith.mulf %23, %32 : vector<16x128xf32>
    %34 = vector.shape_cast %15 : vector<128xf32> to vector<1x128xf32>
    %35 = vector.broadcast %34 : vector<1x128xf32> to vector<16x128xf32>
    %36 = arith.mulf %33, %35 : vector<16x128xf32>
    %37 = vector.shape_cast %17 : vector<128xf32> to vector<1x128xf32>
    %38 = vector.broadcast %37 : vector<1x128xf32> to vector<16x128xf32>
    %39 = arith.addf %36, %38 : vector<16x128xf32>
    %c0_14 = arith.constant 0 : index
    %c0_15 = arith.constant 0 : index
    %40 = vector.load %arg2[%c0_14, %c0_15] : memref<8x128xf32, #tpu.memory_space<vmem>>, vector<8x128xf32>
    %c0_16 = arith.constant 0 : index
    %c0_17 = arith.constant 0 : index
    %c0_18 = arith.constant 0 : index
    %41 = vector.load %arg4[%c0_16, %c0_17, %c0_18] : memref<8x128x128xbf16, #tpu.memory_space<vmem>>, vector<1x128x128xbf16>
    %42 = vector.shape_cast %41 : vector<1x128x128xbf16> to vector<128x128xbf16>
    %43 = vector.extract_strided_slice %0 {offsets = [3, 0], sizes = [1, 128], strides = [1, 1]} : vector<31x128xf32> to vector<1x128xf32>
    %44 = vector.shape_cast %43 : vector<1x128xf32> to vector<128xf32>
    %c0_19 = arith.constant 0 : index
    %c0_20 = arith.constant 0 : index
    %c0_21 = arith.constant 0 : index
    %45 = vector.load %arg5[%c0_19, %c0_20, %c0_21] : memref<8x128x256xbf16, #tpu.memory_space<vmem>>, vector<1x128x256xbf16>
    %46 = vector.shape_cast %45 : vector<1x128x256xbf16> to vector<128x256xbf16>
    %47 = vector.extract_strided_slice %1 {offsets = [0, 0], sizes = [1, 256], strides = [1, 1]} : vector<8x256xf32> to vector<1x256xf32>
    %48 = vector.shape_cast %47 : vector<1x256xf32> to vector<256xf32>
    %c1 = arith.constant 1 : index
    %c0_22 = arith.constant 0 : index
    %c0_23 = arith.constant 0 : index
    %49 = vector.load %arg4[%c1, %c0_22, %c0_23] : memref<8x128x128xbf16, #tpu.memory_space<vmem>>, vector<1x128x128xbf16>
    %50 = vector.shape_cast %49 : vector<1x128x128xbf16> to vector<128x128xbf16>
    %51 = vector.extract_strided_slice %0 {offsets = [4, 0], sizes = [1, 128], strides = [1, 1]} : vector<31x128xf32> to vector<1x128xf32>
    %52 = vector.shape_cast %51 : vector<1x128xf32> to vector<128xf32>
    %53 = vector.extract_strided_slice %0 {offsets = [5, 0], sizes = [1, 128], strides = [1, 1]} : vector<31x128xf32> to vector<1x128xf32>
    %54 = vector.shape_cast %53 : vector<1x128xf32> to vector<128xf32>
    %55 = vector.extract_strided_slice %0 {offsets = [6, 0], sizes = [1, 128], strides = [1, 1]} : vector<31x128xf32> to vector<1x128xf32>
    %56 = vector.shape_cast %55 : vector<1x128xf32> to vector<128xf32>
    %57 = arith.truncf %39 : vector<16x128xf32> to vector<16x128xbf16>
    %cst_24 = arith.constant dense<0.000000e+00> : vector<16x128xf32>
    %58 = tpu.matmul %57, %42, %cst_24 {dimension_numbers = #tpu.dot_dimension_numbers<[1], [0], [0], [1], [0, 0, 1, 1], [], []>} : vector<16x128xbf16>, vector<128x128xbf16>, vector<16x128xf32> -> vector<16x128xf32>
    %59 = vector.shape_cast %44 : vector<128xf32> to vector<1x128xf32>
    %60 = vector.broadcast %59 : vector<1x128xf32> to vector<16x128xf32>
    %61 = arith.addf %58, %60 : vector<16x128xf32>
    %62 = arith.truncf %39 : vector<16x128xf32> to vector<16x128xbf16>
    %cst_25 = arith.constant dense<0.000000e+00> : vector<16x256xf32>
    %63 = tpu.matmul %62, %46, %cst_25 {dimension_numbers = #tpu.dot_dimension_numbers<[1], [0], [0], [1], [0, 0, 1, 1], [], []>} : vector<16x128xbf16>, vector<128x256xbf16>, vector<16x256xf32> -> vector<16x256xf32>
    %64 = vector.shape_cast %48 : vector<256xf32> to vector<1x256xf32>
    %65 = vector.broadcast %64 : vector<1x256xf32> to vector<16x256xf32>
    %66 = arith.addf %63, %65 : vector<16x256xf32>
    %67 = vector.extract_strided_slice %66 {offsets = [0, 128], sizes = [16, 128], strides = [1, 1]} : vector<16x256xf32> to vector<16x128xf32>
    %68 = arith.truncf %67 : vector<16x128xf32> to vector<16x128xbf16>
    %69 = vector.extract_strided_slice %61 {offsets = [0, 0], sizes = [16, 32], strides = [1, 1]} : vector<16x128xf32> to vector<16x32xf32>
    %70 = vector.extract_strided_slice %66 {offsets = [0, 0], sizes = [16, 32], strides = [1, 1]} : vector<16x256xf32> to vector<16x32xf32>
    %71 = vector.extract_strided_slice %68 {offsets = [0, 0], sizes = [16, 32], strides = [1, 1]} : vector<16x128xbf16> to vector<16x32xbf16>
    %cst_26 = arith.constant dense<0.000000e+00> : vector<16x16xf32>
    %72 = tpu.matmul %69, %70, %cst_26 {dimension_numbers = #tpu.dot_dimension_numbers<[1], [1], [0], [0], [0, 0, 1, 0], [], []>} : vector<16x32xf32>, vector<16x32xf32>, vector<16x16xf32> -> vector<16x16xf32>
    %cst_27 = arith.constant dense<0xFF800000> : vector<16xf32>
    %73 = vector.multi_reduction <maximumf>, %72, %cst_27 [1] : vector<16x16xf32> to vector<16xf32>
    %74 = vector.shape_cast %73 : vector<16xf32> to vector<16x1xf32>
    %75 = vector.broadcast %74 : vector<16x1xf32> to vector<16x16xf32>
    %76 = arith.subf %72, %75 : vector<16x16xf32>
    %77 = math.exp %76 : vector<16x16xf32>
    %cst_28 = arith.constant dense<0.000000e+00> : vector<16xf32>
    %78 = vector.multi_reduction <add>, %77, %cst_28 [1] : vector<16x16xf32> to vector<16xf32>
    %79 = vector.shape_cast %78 : vector<16xf32> to vector<16x1xf32>
    %80 = tpu.reciprocal %79 {approx = true} : vector<16x1xf32> -> vector<16x1xf32>
    %81 = vector.broadcast %80 : vector<16x1xf32> to vector<16x16xf32>
    %82 = arith.mulf %77, %81 : vector<16x16xf32>
    %83 = arith.truncf %82 : vector<16x16xf32> to vector<16x16xbf16>
    %cst_29 = arith.constant dense<0.000000e+00> : vector<16x32xf32>
    %84 = tpu.matmul %83, %71, %cst_29 {dimension_numbers = #tpu.dot_dimension_numbers<[1], [0], [0], [1], [0, 0, 1, 1], [], []>} : vector<16x16xbf16>, vector<16x32xbf16>, vector<16x32xf32> -> vector<16x32xf32>
    %85 = vector.extract_strided_slice %61 {offsets = [0, 32], sizes = [16, 32], strides = [1, 1]} : vector<16x128xf32> to vector<16x32xf32>
    %86 = vector.extract_strided_slice %66 {offsets = [0, 32], sizes = [16, 32], strides = [1, 1]} : vector<16x256xf32> to vector<16x32xf32>
    %87 = vector.extract_strided_slice %68 {offsets = [0, 32], sizes = [16, 32], strides = [1, 1]} : vector<16x128xbf16> to vector<16x32xbf16>
    %cst_30 = arith.constant dense<0.000000e+00> : vector<16x16xf32>
    %88 = tpu.matmul %85, %86, %cst_30 {dimension_numbers = #tpu.dot_dimension_numbers<[1], [1], [0], [0], [0, 0, 1, 0], [], []>} : vector<16x32xf32>, vector<16x32xf32>, vector<16x16xf32> -> vector<16x16xf32>
    %cst_31 = arith.constant dense<0xFF800000> : vector<16xf32>
    %89 = vector.multi_reduction <maximumf>, %88, %cst_31 [1] : vector<16x16xf32> to vector<16xf32>
    %90 = vector.shape_cast %89 : vector<16xf32> to vector<16x1xf32>
    %91 = vector.broadcast %90 : vector<16x1xf32> to vector<16x16xf32>
    %92 = arith.subf %88, %91 : vector<16x16xf32>
    %93 = math.exp %92 : vector<16x16xf32>
    %cst_32 = arith.constant dense<0.000000e+00> : vector<16xf32>
    %94 = vector.multi_reduction <add>, %93, %cst_32 [1] : vector<16x16xf32> to vector<16xf32>
    %95 = vector.shape_cast %94 : vector<16xf32> to vector<16x1xf32>
    %96 = tpu.reciprocal %95 {approx = true} : vector<16x1xf32> -> vector<16x1xf32>
    %97 = vector.broadcast %96 : vector<16x1xf32> to vector<16x16xf32>
    %98 = arith.mulf %93, %97 : vector<16x16xf32>
    %99 = arith.truncf %98 : vector<16x16xf32> to vector<16x16xbf16>
    %cst_33 = arith.constant dense<0.000000e+00> : vector<16x32xf32>
    %100 = tpu.matmul %99, %87, %cst_33 {dimension_numbers = #tpu.dot_dimension_numbers<[1], [0], [0], [1], [0, 0, 1, 1], [], []>} : vector<16x16xbf16>, vector<16x32xbf16>, vector<16x32xf32> -> vector<16x32xf32>
    %101 = vector.extract_strided_slice %61 {offsets = [0, 64], sizes = [16, 32], strides = [1, 1]} : vector<16x128xf32> to vector<16x32xf32>
    %102 = vector.extract_strided_slice %66 {offsets = [0, 64], sizes = [16, 32], strides = [1, 1]} : vector<16x256xf32> to vector<16x32xf32>
    %103 = vector.extract_strided_slice %68 {offsets = [0, 64], sizes = [16, 32], strides = [1, 1]} : vector<16x128xbf16> to vector<16x32xbf16>
    %cst_34 = arith.constant dense<0.000000e+00> : vector<16x16xf32>
    %104 = tpu.matmul %101, %102, %cst_34 {dimension_numbers = #tpu.dot_dimension_numbers<[1], [1], [0], [0], [0, 0, 1, 0], [], []>} : vector<16x32xf32>, vector<16x32xf32>, vector<16x16xf32> -> vector<16x16xf32>
    %cst_35 = arith.constant dense<0xFF800000> : vector<16xf32>
    %105 = vector.multi_reduction <maximumf>, %104, %cst_35 [1] : vector<16x16xf32> to vector<16xf32>
    %106 = vector.shape_cast %105 : vector<16xf32> to vector<16x1xf32>
    %107 = vector.broadcast %106 : vector<16x1xf32> to vector<16x16xf32>
    %108 = arith.subf %104, %107 : vector<16x16xf32>
    %109 = math.exp %108 : vector<16x16xf32>
    %cst_36 = arith.constant dense<0.000000e+00> : vector<16xf32>
    %110 = vector.multi_reduction <add>, %109, %cst_36 [1] : vector<16x16xf32> to vector<16xf32>
    %111 = vector.shape_cast %110 : vector<16xf32> to vector<16x1xf32>
    %112 = tpu.reciprocal %111 {approx = true} : vector<16x1xf32> -> vector<16x1xf32>
    %113 = vector.broadcast %112 : vector<16x1xf32> to vector<16x16xf32>
    %114 = arith.mulf %109, %113 : vector<16x16xf32>
    %115 = arith.truncf %114 : vector<16x16xf32> to vector<16x16xbf16>
    %cst_37 = arith.constant dense<0.000000e+00> : vector<16x32xf32>
    %116 = tpu.matmul %115, %103, %cst_37 {dimension_numbers = #tpu.dot_dimension_numbers<[1], [0], [0], [1], [0, 0, 1, 1], [], []>} : vector<16x16xbf16>, vector<16x32xbf16>, vector<16x32xf32> -> vector<16x32xf32>
    %117 = vector.extract_strided_slice %61 {offsets = [0, 96], sizes = [16, 32], strides = [1, 1]} : vector<16x128xf32> to vector<16x32xf32>
    %118 = vector.extract_strided_slice %66 {offsets = [0, 96], sizes = [16, 32], strides = [1, 1]} : vector<16x256xf32> to vector<16x32xf32>
    %119 = vector.extract_strided_slice %68 {offsets = [0, 96], sizes = [16, 32], strides = [1, 1]} : vector<16x128xbf16> to vector<16x32xbf16>
    %cst_38 = arith.constant dense<0.000000e+00> : vector<16x16xf32>
    %120 = tpu.matmul %117, %118, %cst_38 {dimension_numbers = #tpu.dot_dimension_numbers<[1], [1], [0], [0], [0, 0, 1, 0], [], []>} : vector<16x32xf32>, vector<16x32xf32>, vector<16x16xf32> -> vector<16x16xf32>
    %cst_39 = arith.constant dense<0xFF800000> : vector<16xf32>
    %121 = vector.multi_reduction <maximumf>, %120, %cst_39 [1] : vector<16x16xf32> to vector<16xf32>
    %122 = vector.shape_cast %121 : vector<16xf32> to vector<16x1xf32>
    %123 = vector.broadcast %122 : vector<16x1xf32> to vector<16x16xf32>
    %124 = arith.subf %120, %123 : vector<16x16xf32>
    %125 = math.exp %124 : vector<16x16xf32>
    %cst_40 = arith.constant dense<0.000000e+00> : vector<16xf32>
    %126 = vector.multi_reduction <add>, %125, %cst_40 [1] : vector<16x16xf32> to vector<16xf32>
    %127 = vector.shape_cast %126 : vector<16xf32> to vector<16x1xf32>
    %128 = tpu.reciprocal %127 {approx = true} : vector<16x1xf32> -> vector<16x1xf32>
    %129 = vector.broadcast %128 : vector<16x1xf32> to vector<16x16xf32>
    %130 = arith.mulf %125, %129 : vector<16x16xf32>
    %131 = arith.truncf %130 : vector<16x16xf32> to vector<16x16xbf16>
    %cst_41 = arith.constant dense<0.000000e+00> : vector<16x32xf32>
    %132 = tpu.matmul %131, %119, %cst_41 {dimension_numbers = #tpu.dot_dimension_numbers<[1], [0], [0], [1], [0, 0, 1, 1], [], []>} : vector<16x16xbf16>, vector<16x32xbf16>, vector<16x32xf32> -> vector<16x32xf32>
    %133 = tpu.concatenate %84, %100, %116, %132 in 1 : vector<16x32xf32>, vector<16x32xf32>, vector<16x32xf32>, vector<16x32xf32> -> vector<16x128xf32>
    %134 = arith.truncf %133 : vector<16x128xf32> to vector<16x128xbf16>
    %cst_42 = arith.constant dense<0.000000e+00> : vector<16x128xf32>
    %135 = tpu.matmul %134, %50, %cst_42 {dimension_numbers = #tpu.dot_dimension_numbers<[1], [0], [0], [1], [0, 0, 1, 1], [], []>} : vector<16x128xbf16>, vector<128x128xbf16>, vector<16x128xf32> -> vector<16x128xf32>
    %136 = vector.shape_cast %52 : vector<128xf32> to vector<1x128xf32>
    %137 = vector.broadcast %136 : vector<1x128xf32> to vector<16x128xf32>
    %138 = arith.addf %135, %137 : vector<16x128xf32>
    %139 = arith.addf %39, %138 : vector<16x128xf32>
    %cst_43 = arith.constant dense<0.000000e+00> : vector<16xf32>
    %140 = vector.multi_reduction <add>, %139, %cst_43 [1] : vector<16x128xf32> to vector<16xf32>
    %141 = vector.shape_cast %140 : vector<16xf32> to vector<16x1xf32>
    %cst_44 = arith.constant 1.280000e+02 : f32
    %142 = vector.broadcast %cst_44 : f32 to vector<16x1xf32>
    %143 = arith.divf %141, %142 : vector<16x1xf32>
    %144 = vector.broadcast %143 : vector<16x1xf32> to vector<16x128xf32>
    %145 = arith.subf %139, %144 : vector<16x128xf32>
    %146 = arith.mulf %145, %145 : vector<16x128xf32>
    %cst_45 = arith.constant dense<0.000000e+00> : vector<16xf32>
    %147 = vector.multi_reduction <add>, %146, %cst_45 [1] : vector<16x128xf32> to vector<16xf32>
    %148 = vector.shape_cast %147 : vector<16xf32> to vector<16x1xf32>
    %cst_46 = arith.constant 1.280000e+02 : f32
    %149 = vector.broadcast %cst_46 : f32 to vector<16x1xf32>
    %150 = arith.divf %148, %149 : vector<16x1xf32>
    %cst_47 = arith.constant 9.99999974E-6 : f32
    %151 = vector.broadcast %cst_47 : f32 to vector<16x1xf32>
    %152 = arith.addf %150, %151 : vector<16x1xf32>
    %153 = math.rsqrt %152 : vector<16x1xf32>
    %154 = vector.broadcast %153 : vector<16x1xf32> to vector<16x128xf32>
    %155 = arith.mulf %145, %154 : vector<16x128xf32>
    %156 = vector.shape_cast %54 : vector<128xf32> to vector<1x128xf32>
    %157 = vector.broadcast %156 : vector<1x128xf32> to vector<16x128xf32>
    %158 = arith.mulf %155, %157 : vector<16x128xf32>
    %159 = vector.shape_cast %56 : vector<128xf32> to vector<1x128xf32>
    %160 = vector.broadcast %159 : vector<1x128xf32> to vector<16x128xf32>
    %161 = arith.addf %158, %160 : vector<16x128xf32>
    %c2 = arith.constant 2 : index
    %c0_48 = arith.constant 0 : index
    %c0_49 = arith.constant 0 : index
    %162 = vector.load %arg4[%c2, %c0_48, %c0_49] : memref<8x128x128xbf16, #tpu.memory_space<vmem>>, vector<1x128x128xbf16>
    %163 = vector.shape_cast %162 : vector<1x128x128xbf16> to vector<128x128xbf16>
    %164 = vector.extract_strided_slice %0 {offsets = [7, 0], sizes = [1, 128], strides = [1, 1]} : vector<31x128xf32> to vector<1x128xf32>
    %165 = vector.shape_cast %164 : vector<1x128xf32> to vector<128xf32>
    %c1_50 = arith.constant 1 : index
    %c0_51 = arith.constant 0 : index
    %c0_52 = arith.constant 0 : index
    %166 = vector.load %arg5[%c1_50, %c0_51, %c0_52] : memref<8x128x256xbf16, #tpu.memory_space<vmem>>, vector<1x128x256xbf16>
    %167 = vector.shape_cast %166 : vector<1x128x256xbf16> to vector<128x256xbf16>
    %168 = vector.extract_strided_slice %1 {offsets = [1, 0], sizes = [1, 256], strides = [1, 1]} : vector<8x256xf32> to vector<1x256xf32>
    %169 = vector.shape_cast %168 : vector<1x256xf32> to vector<256xf32>
    %c3 = arith.constant 3 : index
    %c0_53 = arith.constant 0 : index
    %c0_54 = arith.constant 0 : index
    %170 = vector.load %arg4[%c3, %c0_53, %c0_54] : memref<8x128x128xbf16, #tpu.memory_space<vmem>>, vector<1x128x128xbf16>
    %171 = vector.shape_cast %170 : vector<1x128x128xbf16> to vector<128x128xbf16>
    %172 = vector.extract_strided_slice %0 {offsets = [8, 0], sizes = [1, 128], strides = [1, 1]} : vector<31x128xf32> to vector<1x128xf32>
    %173 = vector.shape_cast %172 : vector<1x128xf32> to vector<128xf32>
    %174 = vector.extract_strided_slice %0 {offsets = [9, 0], sizes = [1, 128], strides = [1, 1]} : vector<31x128xf32> to vector<1x128xf32>
    %175 = vector.shape_cast %174 : vector<1x128xf32> to vector<128xf32>
    %176 = vector.extract_strided_slice %0 {offsets = [10, 0], sizes = [1, 128], strides = [1, 1]} : vector<31x128xf32> to vector<1x128xf32>
    %177 = vector.shape_cast %176 : vector<1x128xf32> to vector<128xf32>
    %178 = arith.truncf %40 : vector<8x128xf32> to vector<8x128xbf16>
    %cst_55 = arith.constant dense<0.000000e+00> : vector<8x128xf32>
    %179 = tpu.matmul %178, %163, %cst_55 {dimension_numbers = #tpu.dot_dimension_numbers<[1], [0], [0], [1], [0, 0, 1, 1], [], []>} : vector<8x128xbf16>, vector<128x128xbf16>, vector<8x128xf32> -> vector<8x128xf32>
    %180 = vector.shape_cast %165 : vector<128xf32> to vector<1x128xf32>
    %181 = vector.broadcast %180 : vector<1x128xf32> to vector<8x128xf32>
    %182 = arith.addf %179, %181 : vector<8x128xf32>
    %183 = arith.truncf %39 : vector<16x128xf32> to vector<16x128xbf16>
    %cst_56 = arith.constant dense<0.000000e+00> : vector<16x256xf32>
    %184 = tpu.matmul %183, %167, %cst_56 {dimension_numbers = #tpu.dot_dimension_numbers<[1], [0], [0], [1], [0, 0, 1, 1], [], []>} : vector<16x128xbf16>, vector<128x256xbf16>, vector<16x256xf32> -> vector<16x256xf32>
    %185 = vector.shape_cast %169 : vector<256xf32> to vector<1x256xf32>
    %186 = vector.broadcast %185 : vector<1x256xf32> to vector<16x256xf32>
    %187 = arith.addf %184, %186 : vector<16x256xf32>
    %188 = vector.extract_strided_slice %187 {offsets = [0, 128], sizes = [16, 128], strides = [1, 1]} : vector<16x256xf32> to vector<16x128xf32>
    %189 = arith.truncf %188 : vector<16x128xf32> to vector<16x128xbf16>
    %190 = vector.extract_strided_slice %182 {offsets = [0, 0], sizes = [8, 32], strides = [1, 1]} : vector<8x128xf32> to vector<8x32xf32>
    %191 = vector.extract_strided_slice %187 {offsets = [0, 0], sizes = [16, 32], strides = [1, 1]} : vector<16x256xf32> to vector<16x32xf32>
    %192 = vector.extract_strided_slice %189 {offsets = [0, 0], sizes = [16, 32], strides = [1, 1]} : vector<16x128xbf16> to vector<16x32xbf16>
    %cst_57 = arith.constant dense<0.000000e+00> : vector<8x16xf32>
    %193 = tpu.matmul %190, %191, %cst_57 {dimension_numbers = #tpu.dot_dimension_numbers<[1], [1], [0], [0], [0, 0, 1, 0], [], []>} : vector<8x32xf32>, vector<16x32xf32>, vector<8x16xf32> -> vector<8x16xf32>
    %cst_58 = arith.constant dense<0xFF800000> : vector<8xf32>
    %194 = vector.multi_reduction <maximumf>, %193, %cst_58 [1] : vector<8x16xf32> to vector<8xf32>
    %195 = vector.shape_cast %194 : vector<8xf32> to vector<8x1xf32>
    %196 = vector.broadcast %195 : vector<8x1xf32> to vector<8x16xf32>
    %197 = arith.subf %193, %196 : vector<8x16xf32>
    %198 = math.exp %197 : vector<8x16xf32>
    %cst_59 = arith.constant dense<0.000000e+00> : vector<8xf32>
    %199 = vector.multi_reduction <add>, %198, %cst_59 [1] : vector<8x16xf32> to vector<8xf32>
    %200 = vector.shape_cast %199 : vector<8xf32> to vector<8x1xf32>
    %201 = tpu.reciprocal %200 {approx = true} : vector<8x1xf32> -> vector<8x1xf32>
    %202 = vector.broadcast %201 : vector<8x1xf32> to vector<8x16xf32>
    %203 = arith.mulf %198, %202 : vector<8x16xf32>
    %204 = arith.truncf %203 : vector<8x16xf32> to vector<8x16xbf16>
    %cst_60 = arith.constant dense<0.000000e+00> : vector<8x32xf32>
    %205 = tpu.matmul %204, %192, %cst_60 {dimension_numbers = #tpu.dot_dimension_numbers<[1], [0], [0], [1], [0, 0, 1, 1], [], []>} : vector<8x16xbf16>, vector<16x32xbf16>, vector<8x32xf32> -> vector<8x32xf32>
    %206 = vector.extract_strided_slice %182 {offsets = [0, 32], sizes = [8, 32], strides = [1, 1]} : vector<8x128xf32> to vector<8x32xf32>
    %207 = vector.extract_strided_slice %187 {offsets = [0, 32], sizes = [16, 32], strides = [1, 1]} : vector<16x256xf32> to vector<16x32xf32>
    %208 = vector.extract_strided_slice %189 {offsets = [0, 32], sizes = [16, 32], strides = [1, 1]} : vector<16x128xbf16> to vector<16x32xbf16>
    %cst_61 = arith.constant dense<0.000000e+00> : vector<8x16xf32>
    %209 = tpu.matmul %206, %207, %cst_61 {dimension_numbers = #tpu.dot_dimension_numbers<[1], [1], [0], [0], [0, 0, 1, 0], [], []>} : vector<8x32xf32>, vector<16x32xf32>, vector<8x16xf32> -> vector<8x16xf32>
    %cst_62 = arith.constant dense<0xFF800000> : vector<8xf32>
    %210 = vector.multi_reduction <maximumf>, %209, %cst_62 [1] : vector<8x16xf32> to vector<8xf32>
    %211 = vector.shape_cast %210 : vector<8xf32> to vector<8x1xf32>
    %212 = vector.broadcast %211 : vector<8x1xf32> to vector<8x16xf32>
    %213 = arith.subf %209, %212 : vector<8x16xf32>
    %214 = math.exp %213 : vector<8x16xf32>
    %cst_63 = arith.constant dense<0.000000e+00> : vector<8xf32>
    %215 = vector.multi_reduction <add>, %214, %cst_63 [1] : vector<8x16xf32> to vector<8xf32>
    %216 = vector.shape_cast %215 : vector<8xf32> to vector<8x1xf32>
    %217 = tpu.reciprocal %216 {approx = true} : vector<8x1xf32> -> vector<8x1xf32>
    %218 = vector.broadcast %217 : vector<8x1xf32> to vector<8x16xf32>
    %219 = arith.mulf %214, %218 : vector<8x16xf32>
    %220 = arith.truncf %219 : vector<8x16xf32> to vector<8x16xbf16>
    %cst_64 = arith.constant dense<0.000000e+00> : vector<8x32xf32>
    %221 = tpu.matmul %220, %208, %cst_64 {dimension_numbers = #tpu.dot_dimension_numbers<[1], [0], [0], [1], [0, 0, 1, 1], [], []>} : vector<8x16xbf16>, vector<16x32xbf16>, vector<8x32xf32> -> vector<8x32xf32>
    %222 = vector.extract_strided_slice %182 {offsets = [0, 64], sizes = [8, 32], strides = [1, 1]} : vector<8x128xf32> to vector<8x32xf32>
    %223 = vector.extract_strided_slice %187 {offsets = [0, 64], sizes = [16, 32], strides = [1, 1]} : vector<16x256xf32> to vector<16x32xf32>
    %224 = vector.extract_strided_slice %189 {offsets = [0, 64], sizes = [16, 32], strides = [1, 1]} : vector<16x128xbf16> to vector<16x32xbf16>
    %cst_65 = arith.constant dense<0.000000e+00> : vector<8x16xf32>
    %225 = tpu.matmul %222, %223, %cst_65 {dimension_numbers = #tpu.dot_dimension_numbers<[1], [1], [0], [0], [0, 0, 1, 0], [], []>} : vector<8x32xf32>, vector<16x32xf32>, vector<8x16xf32> -> vector<8x16xf32>
    %cst_66 = arith.constant dense<0xFF800000> : vector<8xf32>
    %226 = vector.multi_reduction <maximumf>, %225, %cst_66 [1] : vector<8x16xf32> to vector<8xf32>
    %227 = vector.shape_cast %226 : vector<8xf32> to vector<8x1xf32>
    %228 = vector.broadcast %227 : vector<8x1xf32> to vector<8x16xf32>
    %229 = arith.subf %225, %228 : vector<8x16xf32>
    %230 = math.exp %229 : vector<8x16xf32>
    %cst_67 = arith.constant dense<0.000000e+00> : vector<8xf32>
    %231 = vector.multi_reduction <add>, %230, %cst_67 [1] : vector<8x16xf32> to vector<8xf32>
    %232 = vector.shape_cast %231 : vector<8xf32> to vector<8x1xf32>
    %233 = tpu.reciprocal %232 {approx = true} : vector<8x1xf32> -> vector<8x1xf32>
    %234 = vector.broadcast %233 : vector<8x1xf32> to vector<8x16xf32>
    %235 = arith.mulf %230, %234 : vector<8x16xf32>
    %236 = arith.truncf %235 : vector<8x16xf32> to vector<8x16xbf16>
    %cst_68 = arith.constant dense<0.000000e+00> : vector<8x32xf32>
    %237 = tpu.matmul %236, %224, %cst_68 {dimension_numbers = #tpu.dot_dimension_numbers<[1], [0], [0], [1], [0, 0, 1, 1], [], []>} : vector<8x16xbf16>, vector<16x32xbf16>, vector<8x32xf32> -> vector<8x32xf32>
    %238 = vector.extract_strided_slice %182 {offsets = [0, 96], sizes = [8, 32], strides = [1, 1]} : vector<8x128xf32> to vector<8x32xf32>
    %239 = vector.extract_strided_slice %187 {offsets = [0, 96], sizes = [16, 32], strides = [1, 1]} : vector<16x256xf32> to vector<16x32xf32>
    %240 = vector.extract_strided_slice %189 {offsets = [0, 96], sizes = [16, 32], strides = [1, 1]} : vector<16x128xbf16> to vector<16x32xbf16>
    %cst_69 = arith.constant dense<0.000000e+00> : vector<8x16xf32>
    %241 = tpu.matmul %238, %239, %cst_69 {dimension_numbers = #tpu.dot_dimension_numbers<[1], [1], [0], [0], [0, 0, 1, 0], [], []>} : vector<8x32xf32>, vector<16x32xf32>, vector<8x16xf32> -> vector<8x16xf32>
    %cst_70 = arith.constant dense<0xFF800000> : vector<8xf32>
    %242 = vector.multi_reduction <maximumf>, %241, %cst_70 [1] : vector<8x16xf32> to vector<8xf32>
    %243 = vector.shape_cast %242 : vector<8xf32> to vector<8x1xf32>
    %244 = vector.broadcast %243 : vector<8x1xf32> to vector<8x16xf32>
    %245 = arith.subf %241, %244 : vector<8x16xf32>
    %246 = math.exp %245 : vector<8x16xf32>
    %cst_71 = arith.constant dense<0.000000e+00> : vector<8xf32>
    %247 = vector.multi_reduction <add>, %246, %cst_71 [1] : vector<8x16xf32> to vector<8xf32>
    %248 = vector.shape_cast %247 : vector<8xf32> to vector<8x1xf32>
    %249 = tpu.reciprocal %248 {approx = true} : vector<8x1xf32> -> vector<8x1xf32>
    %250 = vector.broadcast %249 : vector<8x1xf32> to vector<8x16xf32>
    %251 = arith.mulf %246, %250 : vector<8x16xf32>
    %252 = arith.truncf %251 : vector<8x16xf32> to vector<8x16xbf16>
    %cst_72 = arith.constant dense<0.000000e+00> : vector<8x32xf32>
    %253 = tpu.matmul %252, %240, %cst_72 {dimension_numbers = #tpu.dot_dimension_numbers<[1], [0], [0], [1], [0, 0, 1, 1], [], []>} : vector<8x16xbf16>, vector<16x32xbf16>, vector<8x32xf32> -> vector<8x32xf32>
    %254 = tpu.concatenate %205, %221, %237, %253 in 1 : vector<8x32xf32>, vector<8x32xf32>, vector<8x32xf32>, vector<8x32xf32> -> vector<8x128xf32>
    %255 = arith.truncf %254 : vector<8x128xf32> to vector<8x128xbf16>
    %cst_73 = arith.constant dense<0.000000e+00> : vector<8x128xf32>
    %256 = tpu.matmul %255, %171, %cst_73 {dimension_numbers = #tpu.dot_dimension_numbers<[1], [0], [0], [1], [0, 0, 1, 1], [], []>} : vector<8x128xbf16>, vector<128x128xbf16>, vector<8x128xf32> -> vector<8x128xf32>
    %257 = vector.shape_cast %173 : vector<128xf32> to vector<1x128xf32>
    %258 = vector.broadcast %257 : vector<1x128xf32> to vector<8x128xf32>
    %259 = arith.addf %256, %258 : vector<8x128xf32>
    %260 = arith.addf %40, %259 : vector<8x128xf32>
    %cst_74 = arith.constant dense<0.000000e+00> : vector<8xf32>
    %261 = vector.multi_reduction <add>, %260, %cst_74 [1] : vector<8x128xf32> to vector<8xf32>
    %262 = vector.shape_cast %261 : vector<8xf32> to vector<8x1xf32>
    %cst_75 = arith.constant 1.280000e+02 : f32
    %263 = vector.broadcast %cst_75 : f32 to vector<8x1xf32>
    %264 = arith.divf %262, %263 : vector<8x1xf32>
    %265 = vector.broadcast %264 : vector<8x1xf32> to vector<8x128xf32>
    %266 = arith.subf %260, %265 : vector<8x128xf32>
    %267 = arith.mulf %266, %266 : vector<8x128xf32>
    %cst_76 = arith.constant dense<0.000000e+00> : vector<8xf32>
    %268 = vector.multi_reduction <add>, %267, %cst_76 [1] : vector<8x128xf32> to vector<8xf32>
    %269 = vector.shape_cast %268 : vector<8xf32> to vector<8x1xf32>
    %cst_77 = arith.constant 1.280000e+02 : f32
    %270 = vector.broadcast %cst_77 : f32 to vector<8x1xf32>
    %271 = arith.divf %269, %270 : vector<8x1xf32>
    %cst_78 = arith.constant 9.99999974E-6 : f32
    %272 = vector.broadcast %cst_78 : f32 to vector<8x1xf32>
    %273 = arith.addf %271, %272 : vector<8x1xf32>
    %274 = math.rsqrt %273 : vector<8x1xf32>
    %275 = vector.broadcast %274 : vector<8x1xf32> to vector<8x128xf32>
    %276 = arith.mulf %266, %275 : vector<8x128xf32>
    %277 = vector.shape_cast %175 : vector<128xf32> to vector<1x128xf32>
    %278 = vector.broadcast %277 : vector<1x128xf32> to vector<8x128xf32>
    %279 = arith.mulf %276, %278 : vector<8x128xf32>
    %280 = vector.shape_cast %177 : vector<128xf32> to vector<1x128xf32>
    %281 = vector.broadcast %280 : vector<1x128xf32> to vector<8x128xf32>
    %282 = arith.addf %279, %281 : vector<8x128xf32>
    %c2_79 = arith.constant 2 : index
    %c0_80 = arith.constant 0 : index
    %c0_81 = arith.constant 0 : index
    %283 = vector.load %arg5[%c2_79, %c0_80, %c0_81] : memref<8x128x256xbf16, #tpu.memory_space<vmem>>, vector<1x128x256xbf16>
    %284 = vector.shape_cast %283 : vector<1x128x256xbf16> to vector<128x256xbf16>
    %285 = vector.extract_strided_slice %1 {offsets = [2, 0], sizes = [1, 256], strides = [1, 1]} : vector<8x256xf32> to vector<1x256xf32>
    %286 = vector.shape_cast %285 : vector<1x256xf32> to vector<256xf32>
    %c0_82 = arith.constant 0 : index
    %c0_83 = arith.constant 0 : index
    %c0_84 = arith.constant 0 : index
    %287 = vector.load %arg6[%c0_82, %c0_83, %c0_84] : memref<4x256x128xbf16, #tpu.memory_space<vmem>>, vector<1x256x128xbf16>
    %288 = vector.shape_cast %287 : vector<1x256x128xbf16> to vector<256x128xbf16>
    %289 = vector.extract_strided_slice %0 {offsets = [11, 0], sizes = [1, 128], strides = [1, 1]} : vector<31x128xf32> to vector<1x128xf32>
    %290 = vector.shape_cast %289 : vector<1x128xf32> to vector<128xf32>
    %291 = vector.extract_strided_slice %0 {offsets = [12, 0], sizes = [1, 128], strides = [1, 1]} : vector<31x128xf32> to vector<1x128xf32>
    %292 = vector.shape_cast %291 : vector<1x128xf32> to vector<128xf32>
    %293 = vector.extract_strided_slice %0 {offsets = [13, 0], sizes = [1, 128], strides = [1, 1]} : vector<31x128xf32> to vector<1x128xf32>
    %294 = vector.shape_cast %293 : vector<1x128xf32> to vector<128xf32>
    %295 = arith.truncf %161 : vector<16x128xf32> to vector<16x128xbf16>
    %cst_85 = arith.constant dense<0.000000e+00> : vector<16x256xf32>
    %296 = tpu.matmul %295, %284, %cst_85 {dimension_numbers = #tpu.dot_dimension_numbers<[1], [0], [0], [1], [0, 0, 1, 1], [], []>} : vector<16x128xbf16>, vector<128x256xbf16>, vector<16x256xf32> -> vector<16x256xf32>
    %297 = vector.shape_cast %286 : vector<256xf32> to vector<1x256xf32>
    %298 = vector.broadcast %297 : vector<1x256xf32> to vector<16x256xf32>
    %299 = arith.addf %296, %298 : vector<16x256xf32>
    %cst_86 = arith.constant 0.000000e+00 : f32
    %300 = vector.broadcast %cst_86 : f32 to vector<16x256xf32>
    %301 = arith.maximumf %299, %300 : vector<16x256xf32>
    %302 = arith.truncf %301 : vector<16x256xf32> to vector<16x256xbf16>
    %cst_87 = arith.constant dense<0.000000e+00> : vector<16x128xf32>
    %303 = tpu.matmul %302, %288, %cst_87 {dimension_numbers = #tpu.dot_dimension_numbers<[1], [0], [0], [1], [0, 0, 1, 1], [], []>} : vector<16x256xbf16>, vector<256x128xbf16>, vector<16x128xf32> -> vector<16x128xf32>
    %304 = vector.shape_cast %290 : vector<128xf32> to vector<1x128xf32>
    %305 = vector.broadcast %304 : vector<1x128xf32> to vector<16x128xf32>
    %306 = arith.addf %303, %305 : vector<16x128xf32>
    %307 = arith.addf %161, %306 : vector<16x128xf32>
    %cst_88 = arith.constant dense<0.000000e+00> : vector<16xf32>
    %308 = vector.multi_reduction <add>, %307, %cst_88 [1] : vector<16x128xf32> to vector<16xf32>
    %309 = vector.shape_cast %308 : vector<16xf32> to vector<16x1xf32>
    %cst_89 = arith.constant 1.280000e+02 : f32
    %310 = vector.broadcast %cst_89 : f32 to vector<16x1xf32>
    %311 = arith.divf %309, %310 : vector<16x1xf32>
    %312 = vector.broadcast %311 : vector<16x1xf32> to vector<16x128xf32>
    %313 = arith.subf %307, %312 : vector<16x128xf32>
    %314 = arith.mulf %313, %313 : vector<16x128xf32>
    %cst_90 = arith.constant dense<0.000000e+00> : vector<16xf32>
    %315 = vector.multi_reduction <add>, %314, %cst_90 [1] : vector<16x128xf32> to vector<16xf32>
    %316 = vector.shape_cast %315 : vector<16xf32> to vector<16x1xf32>
    %cst_91 = arith.constant 1.280000e+02 : f32
    %317 = vector.broadcast %cst_91 : f32 to vector<16x1xf32>
    %318 = arith.divf %316, %317 : vector<16x1xf32>
    %cst_92 = arith.constant 9.99999974E-6 : f32
    %319 = vector.broadcast %cst_92 : f32 to vector<16x1xf32>
    %320 = arith.addf %318, %319 : vector<16x1xf32>
    %321 = math.rsqrt %320 : vector<16x1xf32>
    %322 = vector.broadcast %321 : vector<16x1xf32> to vector<16x128xf32>
    %323 = arith.mulf %313, %322 : vector<16x128xf32>
    %324 = vector.shape_cast %292 : vector<128xf32> to vector<1x128xf32>
    %325 = vector.broadcast %324 : vector<1x128xf32> to vector<16x128xf32>
    %326 = arith.mulf %323, %325 : vector<16x128xf32>
    %327 = vector.shape_cast %294 : vector<128xf32> to vector<1x128xf32>
    %328 = vector.broadcast %327 : vector<1x128xf32> to vector<16x128xf32>
    %329 = arith.addf %326, %328 : vector<16x128xf32>
    %c3_93 = arith.constant 3 : index
    %c0_94 = arith.constant 0 : index
    %c0_95 = arith.constant 0 : index
    %330 = vector.load %arg5[%c3_93, %c0_94, %c0_95] : memref<8x128x256xbf16, #tpu.memory_space<vmem>>, vector<1x128x256xbf16>
    %331 = vector.shape_cast %330 : vector<1x128x256xbf16> to vector<128x256xbf16>
    %332 = vector.extract_strided_slice %1 {offsets = [3, 0], sizes = [1, 256], strides = [1, 1]} : vector<8x256xf32> to vector<1x256xf32>
    %333 = vector.shape_cast %332 : vector<1x256xf32> to vector<256xf32>
    %c1_96 = arith.constant 1 : index
    %c0_97 = arith.constant 0 : index
    %c0_98 = arith.constant 0 : index
    %334 = vector.load %arg6[%c1_96, %c0_97, %c0_98] : memref<4x256x128xbf16, #tpu.memory_space<vmem>>, vector<1x256x128xbf16>
    %335 = vector.shape_cast %334 : vector<1x256x128xbf16> to vector<256x128xbf16>
    %336 = vector.extract_strided_slice %0 {offsets = [14, 0], sizes = [1, 128], strides = [1, 1]} : vector<31x128xf32> to vector<1x128xf32>
    %337 = vector.shape_cast %336 : vector<1x128xf32> to vector<128xf32>
    %338 = vector.extract_strided_slice %0 {offsets = [15, 0], sizes = [1, 128], strides = [1, 1]} : vector<31x128xf32> to vector<1x128xf32>
    %339 = vector.shape_cast %338 : vector<1x128xf32> to vector<128xf32>
    %340 = vector.extract_strided_slice %0 {offsets = [16, 0], sizes = [1, 128], strides = [1, 1]} : vector<31x128xf32> to vector<1x128xf32>
    %341 = vector.shape_cast %340 : vector<1x128xf32> to vector<128xf32>
    %342 = arith.truncf %282 : vector<8x128xf32> to vector<8x128xbf16>
    %cst_99 = arith.constant dense<0.000000e+00> : vector<8x256xf32>
    %343 = tpu.matmul %342, %331, %cst_99 {dimension_numbers = #tpu.dot_dimension_numbers<[1], [0], [0], [1], [0, 0, 1, 1], [], []>} : vector<8x128xbf16>, vector<128x256xbf16>, vector<8x256xf32> -> vector<8x256xf32>
    %344 = vector.shape_cast %333 : vector<256xf32> to vector<1x256xf32>
    %345 = vector.broadcast %344 : vector<1x256xf32> to vector<8x256xf32>
    %346 = arith.addf %343, %345 : vector<8x256xf32>
    %cst_100 = arith.constant 0.000000e+00 : f32
    %347 = vector.broadcast %cst_100 : f32 to vector<8x256xf32>
    %348 = arith.maximumf %346, %347 : vector<8x256xf32>
    %349 = arith.truncf %348 : vector<8x256xf32> to vector<8x256xbf16>
    %cst_101 = arith.constant dense<0.000000e+00> : vector<8x128xf32>
    %350 = tpu.matmul %349, %335, %cst_101 {dimension_numbers = #tpu.dot_dimension_numbers<[1], [0], [0], [1], [0, 0, 1, 1], [], []>} : vector<8x256xbf16>, vector<256x128xbf16>, vector<8x128xf32> -> vector<8x128xf32>
    %351 = vector.shape_cast %337 : vector<128xf32> to vector<1x128xf32>
    %352 = vector.broadcast %351 : vector<1x128xf32> to vector<8x128xf32>
    %353 = arith.addf %350, %352 : vector<8x128xf32>
    %354 = arith.addf %282, %353 : vector<8x128xf32>
    %cst_102 = arith.constant dense<0.000000e+00> : vector<8xf32>
    %355 = vector.multi_reduction <add>, %354, %cst_102 [1] : vector<8x128xf32> to vector<8xf32>
    %356 = vector.shape_cast %355 : vector<8xf32> to vector<8x1xf32>
    %cst_103 = arith.constant 1.280000e+02 : f32
    %357 = vector.broadcast %cst_103 : f32 to vector<8x1xf32>
    %358 = arith.divf %356, %357 : vector<8x1xf32>
    %359 = vector.broadcast %358 : vector<8x1xf32> to vector<8x128xf32>
    %360 = arith.subf %354, %359 : vector<8x128xf32>
    %361 = arith.mulf %360, %360 : vector<8x128xf32>
    %cst_104 = arith.constant dense<0.000000e+00> : vector<8xf32>
    %362 = vector.multi_reduction <add>, %361, %cst_104 [1] : vector<8x128xf32> to vector<8xf32>
    %363 = vector.shape_cast %362 : vector<8xf32> to vector<8x1xf32>
    %cst_105 = arith.constant 1.280000e+02 : f32
    %364 = vector.broadcast %cst_105 : f32 to vector<8x1xf32>
    %365 = arith.divf %363, %364 : vector<8x1xf32>
    %cst_106 = arith.constant 9.99999974E-6 : f32
    %366 = vector.broadcast %cst_106 : f32 to vector<8x1xf32>
    %367 = arith.addf %365, %366 : vector<8x1xf32>
    %368 = math.rsqrt %367 : vector<8x1xf32>
    %369 = vector.broadcast %368 : vector<8x1xf32> to vector<8x128xf32>
    %370 = arith.mulf %360, %369 : vector<8x128xf32>
    %371 = vector.shape_cast %339 : vector<128xf32> to vector<1x128xf32>
    %372 = vector.broadcast %371 : vector<1x128xf32> to vector<8x128xf32>
    %373 = arith.mulf %370, %372 : vector<8x128xf32>
    %374 = vector.shape_cast %341 : vector<128xf32> to vector<1x128xf32>
    %375 = vector.broadcast %374 : vector<1x128xf32> to vector<8x128xf32>
    %376 = arith.addf %373, %375 : vector<8x128xf32>
    %c4 = arith.constant 4 : index
    %c0_107 = arith.constant 0 : index
    %c0_108 = arith.constant 0 : index
    %377 = vector.load %arg4[%c4, %c0_107, %c0_108] : memref<8x128x128xbf16, #tpu.memory_space<vmem>>, vector<1x128x128xbf16>
    %378 = vector.shape_cast %377 : vector<1x128x128xbf16> to vector<128x128xbf16>
    %379 = vector.extract_strided_slice %0 {offsets = [17, 0], sizes = [1, 128], strides = [1, 1]} : vector<31x128xf32> to vector<1x128xf32>
    %380 = vector.shape_cast %379 : vector<1x128xf32> to vector<128xf32>
    %c4_109 = arith.constant 4 : index
    %c0_110 = arith.constant 0 : index
    %c0_111 = arith.constant 0 : index
    %381 = vector.load %arg5[%c4_109, %c0_110, %c0_111] : memref<8x128x256xbf16, #tpu.memory_space<vmem>>, vector<1x128x256xbf16>
    %382 = vector.shape_cast %381 : vector<1x128x256xbf16> to vector<128x256xbf16>
    %383 = vector.extract_strided_slice %1 {offsets = [4, 0], sizes = [1, 256], strides = [1, 1]} : vector<8x256xf32> to vector<1x256xf32>
    %384 = vector.shape_cast %383 : vector<1x256xf32> to vector<256xf32>
    %c5 = arith.constant 5 : index
    %c0_112 = arith.constant 0 : index
    %c0_113 = arith.constant 0 : index
    %385 = vector.load %arg4[%c5, %c0_112, %c0_113] : memref<8x128x128xbf16, #tpu.memory_space<vmem>>, vector<1x128x128xbf16>
    %386 = vector.shape_cast %385 : vector<1x128x128xbf16> to vector<128x128xbf16>
    %387 = vector.extract_strided_slice %0 {offsets = [18, 0], sizes = [1, 128], strides = [1, 1]} : vector<31x128xf32> to vector<1x128xf32>
    %388 = vector.shape_cast %387 : vector<1x128xf32> to vector<128xf32>
    %389 = vector.extract_strided_slice %0 {offsets = [19, 0], sizes = [1, 128], strides = [1, 1]} : vector<31x128xf32> to vector<1x128xf32>
    %390 = vector.shape_cast %389 : vector<1x128xf32> to vector<128xf32>
    %391 = vector.extract_strided_slice %0 {offsets = [20, 0], sizes = [1, 128], strides = [1, 1]} : vector<31x128xf32> to vector<1x128xf32>
    %392 = vector.shape_cast %391 : vector<1x128xf32> to vector<128xf32>
    %393 = arith.truncf %329 : vector<16x128xf32> to vector<16x128xbf16>
    %cst_114 = arith.constant dense<0.000000e+00> : vector<16x128xf32>
    %394 = tpu.matmul %393, %378, %cst_114 {dimension_numbers = #tpu.dot_dimension_numbers<[1], [0], [0], [1], [0, 0, 1, 1], [], []>} : vector<16x128xbf16>, vector<128x128xbf16>, vector<16x128xf32> -> vector<16x128xf32>
    %395 = vector.shape_cast %380 : vector<128xf32> to vector<1x128xf32>
    %396 = vector.broadcast %395 : vector<1x128xf32> to vector<16x128xf32>
    %397 = arith.addf %394, %396 : vector<16x128xf32>
    %398 = arith.truncf %329 : vector<16x128xf32> to vector<16x128xbf16>
    %cst_115 = arith.constant dense<0.000000e+00> : vector<16x256xf32>
    %399 = tpu.matmul %398, %382, %cst_115 {dimension_numbers = #tpu.dot_dimension_numbers<[1], [0], [0], [1], [0, 0, 1, 1], [], []>} : vector<16x128xbf16>, vector<128x256xbf16>, vector<16x256xf32> -> vector<16x256xf32>
    %400 = vector.shape_cast %384 : vector<256xf32> to vector<1x256xf32>
    %401 = vector.broadcast %400 : vector<1x256xf32> to vector<16x256xf32>
    %402 = arith.addf %399, %401 : vector<16x256xf32>
    %403 = vector.extract_strided_slice %402 {offsets = [0, 128], sizes = [16, 128], strides = [1, 1]} : vector<16x256xf32> to vector<16x128xf32>
    %404 = arith.truncf %403 : vector<16x128xf32> to vector<16x128xbf16>
    %405 = vector.extract_strided_slice %397 {offsets = [0, 0], sizes = [16, 32], strides = [1, 1]} : vector<16x128xf32> to vector<16x32xf32>
    %406 = vector.extract_strided_slice %402 {offsets = [0, 0], sizes = [16, 32], strides = [1, 1]} : vector<16x256xf32> to vector<16x32xf32>
    %407 = vector.extract_strided_slice %404 {offsets = [0, 0], sizes = [16, 32], strides = [1, 1]} : vector<16x128xbf16> to vector<16x32xbf16>
    %cst_116 = arith.constant dense<0.000000e+00> : vector<16x16xf32>
    %408 = tpu.matmul %405, %406, %cst_116 {dimension_numbers = #tpu.dot_dimension_numbers<[1], [1], [0], [0], [0, 0, 1, 0], [], []>} : vector<16x32xf32>, vector<16x32xf32>, vector<16x16xf32> -> vector<16x16xf32>
    %cst_117 = arith.constant dense<0xFF800000> : vector<16xf32>
    %409 = vector.multi_reduction <maximumf>, %408, %cst_117 [1] : vector<16x16xf32> to vector<16xf32>
    %410 = vector.shape_cast %409 : vector<16xf32> to vector<16x1xf32>
    %411 = vector.broadcast %410 : vector<16x1xf32> to vector<16x16xf32>
    %412 = arith.subf %408, %411 : vector<16x16xf32>
    %413 = math.exp %412 : vector<16x16xf32>
    %cst_118 = arith.constant dense<0.000000e+00> : vector<16xf32>
    %414 = vector.multi_reduction <add>, %413, %cst_118 [1] : vector<16x16xf32> to vector<16xf32>
    %415 = vector.shape_cast %414 : vector<16xf32> to vector<16x1xf32>
    %416 = tpu.reciprocal %415 {approx = true} : vector<16x1xf32> -> vector<16x1xf32>
    %417 = vector.broadcast %416 : vector<16x1xf32> to vector<16x16xf32>
    %418 = arith.mulf %413, %417 : vector<16x16xf32>
    %419 = arith.truncf %418 : vector<16x16xf32> to vector<16x16xbf16>
    %cst_119 = arith.constant dense<0.000000e+00> : vector<16x32xf32>
    %420 = tpu.matmul %419, %407, %cst_119 {dimension_numbers = #tpu.dot_dimension_numbers<[1], [0], [0], [1], [0, 0, 1, 1], [], []>} : vector<16x16xbf16>, vector<16x32xbf16>, vector<16x32xf32> -> vector<16x32xf32>
    %421 = vector.extract_strided_slice %397 {offsets = [0, 32], sizes = [16, 32], strides = [1, 1]} : vector<16x128xf32> to vector<16x32xf32>
    %422 = vector.extract_strided_slice %402 {offsets = [0, 32], sizes = [16, 32], strides = [1, 1]} : vector<16x256xf32> to vector<16x32xf32>
    %423 = vector.extract_strided_slice %404 {offsets = [0, 32], sizes = [16, 32], strides = [1, 1]} : vector<16x128xbf16> to vector<16x32xbf16>
    %cst_120 = arith.constant dense<0.000000e+00> : vector<16x16xf32>
    %424 = tpu.matmul %421, %422, %cst_120 {dimension_numbers = #tpu.dot_dimension_numbers<[1], [1], [0], [0], [0, 0, 1, 0], [], []>} : vector<16x32xf32>, vector<16x32xf32>, vector<16x16xf32> -> vector<16x16xf32>
    %cst_121 = arith.constant dense<0xFF800000> : vector<16xf32>
    %425 = vector.multi_reduction <maximumf>, %424, %cst_121 [1] : vector<16x16xf32> to vector<16xf32>
    %426 = vector.shape_cast %425 : vector<16xf32> to vector<16x1xf32>
    %427 = vector.broadcast %426 : vector<16x1xf32> to vector<16x16xf32>
    %428 = arith.subf %424, %427 : vector<16x16xf32>
    %429 = math.exp %428 : vector<16x16xf32>
    %cst_122 = arith.constant dense<0.000000e+00> : vector<16xf32>
    %430 = vector.multi_reduction <add>, %429, %cst_122 [1] : vector<16x16xf32> to vector<16xf32>
    %431 = vector.shape_cast %430 : vector<16xf32> to vector<16x1xf32>
    %432 = tpu.reciprocal %431 {approx = true} : vector<16x1xf32> -> vector<16x1xf32>
    %433 = vector.broadcast %432 : vector<16x1xf32> to vector<16x16xf32>
    %434 = arith.mulf %429, %433 : vector<16x16xf32>
    %435 = arith.truncf %434 : vector<16x16xf32> to vector<16x16xbf16>
    %cst_123 = arith.constant dense<0.000000e+00> : vector<16x32xf32>
    %436 = tpu.matmul %435, %423, %cst_123 {dimension_numbers = #tpu.dot_dimension_numbers<[1], [0], [0], [1], [0, 0, 1, 1], [], []>} : vector<16x16xbf16>, vector<16x32xbf16>, vector<16x32xf32> -> vector<16x32xf32>
    %437 = vector.extract_strided_slice %397 {offsets = [0, 64], sizes = [16, 32], strides = [1, 1]} : vector<16x128xf32> to vector<16x32xf32>
    %438 = vector.extract_strided_slice %402 {offsets = [0, 64], sizes = [16, 32], strides = [1, 1]} : vector<16x256xf32> to vector<16x32xf32>
    %439 = vector.extract_strided_slice %404 {offsets = [0, 64], sizes = [16, 32], strides = [1, 1]} : vector<16x128xbf16> to vector<16x32xbf16>
    %cst_124 = arith.constant dense<0.000000e+00> : vector<16x16xf32>
    %440 = tpu.matmul %437, %438, %cst_124 {dimension_numbers = #tpu.dot_dimension_numbers<[1], [1], [0], [0], [0, 0, 1, 0], [], []>} : vector<16x32xf32>, vector<16x32xf32>, vector<16x16xf32> -> vector<16x16xf32>
    %cst_125 = arith.constant dense<0xFF800000> : vector<16xf32>
    %441 = vector.multi_reduction <maximumf>, %440, %cst_125 [1] : vector<16x16xf32> to vector<16xf32>
    %442 = vector.shape_cast %441 : vector<16xf32> to vector<16x1xf32>
    %443 = vector.broadcast %442 : vector<16x1xf32> to vector<16x16xf32>
    %444 = arith.subf %440, %443 : vector<16x16xf32>
    %445 = math.exp %444 : vector<16x16xf32>
    %cst_126 = arith.constant dense<0.000000e+00> : vector<16xf32>
    %446 = vector.multi_reduction <add>, %445, %cst_126 [1] : vector<16x16xf32> to vector<16xf32>
    %447 = vector.shape_cast %446 : vector<16xf32> to vector<16x1xf32>
    %448 = tpu.reciprocal %447 {approx = true} : vector<16x1xf32> -> vector<16x1xf32>
    %449 = vector.broadcast %448 : vector<16x1xf32> to vector<16x16xf32>
    %450 = arith.mulf %445, %449 : vector<16x16xf32>
    %451 = arith.truncf %450 : vector<16x16xf32> to vector<16x16xbf16>
    %cst_127 = arith.constant dense<0.000000e+00> : vector<16x32xf32>
    %452 = tpu.matmul %451, %439, %cst_127 {dimension_numbers = #tpu.dot_dimension_numbers<[1], [0], [0], [1], [0, 0, 1, 1], [], []>} : vector<16x16xbf16>, vector<16x32xbf16>, vector<16x32xf32> -> vector<16x32xf32>
    %453 = vector.extract_strided_slice %397 {offsets = [0, 96], sizes = [16, 32], strides = [1, 1]} : vector<16x128xf32> to vector<16x32xf32>
    %454 = vector.extract_strided_slice %402 {offsets = [0, 96], sizes = [16, 32], strides = [1, 1]} : vector<16x256xf32> to vector<16x32xf32>
    %455 = vector.extract_strided_slice %404 {offsets = [0, 96], sizes = [16, 32], strides = [1, 1]} : vector<16x128xbf16> to vector<16x32xbf16>
    %cst_128 = arith.constant dense<0.000000e+00> : vector<16x16xf32>
    %456 = tpu.matmul %453, %454, %cst_128 {dimension_numbers = #tpu.dot_dimension_numbers<[1], [1], [0], [0], [0, 0, 1, 0], [], []>} : vector<16x32xf32>, vector<16x32xf32>, vector<16x16xf32> -> vector<16x16xf32>
    %cst_129 = arith.constant dense<0xFF800000> : vector<16xf32>
    %457 = vector.multi_reduction <maximumf>, %456, %cst_129 [1] : vector<16x16xf32> to vector<16xf32>
    %458 = vector.shape_cast %457 : vector<16xf32> to vector<16x1xf32>
    %459 = vector.broadcast %458 : vector<16x1xf32> to vector<16x16xf32>
    %460 = arith.subf %456, %459 : vector<16x16xf32>
    %461 = math.exp %460 : vector<16x16xf32>
    %cst_130 = arith.constant dense<0.000000e+00> : vector<16xf32>
    %462 = vector.multi_reduction <add>, %461, %cst_130 [1] : vector<16x16xf32> to vector<16xf32>
    %463 = vector.shape_cast %462 : vector<16xf32> to vector<16x1xf32>
    %464 = tpu.reciprocal %463 {approx = true} : vector<16x1xf32> -> vector<16x1xf32>
    %465 = vector.broadcast %464 : vector<16x1xf32> to vector<16x16xf32>
    %466 = arith.mulf %461, %465 : vector<16x16xf32>
    %467 = arith.truncf %466 : vector<16x16xf32> to vector<16x16xbf16>
    %cst_131 = arith.constant dense<0.000000e+00> : vector<16x32xf32>
    %468 = tpu.matmul %467, %455, %cst_131 {dimension_numbers = #tpu.dot_dimension_numbers<[1], [0], [0], [1], [0, 0, 1, 1], [], []>} : vector<16x16xbf16>, vector<16x32xbf16>, vector<16x32xf32> -> vector<16x32xf32>
    %469 = tpu.concatenate %420, %436, %452, %468 in 1 : vector<16x32xf32>, vector<16x32xf32>, vector<16x32xf32>, vector<16x32xf32> -> vector<16x128xf32>
    %470 = arith.truncf %469 : vector<16x128xf32> to vector<16x128xbf16>
    %cst_132 = arith.constant dense<0.000000e+00> : vector<16x128xf32>
    %471 = tpu.matmul %470, %386, %cst_132 {dimension_numbers = #tpu.dot_dimension_numbers<[1], [0], [0], [1], [0, 0, 1, 1], [], []>} : vector<16x128xbf16>, vector<128x128xbf16>, vector<16x128xf32> -> vector<16x128xf32>
    %472 = vector.shape_cast %388 : vector<128xf32> to vector<1x128xf32>
    %473 = vector.broadcast %472 : vector<1x128xf32> to vector<16x128xf32>
    %474 = arith.addf %471, %473 : vector<16x128xf32>
    %475 = arith.addf %329, %474 : vector<16x128xf32>
    %cst_133 = arith.constant dense<0.000000e+00> : vector<16xf32>
    %476 = vector.multi_reduction <add>, %475, %cst_133 [1] : vector<16x128xf32> to vector<16xf32>
    %477 = vector.shape_cast %476 : vector<16xf32> to vector<16x1xf32>
    %cst_134 = arith.constant 1.280000e+02 : f32
    %478 = vector.broadcast %cst_134 : f32 to vector<16x1xf32>
    %479 = arith.divf %477, %478 : vector<16x1xf32>
    %480 = vector.broadcast %479 : vector<16x1xf32> to vector<16x128xf32>
    %481 = arith.subf %475, %480 : vector<16x128xf32>
    %482 = arith.mulf %481, %481 : vector<16x128xf32>
    %cst_135 = arith.constant dense<0.000000e+00> : vector<16xf32>
    %483 = vector.multi_reduction <add>, %482, %cst_135 [1] : vector<16x128xf32> to vector<16xf32>
    %484 = vector.shape_cast %483 : vector<16xf32> to vector<16x1xf32>
    %cst_136 = arith.constant 1.280000e+02 : f32
    %485 = vector.broadcast %cst_136 : f32 to vector<16x1xf32>
    %486 = arith.divf %484, %485 : vector<16x1xf32>
    %cst_137 = arith.constant 9.99999974E-6 : f32
    %487 = vector.broadcast %cst_137 : f32 to vector<16x1xf32>
    %488 = arith.addf %486, %487 : vector<16x1xf32>
    %489 = math.rsqrt %488 : vector<16x1xf32>
    %490 = vector.broadcast %489 : vector<16x1xf32> to vector<16x128xf32>
    %491 = arith.mulf %481, %490 : vector<16x128xf32>
    %492 = vector.shape_cast %390 : vector<128xf32> to vector<1x128xf32>
    %493 = vector.broadcast %492 : vector<1x128xf32> to vector<16x128xf32>
    %494 = arith.mulf %491, %493 : vector<16x128xf32>
    %495 = vector.shape_cast %392 : vector<128xf32> to vector<1x128xf32>
    %496 = vector.broadcast %495 : vector<1x128xf32> to vector<16x128xf32>
    %497 = arith.addf %494, %496 : vector<16x128xf32>
    %c6 = arith.constant 6 : index
    %c0_138 = arith.constant 0 : index
    %c0_139 = arith.constant 0 : index
    %498 = vector.load %arg4[%c6, %c0_138, %c0_139] : memref<8x128x128xbf16, #tpu.memory_space<vmem>>, vector<1x128x128xbf16>
    %499 = vector.shape_cast %498 : vector<1x128x128xbf16> to vector<128x128xbf16>
    %500 = vector.extract_strided_slice %0 {offsets = [21, 0], sizes = [1, 128], strides = [1, 1]} : vector<31x128xf32> to vector<1x128xf32>
    %501 = vector.shape_cast %500 : vector<1x128xf32> to vector<128xf32>
    %c5_140 = arith.constant 5 : index
    %c0_141 = arith.constant 0 : index
    %c0_142 = arith.constant 0 : index
    %502 = vector.load %arg5[%c5_140, %c0_141, %c0_142] : memref<8x128x256xbf16, #tpu.memory_space<vmem>>, vector<1x128x256xbf16>
    %503 = vector.shape_cast %502 : vector<1x128x256xbf16> to vector<128x256xbf16>
    %504 = vector.extract_strided_slice %1 {offsets = [5, 0], sizes = [1, 256], strides = [1, 1]} : vector<8x256xf32> to vector<1x256xf32>
    %505 = vector.shape_cast %504 : vector<1x256xf32> to vector<256xf32>
    %c7 = arith.constant 7 : index
    %c0_143 = arith.constant 0 : index
    %c0_144 = arith.constant 0 : index
    %506 = vector.load %arg4[%c7, %c0_143, %c0_144] : memref<8x128x128xbf16, #tpu.memory_space<vmem>>, vector<1x128x128xbf16>
    %507 = vector.shape_cast %506 : vector<1x128x128xbf16> to vector<128x128xbf16>
    %508 = vector.extract_strided_slice %0 {offsets = [22, 0], sizes = [1, 128], strides = [1, 1]} : vector<31x128xf32> to vector<1x128xf32>
    %509 = vector.shape_cast %508 : vector<1x128xf32> to vector<128xf32>
    %510 = vector.extract_strided_slice %0 {offsets = [23, 0], sizes = [1, 128], strides = [1, 1]} : vector<31x128xf32> to vector<1x128xf32>
    %511 = vector.shape_cast %510 : vector<1x128xf32> to vector<128xf32>
    %512 = vector.extract_strided_slice %0 {offsets = [24, 0], sizes = [1, 128], strides = [1, 1]} : vector<31x128xf32> to vector<1x128xf32>
    %513 = vector.shape_cast %512 : vector<1x128xf32> to vector<128xf32>
    %514 = arith.truncf %376 : vector<8x128xf32> to vector<8x128xbf16>
    %cst_145 = arith.constant dense<0.000000e+00> : vector<8x128xf32>
    %515 = tpu.matmul %514, %499, %cst_145 {dimension_numbers = #tpu.dot_dimension_numbers<[1], [0], [0], [1], [0, 0, 1, 1], [], []>} : vector<8x128xbf16>, vector<128x128xbf16>, vector<8x128xf32> -> vector<8x128xf32>
    %516 = vector.shape_cast %501 : vector<128xf32> to vector<1x128xf32>
    %517 = vector.broadcast %516 : vector<1x128xf32> to vector<8x128xf32>
    %518 = arith.addf %515, %517 : vector<8x128xf32>
    %519 = arith.truncf %329 : vector<16x128xf32> to vector<16x128xbf16>
    %cst_146 = arith.constant dense<0.000000e+00> : vector<16x256xf32>
    %520 = tpu.matmul %519, %503, %cst_146 {dimension_numbers = #tpu.dot_dimension_numbers<[1], [0], [0], [1], [0, 0, 1, 1], [], []>} : vector<16x128xbf16>, vector<128x256xbf16>, vector<16x256xf32> -> vector<16x256xf32>
    %521 = vector.shape_cast %505 : vector<256xf32> to vector<1x256xf32>
    %522 = vector.broadcast %521 : vector<1x256xf32> to vector<16x256xf32>
    %523 = arith.addf %520, %522 : vector<16x256xf32>
    %524 = vector.extract_strided_slice %523 {offsets = [0, 128], sizes = [16, 128], strides = [1, 1]} : vector<16x256xf32> to vector<16x128xf32>
    %525 = arith.truncf %524 : vector<16x128xf32> to vector<16x128xbf16>
    %526 = vector.extract_strided_slice %518 {offsets = [0, 0], sizes = [8, 32], strides = [1, 1]} : vector<8x128xf32> to vector<8x32xf32>
    %527 = vector.extract_strided_slice %523 {offsets = [0, 0], sizes = [16, 32], strides = [1, 1]} : vector<16x256xf32> to vector<16x32xf32>
    %528 = vector.extract_strided_slice %525 {offsets = [0, 0], sizes = [16, 32], strides = [1, 1]} : vector<16x128xbf16> to vector<16x32xbf16>
    %cst_147 = arith.constant dense<0.000000e+00> : vector<8x16xf32>
    %529 = tpu.matmul %526, %527, %cst_147 {dimension_numbers = #tpu.dot_dimension_numbers<[1], [1], [0], [0], [0, 0, 1, 0], [], []>} : vector<8x32xf32>, vector<16x32xf32>, vector<8x16xf32> -> vector<8x16xf32>
    %cst_148 = arith.constant dense<0xFF800000> : vector<8xf32>
    %530 = vector.multi_reduction <maximumf>, %529, %cst_148 [1] : vector<8x16xf32> to vector<8xf32>
    %531 = vector.shape_cast %530 : vector<8xf32> to vector<8x1xf32>
    %532 = vector.broadcast %531 : vector<8x1xf32> to vector<8x16xf32>
    %533 = arith.subf %529, %532 : vector<8x16xf32>
    %534 = math.exp %533 : vector<8x16xf32>
    %cst_149 = arith.constant dense<0.000000e+00> : vector<8xf32>
    %535 = vector.multi_reduction <add>, %534, %cst_149 [1] : vector<8x16xf32> to vector<8xf32>
    %536 = vector.shape_cast %535 : vector<8xf32> to vector<8x1xf32>
    %537 = tpu.reciprocal %536 {approx = true} : vector<8x1xf32> -> vector<8x1xf32>
    %538 = vector.broadcast %537 : vector<8x1xf32> to vector<8x16xf32>
    %539 = arith.mulf %534, %538 : vector<8x16xf32>
    %540 = arith.truncf %539 : vector<8x16xf32> to vector<8x16xbf16>
    %cst_150 = arith.constant dense<0.000000e+00> : vector<8x32xf32>
    %541 = tpu.matmul %540, %528, %cst_150 {dimension_numbers = #tpu.dot_dimension_numbers<[1], [0], [0], [1], [0, 0, 1, 1], [], []>} : vector<8x16xbf16>, vector<16x32xbf16>, vector<8x32xf32> -> vector<8x32xf32>
    %542 = vector.extract_strided_slice %518 {offsets = [0, 32], sizes = [8, 32], strides = [1, 1]} : vector<8x128xf32> to vector<8x32xf32>
    %543 = vector.extract_strided_slice %523 {offsets = [0, 32], sizes = [16, 32], strides = [1, 1]} : vector<16x256xf32> to vector<16x32xf32>
    %544 = vector.extract_strided_slice %525 {offsets = [0, 32], sizes = [16, 32], strides = [1, 1]} : vector<16x128xbf16> to vector<16x32xbf16>
    %cst_151 = arith.constant dense<0.000000e+00> : vector<8x16xf32>
    %545 = tpu.matmul %542, %543, %cst_151 {dimension_numbers = #tpu.dot_dimension_numbers<[1], [1], [0], [0], [0, 0, 1, 0], [], []>} : vector<8x32xf32>, vector<16x32xf32>, vector<8x16xf32> -> vector<8x16xf32>
    %cst_152 = arith.constant dense<0xFF800000> : vector<8xf32>
    %546 = vector.multi_reduction <maximumf>, %545, %cst_152 [1] : vector<8x16xf32> to vector<8xf32>
    %547 = vector.shape_cast %546 : vector<8xf32> to vector<8x1xf32>
    %548 = vector.broadcast %547 : vector<8x1xf32> to vector<8x16xf32>
    %549 = arith.subf %545, %548 : vector<8x16xf32>
    %550 = math.exp %549 : vector<8x16xf32>
    %cst_153 = arith.constant dense<0.000000e+00> : vector<8xf32>
    %551 = vector.multi_reduction <add>, %550, %cst_153 [1] : vector<8x16xf32> to vector<8xf32>
    %552 = vector.shape_cast %551 : vector<8xf32> to vector<8x1xf32>
    %553 = tpu.reciprocal %552 {approx = true} : vector<8x1xf32> -> vector<8x1xf32>
    %554 = vector.broadcast %553 : vector<8x1xf32> to vector<8x16xf32>
    %555 = arith.mulf %550, %554 : vector<8x16xf32>
    %556 = arith.truncf %555 : vector<8x16xf32> to vector<8x16xbf16>
    %cst_154 = arith.constant dense<0.000000e+00> : vector<8x32xf32>
    %557 = tpu.matmul %556, %544, %cst_154 {dimension_numbers = #tpu.dot_dimension_numbers<[1], [0], [0], [1], [0, 0, 1, 1], [], []>} : vector<8x16xbf16>, vector<16x32xbf16>, vector<8x32xf32> -> vector<8x32xf32>
    %558 = vector.extract_strided_slice %518 {offsets = [0, 64], sizes = [8, 32], strides = [1, 1]} : vector<8x128xf32> to vector<8x32xf32>
    %559 = vector.extract_strided_slice %523 {offsets = [0, 64], sizes = [16, 32], strides = [1, 1]} : vector<16x256xf32> to vector<16x32xf32>
    %560 = vector.extract_strided_slice %525 {offsets = [0, 64], sizes = [16, 32], strides = [1, 1]} : vector<16x128xbf16> to vector<16x32xbf16>
    %cst_155 = arith.constant dense<0.000000e+00> : vector<8x16xf32>
    %561 = tpu.matmul %558, %559, %cst_155 {dimension_numbers = #tpu.dot_dimension_numbers<[1], [1], [0], [0], [0, 0, 1, 0], [], []>} : vector<8x32xf32>, vector<16x32xf32>, vector<8x16xf32> -> vector<8x16xf32>
    %cst_156 = arith.constant dense<0xFF800000> : vector<8xf32>
    %562 = vector.multi_reduction <maximumf>, %561, %cst_156 [1] : vector<8x16xf32> to vector<8xf32>
    %563 = vector.shape_cast %562 : vector<8xf32> to vector<8x1xf32>
    %564 = vector.broadcast %563 : vector<8x1xf32> to vector<8x16xf32>
    %565 = arith.subf %561, %564 : vector<8x16xf32>
    %566 = math.exp %565 : vector<8x16xf32>
    %cst_157 = arith.constant dense<0.000000e+00> : vector<8xf32>
    %567 = vector.multi_reduction <add>, %566, %cst_157 [1] : vector<8x16xf32> to vector<8xf32>
    %568 = vector.shape_cast %567 : vector<8xf32> to vector<8x1xf32>
    %569 = tpu.reciprocal %568 {approx = true} : vector<8x1xf32> -> vector<8x1xf32>
    %570 = vector.broadcast %569 : vector<8x1xf32> to vector<8x16xf32>
    %571 = arith.mulf %566, %570 : vector<8x16xf32>
    %572 = arith.truncf %571 : vector<8x16xf32> to vector<8x16xbf16>
    %cst_158 = arith.constant dense<0.000000e+00> : vector<8x32xf32>
    %573 = tpu.matmul %572, %560, %cst_158 {dimension_numbers = #tpu.dot_dimension_numbers<[1], [0], [0], [1], [0, 0, 1, 1], [], []>} : vector<8x16xbf16>, vector<16x32xbf16>, vector<8x32xf32> -> vector<8x32xf32>
    %574 = vector.extract_strided_slice %518 {offsets = [0, 96], sizes = [8, 32], strides = [1, 1]} : vector<8x128xf32> to vector<8x32xf32>
    %575 = vector.extract_strided_slice %523 {offsets = [0, 96], sizes = [16, 32], strides = [1, 1]} : vector<16x256xf32> to vector<16x32xf32>
    %576 = vector.extract_strided_slice %525 {offsets = [0, 96], sizes = [16, 32], strides = [1, 1]} : vector<16x128xbf16> to vector<16x32xbf16>
    %cst_159 = arith.constant dense<0.000000e+00> : vector<8x16xf32>
    %577 = tpu.matmul %574, %575, %cst_159 {dimension_numbers = #tpu.dot_dimension_numbers<[1], [1], [0], [0], [0, 0, 1, 0], [], []>} : vector<8x32xf32>, vector<16x32xf32>, vector<8x16xf32> -> vector<8x16xf32>
    %cst_160 = arith.constant dense<0xFF800000> : vector<8xf32>
    %578 = vector.multi_reduction <maximumf>, %577, %cst_160 [1] : vector<8x16xf32> to vector<8xf32>
    %579 = vector.shape_cast %578 : vector<8xf32> to vector<8x1xf32>
    %580 = vector.broadcast %579 : vector<8x1xf32> to vector<8x16xf32>
    %581 = arith.subf %577, %580 : vector<8x16xf32>
    %582 = math.exp %581 : vector<8x16xf32>
    %cst_161 = arith.constant dense<0.000000e+00> : vector<8xf32>
    %583 = vector.multi_reduction <add>, %582, %cst_161 [1] : vector<8x16xf32> to vector<8xf32>
    %584 = vector.shape_cast %583 : vector<8xf32> to vector<8x1xf32>
    %585 = tpu.reciprocal %584 {approx = true} : vector<8x1xf32> -> vector<8x1xf32>
    %586 = vector.broadcast %585 : vector<8x1xf32> to vector<8x16xf32>
    %587 = arith.mulf %582, %586 : vector<8x16xf32>
    %588 = arith.truncf %587 : vector<8x16xf32> to vector<8x16xbf16>
    %cst_162 = arith.constant dense<0.000000e+00> : vector<8x32xf32>
    %589 = tpu.matmul %588, %576, %cst_162 {dimension_numbers = #tpu.dot_dimension_numbers<[1], [0], [0], [1], [0, 0, 1, 1], [], []>} : vector<8x16xbf16>, vector<16x32xbf16>, vector<8x32xf32> -> vector<8x32xf32>
    %590 = tpu.concatenate %541, %557, %573, %589 in 1 : vector<8x32xf32>, vector<8x32xf32>, vector<8x32xf32>, vector<8x32xf32> -> vector<8x128xf32>
    %591 = arith.truncf %590 : vector<8x128xf32> to vector<8x128xbf16>
    %cst_163 = arith.constant dense<0.000000e+00> : vector<8x128xf32>
    %592 = tpu.matmul %591, %507, %cst_163 {dimension_numbers = #tpu.dot_dimension_numbers<[1], [0], [0], [1], [0, 0, 1, 1], [], []>} : vector<8x128xbf16>, vector<128x128xbf16>, vector<8x128xf32> -> vector<8x128xf32>
    %593 = vector.shape_cast %509 : vector<128xf32> to vector<1x128xf32>
    %594 = vector.broadcast %593 : vector<1x128xf32> to vector<8x128xf32>
    %595 = arith.addf %592, %594 : vector<8x128xf32>
    %596 = arith.addf %376, %595 : vector<8x128xf32>
    %cst_164 = arith.constant dense<0.000000e+00> : vector<8xf32>
    %597 = vector.multi_reduction <add>, %596, %cst_164 [1] : vector<8x128xf32> to vector<8xf32>
    %598 = vector.shape_cast %597 : vector<8xf32> to vector<8x1xf32>
    %cst_165 = arith.constant 1.280000e+02 : f32
    %599 = vector.broadcast %cst_165 : f32 to vector<8x1xf32>
    %600 = arith.divf %598, %599 : vector<8x1xf32>
    %601 = vector.broadcast %600 : vector<8x1xf32> to vector<8x128xf32>
    %602 = arith.subf %596, %601 : vector<8x128xf32>
    %603 = arith.mulf %602, %602 : vector<8x128xf32>
    %cst_166 = arith.constant dense<0.000000e+00> : vector<8xf32>
    %604 = vector.multi_reduction <add>, %603, %cst_166 [1] : vector<8x128xf32> to vector<8xf32>
    %605 = vector.shape_cast %604 : vector<8xf32> to vector<8x1xf32>
    %cst_167 = arith.constant 1.280000e+02 : f32
    %606 = vector.broadcast %cst_167 : f32 to vector<8x1xf32>
    %607 = arith.divf %605, %606 : vector<8x1xf32>
    %cst_168 = arith.constant 9.99999974E-6 : f32
    %608 = vector.broadcast %cst_168 : f32 to vector<8x1xf32>
    %609 = arith.addf %607, %608 : vector<8x1xf32>
    %610 = math.rsqrt %609 : vector<8x1xf32>
    %611 = vector.broadcast %610 : vector<8x1xf32> to vector<8x128xf32>
    %612 = arith.mulf %602, %611 : vector<8x128xf32>
    %613 = vector.shape_cast %511 : vector<128xf32> to vector<1x128xf32>
    %614 = vector.broadcast %613 : vector<1x128xf32> to vector<8x128xf32>
    %615 = arith.mulf %612, %614 : vector<8x128xf32>
    %616 = vector.shape_cast %513 : vector<128xf32> to vector<1x128xf32>
    %617 = vector.broadcast %616 : vector<1x128xf32> to vector<8x128xf32>
    %618 = arith.addf %615, %617 : vector<8x128xf32>
    %c6_169 = arith.constant 6 : index
    %c0_170 = arith.constant 0 : index
    %c0_171 = arith.constant 0 : index
    %619 = vector.load %arg5[%c6_169, %c0_170, %c0_171] : memref<8x128x256xbf16, #tpu.memory_space<vmem>>, vector<1x128x256xbf16>
    %620 = vector.shape_cast %619 : vector<1x128x256xbf16> to vector<128x256xbf16>
    %621 = vector.extract_strided_slice %1 {offsets = [6, 0], sizes = [1, 256], strides = [1, 1]} : vector<8x256xf32> to vector<1x256xf32>
    %622 = vector.shape_cast %621 : vector<1x256xf32> to vector<256xf32>
    %c2_172 = arith.constant 2 : index
    %c0_173 = arith.constant 0 : index
    %c0_174 = arith.constant 0 : index
    %623 = vector.load %arg6[%c2_172, %c0_173, %c0_174] : memref<4x256x128xbf16, #tpu.memory_space<vmem>>, vector<1x256x128xbf16>
    %624 = vector.shape_cast %623 : vector<1x256x128xbf16> to vector<256x128xbf16>
    %625 = vector.extract_strided_slice %0 {offsets = [25, 0], sizes = [1, 128], strides = [1, 1]} : vector<31x128xf32> to vector<1x128xf32>
    %626 = vector.shape_cast %625 : vector<1x128xf32> to vector<128xf32>
    %627 = vector.extract_strided_slice %0 {offsets = [26, 0], sizes = [1, 128], strides = [1, 1]} : vector<31x128xf32> to vector<1x128xf32>
    %628 = vector.shape_cast %627 : vector<1x128xf32> to vector<128xf32>
    %629 = vector.extract_strided_slice %0 {offsets = [27, 0], sizes = [1, 128], strides = [1, 1]} : vector<31x128xf32> to vector<1x128xf32>
    %630 = vector.shape_cast %629 : vector<1x128xf32> to vector<128xf32>
    %631 = arith.truncf %497 : vector<16x128xf32> to vector<16x128xbf16>
    %cst_175 = arith.constant dense<0.000000e+00> : vector<16x256xf32>
    %632 = tpu.matmul %631, %620, %cst_175 {dimension_numbers = #tpu.dot_dimension_numbers<[1], [0], [0], [1], [0, 0, 1, 1], [], []>} : vector<16x128xbf16>, vector<128x256xbf16>, vector<16x256xf32> -> vector<16x256xf32>
    %633 = vector.shape_cast %622 : vector<256xf32> to vector<1x256xf32>
    %634 = vector.broadcast %633 : vector<1x256xf32> to vector<16x256xf32>
    %635 = arith.addf %632, %634 : vector<16x256xf32>
    %cst_176 = arith.constant 0.000000e+00 : f32
    %636 = vector.broadcast %cst_176 : f32 to vector<16x256xf32>
    %637 = arith.maximumf %635, %636 : vector<16x256xf32>
    %638 = arith.truncf %637 : vector<16x256xf32> to vector<16x256xbf16>
    %cst_177 = arith.constant dense<0.000000e+00> : vector<16x128xf32>
    %639 = tpu.matmul %638, %624, %cst_177 {dimension_numbers = #tpu.dot_dimension_numbers<[1], [0], [0], [1], [0, 0, 1, 1], [], []>} : vector<16x256xbf16>, vector<256x128xbf16>, vector<16x128xf32> -> vector<16x128xf32>
    %640 = vector.shape_cast %626 : vector<128xf32> to vector<1x128xf32>
    %641 = vector.broadcast %640 : vector<1x128xf32> to vector<16x128xf32>
    %642 = arith.addf %639, %641 : vector<16x128xf32>
    %643 = arith.addf %497, %642 : vector<16x128xf32>
    %cst_178 = arith.constant dense<0.000000e+00> : vector<16xf32>
    %644 = vector.multi_reduction <add>, %643, %cst_178 [1] : vector<16x128xf32> to vector<16xf32>
    %645 = vector.shape_cast %644 : vector<16xf32> to vector<16x1xf32>
    %cst_179 = arith.constant 1.280000e+02 : f32
    %646 = vector.broadcast %cst_179 : f32 to vector<16x1xf32>
    %647 = arith.divf %645, %646 : vector<16x1xf32>
    %648 = vector.broadcast %647 : vector<16x1xf32> to vector<16x128xf32>
    %649 = arith.subf %643, %648 : vector<16x128xf32>
    %650 = arith.mulf %649, %649 : vector<16x128xf32>
    %cst_180 = arith.constant dense<0.000000e+00> : vector<16xf32>
    %651 = vector.multi_reduction <add>, %650, %cst_180 [1] : vector<16x128xf32> to vector<16xf32>
    %652 = vector.shape_cast %651 : vector<16xf32> to vector<16x1xf32>
    %cst_181 = arith.constant 1.280000e+02 : f32
    %653 = vector.broadcast %cst_181 : f32 to vector<16x1xf32>
    %654 = arith.divf %652, %653 : vector<16x1xf32>
    %cst_182 = arith.constant 9.99999974E-6 : f32
    %655 = vector.broadcast %cst_182 : f32 to vector<16x1xf32>
    %656 = arith.addf %654, %655 : vector<16x1xf32>
    %657 = math.rsqrt %656 : vector<16x1xf32>
    %658 = vector.broadcast %657 : vector<16x1xf32> to vector<16x128xf32>
    %659 = arith.mulf %649, %658 : vector<16x128xf32>
    %660 = vector.shape_cast %628 : vector<128xf32> to vector<1x128xf32>
    %661 = vector.broadcast %660 : vector<1x128xf32> to vector<16x128xf32>
    %662 = arith.mulf %659, %661 : vector<16x128xf32>
    %663 = vector.shape_cast %630 : vector<128xf32> to vector<1x128xf32>
    %664 = vector.broadcast %663 : vector<1x128xf32> to vector<16x128xf32>
    %665 = arith.addf %662, %664 : vector<16x128xf32>
    %c7_183 = arith.constant 7 : index
    %c0_184 = arith.constant 0 : index
    %c0_185 = arith.constant 0 : index
    %666 = vector.load %arg5[%c7_183, %c0_184, %c0_185] : memref<8x128x256xbf16, #tpu.memory_space<vmem>>, vector<1x128x256xbf16>
    %667 = vector.shape_cast %666 : vector<1x128x256xbf16> to vector<128x256xbf16>
    %668 = vector.extract_strided_slice %1 {offsets = [7, 0], sizes = [1, 256], strides = [1, 1]} : vector<8x256xf32> to vector<1x256xf32>
    %669 = vector.shape_cast %668 : vector<1x256xf32> to vector<256xf32>
    %c3_186 = arith.constant 3 : index
    %c0_187 = arith.constant 0 : index
    %c0_188 = arith.constant 0 : index
    %670 = vector.load %arg6[%c3_186, %c0_187, %c0_188] : memref<4x256x128xbf16, #tpu.memory_space<vmem>>, vector<1x256x128xbf16>
    %671 = vector.shape_cast %670 : vector<1x256x128xbf16> to vector<256x128xbf16>
    %672 = vector.extract_strided_slice %0 {offsets = [28, 0], sizes = [1, 128], strides = [1, 1]} : vector<31x128xf32> to vector<1x128xf32>
    %673 = vector.shape_cast %672 : vector<1x128xf32> to vector<128xf32>
    %674 = vector.extract_strided_slice %0 {offsets = [29, 0], sizes = [1, 128], strides = [1, 1]} : vector<31x128xf32> to vector<1x128xf32>
    %675 = vector.shape_cast %674 : vector<1x128xf32> to vector<128xf32>
    %676 = vector.extract_strided_slice %0 {offsets = [30, 0], sizes = [1, 128], strides = [1, 1]} : vector<31x128xf32> to vector<1x128xf32>
    %677 = vector.shape_cast %676 : vector<1x128xf32> to vector<128xf32>
    %678 = arith.truncf %618 : vector<8x128xf32> to vector<8x128xbf16>
    %cst_189 = arith.constant dense<0.000000e+00> : vector<8x256xf32>
    %679 = tpu.matmul %678, %667, %cst_189 {dimension_numbers = #tpu.dot_dimension_numbers<[1], [0], [0], [1], [0, 0, 1, 1], [], []>} : vector<8x128xbf16>, vector<128x256xbf16>, vector<8x256xf32> -> vector<8x256xf32>
    %680 = vector.shape_cast %669 : vector<256xf32> to vector<1x256xf32>
    %681 = vector.broadcast %680 : vector<1x256xf32> to vector<8x256xf32>
    %682 = arith.addf %679, %681 : vector<8x256xf32>
    %cst_190 = arith.constant 0.000000e+00 : f32
    %683 = vector.broadcast %cst_190 : f32 to vector<8x256xf32>
    %684 = arith.maximumf %682, %683 : vector<8x256xf32>
    %685 = arith.truncf %684 : vector<8x256xf32> to vector<8x256xbf16>
    %cst_191 = arith.constant dense<0.000000e+00> : vector<8x128xf32>
    %686 = tpu.matmul %685, %671, %cst_191 {dimension_numbers = #tpu.dot_dimension_numbers<[1], [0], [0], [1], [0, 0, 1, 1], [], []>} : vector<8x256xbf16>, vector<256x128xbf16>, vector<8x128xf32> -> vector<8x128xf32>
    %687 = vector.shape_cast %673 : vector<128xf32> to vector<1x128xf32>
    %688 = vector.broadcast %687 : vector<1x128xf32> to vector<8x128xf32>
    %689 = arith.addf %686, %688 : vector<8x128xf32>
    %690 = arith.addf %618, %689 : vector<8x128xf32>
    %cst_192 = arith.constant dense<0.000000e+00> : vector<8xf32>
    %691 = vector.multi_reduction <add>, %690, %cst_192 [1] : vector<8x128xf32> to vector<8xf32>
    %692 = vector.shape_cast %691 : vector<8xf32> to vector<8x1xf32>
    %cst_193 = arith.constant 1.280000e+02 : f32
    %693 = vector.broadcast %cst_193 : f32 to vector<8x1xf32>
    %694 = arith.divf %692, %693 : vector<8x1xf32>
    %695 = vector.broadcast %694 : vector<8x1xf32> to vector<8x128xf32>
    %696 = arith.subf %690, %695 : vector<8x128xf32>
    %697 = arith.mulf %696, %696 : vector<8x128xf32>
    %cst_194 = arith.constant dense<0.000000e+00> : vector<8xf32>
    %698 = vector.multi_reduction <add>, %697, %cst_194 [1] : vector<8x128xf32> to vector<8xf32>
    %699 = vector.shape_cast %698 : vector<8xf32> to vector<8x1xf32>
    %cst_195 = arith.constant 1.280000e+02 : f32
    %700 = vector.broadcast %cst_195 : f32 to vector<8x1xf32>
    %701 = arith.divf %699, %700 : vector<8x1xf32>
    %cst_196 = arith.constant 9.99999974E-6 : f32
    %702 = vector.broadcast %cst_196 : f32 to vector<8x1xf32>
    %703 = arith.addf %701, %702 : vector<8x1xf32>
    %704 = math.rsqrt %703 : vector<8x1xf32>
    %705 = vector.broadcast %704 : vector<8x1xf32> to vector<8x128xf32>
    %706 = arith.mulf %696, %705 : vector<8x128xf32>
    %707 = vector.shape_cast %675 : vector<128xf32> to vector<1x128xf32>
    %708 = vector.broadcast %707 : vector<1x128xf32> to vector<8x128xf32>
    %709 = arith.mulf %706, %708 : vector<8x128xf32>
    %710 = vector.shape_cast %677 : vector<128xf32> to vector<1x128xf32>
    %711 = vector.broadcast %710 : vector<1x128xf32> to vector<8x128xf32>
    %712 = arith.addf %709, %711 : vector<8x128xf32>
    %c0_197 = arith.constant 0 : index
    %c0_198 = arith.constant 0 : index
    %c0_199 = arith.constant 0 : index
    %713 = vector.load %arg9[%c0_197, %c0_198, %c0_199] : memref<1x16x128xf32, #tpu.memory_space<vmem>>, vector<1x16x128xf32>
    %714 = vector.shape_cast %713 : vector<1x16x128xf32> to vector<16x128xf32>
    %715 = vector.shape_cast %665 : vector<16x128xf32> to vector<1x16x128xf32>
    tpu.vector_store %arg9[%c0_197, %c0_198, %c0_199], %715 {strides = array<i32>} : memref<1x16x128xf32, #tpu.memory_space<vmem>>, vector<1x16x128xf32>,
    %c0_200 = arith.constant 0 : index
    %c0_201 = arith.constant 0 : index
    %c0_202 = arith.constant 0 : index
    %716 = vector.load %arg10[%c0_200, %c0_201, %c0_202] : memref<1x8x128xf32, #tpu.memory_space<vmem>>, vector<1x8x128xf32>
    %717 = vector.shape_cast %716 : vector<1x8x128xf32> to vector<8x128xf32>
    %718 = vector.shape_cast %712 : vector<8x128xf32> to vector<1x8x128xf32>
    tpu.vector_store %arg10[%c0_200, %c0_201, %c0_202], %718 {strides = array<i32>} : memref<1x8x128xf32, #tpu.memory_space<vmem>>, vector<1x8x128xf32>,
    return
  }
  func.func @transform_0(%arg0: i32) -> (i32, i32, i32) {
    %c0_i32 = arith.constant 0 : i32
    %c0_i32_0 = arith.constant 0 : i32
    %c0_i32_1 = arith.constant 0 : i32
    return %arg0, %c0_i32, %c0_i32_0 : i32, i32, i32
  }
  func.func @transform_1(%arg0: i32) -> (i32, i32) {
    %c0_i32 = arith.constant 0 : i32
    %c0_i32_0 = arith.constant 0 : i32
    %c0_i32_1 = arith.constant 0 : i32
    return %c0_i32, %c0_i32_0 : i32, i32
  }
  func.func @transform_2(%arg0: i32) -> (i32, i32) {
    %c0_i32 = arith.constant 0 : i32
    %c0_i32_0 = arith.constant 0 : i32
    %c0_i32_1 = arith.constant 0 : i32
    return %c0_i32, %c0_i32_0 : i32, i32
  }
  func.func @transform_3(%arg0: i32) -> (i32, i32, i32) {
    %c0_i32 = arith.constant 0 : i32
    %c0_i32_0 = arith.constant 0 : i32
    %c0_i32_1 = arith.constant 0 : i32
    %c0_i32_2 = arith.constant 0 : i32
    return %c0_i32, %c0_i32_0, %c0_i32_1 : i32, i32, i32
  }
  func.func @transform_4(%arg0: i32) -> (i32, i32, i32) {
    %c0_i32 = arith.constant 0 : i32
    %c0_i32_0 = arith.constant 0 : i32
    %c0_i32_1 = arith.constant 0 : i32
    %c0_i32_2 = arith.constant 0 : i32
    return %c0_i32, %c0_i32_0, %c0_i32_1 : i32, i32, i32
  }
  func.func @transform_5(%arg0: i32) -> (i32, i32, i32) {
    %c0_i32 = arith.constant 0 : i32
    %c0_i32_0 = arith.constant 0 : i32
    %c0_i32_1 = arith.constant 0 : i32
    %c0_i32_2 = arith.constant 0 : i32
    return %c0_i32, %c0_i32_0, %c0_i32_1 : i32, i32, i32
  }
  func.func @transform_6(%arg0: i32) -> (i32, i32) {
    %c0_i32 = arith.constant 0 : i32
    %c0_i32_0 = arith.constant 0 : i32
    %c0_i32_1 = arith.constant 0 : i32
    return %c0_i32, %c0_i32_0 : i32, i32
  }
  func.func @transform_7(%arg0: i32) -> (i32, i32) {
    %c0_i32 = arith.constant 0 : i32
    %c0_i32_0 = arith.constant 0 : i32
    %c0_i32_1 = arith.constant 0 : i32
    return %c0_i32, %c0_i32_0 : i32, i32
  }
  func.func @transform_8(%arg0: i32) -> (i32, i32, i32) {
    %c0_i32 = arith.constant 0 : i32
    %c0_i32_0 = arith.constant 0 : i32
    %c0_i32_1 = arith.constant 0 : i32
    return %arg0, %c0_i32, %c0_i32_0 : i32, i32, i32
  }
  func.func @transform_9(%arg0: i32) -> (i32, i32, i32) {
    %c0_i32 = arith.constant 0 : i32
    %c0_i32_0 = arith.constant 0 : i32
    %c0_i32_1 = arith.constant 0 : i32
    return %arg0, %c0_i32, %c0_i32_0 : i32, i32, i32
  }
}

</mosaic_0001>

<llo_original>
// kernel: transformer_encoder.1
$region0: #{transformer_encoder.1}
  #allocation0 [shape = 'u32[]', space=smem, size = 0x4, offset = 0x4, fixed_abs, tag = 'smem constant byte address 0x4 - core index']
  #allocation1 [shape = 'u32[144,128]{1,0:T(1,128)}', space=vmem, size = 0x12000, scoped, tag = 'internal scratch']
  %s0 = inlined_call_operand.hbm [shape: f32[2,16,2560], index: 0, kind: input, shape index: {}]
  %s1 = inlined_call_operand.hbm [shape: f32[8,128], index: 1, kind: input, shape index: {}]
  %s2 = inlined_call_operand.hbm [shape: bf16[2560,128], index: 2, kind: input, shape index: {}]
  %s3 = inlined_call_operand.hbm [shape: bf16[8,128,128], index: 3, kind: input, shape index: {}]
  %s4 = inlined_call_operand.hbm [shape: bf16[8,128,256], index: 4, kind: input, shape index: {}]
  %s5 = inlined_call_operand.hbm [shape: bf16[4,256,128], index: 5, kind: input, shape index: {}]
  %s6 = inlined_call_operand.hbm [shape: f32[31,128], index: 6, kind: input, shape index: {}]
  %s7 = inlined_call_operand.hbm [shape: f32[8,256], index: 7, kind: input, shape index: {}]
  %s8 = inlined_call_operand.hbm [shape: f32[2,16,128], index: 8, kind: output, shape index: {0}]
  %s9 = inlined_call_operand.hbm [shape: f32[2,8,128], index: 9, kind: output, shape index: {1}]
  %10 = xla_tuple %s8, %s9
  %s11 = sld [smem:[#allocation0]]
  $region105: #{transformer_encoder.1} parent=0
    _
  %s13 = ssub.s32 1, %s11
  %s14 = scalar_select 0, %s13, %s11
  $region1: #{transformer_encoder.1} parent=0
    #allocation2 [shape = 'u8[327680]{0}', space=vmem, size = 0x50000, scoped, tag = 'input window, operand 0']
    #allocation3 [shape = 's32[2]{0}', space=sflag, size = 0x8, scoped, tag = 'scoped memory for transformer_encoder.1']
    #allocation4 [shape = 's32[2]{0}', space=sflag, size = 0x8, scoped, tag = 'scoped memory for transformer_encoder.1']
    #allocation5 [shape = 'u8[4096]{0}', space=vmem, size = 0x1000, scoped, tag = 'input window, operand 1, single buffered']
    #allocation6 [shape = 's32[1]{0}', space=sflag, size = 0x4, scoped, tag = 'scoped memory for transformer_encoder.1']
    #allocation7 [shape = 'u8[655360]{0}', space=vmem, size = 0xa0000, scoped, tag = 'input window, operand 2, single buffered']
    #allocation8 [shape = 'u8[262144]{0}', space=vmem, size = 0x40000, scoped, tag = 'input window, operand 3, single buffered']
    #allocation9 [shape = 's32[1]{0}', space=sflag, size = 0x4, scoped, tag = 'scoped memory for transformer_encoder.1']
    #allocation10 [shape = 'u8[524288]{0}', space=vmem, size = 0x80000, scoped, tag = 'input window, operand 4, single buffered']
    #allocation11 [shape = 'u8[262144]{0}', space=vmem, size = 0x40000, scoped, tag = 'input window, operand 5, single buffered']
    #allocation12 [shape = 's32[1]{0}', space=sflag, size = 0x4, scoped, tag = 'scoped memory for transformer_encoder.1']
    #allocation13 [shape = 'u8[16384]{0}', space=vmem, size = 0x4000, scoped, tag = 'input window, operand 6, single buffered']
    #allocation14 [shape = 'u8[8192]{0}', space=vmem, size = 0x2000, scoped, tag = 'input window, operand 7, single buffered']
    #allocation15 [shape = 's32[1]{0}', space=sflag, size = 0x4, scoped, tag = 'scoped memory for transformer_encoder.1']
    #allocation16 [shape = 'u8[16384]{0}', space=vmem, size = 0x4000, scoped, tag = 'output window, operand 0']
    #allocation17 [shape = 'u8[8192]{0}', space=vmem, size = 0x2000, scoped, tag = 'output window, operand 1']
    #allocation18 [shape = 's32[2]{0}', space=sflag, size = 0x8, scoped, tag = 'scoped memory for transformer_encoder.1']
    %15 = vsyncpa [#allocation3], 0
    %s16 = scalar_lea.sflag [#allocation3], 1
    %17 = vsyncpa %s16, 0
    %18 = vsyncpa [#allocation6], 0
    %19 = vsyncpa [#allocation9], 0
    %20 = vsyncpa [#allocation12], 0
    %21 = vsyncpa [#allocation15], 0
    %22 = vsyncpa [#allocation4], 0
    %s23 = scalar_lea.sflag [#allocation4], 1
    %24 = vsyncpa %s23, 0
    %25 = vsyncpa [#allocation18], 0
    %s26 = scalar_lea.sflag [#allocation18], 1
    %27 = vsyncpa %s26, 0
    loop: start=0, step=1, limit=4
    $region2: #{transformer_encoder.1} parent=1 // loop_pre_header
      _
    $region3: #{transformer_encoder.1} parent=1 // loop_header
      %s29 = sphi 0, %s33
      %p30 = scmp.ge.s32.totalorder %s29, 4
      %s39 = sphi 0, %s41
      %s42 = sphi 0, %s39
      %s43 = sphi 0, %s42
      %s59 = sphi 0, %s43
      %s63 = sphi 0, %s63
      %s65 = sphi 0, %s63
      %s66 = sphi 0, %s65
      %s80 = sphi 0, %s66
      %s84 = sphi 0, %s84
      %s86 = sphi 0, %s84
      %s87 = sphi 0, %s86
      %s101 = sphi 0, %s87
      %s105 = sphi 0, %s105
      %s107 = sphi 0, %s105
      %s108 = sphi 0, %s107
      %s122 = sphi 0, %s108
      %s126 = sphi 0, %s126
      %s128 = sphi 0, %s126
      %s129 = sphi 0, %s128
      %s143 = sphi 0, %s129
      %s147 = sphi 0, %s147
      %s149 = sphi 0, %s147
      %s150 = sphi 0, %s149
      %s164 = sphi 0, %s150
      %s168 = sphi 0, %s168
      %s170 = sphi 0, %s168
      %s171 = sphi 0, %s170
      %s185 = sphi 0, %s171
      %s189 = sphi 0, %s189
      %s191 = sphi 0, %s189
      %s192 = sphi 0, %s191
      %s206 = sphi 0, %s192
      %s212 = sphi 0, %s214
      %s215 = sphi 0, %s212
      %s216 = sphi 0, %s215
      %s232 = sphi 0, %s216
      %s238 = sphi 0, %s240
      %s241 = sphi 0, %s238
      %s242 = sphi 0, %s241
      %s258 = sphi 0, %s242
    $region4: #{transformer_encoder.1} parent=1 // loop_header_branch
      %32 = sbr.rel (%p30) target = $region8
    $region5: #{transformer_encoder.1} parent=1 // loop_body
      %s34 = ssub.s32 %s29, 1
      %s35 = ssub.s32 %s29, 2
      %s36 = sadd.s32 %s29, 1
      %s37 = ssub.s32 %s29, %s36
      %p38 = scmp.eq.s32.totalorder %s37, 0
      %s40 = sadd.s32 %s39, 1
      %s41 = scalar_select %p38, %s39, %s40
      %p44 = pneg %p38
      %p45 = scmp.eq.s32.totalorder %s29, 1
      %p46 = por %p44, %p45
      %p47 = scmp.ne.s32.totalorder %s39, %s42
      %p48 = scmp.eq.s32.totalorder %s29, 0
      %p49 = por %p47, %p48
      %p50 = scmp.ne.s32.totalorder %s39, %s42
      %p51 = scmp.eq.s32.totalorder %s34, 1
      %p52 = por %p50, %p51
      %p53 = scmp.ne.s32.totalorder %s42, %s43
      %p54 = scmp.eq.s32.totalorder %s34, 0
      %p55 = por %p53, %p54
      %p56 = scmp.ne.s32.totalorder %s42, %s43
      %p57 = scmp.eq.s32.totalorder %s35, 1
      %p58 = por %p56, %p57
      %p60 = scmp.ne.s32.totalorder %s43, %s59
      %p61 = scmp.eq.s32.totalorder %s35, 0
      %p62 = por %p60, %p61
      %s64 = sadd.s32 %s63, 1
      %p67 = scmp.eq.s32.totalorder %s29, 1
      %p68 = scmp.ne.s32.totalorder %s63, %s65
      %p69 = scmp.eq.s32.totalorder %s29, 0
      %p70 = por %p68, %p69
      %p71 = scmp.ne.s32.totalorder %s63, %s65
      %p72 = scmp.eq.s32.totalorder %s34, 1
      %p73 = por %p71, %p72
      %p74 = scmp.ne.s32.totalorder %s65, %s66
      %p75 = scmp.eq.s32.totalorder %s34, 0
      %p76 = por %p74, %p75
      %p77 = scmp.ne.s32.totalorder %s65, %s66
      %p78 = scmp.eq.s32.totalorder %s35, 1
      %p79 = por %p77, %p78
      %p81 = scmp.ne.s32.totalorder %s66, %s80
      %p82 = scmp.eq.s32.totalorder %s35, 0
      %p83 = por %p81, %p82
      %s85 = sadd.s32 %s84, 1
      %p88 = scmp.eq.s32.totalorder %s29, 1
      %p89 = scmp.ne.s32.totalorder %s84, %s86
      %p90 = scmp.eq.s32.totalorder %s29, 0
      %p91 = por %p89, %p90
      %p92 = scmp.ne.s32.totalorder %s84, %s86
      %p93 = scmp.eq.s32.totalorder %s34, 1
      %p94 = por %p92, %p93
      %p95 = scmp.ne.s32.totalorder %s86, %s87
      %p96 = scmp.eq.s32.totalorder %s34, 0
      %p97 = por %p95, %p96
      %p98 = scmp.ne.s32.totalorder %s86, %s87
      %p99 = scmp.eq.s32.totalorder %s35, 1
      %p100 = por %p98, %p99
      %p102 = scmp.ne.s32.totalorder %s87, %s101
      %p103 = scmp.eq.s32.totalorder %s35, 0
      %p104 = por %p102, %p103
      %s106 = sadd.s32 %s105, 1
      %p109 = scmp.eq.s32.totalorder %s29, 1
      %p110 = scmp.ne.s32.totalorder %s105, %s107
      %p111 = scmp.eq.s32.totalorder %s29, 0
      %p112 = por %p110, %p111
      %p113 = scmp.ne.s32.totalorder %s105, %s107
      %p114 = scmp.eq.s32.totalorder %s34, 1
      %p115 = por %p113, %p114
      %p116 = scmp.ne.s32.totalorder %s107, %s108
      %p117 = scmp.eq.s32.totalorder %s34, 0
      %p118 = por %p116, %p117
      %p119 = scmp.ne.s32.totalorder %s107, %s108
      %p120 = scmp.eq.s32.totalorder %s35, 1
      %p121 = por %p119, %p120
      %p123 = scmp.ne.s32.totalorder %s108, %s122
      %p124 = scmp.eq.s32.totalorder %s35, 0
      %p125 = por %p123, %p124
      %s127 = sadd.s32 %s126, 1
      %p130 = scmp.eq.s32.totalorder %s29, 1
      %p131 = scmp.ne.s32.totalorder %s126, %s128
      %p132 = scmp.eq.s32.totalorder %s29, 0
      %p133 = por %p131, %p132
      %p134 = scmp.ne.s32.totalorder %s126, %s128
      %p135 = scmp.eq.s32.totalorder %s34, 1
      %p136 = por %p134, %p135
      %p137 = scmp.ne.s32.totalorder %s128, %s129
      %p138 = scmp.eq.s32.totalorder %s34, 0
      %p139 = por %p137, %p138
      %p140 = scmp.ne.s32.totalorder %s128, %s129
      %p141 = scmp.eq.s32.totalorder %s35, 1
      %p142 = por %p140, %p141
      %p144 = scmp.ne.s32.totalorder %s129, %s143
      %p145 = scmp.eq.s32.totalorder %s35, 0
      %p146 = por %p144, %p145
      %s148 = sadd.s32 %s147, 1
      %p151 = scmp.eq.s32.totalorder %s29, 1
      %p152 = scmp.ne.s32.totalorder %s147, %s149
      %p153 = scmp.eq.s32.totalorder %s29, 0
      %p154 = por %p152, %p153
      %p155 = scmp.ne.s32.totalorder %s147, %s149
      %p156 = scmp.eq.s32.totalorder %s34, 1
      %p157 = por %p155, %p156
      %p158 = scmp.ne.s32.totalorder %s149, %s150
      %p159 = scmp.eq.s32.totalorder %s34, 0
      %p160 = por %p158, %p159
      %p161 = scmp.ne.s32.totalorder %s149, %s150
      %p162 = scmp.eq.s32.totalorder %s35, 1
      %p163 = por %p161, %p162
      %p165 = scmp.ne.s32.totalorder %s150, %s164
      %p166 = scmp.eq.s32.totalorder %s35, 0
      %p167 = por %p165, %p166
      %s169 = sadd.s32 %s168, 1
      %p172 = scmp.eq.s32.totalorder %s29, 1
      %p173 = scmp.ne.s32.totalorder %s168, %s170
      %p174 = scmp.eq.s32.totalorder %s29, 0
      %p175 = por %p173, %p174
      %p176 = scmp.ne.s32.totalorder %s168, %s170
      %p177 = scmp.eq.s32.totalorder %s34, 1
      %p178 = por %p176, %p177
      %p179 = scmp.ne.s32.totalorder %s170, %s171
      %p180 = scmp.eq.s32.totalorder %s34, 0
      %p181 = por %p179, %p180
      %p182 = scmp.ne.s32.totalorder %s170, %s171
      %p183 = scmp.eq.s32.totalorder %s35, 1
      %p184 = por %p182, %p183
      %p186 = scmp.ne.s32.totalorder %s171, %s185
      %p187 = scmp.eq.s32.totalorder %s35, 0
      %p188 = por %p186, %p187
      %s190 = sadd.s32 %s189, 1
      %p193 = scmp.eq.s32.totalorder %s29, 1
      %p194 = scmp.ne.s32.totalorder %s189, %s191
      %p195 = scmp.eq.s32.totalorder %s29, 0
      %p196 = por %p194, %p195
      %p197 = scmp.ne.s32.totalorder %s189, %s191
      %p198 = scmp.eq.s32.totalorder %s34, 1
      %p199 = por %p197, %p198
      %p200 = scmp.ne.s32.totalorder %s191, %s192
      %p201 = scmp.eq.s32.totalorder %s34, 0
      %p202 = por %p200, %p201
      %p203 = scmp.ne.s32.totalorder %s191, %s192
      %p204 = scmp.eq.s32.totalorder %s35, 1
      %p205 = por %p203, %p204
      %p207 = scmp.ne.s32.totalorder %s192, %s206
      %p208 = scmp.eq.s32.totalorder %s35, 0
      %p209 = por %p207, %p208
      %s210 = ssub.s32 %s29, %s36
      %p211 = scmp.eq.s32.totalorder %s210, 0
      %s213 = sadd.s32 %s212, 1
      %s214 = scalar_select %p211, %s212, %s213
      %p217 = pneg %p211
      %p218 = scmp.eq.s32.totalorder %s29, 1
      %p219 = por %p217, %p218
      %p220 = scmp.ne.s32.totalorder %s212, %s215
      %p221 = scmp.eq.s32.totalorder %s29, 0
      %p222 = por %p220, %p221
      %p223 = scmp.ne.s32.totalorder %s212, %s215
      %p224 = scmp.eq.s32.totalorder %s34, 1
      %p225 = por %p223, %p224
      %p226 = scmp.ne.s32.totalorder %s215, %s216
      %p227 = scmp.eq.s32.totalorder %s34, 0
      %p228 = por %p226, %p227
      %p229 = scmp.ne.s32.totalorder %s215, %s216
      %p230 = scmp.eq.s32.totalorder %s35, 1
      %p231 = por %p229, %p230
      %p233 = scmp.ne.s32.totalorder %s216, %s232
      %p234 = scmp.eq.s32.totalorder %s35, 0
      %p235 = por %p233, %p234
      %s236 = ssub.s32 %s29, %s36
      %p237 = scmp.eq.s32.totalorder %s236, 0
      %s239 = sadd.s32 %s238, 1
      %s240 = scalar_select %p237, %s238, %s239
      %p243 = pneg %p237
      %p244 = scmp.eq.s32.totalorder %s29, 1
      %p245 = por %p243, %p244
      %p246 = scmp.ne.s32.totalorder %s238, %s241
      %p247 = scmp.eq.s32.totalorder %s29, 0
      %p248 = por %p246, %p247
      %p249 = scmp.ne.s32.totalorder %s238, %s241
      %p250 = scmp.eq.s32.totalorder %s34, 1
      %p251 = por %p249, %p250
      %p252 = scmp.ne.s32.totalorder %s241, %s242
      %p253 = scmp.eq.s32.totalorder %s34, 0
      %p254 = por %p252, %p253
      %p255 = scmp.ne.s32.totalorder %s241, %s242
      %p256 = scmp.eq.s32.totalorder %s35, 1
      %p257 = por %p255, %p256
      %p259 = scmp.ne.s32.totalorder %s242, %s258
      %p260 = scmp.eq.s32.totalorder %s35, 0
      %p261 = por %p259, %p260
      %p262 = scmp.le.s32.totalorder 1, %s29
      %p263 = scmp.lt.s32.totalorder %s29, 3
      %p264 = pnand %p262, %p263
      %p265 = pneg %p264
      // Predicated region
      $region9: #{transformer_encoder.1} parent=5 // pred_check
        _
      $region10: #{transformer_encoder.1} parent=5 // pred_check_branch
        %267 = sbr.rel (%p264) target = $region12
      $region11: #{transformer_encoder.1} parent=5 // pred_region
        %s268 = ssub.s32 %s29, 1
        // Predicated region
        $region13: #{transformer_encoder.1} parent=11 // pred_check
          %p269 = pneg %p76
        $region14: #{transformer_encoder.1} parent=11 // pred_check_branch
          %271 = sbr.rel (%p269) target = $region16
        $region15: #{transformer_encoder.1} parent=11 // pred_region
          %s273 = ssub.s32 128, 128
          %274 = vsyncadd [#allocation6], %s273
          %s276 = sshll.u32 [#allocation5], 4
          %s277 = int_to_ptr.vmem [resolvable:$true] %s276
          %279 = dma.hbm_to_vmem [thread:$0]  %s1, 128, %s277, [#allocation6]
        $region16: #{transformer_encoder.1} parent=11 // pred_fallthru
          _
        // Predicated region
        $region17: #{transformer_encoder.1} parent=11 // pred_check
          %p280 = pneg %p97
        $region18: #{transformer_encoder.1} parent=11 // pred_check_branch
          %282 = sbr.rel (%p280) target = $region20
        $region19: #{transformer_encoder.1} parent=11 // pred_region
          %s284 = ssub.s32 20480, 20480
          %285 = vsyncadd [#allocation6], %s284
          %s286 = sshll.u32 [#allocation7], 4
          %s287 = int_to_ptr.vmem [resolvable:$true] %s286
          %292 = dma.hbm_to_vmem [thread:$0]  %s2, 20480, %s287, [#allocation6], 64, 64, 4
        $region20: #{transformer_encoder.1} parent=11 // pred_fallthru
          _
        // Predicated region
        $region21: #{transformer_encoder.1} parent=11 // pred_check
          %p293 = pneg %p118
        $region22: #{transformer_encoder.1} parent=11 // pred_check_branch
          %295 = sbr.rel (%p293) target = $region24
        $region23: #{transformer_encoder.1} parent=11 // pred_region
          %s297 = ssub.s32 8192, 8192
          %298 = vsyncadd [#allocation9], %s297
          %s299 = sshll.u32 [#allocation8], 4
          %s300 = int_to_ptr.vmem [resolvable:$true] %s299
          %305 = dma.hbm_to_vmem [thread:$0]  %s3, 8192, %s300, [#allocation9], 64, 64, 4
        $region24: #{transformer_encoder.1} parent=11 // pred_fallthru
          _
        // Predicated region
        $region25: #{transformer_encoder.1} parent=11 // pred_check
          %p306 = pneg %p139
        $region26: #{transformer_encoder.1} parent=11 // pred_check_branch
          %308 = sbr.rel (%p306) target = $region28
        $region27: #{transformer_encoder.1} parent=11 // pred_region
          %s310 = ssub.s32 16384, 16384
          %311 = vsyncadd [#allocation9], %s310
          %s312 = sshll.u32 [#allocation10], 4
          %s313 = int_to_ptr.vmem [resolvable:$true] %s312
          %318 = dma.hbm_to_vmem [thread:$0]  %s4, 16384, %s313, [#allocation9], 128, 128, 8
        $region28: #{transformer_encoder.1} parent=11 // pred_fallthru
          _
        // Predicated region
        $region29: #{transformer_encoder.1} parent=11 // pred_check
          %p319 = pneg %p160
        $region30: #{transformer_encoder.1} parent=11 // pred_check_branch
          %321 = sbr.rel (%p319) target = $region32
        $region31: #{transformer_encoder.1} parent=11 // pred_region
          %s323 = ssub.s32 8192, 8192
          %324 = vsyncadd [#allocation12], %s323
          %s325 = sshll.u32 [#allocation11], 4
          %s326 = int_to_ptr.vmem [resolvable:$true] %s325
          %331 = dma.hbm_to_vmem [thread:$0]  %s5, 8192, %s326, [#allocation12], 64, 64, 4
        $region32: #{transformer_encoder.1} parent=11 // pred_fallthru
          _
        // Predicated region
        $region33: #{transformer_encoder.1} parent=11 // pred_check
          %p332 = pneg %p181
        $region34: #{transformer_encoder.1} parent=11 // pred_check_branch
          %334 = sbr.rel (%p332) target = $region36
        $region35: #{transformer_encoder.1} parent=11 // pred_region
          %s336 = ssub.s32 512, 512
          %337 = vsyncadd [#allocation12], %s336
          %s338 = sshll.u32 [#allocation13], 4
          %s339 = int_to_ptr.vmem [resolvable:$true] %s338
          %344 = dma.hbm_to_vmem [thread:$0]  %s6, 512, %s339, [#allocation12], 128, 128, 8
        $region36: #{transformer_encoder.1} parent=11 // pred_fallthru
          _
        // Predicated region
        $region37: #{transformer_encoder.1} parent=11 // pred_check
          %p345 = pneg %p202
        $region38: #{transformer_encoder.1} parent=11 // pred_check_branch
          %347 = sbr.rel (%p345) target = $region40
        $region39: #{transformer_encoder.1} parent=11 // pred_region
          %s349 = ssub.s32 256, 256
          %350 = vsyncadd [#allocation15], %s349
          %s352 = sshll.u32 [#allocation14], 4
          %s353 = int_to_ptr.vmem [resolvable:$true] %s352
          %355 = dma.hbm_to_vmem [thread:$0]  %s7, 256, %s353, [#allocation15]
        $region40: #{transformer_encoder.1} parent=11 // pred_fallthru
          _
      $region12: #{transformer_encoder.1} parent=5 // pred_fallthru
        _
      %p356 = scmp.lt.s32.totalorder %s29, 2
      // Predicated region
      $region41: #{transformer_encoder.1} parent=5 // pred_check
        %p357 = pneg %p356
      $region42: #{transformer_encoder.1} parent=5 // pred_check_branch
        %359 = sbr.rel (%p357) target = $region44
      $region43: #{transformer_encoder.1} parent=5 // pred_region
        // Predicated region
        $region45: #{transformer_encoder.1} parent=43 // pred_check
          %p360 = pneg %p49
        $region46: #{transformer_encoder.1} parent=43 // pred_check_branch
          %362 = sbr.rel (%p360) target = $region48
        $region47: #{transformer_encoder.1} parent=43 // pred_region
          %s363 = sand.u32 %s39, 1
          %s364 = scalar_lea.sflag [#allocation3], %s363
          %s365 = sand.u32 %s39, 1
          %s366 = smul.addr %s365, 320
          %s367 = scalar_lea.vmem [#allocation2], %s366
          %s369 = ssub.s32 5120, 5120
          %370 = vsyncadd %s364, %s369
          %s371 = smul.addr %s29, 40
          %s372 = smul.addr %s371, 128
          %s373 = scalar_lea.hbm %s0, %s372
          %s374 = sshll.u32 %s367, 4
          %s375 = int_to_ptr.vmem [resolvable:$true] %s374
          %380 = dma.hbm_to_vmem [thread:$0]  %s373, 5120, %s375, %s364, 2560, 2560, 160
        $region48: #{transformer_encoder.1} parent=43 // pred_fallthru
          _
      $region44: #{transformer_encoder.1} parent=5 // pred_fallthru
        _
      %p381 = scmp.le.s32.totalorder 1, %s29
      %p382 = scmp.lt.s32.totalorder %s29, 3
      %p383 = pnand %p381, %p382
      %p384 = pneg %p383
      // Predicated region
      $region49: #{transformer_encoder.1} parent=5 // pred_check
        _
      $region50: #{transformer_encoder.1} parent=5 // pred_check_branch
        %386 = sbr.rel (%p383) target = $region52
      $region51: #{transformer_encoder.1} parent=5 // pred_region
        %s387 = ssub.s32 %s29, 1
        %s388 = sand.u32 %s42, 1
        %s389 = scalar_lea.sflag [#allocation3], %s388
        %s390 = sand.u32 %s42, 1
        %s391 = smul.addr %s390, 320
        %s392 = scalar_lea.vmem [#allocation2], %s391
        // Predicated region
        $region53: #{transformer_encoder.1} parent=51 // pred_check
          %p393 = pneg %p55
        $region54: #{transformer_encoder.1} parent=51 // pred_check_branch
          %395 = sbr.rel (%p393) target = $region56
        $region55: #{transformer_encoder.1} parent=51 // pred_region
          %396 = dma.done %s389, 5120
        $region56: #{transformer_encoder.1} parent=51 // pred_fallthru
          _
        // Predicated region
        $region57: #{transformer_encoder.1} parent=51 // pred_check
          %p397 = pneg %p76
        $region58: #{transformer_encoder.1} parent=51 // pred_check_branch
          %399 = sbr.rel (%p397) target = $region60
        $region59: #{transformer_encoder.1} parent=51 // pred_region
          %400 = dma.done [#allocation6], 128
        $region60: #{transformer_encoder.1} parent=51 // pred_fallthru
          _
        // Predicated region
        $region61: #{transformer_encoder.1} parent=51 // pred_check
          %p401 = pneg %p97
        $region62: #{transformer_encoder.1} parent=51 // pred_check_branch
          %403 = sbr.rel (%p401) target = $region64
        $region63: #{transformer_encoder.1} parent=51 // pred_region
          %404 = dma.done [#allocation6], 20480
        $region64: #{transformer_encoder.1} parent=51 // pred_fallthru
          _
        // Predicated region
        $region65: #{transformer_encoder.1} parent=51 // pred_check
          %p405 = pneg %p118
        $region66: #{transformer_encoder.1} parent=51 // pred_check_branch
          %407 = sbr.rel (%p405) target = $region68
        $region67: #{transformer_encoder.1} parent=51 // pred_region
          %408 = dma.done [#allocation9], 8192
        $region68: #{transformer_encoder.1} parent=51 // pred_fallthru
          _
        // Predicated region
        $region69: #{transformer_encoder.1} parent=51 // pred_check
          %p409 = pneg %p139
        $region70: #{transformer_encoder.1} parent=51 // pred_check_branch
          %411 = sbr.rel (%p409) target = $region72
        $region71: #{transformer_encoder.1} parent=51 // pred_region
          %412 = dma.done [#allocation9], 16384
        $region72: #{transformer_encoder.1} parent=51 // pred_fallthru
          _
        // Predicated region
        $region73: #{transformer_encoder.1} parent=51 // pred_check
          %p413 = pneg %p160
        $region74: #{transformer_encoder.1} parent=51 // pred_check_branch
          %415 = sbr.rel (%p413) target = $region76
        $region75: #{transformer_encoder.1} parent=51 // pred_region
          %416 = dma.done [#allocation12], 8192
        $region76: #{transformer_encoder.1} parent=51 // pred_fallthru
          _
        // Predicated region
        $region77: #{transformer_encoder.1} parent=51 // pred_check
          %p417 = pneg %p181
        $region78: #{transformer_encoder.1} parent=51 // pred_check_branch
          %419 = sbr.rel (%p417) target = $region80
        $region79: #{transformer_encoder.1} parent=51 // pred_region
          %420 = dma.done [#allocation12], 512
        $region80: #{transformer_encoder.1} parent=51 // pred_fallthru
          _
        // Predicated region
        $region81: #{transformer_encoder.1} parent=51 // pred_check
          %p421 = pneg %p202
        $region82: #{transformer_encoder.1} parent=51 // pred_check_branch
          %423 = sbr.rel (%p421) target = $region84
        $region83: #{transformer_encoder.1} parent=51 // pred_region
          %424 = dma.done [#allocation15], 256
        $region84: #{transformer_encoder.1} parent=51 // pred_fallthru
          _
        %s425 = sand.u32 %s42, 1
        %s426 = scalar_lea.sflag [#allocation3], %s425
        %s427 = sand.u32 %s42, 1
        %s428 = smul.addr %s427, 320
        %s429 = scalar_lea.vmem [#allocation2], %s428
        %p430 = pneg %p55
        %p431 = pneg %p52
        %p432 = pneg %p76
        %p433 = pneg %p73
        %p434 = pneg %p97
        %p435 = pneg %p94
        %p436 = pneg %p118
        %p437 = pneg %p115
        %p438 = pneg %p139
        %p439 = pneg %p136
        %p440 = pneg %p160
        %p441 = pneg %p157
        %p442 = pneg %p181
        %p443 = pneg %p178
        %p444 = pneg %p202
        %p445 = pneg %p199
        %p446 = pneg %p228
        %p447 = pneg %p225
        %s448 = sand.u32 %s215, 1
        %s449 = scalar_lea.sflag [#allocation4], %s448
        %s450 = sand.u32 %s215, 1
        %s451 = smul.addr %s450, 16
        %s452 = scalar_lea.vmem [#allocation16], %s451
        %p453 = pneg %p254
        %p454 = pneg %p251
        %s455 = sand.u32 %s241, 1
        %s456 = scalar_lea.sflag [#allocation18], %s455
        %s457 = sand.u32 %s241, 1
        %s458 = smul.addr %s457, 8
        %s459 = scalar_lea.vmem [#allocation17], %s458
        %v461 = vld [vmem:[#allocation13] sm:$0xff]
        %v462 = vld [vmem:[#allocation13 + $0x8] sm:$0xff]
        %v463 = vld [vmem:[#allocation13 + $0x10] sm:$0xff]
        %v464 = vld [vmem:[#allocation13 + $0x18] sm:$0x7f]
        %v465 = vld [vmem:[#allocation14] sm:$0xff]
        %v466 = vld [vmem:[#allocation14 + $0x8] sm:$0xff]
        %v467 = vld [vmem:[%s392] sm:$0xff]
        %v468 = vld [vmem:[%s392 + $0x8] sm:$0xff]
        %v469 = vld [vmem:[%s392 + $0x10] sm:$0xff]
        %v470 = vld [vmem:[%s392 + $0x18] sm:$0xff]
        %v471 = vld [vmem:[%s392 + $0x20] sm:$0xff]
        %v472 = vld [vmem:[%s392 + $0x28] sm:$0xff]
        %v473 = vld [vmem:[%s392 + $0x30] sm:$0xff]
        %v474 = vld [vmem:[%s392 + $0x38] sm:$0xff]
        %v475 = vld [vmem:[%s392 + $0x40] sm:$0xff]
        %v476 = vld [vmem:[%s392 + $0x48] sm:$0xff]
        %v477 = vld [vmem:[%s392 + $0x50] sm:$0xff]
        %v478 = vld [vmem:[%s392 + $0x58] sm:$0xff]
        %v479 = vld [vmem:[%s392 + $0x60] sm:$0xff]
        %v480 = vld [vmem:[%s392 + $0x68] sm:$0xff]
        %v481 = vld [vmem:[%s392 + $0x70] sm:$0xff]
        %v482 = vld [vmem:[%s392 + $0x78] sm:$0xff]
        %v483 = vld [vmem:[%s392 + $0x80] sm:$0xff]
        %v484 = vld [vmem:[%s392 + $0x88] sm:$0xff]
        %v485 = vld [vmem:[%s392 + $0x90] sm:$0xff]
        %v486 = vld [vmem:[%s392 + $0x98] sm:$0xff]
        %v487 = vld [vmem:[%s392 + $0xa0] sm:$0xff]
        %v488 = vld [vmem:[%s392 + $0xa8] sm:$0xff]
        %v489 = vld [vmem:[%s392 + $0xb0] sm:$0xff]
        %v490 = vld [vmem:[%s392 + $0xb8] sm:$0xff]
        %v491 = vld [vmem:[%s392 + $0xc0] sm:$0xff]
        %v492 = vld [vmem:[%s392 + $0xc8] sm:$0xff]
        %v493 = vld [vmem:[%s392 + $0xd0] sm:$0xff]
        %v494 = vld [vmem:[%s392 + $0xd8] sm:$0xff]
        %v495 = vld [vmem:[%s392 + $0xe0] sm:$0xff]
        %v496 = vld [vmem:[%s392 + $0xe8] sm:$0xff]
        %v497 = vld [vmem:[%s392 + $0xf0] sm:$0xff]
        %v498 = vld [vmem:[%s392 + $0xf8] sm:$0xff]
        %v499 = vld [vmem:[%s392 + $0x100] sm:$0xff]
        %v500 = vld [vmem:[%s392 + $0x108] sm:$0xff]
        %v501 = vld [vmem:[%s392 + $0x110] sm:$0xff]
        %v502 = vld [vmem:[%s392 + $0x118] sm:$0xff]
        %v503 = vld [vmem:[%s392 + $0x120] sm:$0xff]
        %v504 = vld [vmem:[%s392 + $0x128] sm:$0xff]
        %v505 = vld [vmem:[%s392 + $0x130] sm:$0xff]
        %v506 = vld [vmem:[%s392 + $0x138] sm:$0xff]
        %v507 = vpack.c.bf16 %v487, %v467
        %v508 = vpack.c.bf16 %v488, %v468
        %v509 = vpack.c.bf16 %v489, %v469
        %v510 = vpack.c.bf16 %v490, %v470
        %v511 = vpack.c.bf16 %v491, %v471
        %v512 = vpack.c.bf16 %v492, %v472
        %v513 = vpack.c.bf16 %v493, %v473
        %v514 = vpack.c.bf16 %v494, %v474
        %v515 = vpack.c.bf16 %v495, %v475
        %v516 = vpack.c.bf16 %v496, %v476
        %v517 = vpack.c.bf16 %v497, %v477
        %v518 = vpack.c.bf16 %v498, %v478
        %v519 = vpack.c.bf16 %v499, %v479
        %v520 = vpack.c.bf16 %v500, %v480
        %v521 = vpack.c.bf16 %v501, %v481
        %v522 = vpack.c.bf16 %v502, %v482
        %v523 = vpack.c.bf16 %v503, %v483
        %v524 = vpack.c.bf16 %v504, %v484
        %v525 = vpack.c.bf16 %v505, %v485
        %v526 = vpack.c.bf16 %v506, %v486
        %v527 = vld [vmem:[#allocation7] sm:$0xf]
        %v528 = vld [vmem:[#allocation7 + $0x4] sm:$0xf]
        %v529 = vld [vmem:[#allocation7 + $0x8] sm:$0xf]
        %v530 = vld [vmem:[#allocation7 + $0xc] sm:$0xf]
        %v531 = vld [vmem:[#allocation7 + $0x10] sm:$0xf]
        %v532 = vld [vmem:[#allocation7 + $0x14] sm:$0xf]
        %v533 = vld [vmem:[#allocation7 + $0x18] sm:$0xf]
        %v534 = vld [vmem:[#allocation7 + $0x1c] sm:$0xf]
        %v535 = vld [vmem:[#allocation7 + $0x20] sm:$0xf]
        %v536 = vld [vmem:[#allocation7 + $0x24] sm:$0xf]
        %v537 = vld [vmem:[#allocation7 + $0x28] sm:$0xf]
        %v538 = vld [vmem:[#allocation7 + $0x2c] sm:$0xf]
        %v539 = vld [vmem:[#allocation7 + $0x30] sm:$0xf]
        %v540 = vld [vmem:[#allocation7 + $0x34] sm:$0xf]
        %v541 = vld [vmem:[#allocation7 + $0x38] sm:$0xf]
        %v542 = vld [vmem:[#allocation7 + $0x3c] sm:$0xf]
        %v543 = vld [vmem:[#allocation7 + $0x40] sm:$0xf]
        %v544 = vld [vmem:[#allocation7 + $0x44] sm:$0xf]
        %v545 = vld [vmem:[#allocation7 + $0x48] sm:$0xf]
        %v546 = vld [vmem:[#allocation7 + $0x4c] sm:$0xf]
        %v547 = vld [vmem:[#allocation7 + $0x50] sm:$0xf]
        %v548 = vld [vmem:[#allocation7 + $0x54] sm:$0xf]
        %v549 = vld [vmem:[#allocation7 + $0x58] sm:$0xf]
        %v550 = vld [vmem:[#allocation7 + $0x5c] sm:$0xf]
        %v551 = vld [vmem:[#allocation7 + $0x60] sm:$0xf]
        %v552 = vld [vmem:[#allocation7 + $0x64] sm:$0xf]
        %v553 = vld [vmem:[#allocation7 + $0x68] sm:$0xf]
        %v554 = vld [vmem:[#allocation7 + $0x6c] sm:$0xf]
        %v555 = vld [vmem:[#allocation7 + $0x70] sm:$0xf]
        %v556 = vld [vmem:[#allocation7 + $0x74] sm:$0xf]
        %v557 = vld [vmem:[#allocation7 + $0x78] sm:$0xf]
        %v558 = vld [vmem:[#allocation7 + $0x7c] sm:$0xf]
        %v559 = vld [vmem:[#allocation7 + $0x80] sm:$0xf]
        %v560 = vld [vmem:[#allocation7 + $0x84] sm:$0xf]
        %v561 = vld [vmem:[#allocation7 + $0x88] sm:$0xf]
        %v562 = vld [vmem:[#allocation7 + $0x8c] sm:$0xf]
        %v563 = vld [vmem:[#allocation7 + $0x90] sm:$0xf]
        %v564 = vld [vmem:[#allocation7 + $0x94] sm:$0xf]
        %v565 = vld [vmem:[#allocation7 + $0x98] sm:$0xf]
        %v566 = vld [vmem:[#allocation7 + $0x9c] sm:$0xf]
        %v567 = vld [vmem:[#allocation7 + $0xa0] sm:$0xf]
        %v568 = vld [vmem:[#allocation7 + $0xa4] sm:$0xf]
        %v569 = vld [vmem:[#allocation7 + $0xa8] sm:$0xf]
        %v570 = vld [vmem:[#allocation7 + $0xac] sm:$0xf]
        %v571 = vld [vmem:[#allocation7 + $0xb0] sm:$0xf]
        %v572 = vld [vmem:[#allocation7 + $0xb4] sm:$0xf]
        %v573 = vld [vmem:[#allocation7 + $0xb8] sm:$0xf]
        %v574 = vld [vmem:[#allocation7 + $0xbc] sm:$0xf]
        %v575 = vld [vmem:[#allocation7 + $0xc0] sm:$0xf]
        %v576 = vld [vmem:[#allocation7 + $0xc4] sm:$0xf]
        %v577 = vld [vmem:[#allocation7 + $0xc8] sm:$0xf]
        %v578 = vld [vmem:[#allocation7 + $0xcc] sm:$0xf]
        %v579 = vld [vmem:[#allocation7 + $0xd0] sm:$0xf]
        %v580 = vld [vmem:[#allocation7 + $0xd4] sm:$0xf]
        %v581 = vld [vmem:[#allocation7 + $0xd8] sm:$0xf]
        %v582 = vld [vmem:[#allocation7 + $0xdc] sm:$0xf]
        %v583 = vld [vmem:[#allocation7 + $0xe0] sm:$0xf]
        %v584 = vld [vmem:[#allocation7 + $0xe4] sm:$0xf]
        %v585 = vld [vmem:[#allocation7 + $0xe8] sm:$0xf]
        %v586 = vld [vmem:[#allocation7 + $0xec] sm:$0xf]
        %v587 = vld [vmem:[#allocation7 + $0xf0] sm:$0xf]
        %v588 = vld [vmem:[#allocation7 + $0xf4] sm:$0xf]
        %v589 = vld [vmem:[#allocation7 + $0xf8] sm:$0xf]
        %v590 = vld [vmem:[#allocation7 + $0xfc] sm:$0xf]
        %v591 = vld [vmem:[#allocation7 + $0x100] sm:$0xf]
        %v592 = vld [vmem:[#allocation7 + $0x104] sm:$0xf]
        %v593 = vld [vmem:[#allocation7 + $0x108] sm:$0xf]
        %v594 = vld [vmem:[#allocation7 + $0x10c] sm:$0xf]
        %v595 = vld [vmem:[#allocation7 + $0x110] sm:$0xf]
        %v596 = vld [vmem:[#allocation7 + $0x114] sm:$0xf]
        %v597 = vld [vmem:[#allocation7 + $0x118] sm:$0xf]
        %v598 = vld [vmem:[#allocation7 + $0x11c] sm:$0xf]
        %v599 = vld [vmem:[#allocation7 + $0x120] sm:$0xf]
        %v600 = vld [vmem:[#allocation7 + $0x124] sm:$0xf]
        %v601 = vld [vmem:[#allocation7 + $0x128] sm:$0xf]
        %v602 = vld [vmem:[#allocation7 + $0x12c] sm:$0xf]
        %v603 = vld [vmem:[#allocation7 + $0x130] sm:$0xf]
        %v604 = vld [vmem:[#allocation7 + $0x134] sm:$0xf]
        %v605 = vld [vmem:[#allocation7 + $0x138] sm:$0xf]
        %v606 = vld [vmem:[#allocation7 + $0x13c] sm:$0xf]
        %v607 = vld [vmem:[#allocation7 + $0x140] sm:$0xf]
        %v608 = vld [vmem:[#allocation7 + $0x144] sm:$0xf]
        %v609 = vld [vmem:[#allocation7 + $0x148] sm:$0xf]
        %v610 = vld [vmem:[#allocation7 + $0x14c] sm:$0xf]
        %v611 = vld [vmem:[#allocation7 + $0x150] sm:$0xf]
        %v612 = vld [vmem:[#allocation7 + $0x154] sm:$0xf]
        %v613 = vld [vmem:[#allocation7 + $0x158] sm:$0xf]
        %v614 = vld [vmem:[#allocation7 + $0x15c] sm:$0xf]
        %v615 = vld [vmem:[#allocation7 + $0x160] sm:$0xf]
        %v616 = vld [vmem:[#allocation7 + $0x164] sm:$0xf]
        %v617 = vld [vmem:[#allocation7 + $0x168] sm:$0xf]
        %v618 = vld [vmem:[#allocation7 + $0x16c] sm:$0xf]
        %v619 = vld [vmem:[#allocation7 + $0x170] sm:$0xf]
        %v620 = vld [vmem:[#allocation7 + $0x174] sm:$0xf]
        %v621 = vld [vmem:[#allocation7 + $0x178] sm:$0xf]
        %v622 = vld [vmem:[#allocation7 + $0x17c] sm:$0xf]
        %v623 = vld [vmem:[#allocation7 + $0x180] sm:$0xf]
        %v624 = vld [vmem:[#allocation7 + $0x184] sm:$0xf]
        %v625 = vld [vmem:[#allocation7 + $0x188] sm:$0xf]
        %v626 = vld [vmem:[#allocation7 + $0x18c] sm:$0xf]
        %v627 = vld [vmem:[#allocation7 + $0x190] sm:$0xf]
        %v628 = vld [vmem:[#allocation7 + $0x194] sm:$0xf]
        %v629 = vld [vmem:[#allocation7 + $0x198] sm:$0xf]
        %v630 = vld [vmem:[#allocation7 + $0x19c] sm:$0xf]
        %v631 = vld [vmem:[#allocation7 + $0x1a0] sm:$0xf]
        %v632 = vld [vmem:[#allocation7 + $0x1a4] sm:$0xf]
        %v633 = vld [vmem:[#allocation7 + $0x1a8] sm:$0xf]
        %v634 = vld [vmem:[#allocation7 + $0x1ac] sm:$0xf]
        %v635 = vld [vmem:[#allocation7 + $0x1b0] sm:$0xf]
        %v636 = vld [vmem:[#allocation7 + $0x1b4] sm:$0xf]
        %v637 = vld [vmem:[#allocation7 + $0x1b8] sm:$0xf]
        %v638 = vld [vmem:[#allocation7 + $0x1bc] sm:$0xf]
        %v639 = vld [vmem:[#allocation7 + $0x1c0] sm:$0xf]
        %v640 = vld [vmem:[#allocation7 + $0x1c4] sm:$0xf]
        %v641 = vld [vmem:[#allocation7 + $0x1c8] sm:$0xf]
        %v642 = vld [vmem:[#allocation7 + $0x1cc] sm:$0xf]
        %v643 = vld [vmem:[#allocation7 + $0x1d0] sm:$0xf]
        %v644 = vld [vmem:[#allocation7 + $0x1d4] sm:$0xf]
        %v645 = vld [vmem:[#allocation7 + $0x1d8] sm:$0xf]
        %v646 = vld [vmem:[#allocation7 + $0x1dc] sm:$0xf]
        %v647 = vld [vmem:[#allocation7 + $0x1e0] sm:$0xf]
        %v648 = vld [vmem:[#allocation7 + $0x1e4] sm:$0xf]
        %v649 = vld [vmem:[#allocation7 + $0x1e8] sm:$0xf]
        %v650 = vld [vmem:[#allocation7 + $0x1ec] sm:$0xf]
        %v651 = vld [vmem:[#allocation7 + $0x1f0] sm:$0xf]
        %v652 = vld [vmem:[#allocation7 + $0x1f4] sm:$0xf]
        %v653 = vld [vmem:[#allocation7 + $0x1f8] sm:$0xf]
        %v654 = vld [vmem:[#allocation7 + $0x1fc] sm:$0xf]
        %v655 = vld [vmem:[#allocation7 + $0x200] sm:$0xf]
        %v656 = vld [vmem:[#allocation7 + $0x204] sm:$0xf]
        %v657 = vld [vmem:[#allocation7 + $0x208] sm:$0xf]
        %v658 = vld [vmem:[#allocation7 + $0x20c] sm:$0xf]
        %v659 = vld [vmem:[#allocation7 + $0x210] sm:$0xf]
        %v660 = vld [vmem:[#allocation7 + $0x214] sm:$0xf]
        %v661 = vld [vmem:[#allocation7 + $0x218] sm:$0xf]
        %v662 = vld [vmem:[#allocation7 + $0x21c] sm:$0xf]
        %v663 = vld [vmem:[#allocation7 + $0x220] sm:$0xf]
        %v664 = vld [vmem:[#allocation7 + $0x224] sm:$0xf]
        %v665 = vld [vmem:[#allocation7 + $0x228] sm:$0xf]
        %v666 = vld [vmem:[#allocation7 + $0x22c] sm:$0xf]
        %v667 = vld [vmem:[#allocation7 + $0x230] sm:$0xf]
        %v668 = vld [vmem:[#allocation7 + $0x234] sm:$0xf]
        %v669 = vld [vmem:[#allocation7 + $0x238] sm:$0xf]
        %v670 = vld [vmem:[#allocation7 + $0x23c] sm:$0xf]
        %v671 = vld [vmem:[#allocation7 + $0x240] sm:$0xf]
        %v672 = vld [vmem:[#allocation7 + $0x244] sm:$0xf]
        %v673 = vld [vmem:[#allocation7 + $0x248] sm:$0xf]
        %v674 = vld [vmem:[#allocation7 + $0x24c] sm:$0xf]
        %v675 = vld [vmem:[#allocation7 + $0x250] sm:$0xf]
        %v676 = vld [vmem:[#allocation7 + $0x254] sm:$0xf]
        %v677 = vld [vmem:[#allocation7 + $0x258] sm:$0xf]
        %v678 = vld [vmem:[#allocation7 + $0x25c] sm:$0xf]
        %v679 = vld [vmem:[#allocation7 + $0x260] sm:$0xf]
        %v680 = vld [vmem:[#allocation7 + $0x264] sm:$0xf]
        %v681 = vld [vmem:[#allocation7 + $0x268] sm:$0xf]
        %v682 = vld [vmem:[#allocation7 + $0x26c] sm:$0xf]
        %v683 = vld [vmem:[#allocation7 + $0x270] sm:$0xf]
        %v684 = vld [vmem:[#allocation7 + $0x274] sm:$0xf]
        %v685 = vld [vmem:[#allocation7 + $0x278] sm:$0xf]
        %v686 = vld [vmem:[#allocation7 + $0x27c] sm:$0xf]
        %v687 = vld [vmem:[#allocation7 + $0x280] sm:$0xf]
        %v688 = vld [vmem:[#allocation7 + $0x284] sm:$0xf]
        %v689 = vld [vmem:[#allocation7 + $0x288] sm:$0xf]
        %v690 = vld [vmem:[#allocation7 + $0x28c] sm:$0xf]
        %v691 = vld [vmem:[#allocation7 + $0x290] sm:$0xf]
        %v692 = vld [vmem:[#allocation7 + $0x294] sm:$0xf]
        %v693 = vld [vmem:[#allocation7 + $0x298] sm:$0xf]
        %v694 = vld [vmem:[#allocation7 + $0x29c] sm:$0xf]
        %v695 = vld [vmem:[#allocation7 + $0x2a0] sm:$0xf]
        %v696 = vld [vmem:[#allocation7 + $0x2a4] sm:$0xf]
        %v697 = vld [vmem:[#allocation7 + $0x2a8] sm:$0xf]
        %v698 = vld [vmem:[#allocation7 + $0x2ac] sm:$0xf]
        %v699 = vld [vmem:[#allocation7 + $0x2b0] sm:$0xf]
        %v700 = vld [vmem:[#allocation7 + $0x2b4] sm:$0xf]
        %v701 = vld [vmem:[#allocation7 + $0x2b8] sm:$0xf]
        %v702 = vld [vmem:[#allocation7 + $0x2bc] sm:$0xf]
        %v703 = vld [vmem:[#allocation7 + $0x2c0] sm:$0xf]
        %v704 = vld [vmem:[#allocation7 + $0x2c4] sm:$0xf]
        %v705 = vld [vmem:[#allocation7 + $0x2c8] sm:$0xf]
        %v706 = vld [vmem:[#allocation7 + $0x2cc] sm:$0xf]
        %v707 = vld [vmem:[#allocation7 + $0x2d0] sm:$0xf]
        %v708 = vld [vmem:[#allocation7 + $0x2d4] sm:$0xf]
        %v709 = vld [vmem:[#allocation7 + $0x2d8] sm:$0xf]
        %v710 = vld [vmem:[#allocation7 + $0x2dc] sm:$0xf]
        %v711 = vld [vmem:[#allocation7 + $0x2e0] sm:$0xf]
        %v712 = vld [vmem:[#allocation7 + $0x2e4] sm:$0xf]
        %v713 = vld [vmem:[#allocation7 + $0x2e8] sm:$0xf]
        %v714 = vld [vmem:[#allocation7 + $0x2ec] sm:$0xf]
        %v715 = vld [vmem:[#allocation7 + $0x2f0] sm:$0xf]
        %v716 = vld [vmem:[#allocation7 + $0x2f4] sm:$0xf]
        %v717 = vld [vmem:[#allocation7 + $0x2f8] sm:$0xf]
        %v718 = vld [vmem:[#allocation7 + $0x2fc] sm:$0xf]
        %v719 = vld [vmem:[#allocation7 + $0x300] sm:$0xf]
        %v720 = vld [vmem:[#allocation7 + $0x304] sm:$0xf]
        %v721 = vld [vmem:[#allocation7 + $0x308] sm:$0xf]
        %v722 = vld [vmem:[#allocation7 + $0x30c] sm:$0xf]
        %v723 = vld [vmem:[#allocation7 + $0x310] sm:$0xf]
        %v724 = vld [vmem:[#allocation7 + $0x314] sm:$0xf]
        %v725 = vld [vmem:[#allocation7 + $0x318] sm:$0xf]
        %v726 = vld [vmem:[#allocation7 + $0x31c] sm:$0xf]
        %v727 = vld [vmem:[#allocation7 + $0x320] sm:$0xf]
        %v728 = vld [vmem:[#allocation7 + $0x324] sm:$0xf]
        %v729 = vld [vmem:[#allocation7 + $0x328] sm:$0xf]
        %v730 = vld [vmem:[#allocation7 + $0x32c] sm:$0xf]
        %v731 = vld [vmem:[#allocation7 + $0x330] sm:$0xf]
        %v732 = vld [vmem:[#allocation7 + $0x334] sm:$0xf]
        %v733 = vld [vmem:[#allocation7 + $0x338] sm:$0xf]
        %v734 = vld [vmem:[#allocation7 + $0x33c] sm:$0xf]
        %v735 = vld [vmem:[#allocation7 + $0x340] sm:$0xf]
        %v736 = vld [vmem:[#allocation7 + $0x344] sm:$0xf]
        %v737 = vld [vmem:[#allocation7 + $0x348] sm:$0xf]
        %v738 = vld [vmem:[#allocation7 + $0x34c] sm:$0xf]
        %v739 = vld [vmem:[#allocation7 + $0x350] sm:$0xf]
        %v740 = vld [vmem:[#allocation7 + $0x354] sm:$0xf]
        %v741 = vld [vmem:[#allocation7 + $0x358] sm:$0xf]
        %v742 = vld [vmem:[#allocation7 + $0x35c] sm:$0xf]
        %v743 = vld [vmem:[#allocation7 + $0x360] sm:$0xf]
        %v744 = vld [vmem:[#allocation7 + $0x364] sm:$0xf]
        %v745 = vld [vmem:[#allocation7 + $0x368] sm:$0xf]
        %v746 = vld [vmem:[#allocation7 + $0x36c] sm:$0xf]
        %v747 = vld [vmem:[#allocation7 + $0x370] sm:$0xf]
        %v748 = vld [vmem:[#allocation7 + $0x374] sm:$0xf]
        %v749 = vld [vmem:[#allocation7 + $0x378] sm:$0xf]
        %v750 = vld [vmem:[#allocation7 + $0x37c] sm:$0xf]
        %v751 = vld [vmem:[#allocation7 + $0x380] sm:$0xf]
        %v752 = vld [vmem:[#allocation7 + $0x384] sm:$0xf]
        %v753 = vld [vmem:[#allocation7 + $0x388] sm:$0xf]
        %v754 = vld [vmem:[#allocation7 + $0x38c] sm:$0xf]
        %v755 = vld [vmem:[#allocation7 + $0x390] sm:$0xf]
        %v756 = vld [vmem:[#allocation7 + $0x394] sm:$0xf]
        %v757 = vld [vmem:[#allocation7 + $0x398] sm:$0xf]
        %v758 = vld [vmem:[#allocation7 + $0x39c] sm:$0xf]
        %v759 = vld [vmem:[#allocation7 + $0x3a0] sm:$0xf]
        %v760 = vld [vmem:[#allocation7 + $0x3a4] sm:$0xf]
        %v761 = vld [vmem:[#allocation7 + $0x3a8] sm:$0xf]
        %v762 = vld [vmem:[#allocation7 + $0x3ac] sm:$0xf]
        %v763 = vld [vmem:[#allocation7 + $0x3b0] sm:$0xf]
        %v764 = vld [vmem:[#allocation7 + $0x3b4] sm:$0xf]
        %v765 = vld [vmem:[#allocation7 + $0x3b8] sm:$0xf]
        %v766 = vld [vmem:[#allocation7 + $0x3bc] sm:$0xf]
        %v767 = vld [vmem:[#allocation7 + $0x3c0] sm:$0xf]
        %v768 = vld [vmem:[#allocation7 + $0x3c4] sm:$0xf]
        %v769 = vld [vmem:[#allocation7 + $0x3c8] sm:$0xf]
        %v770 = vld [vmem:[#allocation7 + $0x3cc] sm:$0xf]
        %v771 = vld [vmem:[#allocation7 + $0x3d0] sm:$0xf]
        %v772 = vld [vmem:[#allocation7 + $0x3d4] sm:$0xf]
        %v773 = vld [vmem:[#allocation7 + $0x3d8] sm:$0xf]
        %v774 = vld [vmem:[#allocation7 + $0x3dc] sm:$0xf]
        %v775 = vld [vmem:[#allocation7 + $0x3e0] sm:$0xf]
        %v776 = vld [vmem:[#allocation7 + $0x3e4] sm:$0xf]
        %v777 = vld [vmem:[#allocation7 + $0x3e8] sm:$0xf]
        %v778 = vld [vmem:[#allocation7 + $0x3ec] sm:$0xf]
        %v779 = vld [vmem:[#allocation7 + $0x3f0] sm:$0xf]
        %v780 = vld [vmem:[#allocation7 + $0x3f4] sm:$0xf]
        %v781 = vld [vmem:[#allocation7 + $0x3f8] sm:$0xf]
        %v782 = vld [vmem:[#allocation7 + $0x3fc] sm:$0xf]
        %v783 = vld [vmem:[#allocation7 + $0x400] sm:$0xf]
        %v784 = vld [vmem:[#allocation7 + $0x404] sm:$0xf]
        %v785 = vld [vmem:[#allocation7 + $0x408] sm:$0xf]
        %v786 = vld [vmem:[#allocation7 + $0x40c] sm:$0xf]
        %v787 = vld [vmem:[#allocation7 + $0x410] sm:$0xf]
        %v788 = vld [vmem:[#allocation7 + $0x414] sm:$0xf]
        %v789 = vld [vmem:[#allocation7 + $0x418] sm:$0xf]
        %v790 = vld [vmem:[#allocation7 + $0x41c] sm:$0xf]
        %v791 = vld [vmem:[#allocation7 + $0x420] sm:$0xf]
        %v792 = vld [vmem:[#allocation7 + $0x424] sm:$0xf]
        %v793 = vld [vmem:[#allocation7 + $0x428] sm:$0xf]
        %v794 = vld [vmem:[#allocation7 + $0x42c] sm:$0xf]
        %v795 = vld [vmem:[#allocation7 + $0x430] sm:$0xf]
        %v796 = vld [vmem:[#allocation7 + $0x434] sm:$0xf]
        %v797 = vld [vmem:[#allocation7 + $0x438] sm:$0xf]
        %v798 = vld [vmem:[#allocation7 + $0x43c] sm:$0xf]
        %v799 = vld [vmem:[#allocation7 + $0x440] sm:$0xf]
        %v800 = vld [vmem:[#allocation7 + $0x444] sm:$0xf]
        %v801 = vld [vmem:[#allocation7 + $0x448] sm:$0xf]
        %v802 = vld [vmem:[#allocation7 + $0x44c] sm:$0xf]
        %v803 = vld [vmem:[#allocation7 + $0x450] sm:$0xf]
        %v804 = vld [vmem:[#allocation7 + $0x454] sm:$0xf]
        %v805 = vld [vmem:[#allocation7 + $0x458] sm:$0xf]
        %v806 = vld [vmem:[#allocation7 + $0x45c] sm:$0xf]
        %v807 = vld [vmem:[#allocation7 + $0x460] sm:$0xf]
        %v808 = vld [vmem:[#allocation7 + $0x464] sm:$0xf]
        %v809 = vld [vmem:[#allocation7 + $0x468] sm:$0xf]
        %v810 = vld [vmem:[#allocation7 + $0x46c] sm:$0xf]
        %v811 = vld [vmem:[#allocation7 + $0x470] sm:$0xf]
        %v812 = vld [vmem:[#allocation7 + $0x474] sm:$0xf]
        %v813 = vld [vmem:[#allocation7 + $0x478] sm:$0xf]
        %v814 = vld [vmem:[#allocation7 + $0x47c] sm:$0xf]
        %v815 = vld [vmem:[#allocation7 + $0x480] sm:$0xf]
        %v816 = vld [vmem:[#allocation7 + $0x484] sm:$0xf]
        %v817 = vld [vmem:[#allocation7 + $0x488] sm:$0xf]
        %v818 = vld [vmem:[#allocation7 + $0x48c] sm:$0xf]
        %v819 = vld [vmem:[#allocation7 + $0x490] sm:$0xf]
        %v820 = vld [vmem:[#allocation7 + $0x494] sm:$0xf]
        %v821 = vld [vmem:[#allocation7 + $0x498] sm:$0xf]
        %v822 = vld [vmem:[#allocation7 + $0x49c] sm:$0xf]
        %v823 = vld [vmem:[#allocation7 + $0x4a0] sm:$0xf]
        %v824 = vld [vmem:[#allocation7 + $0x4a4] sm:$0xf]
        %v825 = vld [vmem:[#allocation7 + $0x4a8] sm:$0xf]
        %v826 = vld [vmem:[#allocation7 + $0x4ac] sm:$0xf]
        %v827 = vld [vmem:[#allocation7 + $0x4b0] sm:$0xf]
        %v828 = vld [vmem:[#allocation7 + $0x4b4] sm:$0xf]
        %v829 = vld [vmem:[#allocation7 + $0x4b8] sm:$0xf]
        %v830 = vld [vmem:[#allocation7 + $0x4bc] sm:$0xf]
        %v831 = vld [vmem:[#allocation7 + $0x4c0] sm:$0xf]
        %v832 = vld [vmem:[#allocation7 + $0x4c4] sm:$0xf]
        %v833 = vld [vmem:[#allocation7 + $0x4c8] sm:$0xf]
        %v834 = vld [vmem:[#allocation7 + $0x4cc] sm:$0xf]
        %v835 = vld [vmem:[#allocation7 + $0x4d0] sm:$0xf]
        %v836 = vld [vmem:[#allocation7 + $0x4d4] sm:$0xf]
        %v837 = vld [vmem:[#allocation7 + $0x4d8] sm:$0xf]
        %v838 = vld [vmem:[#allocation7 + $0x4dc] sm:$0xf]
        %v839 = vld [vmem:[#allocation7 + $0x4e0] sm:$0xf]
        %v840 = vld [vmem:[#allocation7 + $0x4e4] sm:$0xf]
        %v841 = vld [vmem:[#allocation7 + $0x4e8] sm:$0xf]
        %v842 = vld [vmem:[#allocation7 + $0x4ec] sm:$0xf]
        %v843 = vld [vmem:[#allocation7 + $0x4f0] sm:$0xf]
        %v844 = vld [vmem:[#allocation7 + $0x4f4] sm:$0xf]
        %v845 = vld [vmem:[#allocation7 + $0x4f8] sm:$0xf]
        %v846 = vld [vmem:[#allocation7 + $0x4fc] sm:$0xf]
        %v847 = vlaneseq
        %v848 = vshrl.u32 %v847, 7
        %v849 = vsub.s32 0, %v848
        %v850 = vrot.slane %v461, %v849
        %v1171 = vunpack.c.l.b16 %v527
        %v1172 = vunpack.c.l.b16 %v528
        %v1173 = vunpack.c.l.b16 %v529
        %v1174 = vunpack.c.l.b16 %v530
        %v1175 = vunpack.c.l.b16 %v531
        %v1176 = vunpack.c.l.b16 %v532
        %v1177 = vunpack.c.l.b16 %v533
        %v1178 = vunpack.c.l.b16 %v534
        %v1179 = vunpack.c.l.b16 %v535
        %v1180 = vunpack.c.l.b16 %v536
        %v1181 = vunpack.c.l.b16 %v537
        %v1182 = vunpack.c.l.b16 %v538
        %v1183 = vunpack.c.l.b16 %v539
        %v1184 = vunpack.c.l.b16 %v540
        %v1185 = vunpack.c.l.b16 %v541
        %v1186 = vunpack.c.l.b16 %v542
        %v1187 = vunpack.c.l.b16 %v543
        %v1188 = vunpack.c.l.b16 %v544
        %v1189 = vunpack.c.l.b16 %v545
        %v1190 = vunpack.c.l.b16 %v546
        %v1191 = vunpack.c.l.b16 %v547
        %v1192 = vunpack.c.l.b16 %v548
        %v1193 = vunpack.c.l.b16 %v549
        %v1194 = vunpack.c.l.b16 %v550
        %v1195 = vunpack.c.l.b16 %v551
        %v1196 = vunpack.c.l.b16 %v552
        %v1197 = vunpack.c.l.b16 %v553
        %v1198 = vunpack.c.l.b16 %v554
        %v1199 = vunpack.c.l.b16 %v555
        %v1200 = vunpack.c.l.b16 %v556
        %v1201 = vunpack.c.l.b16 %v557
        %v1202 = vunpack.c.l.b16 %v558
        %v1203 = vunpack.c.l.b16 %v559
        %v1204 = vunpack.c.l.b16 %v560
        %v1205 = vunpack.c.l.b16 %v561
        %v1206 = vunpack.c.l.b16 %v562
        %v1207 = vunpack.c.l.b16 %v563
        %v1208 = vunpack.c.l.b16 %v564
        %v1209 = vunpack.c.l.b16 %v565
        %v1210 = vunpack.c.l.b16 %v566
        %v1211 = vunpack.c.l.b16 %v567
        %v1212 = vunpack.c.l.b16 %v568
        %v1213 = vunpack.c.l.b16 %v569
        %v1214 = vunpack.c.l.b16 %v570
        %v1215 = vunpack.c.l.b16 %v571
        %v1216 = vunpack.c.l.b16 %v572
        %v1217 = vunpack.c.l.b16 %v573
        %v1218 = vunpack.c.l.b16 %v574
        %v1219 = vunpack.c.l.b16 %v575
        %v1220 = vunpack.c.l.b16 %v576
        %v1221 = vunpack.c.l.b16 %v577
        %v1222 = vunpack.c.l.b16 %v578
        %v1223 = vunpack.c.l.b16 %v579
        %v1224 = vunpack.c.l.b16 %v580
        %v1225 = vunpack.c.l.b16 %v581
        %v1226 = vunpack.c.l.b16 %v582
        %v1227 = vunpack.c.l.b16 %v583
        %v1228 = vunpack.c.l.b16 %v584
        %v1229 = vunpack.c.l.b16 %v585
        %v1230 = vunpack.c.l.b16 %v586
        %v1231 = vunpack.c.l.b16 %v587
        %v1232 = vunpack.c.l.b16 %v588
        %v1233 = vunpack.c.l.b16 %v589
        %v1234 = vunpack.c.l.b16 %v590
        %v1235 = vunpack.c.l.b16 %v591
        %v1236 = vunpack.c.l.b16 %v592
        %v1237 = vunpack.c.l.b16 %v593
        %v1238 = vunpack.c.l.b16 %v594
        %v1239 = vunpack.c.l.b16 %v595
        %v1240 = vunpack.c.l.b16 %v596
        %v1241 = vunpack.c.l.b16 %v597
        %v1242 = vunpack.c.l.b16 %v598
        %v1243 = vunpack.c.l.b16 %v599
        %v1244 = vunpack.c.l.b16 %v600
        %v1245 = vunpack.c.l.b16 %v601
        %v1246 = vunpack.c.l.b16 %v602
        %v1247 = vunpack.c.l.b16 %v603
        %v1248 = vunpack.c.l.b16 %v604
        %v1249 = vunpack.c.l.b16 %v605
        %v1250 = vunpack.c.l.b16 %v606
        %v1251 = vunpack.c.l.b16 %v607
        %v1252 = vunpack.c.l.b16 %v608
        %v1253 = vunpack.c.l.b16 %v609
        %v1254 = vunpack.c.l.b16 %v610
        %v1255 = vunpack.c.l.b16 %v611
        %v1256 = vunpack.c.l.b16 %v612
        %v1257 = vunpack.c.l.b16 %v613
        %v1258 = vunpack.c.l.b16 %v614
        %v1259 = vunpack.c.l.b16 %v615
        %v1260 = vunpack.c.l.b16 %v616
        %v1261 = vunpack.c.l.b16 %v617
        %v1262 = vunpack.c.l.b16 %v618
        %v1263 = vunpack.c.l.b16 %v619
        %v1264 = vunpack.c.l.b16 %v620
        %v1265 = vunpack.c.l.b16 %v621
        %v1266 = vunpack.c.l.b16 %v622
        %v1267 = vunpack.c.l.b16 %v623
        %v1268 = vunpack.c.l.b16 %v624
        %v1269 = vunpack.c.l.b16 %v625
        %v1270 = vunpack.c.l.b16 %v626
        %v1271 = vunpack.c.l.b16 %v627
        %v1272 = vunpack.c.l.b16 %v628
        %v1273 = vunpack.c.l.b16 %v629
        %v1274 = vunpack.c.l.b16 %v630
        %v1275 = vunpack.c.l.b16 %v631
        %v1276 = vunpack.c.l.b16 %v632
        %v1277 = vunpack.c.l.b16 %v633
        %v1278 = vunpack.c.l.b16 %v634
        %v1279 = vunpack.c.l.b16 %v635
        %v1280 = vunpack.c.l.b16 %v636
        %v1281 = vunpack.c.l.b16 %v637
        %v1282 = vunpack.c.l.b16 %v638
        %v1283 = vunpack.c.l.b16 %v639
        %v1284 = vunpack.c.l.b16 %v640
        %v1285 = vunpack.c.l.b16 %v641
        %v1286 = vunpack.c.l.b16 %v642
        %v1287 = vunpack.c.l.b16 %v643
        %v1288 = vunpack.c.l.b16 %v644
        %v1289 = vunpack.c.l.b16 %v645
        %v1290 = vunpack.c.l.b16 %v646
        %v1291 = vunpack.c.l.b16 %v647
        %v1292 = vunpack.c.l.b16 %v648
        %v1293 = vunpack.c.l.b16 %v649
        %v1294 = vunpack.c.l.b16 %v650
        %v1295 = vunpack.c.l.b16 %v651
        %v1296 = vunpack.c.l.b16 %v652
        %v1297 = vunpack.c.l.b16 %v653
        %v1298 = vunpack.c.l.b16 %v654
        %v1299 = vunpack.c.l.b16 %v655
        %v1300 = vunpack.c.l.b16 %v656
        %v1301 = vunpack.c.l.b16 %v657
        %v1302 = vunpack.c.l.b16 %v658
        %v1303 = vunpack.c.l.b16 %v659
        %v1304 = vunpack.c.l.b16 %v660
        %v1305 = vunpack.c.l.b16 %v661
        %v1306 = vunpack.c.l.b16 %v662
        %v1307 = vunpack.c.l.b16 %v663
        %v1308 = vunpack.c.l.b16 %v664
        %v1309 = vunpack.c.l.b16 %v665
        %v1310 = vunpack.c.l.b16 %v666
        %v1311 = vunpack.c.l.b16 %v667
        %v1312 = vunpack.c.l.b16 %v668
        %v1313 = vunpack.c.l.b16 %v669
        %v1314 = vunpack.c.l.b16 %v670
        %v1315 = vunpack.c.l.b16 %v671
        %v1316 = vunpack.c.l.b16 %v672
        %v1317 = vunpack.c.l.b16 %v673
        %v1318 = vunpack.c.l.b16 %v674
        %v1319 = vunpack.c.l.b16 %v675
        %v1320 = vunpack.c.l.b16 %v676
        %v1321 = vunpack.c.l.b16 %v677
        %v1322 = vunpack.c.l.b16 %v678
        %v1323 = vunpack.c.l.b16 %v679
        %v1324 = vunpack.c.l.b16 %v680
        %v1325 = vunpack.c.l.b16 %v681
        %v1326 = vunpack.c.l.b16 %v682
        %v1327 = vunpack.c.l.b16 %v683
        %v1328 = vunpack.c.l.b16 %v684
        %v1329 = vunpack.c.l.b16 %v685
        %v1330 = vunpack.c.l.b16 %v686
        %v1331 = vunpack.c.l.b16 %v687
        %v1332 = vunpack.c.l.b16 %v688
        %v1333 = vunpack.c.l.b16 %v689
        %v1334 = vunpack.c.l.b16 %v690
        %v1335 = vunpack.c.l.b16 %v691
        %v1336 = vunpack.c.l.b16 %v692
        %v1337 = vunpack.c.l.b16 %v693
        %v1338 = vunpack.c.l.b16 %v694
        %v1339 = vunpack.c.l.b16 %v695
        %v1340 = vunpack.c.l.b16 %v696
        %v1341 = vunpack.c.l.b16 %v697
        %v1342 = vunpack.c.l.b16 %v698
        %v1343 = vunpack.c.l.b16 %v699
        %v1344 = vunpack.c.l.b16 %v700
        %v1345 = vunpack.c.l.b16 %v701
        %v1346 = vunpack.c.l.b16 %v702
        %v1347 = vunpack.c.l.b16 %v703
        %v1348 = vunpack.c.l.b16 %v704
        %v1349 = vunpack.c.l.b16 %v705
        %v1350 = vunpack.c.l.b16 %v706
        %v1351 = vunpack.c.l.b16 %v707
        %v1352 = vunpack.c.l.b16 %v708
        %v1353 = vunpack.c.l.b16 %v709
        %v1354 = vunpack.c.l.b16 %v710
        %v1355 = vunpack.c.l.b16 %v711
        %v1356 = vunpack.c.l.b16 %v712
        %v1357 = vunpack.c.l.b16 %v713
        %v1358 = vunpack.c.l.b16 %v714
        %v1359 = vunpack.c.l.b16 %v715
        %v1360 = vunpack.c.l.b16 %v716
        %v1361 = vunpack.c.l.b16 %v717
        %v1362 = vunpack.c.l.b16 %v718
        %v1363 = vunpack.c.l.b16 %v719
        %v1364 = vunpack.c.l.b16 %v720
        %v1365 = vunpack.c.l.b16 %v721
        %v1366 = vunpack.c.l.b16 %v722
        %v1367 = vunpack.c.l.b16 %v723
        %v1368 = vunpack.c.l.b16 %v724
        %v1369 = vunpack.c.l.b16 %v725
        %v1370 = vunpack.c.l.b16 %v726
        %v1371 = vunpack.c.l.b16 %v727
        %v1372 = vunpack.c.l.b16 %v728
        %v1373 = vunpack.c.l.b16 %v729
        %v1374 = vunpack.c.l.b16 %v730
        %v1375 = vunpack.c.l.b16 %v731
        %v1376 = vunpack.c.l.b16 %v732
        %v1377 = vunpack.c.l.b16 %v733
        %v1378 = vunpack.c.l.b16 %v734
        %v1379 = vunpack.c.l.b16 %v735
        %v1380 = vunpack.c.l.b16 %v736
        %v1381 = vunpack.c.l.b16 %v737
        %v1382 = vunpack.c.l.b16 %v738
        %v1383 = vunpack.c.l.b16 %v739
        %v1384 = vunpack.c.l.b16 %v740
        %v1385 = vunpack.c.l.b16 %v741
        %v1386 = vunpack.c.l.b16 %v742
        %v1387 = vunpack.c.l.b16 %v743
        %v1388 = vunpack.c.l.b16 %v744
        %v1389 = vunpack.c.l.b16 %v745
        %v1390 = vunpack.c.l.b16 %v746
        %v1391 = vunpack.c.l.b16 %v747
        %v1392 = vunpack.c.l.b16 %v748
        %v1393 = vunpack.c.l.b16 %v749
        %v1394 = vunpack.c.l.b16 %v750
        %v1395 = vunpack.c.l.b16 %v751
        %v1396 = vunpack.c.l.b16 %v752
        %v1397 = vunpack.c.l.b16 %v753
        %v1398 = vunpack.c.l.b16 %v754
        %v1399 = vunpack.c.l.b16 %v755
        %v1400 = vunpack.c.l.b16 %v756
        %v1401 = vunpack.c.l.b16 %v757
        %v1402 = vunpack.c.l.b16 %v758
        %v1403 = vunpack.c.l.b16 %v759
        %v1404 = vunpack.c.l.b16 %v760
        %v1405 = vunpack.c.l.b16 %v761
        %v1406 = vunpack.c.l.b16 %v762
        %v1407 = vunpack.c.l.b16 %v763
        %v1408 = vunpack.c.l.b16 %v764
        %v1409 = vunpack.c.l.b16 %v765
        %v1410 = vunpack.c.l.b16 %v766
        %v1411 = vunpack.c.l.b16 %v767
        %v1412 = vunpack.c.l.b16 %v768
        %v1413 = vunpack.c.l.b16 %v769
        %v1414 = vunpack.c.l.b16 %v770
        %v1415 = vunpack.c.l.b16 %v771
        %v1416 = vunpack.c.l.b16 %v772
        %v1417 = vunpack.c.l.b16 %v773
        %v1418 = vunpack.c.l.b16 %v774
        %v1419 = vunpack.c.l.b16 %v775
        %v1420 = vunpack.c.l.b16 %v776
        %v1421 = vunpack.c.l.b16 %v777
        %v1422 = vunpack.c.l.b16 %v778
        %v1423 = vunpack.c.l.b16 %v779
        %v1424 = vunpack.c.l.b16 %v780
        %v1425 = vunpack.c.l.b16 %v781
        %v1426 = vunpack.c.l.b16 %v782
        %v1427 = vunpack.c.l.b16 %v783
        %v1428 = vunpack.c.l.b16 %v784
        %v1429 = vunpack.c.l.b16 %v785
        %v1430 = vunpack.c.l.b16 %v786
        %v1431 = vunpack.c.l.b16 %v787
        %v1432 = vunpack.c.l.b16 %v788
        %v1433 = vunpack.c.l.b16 %v789
        %v1434 = vunpack.c.l.b16 %v790
        %v1435 = vunpack.c.l.b16 %v791
        %v1436 = vunpack.c.l.b16 %v792
        %v1437 = vunpack.c.l.b16 %v793
        %v1438 = vunpack.c.l.b16 %v794
        %v1439 = vunpack.c.l.b16 %v795
        %v1440 = vunpack.c.l.b16 %v796
        %v1441 = vunpack.c.l.b16 %v797
        %v1442 = vunpack.c.l.b16 %v798
        %v1443 = vunpack.c.l.b16 %v799
        %v1444 = vunpack.c.l.b16 %v800
        %v1445 = vunpack.c.l.b16 %v801
        %v1446 = vunpack.c.l.b16 %v802
        %v1447 = vunpack.c.l.b16 %v803
        %v1448 = vunpack.c.l.b16 %v804
        %v1449 = vunpack.c.l.b16 %v805
        %v1450 = vunpack.c.l.b16 %v806
        %v1451 = vunpack.c.l.b16 %v807
        %v1452 = vunpack.c.l.b16 %v808
        %v1453 = vunpack.c.l.b16 %v809
        %v1454 = vunpack.c.l.b16 %v810
        %v1455 = vunpack.c.l.b16 %v811
        %v1456 = vunpack.c.l.b16 %v812
        %v1457 = vunpack.c.l.b16 %v813
        %v1458 = vunpack.c.l.b16 %v814
        %v1459 = vunpack.c.l.b16 %v815
        %v1460 = vunpack.c.l.b16 %v816
        %v1461 = vunpack.c.l.b16 %v817
        %v1462 = vunpack.c.l.b16 %v818
        %v1463 = vunpack.c.l.b16 %v819
        %v1464 = vunpack.c.l.b16 %v820
        %v1465 = vunpack.c.l.b16 %v821
        %v1466 = vunpack.c.l.b16 %v822
        %v1467 = vunpack.c.l.b16 %v823
        %v1468 = vunpack.c.l.b16 %v824
        %v1469 = vunpack.c.l.b16 %v825
        %v1470 = vunpack.c.l.b16 %v826
        %v1471 = vunpack.c.l.b16 %v827
        %v1472 = vunpack.c.l.b16 %v828
        %v1473 = vunpack.c.l.b16 %v829
        %v1474 = vunpack.c.l.b16 %v830
        %v1475 = vunpack.c.l.b16 %v831
        %v1476 = vunpack.c.l.b16 %v832
        %v1477 = vunpack.c.l.b16 %v833
        %v1478 = vunpack.c.l.b16 %v834
        %v1479 = vunpack.c.l.b16 %v835
        %v1480 = vunpack.c.l.b16 %v836
        %v1481 = vunpack.c.l.b16 %v837
        %v1482 = vunpack.c.l.b16 %v838
        %v1483 = vunpack.c.l.b16 %v839
        %v1484 = vunpack.c.l.b16 %v840
        %v1485 = vunpack.c.l.b16 %v841
        %v1486 = vunpack.c.l.b16 %v842
        %v1487 = vunpack.c.l.b16 %v843
        %v1488 = vunpack.c.l.b16 %v844
        %v1489 = vunpack.c.l.b16 %v845
        %v1490 = vunpack.c.l.b16 %v846
        %v1491 = vpack.c.b16 %v1172, %v1171
        %v1492 = vpack.c.b16 %v1174, %v1173
        %v1493 = vpack.c.b16 %v1176, %v1175
        %v1494 = vpack.c.b16 %v1178, %v1177
        %v1495 = vpack.c.b16 %v1180, %v1179
        %v1496 = vpack.c.b16 %v1182, %v1181
        %v1497 = vpack.c.b16 %v1184, %v1183
        %v1498 = vpack.c.b16 %v1186, %v1185
        %v1499 = vpack.c.b16 %v1188, %v1187
        %v1500 = vpack.c.b16 %v1190, %v1189
        %v1501 = vpack.c.b16 %v1192, %v1191
        %v1502 = vpack.c.b16 %v1194, %v1193
        %v1503 = vpack.c.b16 %v1196, %v1195
        %v1504 = vpack.c.b16 %v1198, %v1197
        %v1505 = vpack.c.b16 %v1200, %v1199
        %v1506 = vpack.c.b16 %v1202, %v1201
        %v1507 = vpack.c.b16 %v1204, %v1203
        %v1508 = vpack.c.b16 %v1206, %v1205
        %v1509 = vpack.c.b16 %v1208, %v1207
        %v1510 = vpack.c.b16 %v1210, %v1209
        %v1511 = vpack.c.b16 %v1212, %v1211
        %v1512 = vpack.c.b16 %v1214, %v1213
        %v1513 = vpack.c.b16 %v1216, %v1215
        %v1514 = vpack.c.b16 %v1218, %v1217
        %v1515 = vpack.c.b16 %v1220, %v1219
        %v1516 = vpack.c.b16 %v1222, %v1221
        %v1517 = vpack.c.b16 %v1224, %v1223
        %v1518 = vpack.c.b16 %v1226, %v1225
        %v1519 = vpack.c.b16 %v1228, %v1227
        %v1520 = vpack.c.b16 %v1230, %v1229
        %v1521 = vpack.c.b16 %v1232, %v1231
        %v1522 = vpack.c.b16 %v1234, %v1233
        %v1523 = vpack.c.b16 %v1236, %v1235
        %v1524 = vpack.c.b16 %v1238, %v1237
        %v1525 = vpack.c.b16 %v1240, %v1239
        %v1526 = vpack.c.b16 %v1242, %v1241
        %v1527 = vpack.c.b16 %v1244, %v1243
        %v1528 = vpack.c.b16 %v1246, %v1245
        %v1529 = vpack.c.b16 %v1248, %v1247
        %v1530 = vpack.c.b16 %v1250, %v1249
        %v1531 = vpack.c.b16 %v1252, %v1251
        %v1532 = vpack.c.b16 %v1254, %v1253
        %v1533 = vpack.c.b16 %v1256, %v1255
        %v1534 = vpack.c.b16 %v1258, %v1257
        %v1535 = vpack.c.b16 %v1260, %v1259
        %v1536 = vpack.c.b16 %v1262, %v1261
        %v1537 = vpack.c.b16 %v1264, %v1263
        %v1538 = vpack.c.b16 %v1266, %v1265
        %v1539 = vpack.c.b16 %v1268, %v1267
        %v1540 = vpack.c.b16 %v1270, %v1269
        %v1541 = vpack.c.b16 %v1272, %v1271
        %v1542 = vpack.c.b16 %v1274, %v1273
        %v1543 = vpack.c.b16 %v1276, %v1275
        %v1544 = vpack.c.b16 %v1278, %v1277
        %v1545 = vpack.c.b16 %v1280, %v1279
        %v1546 = vpack.c.b16 %v1282, %v1281
        %v1547 = vpack.c.b16 %v1284, %v1283
        %v1548 = vpack.c.b16 %v1286, %v1285
        %v1549 = vpack.c.b16 %v1288, %v1287
        %v1550 = vpack.c.b16 %v1290, %v1289
        %v1551 = vpack.c.b16 %v1292, %v1291
        %v1552 = vpack.c.b16 %v1294, %v1293
        %v1553 = vpack.c.b16 %v1296, %v1295
        %v1554 = vpack.c.b16 %v1298, %v1297
        %v1555 = vpack.c.b16 %v1300, %v1299
        %v1556 = vpack.c.b16 %v1302, %v1301
        %v1557 = vpack.c.b16 %v1304, %v1303
        %v1558 = vpack.c.b16 %v1306, %v1305
        %v1559 = vpack.c.b16 %v1308, %v1307
        %v1560 = vpack.c.b16 %v1310, %v1309
        %v1561 = vpack.c.b16 %v1312, %v1311
        %v1562 = vpack.c.b16 %v1314, %v1313
        %v1563 = vpack.c.b16 %v1316, %v1315
        %v1564 = vpack.c.b16 %v1318, %v1317
        %v1565 = vpack.c.b16 %v1320, %v1319
        %v1566 = vpack.c.b16 %v1322, %v1321
        %v1567 = vpack.c.b16 %v1324, %v1323
        %v1568 = vpack.c.b16 %v1326, %v1325
        %v1569 = vpack.c.b16 %v1328, %v1327
        %v1570 = vpack.c.b16 %v1330, %v1329
        %v1571 = vpack.c.b16 %v1332, %v1331
        %v1572 = vpack.c.b16 %v1334, %v1333
        %v1573 = vpack.c.b16 %v1336, %v1335
        %v1574 = vpack.c.b16 %v1338, %v1337
        %v1575 = vpack.c.b16 %v1340, %v1339
        %v1576 = vpack.c.b16 %v1342, %v1341
        %v1577 = vpack.c.b16 %v1344, %v1343
        %v1578 = vpack.c.b16 %v1346, %v1345
        %v1579 = vpack.c.b16 %v1348, %v1347
        %v1580 = vpack.c.b16 %v1350, %v1349
        %v1581 = vpack.c.b16 %v1352, %v1351
        %v1582 = vpack.c.b16 %v1354, %v1353
        %v1583 = vpack.c.b16 %v1356, %v1355
        %v1584 = vpack.c.b16 %v1358, %v1357
        %v1585 = vpack.c.b16 %v1360, %v1359
        %v1586 = vpack.c.b16 %v1362, %v1361
        %v1587 = vpack.c.b16 %v1364, %v1363
        %v1588 = vpack.c.b16 %v1366, %v1365
        %v1589 = vpack.c.b16 %v1368, %v1367
        %v1590 = vpack.c.b16 %v1370, %v1369
        %v1591 = vpack.c.b16 %v1372, %v1371
        %v1592 = vpack.c.b16 %v1374, %v1373
        %v1593 = vpack.c.b16 %v1376, %v1375
        %v1594 = vpack.c.b16 %v1378, %v1377
        %v1595 = vpack.c.b16 %v1380, %v1379
        %v1596 = vpack.c.b16 %v1382, %v1381
        %v1597 = vpack.c.b16 %v1384, %v1383
        %v1598 = vpack.c.b16 %v1386, %v1385
        %v1599 = vpack.c.b16 %v1388, %v1387
        %v1600 = vpack.c.b16 %v1390, %v1389
        %v1601 = vpack.c.b16 %v1392, %v1391
        %v1602 = vpack.c.b16 %v1394, %v1393
        %v1603 = vpack.c.b16 %v1396, %v1395
        %v1604 = vpack.c.b16 %v1398, %v1397
        %v1605 = vpack.c.b16 %v1400, %v1399
        %v1606 = vpack.c.b16 %v1402, %v1401
        %v1607 = vpack.c.b16 %v1404, %v1403
        %v1608 = vpack.c.b16 %v1406, %v1405
        %v1609 = vpack.c.b16 %v1408, %v1407
        %v1610 = vpack.c.b16 %v1410, %v1409
        %v1611 = vpack.c.b16 %v1412, %v1411
        %v1612 = vpack.c.b16 %v1414, %v1413
        %v1613 = vpack.c.b16 %v1416, %v1415
        %v1614 = vpack.c.b16 %v1418, %v1417
        %v1615 = vpack.c.b16 %v1420, %v1419
        %v1616 = vpack.c.b16 %v1422, %v1421
        %v1617 = vpack.c.b16 %v1424, %v1423
        %v1618 = vpack.c.b16 %v1426, %v1425
        %v1619 = vpack.c.b16 %v1428, %v1427
        %v1620 = vpack.c.b16 %v1430, %v1429
        %v1621 = vpack.c.b16 %v1432, %v1431
        %v1622 = vpack.c.b16 %v1434, %v1433
        %v1623 = vpack.c.b16 %v1436, %v1435
        %v1624 = vpack.c.b16 %v1438, %v1437
        %v1625 = vpack.c.b16 %v1440, %v1439
        %v1626 = vpack.c.b16 %v1442, %v1441
        %v1627 = vpack.c.b16 %v1444, %v1443
        %v1628 = vpack.c.b16 %v1446, %v1445
        %v1629 = vpack.c.b16 %v1448, %v1447
        %v1630 = vpack.c.b16 %v1450, %v1449
        %v1631 = vpack.c.b16 %v1452, %v1451
        %v1632 = vpack.c.b16 %v1454, %v1453
        %v1633 = vpack.c.b16 %v1456, %v1455
        %v1634 = vpack.c.b16 %v1458, %v1457
        %v1635 = vpack.c.b16 %v1460, %v1459
        %v1636 = vpack.c.b16 %v1462, %v1461
        %v1637 = vpack.c.b16 %v1464, %v1463
        %v1638 = vpack.c.b16 %v1466, %v1465
        %v1639 = vpack.c.b16 %v1468, %v1467
        %v1640 = vpack.c.b16 %v1470, %v1469
        %v1641 = vpack.c.b16 %v1472, %v1471
        %v1642 = vpack.c.b16 %v1474, %v1473
        %v1643 = vpack.c.b16 %v1476, %v1475
        %v1644 = vpack.c.b16 %v1478, %v1477
        %v1645 = vpack.c.b16 %v1480, %v1479
        %v1646 = vpack.c.b16 %v1482, %v1481
        %v1647 = vpack.c.b16 %v1484, %v1483
        %v1648 = vpack.c.b16 %v1486, %v1485
        %v1649 = vpack.c.b16 %v1488, %v1487
        %v1650 = vpack.c.b16 %v1490, %v1489
        %1811 = vmatprep.subr.bf16.mxu0 0
        %1812 = vmatpush1.bf16.msra.mxu0 %v1498
        %1813 = vmatprep.subr.bf16.mxu0 0
        %1814 = vmatpush1.bf16.msra.mxu0 %v1497
        %1815 = vmatprep.subr.bf16.mxu0 0
        %1816 = vmatpush1.bf16.msra.mxu0 %v1496
        %1817 = vmatprep.subr.bf16.mxu0 0
        %1818 = vmatpush1.bf16.msra.mxu0 %v1495
        %1819 = vmatprep.subr.bf16.mxu0 0
        %1820 = vmatpush1.bf16.msra.mxu0 %v1494
        %1821 = vmatprep.subr.bf16.mxu0 0
        %1822 = vmatpush1.bf16.msra.mxu0 %v1493
        %1823 = vmatprep.subr.bf16.mxu0 0
        %1824 = vmatpush1.bf16.msra.mxu0 %v1492
        %1825 = vmatprep.subr.bf16.mxu0 0
        %1826 = vmatpush1.bf16.msra.mxu0 %v1491
        %1827 = vmatprep.subr.bf16.mxu0 0
        %1828 = vmatpush2.bf16.msra.mxu0 %v1506
        %1829 = vmatprep.subr.bf16.mxu0 0
        %1830 = vmatpush2.bf16.msra.mxu0 %v1505
        %1831 = vmatprep.subr.bf16.mxu0 0
        %1832 = vmatpush2.bf16.msra.mxu0 %v1504
        %1833 = vmatprep.subr.bf16.mxu0 0
        %1834 = vmatpush2.bf16.msra.mxu0 %v1503
        %1835 = vmatprep.subr.bf16.mxu0 0
        %1836 = vmatpush2.bf16.msra.mxu0 %v1502
        %1837 = vmatprep.subr.bf16.mxu0 0
        %1838 = vmatpush2.bf16.msra.mxu0 %v1501
        %1839 = vmatprep.subr.bf16.mxu0 0
        %1840 = vmatpush2.bf16.msra.mxu0 %v1500
        %1841 = vmatprep.subr.bf16.mxu0 0
        %1842 = vmatpush2.bf16.msra.mxu0 %v1499
        %1843 = vmatprep.mubr.bf16.mxu0 %v508
        %1844 = vmatmul.mubr.bf16.gmra.mxu0 %v507
        %v1845 = vpop.f32.mrf.mxu0
        %v1846 = vadd.f32 %v850, %v1845
        %v1847 = vpop.f32.mrf.mxu0
        %v1848 = vpop.f32.mrf.mxu0
        %v1849 = vadd.f32 %v850, %v1848
        %v1850 = vpop.f32.mrf.mxu0
        %1851 = vdwg.mxu0
        %1852 = vmatprep.subr.bf16.mxu0 0
        %1853 = vmatpush1.bf16.msra.mxu0 %v1514
        %1854 = vmatprep.subr.bf16.mxu0 0
        %1855 = vmatpush1.bf16.msra.mxu0 %v1513
        %1856 = vmatprep.subr.bf16.mxu0 0
        %1857 = vmatpush1.bf16.msra.mxu0 %v1512
        %1858 = vmatprep.subr.bf16.mxu0 0
        %1859 = vmatpush1.bf16.msra.mxu0 %v1511
        %1860 = vmatprep.subr.bf16.mxu0 0
        %1861 = vmatpush1.bf16.msra.mxu0 %v1510
        %1862 = vmatprep.subr.bf16.mxu0 0
        %1863 = vmatpush1.bf16.msra.mxu0 %v1509
        %1864 = vmatprep.subr.bf16.mxu0 0
        %1865 = vmatpush1.bf16.msra.mxu0 %v1508
        %1866 = vmatprep.subr.bf16.mxu0 0
        %1867 = vmatpush1.bf16.msra.mxu0 %v1507
        %1868 = vmatprep.subr.bf16.mxu0 0
        %1869 = vmatpush2.bf16.msra.mxu0 %v1522
        %1870 = vmatprep.subr.bf16.mxu0 0
        %1871 = vmatpush2.bf16.msra.mxu0 %v1521
        %1872 = vmatprep.subr.bf16.mxu0 0
        %1873 = vmatpush2.bf16.msra.mxu0 %v1520
        %1874 = vmatprep.subr.bf16.mxu0 0
        %1875 = vmatpush2.bf16.msra.mxu0 %v1519
        %1876 = vmatprep.subr.bf16.mxu0 0
        %1877 = vmatpush2.bf16.msra.mxu0 %v1518
        %1878 = vmatprep.subr.bf16.mxu0 0
        %1879 = vmatpush2.bf16.msra.mxu0 %v1517
        %1880 = vmatprep.subr.bf16.mxu0 0
        %1881 = vmatpush2.bf16.msra.mxu0 %v1516
        %1882 = vmatprep.subr.bf16.mxu0 0
        %1883 = vmatpush2.bf16.msra.mxu0 %v1515
        %1884 = vmatprep.mubr.bf16.mxu0 %v510
        %1885 = vmatmul.mubr.bf16.gmra.mxu0 %v509
        %v1886 = vpop.f32.mrf.mxu0
        %v1887 = vadd.f32 %v1846, %v1886
        %v1888 = vpop.f32.mrf.mxu0
        %v1889 = vpop.f32.mrf.mxu0
        %v1890 = vadd.f32 %v1849, %v1889
        %v1891 = vpop.f32.mrf.mxu0
        %1892 = vdwg.mxu0
        %1893 = vmatprep.subr.bf16.mxu0 0
        %1894 = vmatpush1.bf16.msra.mxu0 %v1530
        %1895 = vmatprep.subr.bf16.mxu0 0
        %1896 = vmatpush1.bf16.msra.mxu0 %v1529
        %1897 = vmatprep.subr.bf16.mxu0 0
        %1898 = vmatpush1.bf16.msra.mxu0 %v1528
        %1899 = vmatprep.subr.bf16.mxu0 0
        %1900 = vmatpush1.bf16.msra.mxu0 %v1527
        %1901 = vmatprep.subr.bf16.mxu0 0
        %1902 = vmatpush1.bf16.msra.mxu0 %v1526
        %1903 = vmatprep.subr.bf16.mxu0 0
        %1904 = vmatpush1.bf16.msra.mxu0 %v1525
        %1905 = vmatprep.subr.bf16.mxu0 0
        %1906 = vmatpush1.bf16.msra.mxu0 %v1524
        %1907 = vmatprep.subr.bf16.mxu0 0
        %1908 = vmatpush1.bf16.msra.mxu0 %v1523
        %1909 = vmatprep.subr.bf16.mxu0 0
        %1910 = vmatpush2.bf16.msra.mxu0 %v1538
        %1911 = vmatprep.subr.bf16.mxu0 0
        %1912 = vmatpush2.bf16.msra.mxu0 %v1537
        %1913 = vmatprep.subr.bf16.mxu0 0
        %1914 = vmatpush2.bf16.msra.mxu0 %v1536
        %1915 = vmatprep.subr.bf16.mxu0 0
        %1916 = vmatpush2.bf16.msra.mxu0 %v1535
        %1917 = vmatprep.subr.bf16.mxu0 0
        %1918 = vmatpush2.bf16.msra.mxu0 %v1534
        %1919 = vmatprep.subr.bf16.mxu0 0
        %1920 = vmatpush2.bf16.msra.mxu0 %v1533
        %1921 = vmatprep.subr.bf16.mxu0 0
        %1922 = vmatpush2.bf16.msra.mxu0 %v1532
        %1923 = vmatprep.subr.bf16.mxu0 0
        %1924 = vmatpush2.bf16.msra.mxu0 %v1531
        %1925 = vmatprep.mubr.bf16.mxu0 %v512
        %1926 = vmatmul.mubr.bf16.gmra.mxu0 %v511
        %v1927 = vpop.f32.mrf.mxu0
        %v1928 = vadd.f32 %v1887, %v1927
        %v1929 = vpop.f32.mrf.mxu0
        %v1930 = vpop.f32.mrf.mxu0
        %v1931 = vadd.f32 %v1890, %v1930
        %v1932 = vpop.f32.mrf.mxu0
        %1933 = vdwg.mxu0
        %1934 = vmatprep.subr.bf16.mxu0 0
        %1935 = vmatpush1.bf16.msra.mxu0 %v1546
        %1936 = vmatprep.subr.bf16.mxu0 0
        %1937 = vmatpush1.bf16.msra.mxu0 %v1545
        %1938 = vmatprep.subr.bf16.mxu0 0
        %1939 = vmatpush1.bf16.msra.mxu0 %v1544
        %1940 = vmatprep.subr.bf16.mxu0 0
        %1941 = vmatpush1.bf16.msra.mxu0 %v1543
        %1942 = vmatprep.subr.bf16.mxu0 0
        %1943 = vmatpush1.bf16.msra.mxu0 %v1542
        %1944 = vmatprep.subr.bf16.mxu0 0
        %1945 = vmatpush1.bf16.msra.mxu0 %v1541
        %1946 = vmatprep.subr.bf16.mxu0 0
        %1947 = vmatpush1.bf16.msra.mxu0 %v1540
        %1948 = vmatprep.subr.bf16.mxu0 0
        %1949 = vmatpush1.bf16.msra.mxu0 %v1539
        %1950 = vmatprep.subr.bf16.mxu0 0
        %1951 = vmatpush2.bf16.msra.mxu0 %v1554
        %1952 = vmatprep.subr.bf16.mxu0 0
        %1953 = vmatpush2.bf16.msra.mxu0 %v1553
        %1954 = vmatprep.subr.bf16.mxu0 0
        %1955 = vmatpush2.bf16.msra.mxu0 %v1552
        %1956 = vmatprep.subr.bf16.mxu0 0
        %1957 = vmatpush2.bf16.msra.mxu0 %v1551
        %1958 = vmatprep.subr.bf16.mxu0 0
        %1959 = vmatpush2.bf16.msra.mxu0 %v1550
        %1960 = vmatprep.subr.bf16.mxu0 0
        %1961 = vmatpush2.bf16.msra.mxu0 %v1549
        %1962 = vmatprep.subr.bf16.mxu0 0
        %1963 = vmatpush2.bf16.msra.mxu0 %v1548
        %1964 = vmatprep.subr.bf16.mxu0 0
        %1965 = vmatpush2.bf16.msra.mxu0 %v1547
        %1966 = vmatprep.mubr.bf16.mxu0 %v514
        %1967 = vmatmul.mubr.bf16.gmra.mxu0 %v513
        %v1968 = vpop.f32.mrf.mxu0
        %v1969 = vadd.f32 %v1928, %v1968
        %v1970 = vpop.f32.mrf.mxu0
        %v1971 = vpop.f32.mrf.mxu0
        %v1972 = vadd.f32 %v1931, %v1971
        %v1973 = vpop.f32.mrf.mxu0
        %1974 = vdwg.mxu0
        %1975 = vmatprep.subr.bf16.mxu0 0
        %1976 = vmatpush1.bf16.msra.mxu0 %v1562
        %1977 = vmatprep.subr.bf16.mxu0 0
        %1978 = vmatpush1.bf16.msra.mxu0 %v1561
        %1979 = vmatprep.subr.bf16.mxu0 0
        %1980 = vmatpush1.bf16.msra.mxu0 %v1560
        %1981 = vmatprep.subr.bf16.mxu0 0
        %1982 = vmatpush1.bf16.msra.mxu0 %v1559
        %1983 = vmatprep.subr.bf16.mxu0 0
        %1984 = vmatpush1.bf16.msra.mxu0 %v1558
        %1985 = vmatprep.subr.bf16.mxu0 0
        %1986 = vmatpush1.bf16.msra.mxu0 %v1557
        %1987 = vmatprep.subr.bf16.mxu0 0
        %1988 = vmatpush1.bf16.msra.mxu0 %v1556
        %1989 = vmatprep.subr.bf16.mxu0 0
        %1990 = vmatpush1.bf16.msra.mxu0 %v1555
        %1991 = vmatprep.subr.bf16.mxu0 0
        %1992 = vmatpush2.bf16.msra.mxu0 %v1570
        %1993 = vmatprep.subr.bf16.mxu0 0
        %1994 = vmatpush2.bf16.msra.mxu0 %v1569
        %1995 = vmatprep.subr.bf16.mxu0 0
        %1996 = vmatpush2.bf16.msra.mxu0 %v1568
        %1997 = vmatprep.subr.bf16.mxu0 0
        %1998 = vmatpush2.bf16.msra.mxu0 %v1567
        %1999 = vmatprep.subr.bf16.mxu0 0
        %2000 = vmatpush2.bf16.msra.mxu0 %v1566
        %2001 = vmatprep.subr.bf16.mxu0 0
        %2002 = vmatpush2.bf16.msra.mxu0 %v1565
        %2003 = vmatprep.subr.bf16.mxu0 0
        %2004 = vmatpush2.bf16.msra.mxu0 %v1564
        %2005 = vmatprep.subr.bf16.mxu0 0
        %2006 = vmatpush2.bf16.msra.mxu0 %v1563
        %2007 = vmatprep.mubr.bf16.mxu0 %v516
        %2008 = vmatmul.mubr.bf16.gmra.mxu0 %v515
        %v2009 = vpop.f32.mrf.mxu0
        %v2010 = vadd.f32 %v1969, %v2009
        %v2011 = vpop.f32.mrf.mxu0
        %v2012 = vpop.f32.mrf.mxu0
        %v2013 = vadd.f32 %v1972, %v2012
        %v2014 = vpop.f32.mrf.mxu0
        %2015 = vdwg.mxu0
        %2016 = vmatprep.subr.bf16.mxu0 0
        %2017 = vmatpush1.bf16.msra.mxu0 %v1578
        %2018 = vmatprep.subr.bf16.mxu0 0
        %2019 = vmatpush1.bf16.msra.mxu0 %v1577
        %2020 = vmatprep.subr.bf16.mxu0 0
        %2021 = vmatpush1.bf16.msra.mxu0 %v1576
        %2022 = vmatprep.subr.bf16.mxu0 0
        %2023 = vmatpush1.bf16.msra.mxu0 %v1575
        %2024 = vmatprep.subr.bf16.mxu0 0
        %2025 = vmatpush1.bf16.msra.mxu0 %v1574
        %2026 = vmatprep.subr.bf16.mxu0 0
        %2027 = vmatpush1.bf16.msra.mxu0 %v1573
        %2028 = vmatprep.subr.bf16.mxu0 0
        %2029 = vmatpush1.bf16.msra.mxu0 %v1572
        %2030 = vmatprep.subr.bf16.mxu0 0
        %2031 = vmatpush1.bf16.msra.mxu0 %v1571
        %2032 = vmatprep.subr.bf16.mxu0 0
        %2033 = vmatpush2.bf16.msra.mxu0 %v1586
        %2034 = vmatprep.subr.bf16.mxu0 0
        %2035 = vmatpush2.bf16.msra.mxu0 %v1585
        %2036 = vmatprep.subr.bf16.mxu0 0
        %2037 = vmatpush2.bf16.msra.mxu0 %v1584
        %2038 = vmatprep.subr.bf16.mxu0 0
        %2039 = vmatpush2.bf16.msra.mxu0 %v1583
        %2040 = vmatprep.subr.bf16.mxu0 0
        %2041 = vmatpush2.bf16.msra.mxu0 %v1582
        %2042 = vmatprep.subr.bf16.mxu0 0
        %2043 = vmatpush2.bf16.msra.mxu0 %v1581
        %2044 = vmatprep.subr.bf16.mxu0 0
        %2045 = vmatpush2.bf16.msra.mxu0 %v1580
        %2046 = vmatprep.subr.bf16.mxu0 0
        %2047 = vmatpush2.bf16.msra.mxu0 %v1579
        %2048 = vmatprep.mubr.bf16.mxu0 %v518
        %2049 = vmatmul.mubr.bf16.gmra.mxu0 %v517
        %v2050 = vpop.f32.mrf.mxu0
        %v2051 = vadd.f32 %v2010, %v2050
        %v2052 = vpop.f32.mrf.mxu0
        %v2053 = vpop.f32.mrf.mxu0
        %v2054 = vadd.f32 %v2013, %v2053
        %v2055 = vpop.f32.mrf.mxu0
        %2056 = vdwg.mxu0
        %2057 = vmatprep.subr.bf16.mxu0 0
        %2058 = vmatpush1.bf16.msra.mxu0 %v1594
        %2059 = vmatprep.subr.bf16.mxu0 0
        %2060 = vmatpush1.bf16.msra.mxu0 %v1593
        %2061 = vmatprep.subr.bf16.mxu0 0
        %2062 = vmatpush1.bf16.msra.mxu0 %v1592
        %2063 = vmatprep.subr.bf16.mxu0 0
        %2064 = vmatpush1.bf16.msra.mxu0 %v1591
        %2065 = vmatprep.subr.bf16.mxu0 0
        %2066 = vmatpush1.bf16.msra.mxu0 %v1590
        %2067 = vmatprep.subr.bf16.mxu0 0
        %2068 = vmatpush1.bf16.msra.mxu0 %v1589
        %2069 = vmatprep.subr.bf16.mxu0 0
        %2070 = vmatpush1.bf16.msra.mxu0 %v1588
        %2071 = vmatprep.subr.bf16.mxu0 0
        %2072 = vmatpush1.bf16.msra.mxu0 %v1587
        %2073 = vmatprep.subr.bf16.mxu0 0
        %2074 = vmatpush2.bf16.msra.mxu0 %v1602
        %2075 = vmatprep.subr.bf16.mxu0 0
        %2076 = vmatpush2.bf16.msra.mxu0 %v1601
        %2077 = vmatprep.subr.bf16.mxu0 0
        %2078 = vmatpush2.bf16.msra.mxu0 %v1600
        %2079 = vmatprep.subr.bf16.mxu0 0
        %2080 = vmatpush2.bf16.msra.mxu0 %v1599
        %2081 = vmatprep.subr.bf16.mxu0 0
        %2082 = vmatpush2.bf16.msra.mxu0 %v1598
        %2083 = vmatprep.subr.bf16.mxu0 0
        %2084 = vmatpush2.bf16.msra.mxu0 %v1597
        %2085 = vmatprep.subr.bf16.mxu0 0
        %2086 = vmatpush2.bf16.msra.mxu0 %v1596
        %2087 = vmatprep.subr.bf16.mxu0 0
        %2088 = vmatpush2.bf16.msra.mxu0 %v1595
        %2089 = vmatprep.mubr.bf16.mxu0 %v520
        %2090 = vmatmul.mubr.bf16.gmra.mxu0 %v519
        %v2091 = vpop.f32.mrf.mxu0
        %v2092 = vadd.f32 %v2051, %v2091
        %v2093 = vpop.f32.mrf.mxu0
        %v2094 = vpop.f32.mrf.mxu0
        %v2095 = vadd.f32 %v2054, %v2094
        %v2096 = vpop.f32.mrf.mxu0
        %2097 = vdwg.mxu0
        %2098 = vmatprep.subr.bf16.mxu0 0
        %2099 = vmatpush1.bf16.msra.mxu0 %v1610
        %2100 = vmatprep.subr.bf16.mxu0 0
        %2101 = vmatpush1.bf16.msra.mxu0 %v1609
        %2102 = vmatprep.subr.bf16.mxu0 0
        %2103 = vmatpush1.bf16.msra.mxu0 %v1608
        %2104 = vmatprep.subr.bf16.mxu0 0
        %2105 = vmatpush1.bf16.msra.mxu0 %v1607
        %2106 = vmatprep.subr.bf16.mxu0 0
        %2107 = vmatpush1.bf16.msra.mxu0 %v1606
        %2108 = vmatprep.subr.bf16.mxu0 0
        %2109 = vmatpush1.bf16.msra.mxu0 %v1605
        %2110 = vmatprep.subr.bf16.mxu0 0
        %2111 = vmatpush1.bf16.msra.mxu0 %v1604
        %2112 = vmatprep.subr.bf16.mxu0 0
        %2113 = vmatpush1.bf16.msra.mxu0 %v1603
        %2114 = vmatprep.subr.bf16.mxu0 0
        %2115 = vmatpush2.bf16.msra.mxu0 %v1618
        %2116 = vmatprep.subr.bf16.mxu0 0
        %2117 = vmatpush2.bf16.msra.mxu0 %v1617
        %2118 = vmatprep.subr.bf16.mxu0 0
        %2119 = vmatpush2.bf16.msra.mxu0 %v1616
        %2120 = vmatprep.subr.bf16.mxu0 0
        %2121 = vmatpush2.bf16.msra.mxu0 %v1615
        %2122 = vmatprep.subr.bf16.mxu0 0
        %2123 = vmatpush2.bf16.msra.mxu0 %v1614
        %2124 = vmatprep.subr.bf16.mxu0 0
        %2125 = vmatpush2.bf16.msra.mxu0 %v1613
        %2126 = vmatprep.subr.bf16.mxu0 0
        %2127 = vmatpush2.bf16.msra.mxu0 %v1612
        %2128 = vmatprep.subr.bf16.mxu0 0
        %2129 = vmatpush2.bf16.msra.mxu0 %v1611
        %2130 = vmatprep.mubr.bf16.mxu0 %v522
        %2131 = vmatmul.mubr.bf16.gmra.mxu0 %v521
        %v2132 = vpop.f32.mrf.mxu0
        %v2133 = vadd.f32 %v2092, %v2132
        %v2134 = vpop.f32.mrf.mxu0
        %v2135 = vpop.f32.mrf.mxu0
        %v2136 = vadd.f32 %v2095, %v2135
        %v2137 = vpop.f32.mrf.mxu0
        %2138 = vdwg.mxu0
        %2139 = vmatprep.subr.bf16.mxu0 0
        %2140 = vmatpush1.bf16.msra.mxu0 %v1626
        %2141 = vmatprep.subr.bf16.mxu0 0
        %2142 = vmatpush1.bf16.msra.mxu0 %v1625
        %2143 = vmatprep.subr.bf16.mxu0 0
        %2144 = vmatpush1.bf16.msra.mxu0 %v1624
        %2145 = vmatprep.subr.bf16.mxu0 0
        %2146 = vmatpush1.bf16.msra.mxu0 %v1623
        %2147 = vmatprep.subr.bf16.mxu0 0
        %2148 = vmatpush1.bf16.msra.mxu0 %v1622
        %2149 = vmatprep.subr.bf16.mxu0 0
        %2150 = vmatpush1.bf16.msra.mxu0 %v1621
        %2151 = vmatprep.subr.bf16.mxu0 0
        %2152 = vmatpush1.bf16.msra.mxu0 %v1620
        %2153 = vmatprep.subr.bf16.mxu0 0
        %2154 = vmatpush1.bf16.msra.mxu0 %v1619
        %2155 = vmatprep.subr.bf16.mxu0 0
        %2156 = vmatpush2.bf16.msra.mxu0 %v1634
        %2157 = vmatprep.subr.bf16.mxu0 0
        %2158 = vmatpush2.bf16.msra.mxu0 %v1633
        %2159 = vmatprep.subr.bf16.mxu0 0
        %2160 = vmatpush2.bf16.msra.mxu0 %v1632
        %2161 = vmatprep.subr.bf16.mxu0 0
        %2162 = vmatpush2.bf16.msra.mxu0 %v1631
        %2163 = vmatprep.subr.bf16.mxu0 0
        %2164 = vmatpush2.bf16.msra.mxu0 %v1630
        %2165 = vmatprep.subr.bf16.mxu0 0
        %2166 = vmatpush2.bf16.msra.mxu0 %v1629
        %2167 = vmatprep.subr.bf16.mxu0 0
        %2168 = vmatpush2.bf16.msra.mxu0 %v1628
        %2169 = vmatprep.subr.bf16.mxu0 0
        %2170 = vmatpush2.bf16.msra.mxu0 %v1627
        %2171 = vmatprep.mubr.bf16.mxu0 %v524
        %2172 = vmatmul.mubr.bf16.gmra.mxu0 %v523
        %v2173 = vpop.f32.mrf.mxu0
        %v2174 = vadd.f32 %v2133, %v2173
        %v2175 = vpop.f32.mrf.mxu0
        %v2176 = vpop.f32.mrf.mxu0
        %v2177 = vadd.f32 %v2136, %v2176
        %v2178 = vpop.f32.mrf.mxu0
        %2179 = vdwg.mxu0
        %2180 = vmatprep.subr.bf16.mxu0 0
        %2181 = vmatpush1.bf16.msra.mxu0 %v1642
        %2182 = vmatprep.subr.bf16.mxu0 0
        %2183 = vmatpush1.bf16.msra.mxu0 %v1641
        %2184 = vmatprep.subr.bf16.mxu0 0
        %2185 = vmatpush1.bf16.msra.mxu0 %v1640
        %2186 = vmatprep.subr.bf16.mxu0 0
        %2187 = vmatpush1.bf16.msra.mxu0 %v1639
        %2188 = vmatprep.subr.bf16.mxu0 0
        %2189 = vmatpush1.bf16.msra.mxu0 %v1638
        %2190 = vmatprep.subr.bf16.mxu0 0
        %2191 = vmatpush1.bf16.msra.mxu0 %v1637
        %2192 = vmatprep.subr.bf16.mxu0 0
        %2193 = vmatpush1.bf16.msra.mxu0 %v1636
        %2194 = vmatprep.subr.bf16.mxu0 0
        %2195 = vmatpush1.bf16.msra.mxu0 %v1635
        %2196 = vmatprep.subr.bf16.mxu0 0
        %2197 = vmatpush2.bf16.msra.mxu0 %v1650
        %2198 = vmatprep.subr.bf16.mxu0 0
        %2199 = vmatpush2.bf16.msra.mxu0 %v1649
        %2200 = vmatprep.subr.bf16.mxu0 0
        %2201 = vmatpush2.bf16.msra.mxu0 %v1648
        %2202 = vmatprep.subr.bf16.mxu0 0
        %2203 = vmatpush2.bf16.msra.mxu0 %v1647
        %2204 = vmatprep.subr.bf16.mxu0 0
        %2205 = vmatpush2.bf16.msra.mxu0 %v1646
        %2206 = vmatprep.subr.bf16.mxu0 0
        %2207 = vmatpush2.bf16.msra.mxu0 %v1645
        %2208 = vmatprep.subr.bf16.mxu0 0
        %2209 = vmatpush2.bf16.msra.mxu0 %v1644
        %2210 = vmatprep.subr.bf16.mxu0 0
        %2211 = vmatpush2.bf16.msra.mxu0 %v1643
        %2212 = vmatprep.mubr.bf16.mxu0 %v526
        %2213 = vmatmul.mubr.bf16.gmra.mxu0 %v525
        %v2214 = vpop.f32.mrf.mxu0
        %v2215 = vadd.f32 %v2174, %v2214
        %v2216 = vpop.f32.mrf.mxu0
        %v2217 = vpop.f32.mrf.mxu0
        %v2218 = vadd.f32 %v2177, %v2217
        %v2219 = vpop.f32.mrf.mxu0
        %2220 = vdwg.mxu0
        %v2221 = vmax.f32 %v2215, 0.0
        %v2222 = vmax.f32 %v2218, 0.0
        %2223 = vadd.xlane.f32.xlu0 %v2221
        %v2224 = vpop.xlane.xlu0 %2223
        %2225 = vadd.xlane.f32.xlu0 %v2222
        %v2226 = vpop.xlane.xlu0 %2225
        %v2227 = vrcp.pop 128.0
        %v2228 = vmul.f32 %v2224, %v2227
        %v2229 = vmul.f32 %v2226, %v2227
        %v2230 = vsub.f32 %v2221, %v2228
        %v2231 = vsub.f32 %v2222, %v2229
        %v2232 = vmul.f32 %v2230, %v2230
        %v2233 = vmul.f32 %v2231, %v2231
        %2234 = vadd.xlane.f32.xlu0 %v2232
        %v2235 = vpop.xlane.xlu0 %2234
        %2236 = vadd.xlane.f32.xlu0 %v2233
        %v2237 = vpop.xlane.xlu0 %2236
        %v2238 = vmul.f32 %v2235, %v2227
        %v2239 = vmul.f32 %v2237, %v2227
        %v2240 = vadd.f32 %v2238, 1e-05
        %v2241 = vadd.f32 %v2239, 1e-05
        %v2242 = vrsqrt.pop %v2240
        %v2243 = vrsqrt.pop %v2241
        %v2244 = vmul.f32 %v2230, %v2242
        %v2245 = vmul.f32 %v2231, %v2243
        %v2246 = vlaneseq
        %v2247 = vshrl.u32 %v2246, 7
        %v2248 = vsub.s32 1, %v2247
        %v2249 = vrot.slane %v461, %v2248
        %v2250 = vmul.f32 %v2244, %v2249
        %v2251 = vmul.f32 %v2245, %v2249
        %v2252 = vlaneseq
        %v2253 = vshrl.u32 %v2252, 7
        %v2254 = vsub.s32 2, %v2253
        %v2255 = vrot.slane %v461, %v2254
        %v2256 = vadd.f32 %v2250, %v2255
        %v2257 = vadd.f32 %v2251, %v2255
        %v2258 = vld [vmem:[#allocation5] sm:$0xff]
        %v2259 = vld [vmem:[#allocation8] sm:$0xf]
        %v2260 = vld [vmem:[#allocation8 + $0x4] sm:$0xf]
        %v2261 = vld [vmem:[#allocation8 + $0x8] sm:$0xf]
        %v2262 = vld [vmem:[#allocation8 + $0xc] sm:$0xf]
        %v2263 = vld [vmem:[#allocation8 + $0x10] sm:$0xf]
        %v2264 = vld [vmem:[#allocation8 + $0x14] sm:$0xf]
        %v2265 = vld [vmem:[#allocation8 + $0x18] sm:$0xf]
        %v2266 = vld [vmem:[#allocation8 + $0x1c] sm:$0xf]
        %v2267 = vld [vmem:[#allocation8 + $0x20] sm:$0xf]
        %v2268 = vld [vmem:[#allocation8 + $0x24] sm:$0xf]
        %v2269 = vld [vmem:[#allocation8 + $0x28] sm:$0xf]
        %v2270 = vld [vmem:[#allocation8 + $0x2c] sm:$0xf]
        %v2271 = vld [vmem:[#allocation8 + $0x30] sm:$0xf]
        %v2272 = vld [vmem:[#allocation8 + $0x34] sm:$0xf]
        %v2273 = vld [vmem:[#allocation8 + $0x38] sm:$0xf]
        %v2274 = vld [vmem:[#allocation8 + $0x3c] sm:$0xf]
        %v2275 = vld [vmem:[#allocation10] sm:$0xff]
        %v2276 = vld [vmem:[#allocation10 + $0x8] sm:$0xff]
        %v2277 = vld [vmem:[#allocation10 + $0x10] sm:$0xff]
        %v2278 = vld [vmem:[#allocation10 + $0x18] sm:$0xff]
        %v2279 = vld [vmem:[#allocation10 + $0x20] sm:$0xff]
        %v2280 = vld [vmem:[#allocation10 + $0x28] sm:$0xff]
        %v2281 = vld [vmem:[#allocation10 + $0x30] sm:$0xff]
        %v2282 = vld [vmem:[#allocation10 + $0x38] sm:$0xff]
        %v2283 = vld [vmem:[#allocation10 + $0x40] sm:$0xff]
        %v2284 = vld [vmem:[#allocation10 + $0x48] sm:$0xff]
        %v2285 = vld [vmem:[#allocation10 + $0x50] sm:$0xff]
        %v2286 = vld [vmem:[#allocation10 + $0x58] sm:$0xff]
        %v2287 = vld [vmem:[#allocation10 + $0x60] sm:$0xff]
        %v2288 = vld [vmem:[#allocation10 + $0x68] sm:$0xff]
        %v2289 = vld [vmem:[#allocation10 + $0x70] sm:$0xff]
        %v2290 = vld [vmem:[#allocation10 + $0x78] sm:$0xff]
        %s2291 = scalar_lea.vmem [#allocation8], 64
        %v2292 = vld [vmem:[%s2291] sm:$0xf]
        %v2293 = vld [vmem:[%s2291 + $0x4] sm:$0xf]
        %v2294 = vld [vmem:[%s2291 + $0x8] sm:$0xf]
        %v2295 = vld [vmem:[%s2291 + $0xc] sm:$0xf]
        %v2296 = vld [vmem:[%s2291 + $0x10] sm:$0xf]
        %v2297 = vld [vmem:[%s2291 + $0x14] sm:$0xf]
        %v2298 = vld [vmem:[%s2291 + $0x18] sm:$0xf]
        %v2299 = vld [vmem:[%s2291 + $0x1c] sm:$0xf]
        %v2300 = vld [vmem:[%s2291 + $0x20] sm:$0xf]
        %v2301 = vld [vmem:[%s2291 + $0x24] sm:$0xf]
        %v2302 = vld [vmem:[%s2291 + $0x28] sm:$0xf]
        %v2303 = vld [vmem:[%s2291 + $0x2c] sm:$0xf]
        %v2304 = vld [vmem:[%s2291 + $0x30] sm:$0xf]
        %v2305 = vld [vmem:[%s2291 + $0x34] sm:$0xf]
        %v2306 = vld [vmem:[%s2291 + $0x38] sm:$0xf]
        %v2307 = vld [vmem:[%s2291 + $0x3c] sm:$0xf]
        %v2308 = vpack.c.bf16 %v2257, %v2256
        %v2309 = vlaneseq
        %v2310 = vshrl.u32 %v2309, 7
        %v2311 = vsub.s32 3, %v2310
        %v2312 = vrot.slane %v461, %v2311
        %v2329 = vunpack.c.l.b16 %v2259
        %v2330 = vunpack.c.l.b16 %v2260
        %v2331 = vunpack.c.l.b16 %v2261
        %v2332 = vunpack.c.l.b16 %v2262
        %v2333 = vunpack.c.l.b16 %v2263
        %v2334 = vunpack.c.l.b16 %v2264
        %v2335 = vunpack.c.l.b16 %v2265
        %v2336 = vunpack.c.l.b16 %v2266
        %v2337 = vunpack.c.l.b16 %v2267
        %v2338 = vunpack.c.l.b16 %v2268
        %v2339 = vunpack.c.l.b16 %v2269
        %v2340 = vunpack.c.l.b16 %v2270
        %v2341 = vunpack.c.l.b16 %v2271
        %v2342 = vunpack.c.l.b16 %v2272
        %v2343 = vunpack.c.l.b16 %v2273
        %v2344 = vunpack.c.l.b16 %v2274
        %v2345 = vpack.c.b16 %v2330, %v2329
        %v2346 = vpack.c.b16 %v2332, %v2331
        %v2347 = vpack.c.b16 %v2334, %v2333
        %v2348 = vpack.c.b16 %v2336, %v2335
        %v2349 = vpack.c.b16 %v2338, %v2337
        %v2350 = vpack.c.b16 %v2340, %v2339
        %v2351 = vpack.c.b16 %v2342, %v2341
        %v2352 = vpack.c.b16 %v2344, %v2343
        %2361 = vmatprep.subr.bf16.mxu0 0
        %2362 = vmatpush1.bf16.msra.mxu0 %v2352
        %2363 = vmatprep.subr.bf16.mxu0 0
        %2364 = vmatpush1.bf16.msra.mxu0 %v2351
        %2365 = vmatprep.subr.bf16.mxu0 0
        %2366 = vmatpush1.bf16.msra.mxu0 %v2350
        %2367 = vmatprep.subr.bf16.mxu0 0
        %2368 = vmatpush1.bf16.msra.mxu0 %v2349
        %2369 = vmatprep.subr.bf16.mxu0 0
        %2370 = vmatpush1.bf16.msra.mxu0 %v2348
        %2371 = vmatprep.subr.bf16.mxu0 0
        %2372 = vmatpush1.bf16.msra.mxu0 %v2347
        %2373 = vmatprep.subr.bf16.mxu0 0
        %2374 = vmatpush1.bf16.msra.mxu0 %v2346
        %2375 = vmatprep.subr.bf16.mxu0 0
        %2376 = vmatpush1.bf16.msra.mxu0 %v2345
        %2377 = vmatprep.subr.bf16.mxu0 0
        %2378 = vmatpush2.bf16.msra.mxu0 0
        %2379 = vmatprep.subr.bf16.mxu0 0
        %2380 = vmatpush2.bf16.msra.mxu0 0
        %2381 = vmatprep.subr.bf16.mxu0 0
        %2382 = vmatpush2.bf16.msra.mxu0 0
        %2383 = vmatprep.subr.bf16.mxu0 0
        %2384 = vmatpush2.bf16.msra.mxu0 0
        %2385 = vmatprep.subr.bf16.mxu0 0
        %2386 = vmatpush2.bf16.msra.mxu0 0
        %2387 = vmatprep.subr.bf16.mxu0 0
        %2388 = vmatpush2.bf16.msra.mxu0 0
        %2389 = vmatprep.subr.bf16.mxu0 0
        %2390 = vmatpush2.bf16.msra.mxu0 0
        %2391 = vmatprep.subr.bf16.mxu0 0
        %2392 = vmatpush2.bf16.msra.mxu0 0
        %2393 = vmatprep.mubr.bf16.mxu0 0
        %2394 = vmatmul.mubr.bf16.gmra.mxu0 %v2308
        %v2395 = vpop.f32.mrf.mxu0
        %v2396 = vadd.f32 %v2312, %v2395
        %v2397 = vpop.f32.mrf.mxu0
        %v2398 = vpop.f32.mrf.mxu0
        %v2399 = vadd.f32 %v2312, %v2398
        %v2400 = vpop.f32.mrf.mxu0
        %2401 = vdwg.mxu0
        %v2402 = vlaneseq
        %v2403 = vshrl.u32 %v2402, 7
        %v2404 = vsub.s32 0, %v2403
        %v2405 = vrot.slane %v465, %v2404
        %v2406 = vlaneseq
        %v2407 = vshrl.u32 %v2406, 7
        %v2408 = vsub.s32 0, %v2407
        %v2409 = vrot.slane %v466, %v2408
        %v2426 = vunpack.c.l.b16 %v2275
        %v2427 = vunpack.c.h.b16 %v2275
        %v2428 = vunpack.c.l.b16 %v2276
        %v2429 = vunpack.c.h.b16 %v2276
        %v2430 = vunpack.c.l.b16 %v2277
        %v2431 = vunpack.c.h.b16 %v2277
        %v2432 = vunpack.c.l.b16 %v2278
        %v2433 = vunpack.c.h.b16 %v2278
        %v2434 = vunpack.c.l.b16 %v2279
        %v2435 = vunpack.c.h.b16 %v2279
        %v2436 = vunpack.c.l.b16 %v2280
        %v2437 = vunpack.c.h.b16 %v2280
        %v2438 = vunpack.c.l.b16 %v2281
        %v2439 = vunpack.c.h.b16 %v2281
        %v2440 = vunpack.c.l.b16 %v2282
        %v2441 = vunpack.c.h.b16 %v2282
        %v2442 = vunpack.c.l.b16 %v2283
        %v2443 = vunpack.c.h.b16 %v2283
        %v2444 = vunpack.c.l.b16 %v2284
        %v2445 = vunpack.c.h.b16 %v2284
        %v2446 = vunpack.c.l.b16 %v2285
        %v2447 = vunpack.c.h.b16 %v2285
        %v2448 = vunpack.c.l.b16 %v2286
        %v2449 = vunpack.c.h.b16 %v2286
        %v2450 = vunpack.c.l.b16 %v2287
        %v2451 = vunpack.c.h.b16 %v2287
        %v2452 = vunpack.c.l.b16 %v2288
        %v2453 = vunpack.c.h.b16 %v2288
        %v2454 = vunpack.c.l.b16 %v2289
        %v2455 = vunpack.c.h.b16 %v2289
        %v2456 = vunpack.c.l.b16 %v2290
        %v2457 = vunpack.c.h.b16 %v2290
        %v2458 = vpack.c.b16 %v2428, %v2426
        %v2459 = vpack.c.b16 %v2429, %v2427
        %v2460 = vpack.c.b16 %v2432, %v2430
        %v2461 = vpack.c.b16 %v2433, %v2431
        %v2462 = vpack.c.b16 %v2436, %v2434
        %v2463 = vpack.c.b16 %v2437, %v2435
        %v2464 = vpack.c.b16 %v2440, %v2438
        %v2465 = vpack.c.b16 %v2441, %v2439
        %v2466 = vpack.c.b16 %v2444, %v2442
        %v2467 = vpack.c.b16 %v2445, %v2443
        %v2468 = vpack.c.b16 %v2448, %v2446
        %v2469 = vpack.c.b16 %v2449, %v2447
        %v2470 = vpack.c.b16 %v2452, %v2450
        %v2471 = vpack.c.b16 %v2453, %v2451
        %v2472 = vpack.c.b16 %v2456, %v2454
        %v2473 = vpack.c.b16 %v2457, %v2455
        %2490 = vmatprep.subr.bf16.mxu0 %v2473
        %2491 = vmatpush1.bf16.msra.mxu0 %v2472
        %2492 = vmatprep.subr.bf16.mxu0 %v2471
        %2493 = vmatpush1.bf16.msra.mxu0 %v2470
        %2494 = vmatprep.subr.bf16.mxu0 %v2469
        %2495 = vmatpush1.bf16.msra.mxu0 %v2468
        %2496 = vmatprep.subr.bf16.mxu0 %v2467
        %2497 = vmatpush1.bf16.msra.mxu0 %v2466
        %2498 = vmatprep.subr.bf16.mxu0 %v2465
        %2499 = vmatpush1.bf16.msra.mxu0 %v2464
        %2500 = vmatprep.subr.bf16.mxu0 %v2463
        %2501 = vmatpush1.bf16.msra.mxu0 %v2462
        %2502 = vmatprep.subr.bf16.mxu0 %v2461
        %2503 = vmatpush1.bf16.msra.mxu0 %v2460
        %2504 = vmatprep.subr.bf16.mxu0 %v2459
        %2505 = vmatpush1.bf16.msra.mxu0 %v2458
        %2506 = vmatprep.subr.bf16.mxu0 0
        %2507 = vmatpush2.bf16.msra.mxu0 0
        %2508 = vmatprep.subr.bf16.mxu0 0
        %2509 = vmatpush2.bf16.msra.mxu0 0
        %2510 = vmatprep.subr.bf16.mxu0 0
        %2511 = vmatpush2.bf16.msra.mxu0 0
        %2512 = vmatprep.subr.bf16.mxu0 0
        %2513 = vmatpush2.bf16.msra.mxu0 0
        %2514 = vmatprep.subr.bf16.mxu0 0
        %2515 = vmatpush2.bf16.msra.mxu0 0
        %2516 = vmatprep.subr.bf16.mxu0 0
        %2517 = vmatpush2.bf16.msra.mxu0 0
        %2518 = vmatprep.subr.bf16.mxu0 0
        %2519 = vmatpush2.bf16.msra.mxu0 0
        %2520 = vmatprep.subr.bf16.mxu0 0
        %2521 = vmatpush2.bf16.msra.mxu0 0
        %2522 = vmatprep.mubr.bf16.mxu0 0
        %2523 = vmatmul.mubr.bf16.gmra.mxu0 %v2308
        %v2524 = vpop.f32.mrf.mxu0
        %v2525 = vadd.f32 %v2405, %v2524
        %v2526 = vpop.f32.mrf.mxu0
        %v2527 = vadd.f32 %v2409, %v2526
        %v2528 = vpop.f32.mrf.mxu0
        %v2529 = vadd.f32 %v2405, %v2528
        %v2530 = vpop.f32.mrf.mxu0
        %v2531 = vadd.f32 %v2409, %v2530
        %2532 = vdwg.mxu0
        %v2533 = vpack.c.bf16 %v2531, %v2527
        %vm2534 = vcmask 261120
        %v2536 = vsel %vm2534, %v2396, 0
        %v2539 = vsel %vm2534, %v2399, 0
        %v2542 = vsel %vm2534, %v2525, 0
        %v2545 = vsel %vm2534, %v2529, 0
        %2547 = vmatprep.subr.mxu0 0.0
        %2548 = vmatpush1.xpose.msra.mxu0 0.0
        %2549 = vmatprep.subr.mxu0 0.0
        %2550 = vmatpush1.xpose.msra.mxu0 0.0
        %2551 = vmatprep.subr.mxu0 0.0
        %2552 = vmatpush1.xpose.msra.mxu0 0.0
        %2553 = vmatprep.subr.mxu0 0.0
        %2554 = vmatpush1.xpose.msra.mxu0 0.0
        %2555 = vmatprep.subr.mxu0 0.0
        %2556 = vmatpush1.xpose.msra.mxu0 0.0
        %2557 = vmatprep.subr.mxu0 0.0
        %2558 = vmatpush1.xpose.msra.mxu0 0.0
        %2559 = vmatprep.subr.mxu0 0.0
        %2560 = vmatpush1.xpose.msra.mxu0 0.0
        %2561 = vmatprep.subr.mxu0 0.0
        %2562 = vmatpush1.xpose.msra.mxu0 0.0
        %2563 = vmatprep.subr.mxu0 0.0
        %2564 = vmatpush1.xpose.msra.mxu0 0.0
        %2565 = vmatprep.subr.mxu0 0.0
        %2566 = vmatpush1.xpose.msra.mxu0 0.0
        %2567 = vmatprep.subr.mxu0 0.0
        %2568 = vmatpush1.xpose.msra.mxu0 0.0
        %2569 = vmatprep.subr.mxu0 0.0
        %2570 = vmatpush1.xpose.msra.mxu0 0.0
        %2571 = vmatprep.subr.mxu0 0.0
        %2572 = vmatpush1.xpose.msra.mxu0 0.0
        %2573 = vmatprep.subr.mxu0 0.0
        %2574 = vmatpush1.xpose.msra.mxu0 0.0
        %2575 = vmatprep.subr.mxu0 0.0
        %2576 = vmatpush1.xpose.msra.mxu0 %v2545
        %2577 = vmatprep.subr.mxu0 0.0
        %2578 = vmatpush1.xpose.msra.mxu0 %v2542
        %2579 = vmatprep.subr.mxu0 0.0
        %2580 = vmatpush2.xpose.msra.mxu0 0.0
        %2581 = vmatprep.subr.mxu0 0.0
        %2582 = vmatpush2.xpose.msra.mxu0 0.0
        %2583 = vmatprep.subr.mxu0 0.0
        %2584 = vmatpush2.xpose.msra.mxu0 0.0
        %2585 = vmatprep.subr.mxu0 0.0
        %2586 = vmatpush2.xpose.msra.mxu0 0.0
        %2587 = vmatprep.subr.mxu0 0.0
        %2588 = vmatpush2.xpose.msra.mxu0 0.0
        %2589 = vmatprep.subr.mxu0 0.0
        %2590 = vmatpush2.xpose.msra.mxu0 0.0
        %2591 = vmatprep.subr.mxu0 0.0
        %2592 = vmatpush2.xpose.msra.mxu0 0.0
        %2593 = vmatprep.subr.mxu0 0.0
        %2594 = vmatpush2.xpose.msra.mxu0 0.0
        %2595 = vmatprep.subr.mxu0 0.0
        %2596 = vmatpush2.xpose.msra.mxu0 0.0
        %2597 = vmatprep.subr.mxu0 0.0
        %2598 = vmatpush2.xpose.msra.mxu0 0.0
        %2599 = vmatprep.subr.mxu0 0.0
        %2600 = vmatpush2.xpose.msra.mxu0 0.0
        %2601 = vmatprep.subr.mxu0 0.0
        %2602 = vmatpush2.xpose.msra.mxu0 0.0
        %2603 = vmatprep.subr.mxu0 0.0
        %2604 = vmatpush2.xpose.msra.mxu0 0.0
        %2605 = vmatprep.subr.mxu0 0.0
        %2606 = vmatpush2.xpose.msra.mxu0 0.0
        %2607 = vmatprep.subr.mxu0 0.0
        %2608 = vmatpush2.xpose.msra.mxu0 0.0
        %2609 = vmatprep.subr.mxu0 0.0
        %2610 = vmatpush2.xpose.msra.mxu0 0.0
        %2611 = vmatprep.mubr.f32.mxu0 0.0
        %2612 = vmatmul.mubr.f32.gmra.mxu0 %v2536
        %v2613 = vpop.f32.mrf.mxu0
        %v2614 = vadd.f32 0.0, %v2613
        %v2615 = vpop.f32.mrf.mxu0
        %2616 = vmatprep.mubr.f32.mxu0 0.0
        %2617 = vmatmul.mubr.f32.gmra.mxu0 %v2539
        %v2618 = vpop.f32.mrf.mxu0
        %v2619 = vadd.f32 0.0, %v2618
        %v2620 = vpop.f32.mrf.mxu0
        %2621 = vdwg.mxu0
        %vm2622 = vcmask 130048
        %v2623 = vsel %vm2622, %v2614, -inf
        %2624 = vmax.xlane.f32.xlu0 %v2623
        %v2625 = vpop.xlane.xlu0 %2624
        %v2626 = vsel %vm2622, %v2619, -inf
        %2627 = vmax.xlane.f32.xlu0 %v2626
        %v2628 = vpop.xlane.xlu0 %2627
        %v2629 = vsub.f32 %v2614, %v2625
        %v2630 = vsub.f32 %v2619, %v2628
        %v2631 = vmul.f32 %v2629, 1.442695
        %v2632 = vpow.pop %v2631
        %v2633 = vmul.f32 %v2630, 1.442695
        %v2634 = vpow.pop %v2633
        %v2635 = vsel %vm2622, %v2632, 0.0
        %2636 = vadd.xlane.f32.xlu0 %v2635
        %v2637 = vpop.xlane.xlu0 %2636
        %v2638 = vsel %vm2622, %v2634, 0.0
        %2639 = vadd.xlane.f32.xlu0 %v2638
        %v2640 = vpop.xlane.xlu0 %2639
        %v2641 = vrcp.pop %v2637
        %v2642 = vrcp.pop %v2640
        %v2643 = vmul.f32 %v2632, %v2641
        %v2644 = vmul.f32 %v2634, %v2642
        %v2645 = vpack.c.bf16 %v2644, %v2643
        %v2647 = vsel %vm2622, %v2645, 0
        %2649 = vmatprep.subr.bf16.mxu0 0
        %2650 = vmatpush1.bf16.msra.mxu0 0
        %2651 = vmatprep.subr.bf16.mxu0 0
        %2652 = vmatpush1.bf16.msra.mxu0 0
        %2653 = vmatprep.subr.bf16.mxu0 0
        %2654 = vmatpush1.bf16.msra.mxu0 0
        %2655 = vmatprep.subr.bf16.mxu0 0
        %2656 = vmatpush1.bf16.msra.mxu0 0
        %2657 = vmatprep.subr.bf16.mxu0 0
        %2658 = vmatpush1.bf16.msra.mxu0 0
        %2659 = vmatprep.subr.bf16.mxu0 0
        %2660 = vmatpush1.bf16.msra.mxu0 0
        %2661 = vmatprep.subr.bf16.mxu0 0
        %2662 = vmatpush1.bf16.msra.mxu0 0
        %2663 = vmatprep.subr.bf16.mxu0 0
        %2664 = vmatpush1.bf16.msra.mxu0 %v2533
        %2665 = vmatprep.subr.bf16.mxu0 0
        %2666 = vmatpush2.bf16.msra.mxu0 0
        %2667 = vmatprep.subr.bf16.mxu0 0
        %2668 = vmatpush2.bf16.msra.mxu0 0
        %2669 = vmatprep.subr.bf16.mxu0 0
        %2670 = vmatpush2.bf16.msra.mxu0 0
        %2671 = vmatprep.subr.bf16.mxu0 0
        %2672 = vmatpush2.bf16.msra.mxu0 0
        %2673 = vmatprep.subr.bf16.mxu0 0
        %2674 = vmatpush2.bf16.msra.mxu0 0
        %2675 = vmatprep.subr.bf16.mxu0 0
        %2676 = vmatpush2.bf16.msra.mxu0 0
        %2677 = vmatprep.subr.bf16.mxu0 0
        %2678 = vmatpush2.bf16.msra.mxu0 0
        %2679 = vmatprep.subr.bf16.mxu0 0
        %2680 = vmatpush2.bf16.msra.mxu0 0
        %2681 = vmatprep.mubr.bf16.mxu0 0
        %2682 = vmatmul.mubr.bf16.gmra.mxu0 %v2647
        %v2683 = vpop.f32.mrf.mxu0
        %v2684 = vadd.f32 0.0, %v2683
        %v2685 = vpop.f32.mrf.mxu0
        %v2686 = vpop.f32.mrf.mxu0
        %v2687 = vadd.f32 0.0, %v2686
        %v2688 = vpop.f32.mrf.mxu0
        %2689 = vdwg.mxu0
        %2690 = vrot.lane.b32.xlu0 %v2396, 96
        %v2691 = vpop.permute.xlu0 %2690
        %2692 = vrot.lane.b32.xlu0 %v2399, 96
        %v2693 = vpop.permute.xlu0 %2692
        %2694 = vrot.lane.b32.xlu0 %v2525, 96
        %v2695 = vpop.permute.xlu0 %2694
        %2696 = vrot.lane.b32.xlu0 %v2529, 96
        %v2697 = vpop.permute.xlu0 %2696
        %v2698 = vsel %vm2534, %v2691, 0
        %v2700 = vsel %vm2534, %v2693, 0
        %v2702 = vsel %vm2534, %v2695, 0
        %v2704 = vsel %vm2534, %v2697, 0
        %2706 = vmatprep.subr.mxu0 0.0
        %2707 = vmatpush1.xpose.msra.mxu0 0.0
        %2708 = vmatprep.subr.mxu0 0.0
        %2709 = vmatpush1.xpose.msra.mxu0 0.0
        %2710 = vmatprep.subr.mxu0 0.0
        %2711 = vmatpush1.xpose.msra.mxu0 0.0
        %2712 = vmatprep.subr.mxu0 0.0
        %2713 = vmatpush1.xpose.msra.mxu0 0.0
        %2714 = vmatprep.subr.mxu0 0.0
        %2715 = vmatpush1.xpose.msra.mxu0 0.0
        %2716 = vmatprep.subr.mxu0 0.0
        %2717 = vmatpush1.xpose.msra.mxu0 0.0
        %2718 = vmatprep.subr.mxu0 0.0
        %2719 = vmatpush1.xpose.msra.mxu0 0.0
        %2720 = vmatprep.subr.mxu0 0.0
        %2721 = vmatpush1.xpose.msra.mxu0 0.0
        %2722 = vmatprep.subr.mxu0 0.0
        %2723 = vmatpush1.xpose.msra.mxu0 0.0
        %2724 = vmatprep.subr.mxu0 0.0
        %2725 = vmatpush1.xpose.msra.mxu0 0.0
        %2726 = vmatprep.subr.mxu0 0.0
        %2727 = vmatpush1.xpose.msra.mxu0 0.0
        %2728 = vmatprep.subr.mxu0 0.0
        %2729 = vmatpush1.xpose.msra.mxu0 0.0
        %2730 = vmatprep.subr.mxu0 0.0
        %2731 = vmatpush1.xpose.msra.mxu0 0.0
        %2732 = vmatprep.subr.mxu0 0.0
        %2733 = vmatpush1.xpose.msra.mxu0 0.0
        %2734 = vmatprep.subr.mxu0 0.0
        %2735 = vmatpush1.xpose.msra.mxu0 %v2704
        %2736 = vmatprep.subr.mxu0 0.0
        %2737 = vmatpush1.xpose.msra.mxu0 %v2702
        %2738 = vmatprep.subr.mxu0 0.0
        %2739 = vmatpush2.xpose.msra.mxu0 0.0
        %2740 = vmatprep.subr.mxu0 0.0
        %2741 = vmatpush2.xpose.msra.mxu0 0.0
        %2742 = vmatprep.subr.mxu0 0.0
        %2743 = vmatpush2.xpose.msra.mxu0 0.0
        %2744 = vmatprep.subr.mxu0 0.0
        %2745 = vmatpush2.xpose.msra.mxu0 0.0
        %2746 = vmatprep.subr.mxu0 0.0
        %2747 = vmatpush2.xpose.msra.mxu0 0.0
        %2748 = vmatprep.subr.mxu0 0.0
        %2749 = vmatpush2.xpose.msra.mxu0 0.0
        %2750 = vmatprep.subr.mxu0 0.0
        %2751 = vmatpush2.xpose.msra.mxu0 0.0
        %2752 = vmatprep.subr.mxu0 0.0
        %2753 = vmatpush2.xpose.msra.mxu0 0.0
        %2754 = vmatprep.subr.mxu0 0.0
        %2755 = vmatpush2.xpose.msra.mxu0 0.0
        %2756 = vmatprep.subr.mxu0 0.0
        %2757 = vmatpush2.xpose.msra.mxu0 0.0
        %2758 = vmatprep.subr.mxu0 0.0
        %2759 = vmatpush2.xpose.msra.mxu0 0.0
        %2760 = vmatprep.subr.mxu0 0.0
        %2761 = vmatpush2.xpose.msra.mxu0 0.0
        %2762 = vmatprep.subr.mxu0 0.0
        %2763 = vmatpush2.xpose.msra.mxu0 0.0
        %2764 = vmatprep.subr.mxu0 0.0
        %2765 = vmatpush2.xpose.msra.mxu0 0.0
        %2766 = vmatprep.subr.mxu0 0.0
        %2767 = vmatpush2.xpose.msra.mxu0 0.0
        %2768 = vmatprep.subr.mxu0 0.0
        %2769 = vmatpush2.xpose.msra.mxu0 0.0
        %2770 = vmatprep.mubr.f32.mxu0 0.0
        %2771 = vmatmul.mubr.f32.gmra.mxu0 %v2698
        %v2772 = vpop.f32.mrf.mxu0
        %v2773 = vadd.f32 0.0, %v2772
        %v2774 = vpop.f32.mrf.mxu0
        %2775 = vmatprep.mubr.f32.mxu0 0.0
        %2776 = vmatmul.mubr.f32.gmra.mxu0 %v2700
        %v2777 = vpop.f32.mrf.mxu0
        %v2778 = vadd.f32 0.0, %v2777
        %v2779 = vpop.f32.mrf.mxu0
        %2780 = vdwg.mxu0
        %v2781 = vsel %vm2622, %v2773, -inf
        %2782 = vmax.xlane.f32.xlu0 %v2781
        %v2783 = vpop.xlane.xlu0 %2782
        %v2784 = vsel %vm2622, %v2778, -inf
        %2785 = vmax.xlane.f32.xlu0 %v2784
        %v2786 = vpop.xlane.xlu0 %2785
        %v2787 = vsub.f32 %v2773, %v2783
        %v2788 = vsub.f32 %v2778, %v2786
        %v2789 = vmul.f32 %v2787, 1.442695
        %v2790 = vpow.pop %v2789
        %v2791 = vmul.f32 %v2788, 1.442695
        %v2792 = vpow.pop %v2791
        %v2793 = vsel %vm2622, %v2790, 0.0
        %2794 = vadd.xlane.f32.xlu0 %v2793
        %v2795 = vpop.xlane.xlu0 %2794
        %v2796 = vsel %vm2622, %v2792, 0.0
        %2797 = vadd.xlane.f32.xlu0 %v2796
        %v2798 = vpop.xlane.xlu0 %2797
        %v2799 = vrcp.pop %v2795
        %v2800 = vrcp.pop %v2798
        %v2801 = vmul.f32 %v2790, %v2799
        %v2802 = vmul.f32 %v2792, %v2800
        %v2803 = vpack.c.bf16 %v2802, %v2801
        %2805 = vrot.lane.b32.xlu0 %v2533, 96
        %v2806 = vpop.permute.xlu0 %2805
        %v2809 = vsel %vm2622, %v2803, 0
        %2811 = vmatprep.subr.bf16.mxu0 0
        %2812 = vmatpush1.bf16.msra.mxu0 0
        %2813 = vmatprep.subr.bf16.mxu0 0
        %2814 = vmatpush1.bf16.msra.mxu0 0
        %2815 = vmatprep.subr.bf16.mxu0 0
        %2816 = vmatpush1.bf16.msra.mxu0 0
        %2817 = vmatprep.subr.bf16.mxu0 0
        %2818 = vmatpush1.bf16.msra.mxu0 0
        %2819 = vmatprep.subr.bf16.mxu0 0
        %2820 = vmatpush1.bf16.msra.mxu0 0
        %2821 = vmatprep.subr.bf16.mxu0 0
        %2822 = vmatpush1.bf16.msra.mxu0 0
        %2823 = vmatprep.subr.bf16.mxu0 0
        %2824 = vmatpush1.bf16.msra.mxu0 0
        %2825 = vmatprep.subr.bf16.mxu0 0
        %2826 = vmatpush1.bf16.msra.mxu0 %v2806
        %2827 = vmatprep.subr.bf16.mxu0 0
        %2828 = vmatpush2.bf16.msra.mxu0 0
        %2829 = vmatprep.subr.bf16.mxu0 0
        %2830 = vmatpush2.bf16.msra.mxu0 0
        %2831 = vmatprep.subr.bf16.mxu0 0
        %2832 = vmatpush2.bf16.msra.mxu0 0
        %2833 = vmatprep.subr.bf16.mxu0 0
        %2834 = vmatpush2.bf16.msra.mxu0 0
        %2835 = vmatprep.subr.bf16.mxu0 0
        %2836 = vmatpush2.bf16.msra.mxu0 0
        %2837 = vmatprep.subr.bf16.mxu0 0
        %2838 = vmatpush2.bf16.msra.mxu0 0
        %2839 = vmatprep.subr.bf16.mxu0 0
        %2840 = vmatpush2.bf16.msra.mxu0 0
        %2841 = vmatprep.subr.bf16.mxu0 0
        %2842 = vmatpush2.bf16.msra.mxu0 0
        %2843 = vmatprep.mubr.bf16.mxu0 0
        %2844 = vmatmul.mubr.bf16.gmra.mxu0 %v2809
        %v2845 = vpop.f32.mrf.mxu0
        %v2846 = vadd.f32 0.0, %v2845
        %v2847 = vpop.f32.mrf.mxu0
        %v2848 = vpop.f32.mrf.mxu0
        %v2849 = vadd.f32 0.0, %v2848
        %v2850 = vpop.f32.mrf.mxu0
        %2851 = vdwg.mxu0
        %2852 = vrot.lane.b32.xlu0 %v2396, 64
        %v2853 = vpop.permute.xlu0 %2852
        %2854 = vrot.lane.b32.xlu0 %v2399, 64
        %v2855 = vpop.permute.xlu0 %2854
        %2856 = vrot.lane.b32.xlu0 %v2525, 64
        %v2857 = vpop.permute.xlu0 %2856
        %2858 = vrot.lane.b32.xlu0 %v2529, 64
        %v2859 = vpop.permute.xlu0 %2858
        %v2860 = vsel %vm2534, %v2853, 0
        %v2862 = vsel %vm2534, %v2855, 0
        %v2864 = vsel %vm2534, %v2857, 0
        %v2866 = vsel %vm2534, %v2859, 0
        %2868 = vmatprep.subr.mxu0 0.0
        %2869 = vmatpush1.xpose.msra.mxu0 0.0
        %2870 = vmatprep.subr.mxu0 0.0
        %2871 = vmatpush1.xpose.msra.mxu0 0.0
        %2872 = vmatprep.subr.mxu0 0.0
        %2873 = vmatpush1.xpose.msra.mxu0 0.0
        %2874 = vmatprep.subr.mxu0 0.0
        %2875 = vmatpush1.xpose.msra.mxu0 0.0
        %2876 = vmatprep.subr.mxu0 0.0
        %2877 = vmatpush1.xpose.msra.mxu0 0.0
        %2878 = vmatprep.subr.mxu0 0.0
        %2879 = vmatpush1.xpose.msra.mxu0 0.0
        %2880 = vmatprep.subr.mxu0 0.0
        %2881 = vmatpush1.xpose.msra.mxu0 0.0
        %2882 = vmatprep.subr.mxu0 0.0
        %2883 = vmatpush1.xpose.msra.mxu0 0.0
        %2884 = vmatprep.subr.mxu0 0.0
        %2885 = vmatpush1.xpose.msra.mxu0 0.0
        %2886 = vmatprep.subr.mxu0 0.0
        %2887 = vmatpush1.xpose.msra.mxu0 0.0
        %2888 = vmatprep.subr.mxu0 0.0
        %2889 = vmatpush1.xpose.msra.mxu0 0.0
        %2890 = vmatprep.subr.mxu0 0.0
        %2891 = vmatpush1.xpose.msra.mxu0 0.0
        %2892 = vmatprep.subr.mxu0 0.0
        %2893 = vmatpush1.xpose.msra.mxu0 0.0
        %2894 = vmatprep.subr.mxu0 0.0
        %2895 = vmatpush1.xpose.msra.mxu0 0.0
        %2896 = vmatprep.subr.mxu0 0.0
        %2897 = vmatpush1.xpose.msra.mxu0 %v2866
        %2898 = vmatprep.subr.mxu0 0.0
        %2899 = vmatpush1.xpose.msra.mxu0 %v2864
        %2900 = vmatprep.subr.mxu0 0.0
        %2901 = vmatpush2.xpose.msra.mxu0 0.0
        %2902 = vmatprep.subr.mxu0 0.0
        %2903 = vmatpush2.xpose.msra.mxu0 0.0
        %2904 = vmatprep.subr.mxu0 0.0
        %2905 = vmatpush2.xpose.msra.mxu0 0.0
        %2906 = vmatprep.subr.mxu0 0.0
        %2907 = vmatpush2.xpose.msra.mxu0 0.0
        %2908 = vmatprep.subr.mxu0 0.0
        %2909 = vmatpush2.xpose.msra.mxu0 0.0
        %2910 = vmatprep.subr.mxu0 0.0
        %2911 = vmatpush2.xpose.msra.mxu0 0.0
        %2912 = vmatprep.subr.mxu0 0.0
        %2913 = vmatpush2.xpose.msra.mxu0 0.0
        %2914 = vmatprep.subr.mxu0 0.0
        %2915 = vmatpush2.xpose.msra.mxu0 0.0
        %2916 = vmatprep.subr.mxu0 0.0
        %2917 = vmatpush2.xpose.msra.mxu0 0.0
        %2918 = vmatprep.subr.mxu0 0.0
        %2919 = vmatpush2.xpose.msra.mxu0 0.0
        %2920 = vmatprep.subr.mxu0 0.0
        %2921 = vmatpush2.xpose.msra.mxu0 0.0
        %2922 = vmatprep.subr.mxu0 0.0
        %2923 = vmatpush2.xpose.msra.mxu0 0.0
        %2924 = vmatprep.subr.mxu0 0.0
        %2925 = vmatpush2.xpose.msra.mxu0 0.0
        %2926 = vmatprep.subr.mxu0 0.0
        %2927 = vmatpush2.xpose.msra.mxu0 0.0
        %2928 = vmatprep.subr.mxu0 0.0
        %2929 = vmatpush2.xpose.msra.mxu0 0.0
        %2930 = vmatprep.subr.mxu0 0.0
        %2931 = vmatpush2.xpose.msra.mxu0 0.0
        %2932 = vmatprep.mubr.f32.mxu0 0.0
        %2933 = vmatmul.mubr.f32.gmra.mxu0 %v2860
        %v2934 = vpop.f32.mrf.mxu0
        %v2935 = vadd.f32 0.0, %v2934
        %v2936 = vpop.f32.mrf.mxu0
        %2937 = vmatprep.mubr.f32.mxu0 0.0
        %2938 = vmatmul.mubr.f32.gmra.mxu0 %v2862
        %v2939 = vpop.f32.mrf.mxu0
        %v2940 = vadd.f32 0.0, %v2939
        %v2941 = vpop.f32.mrf.mxu0
        %2942 = vdwg.mxu0
        %v2943 = vsel %vm2622, %v2935, -inf
        %2944 = vmax.xlane.f32.xlu0 %v2943
        %v2945 = vpop.xlane.xlu0 %2944
        %v2946 = vsel %vm2622, %v2940, -inf
        %2947 = vmax.xlane.f32.xlu0 %v2946
        %v2948 = vpop.xlane.xlu0 %2947
        %v2949 = vsub.f32 %v2935, %v2945
        %v2950 = vsub.f32 %v2940, %v2948
        %v2951 = vmul.f32 %v2949, 1.442695
        %v2952 = vpow.pop %v2951
        %v2953 = vmul.f32 %v2950, 1.442695
        %v2954 = vpow.pop %v2953
        %v2955 = vsel %vm2622, %v2952, 0.0
        %2956 = vadd.xlane.f32.xlu0 %v2955
        %v2957 = vpop.xlane.xlu0 %2956
        %v2958 = vsel %vm2622, %v2954, 0.0
        %2959 = vadd.xlane.f32.xlu0 %v2958
        %v2960 = vpop.xlane.xlu0 %2959
        %v2961 = vrcp.pop %v2957
        %v2962 = vrcp.pop %v2960
        %v2963 = vmul.f32 %v2952, %v2961
        %v2964 = vmul.f32 %v2954, %v2962
        %v2965 = vpack.c.bf16 %v2964, %v2963
        %2966 = vrot.lane.b32.xlu0 %v2533, 64
        %v2967 = vpop.permute.xlu0 %2966
        %v2970 = vsel %vm2622, %v2965, 0
        %2972 = vmatprep.subr.bf16.mxu0 0
        %2973 = vmatpush1.bf16.msra.mxu0 0
        %2974 = vmatprep.subr.bf16.mxu0 0
        %2975 = vmatpush1.bf16.msra.mxu0 0
        %2976 = vmatprep.subr.bf16.mxu0 0
        %2977 = vmatpush1.bf16.msra.mxu0 0
        %2978 = vmatprep.subr.bf16.mxu0 0
        %2979 = vmatpush1.bf16.msra.mxu0 0
        %2980 = vmatprep.subr.bf16.mxu0 0
        %2981 = vmatpush1.bf16.msra.mxu0 0
        %2982 = vmatprep.subr.bf16.mxu0 0
        %2983 = vmatpush1.bf16.msra.mxu0 0
        %2984 = vmatprep.subr.bf16.mxu0 0
        %2985 = vmatpush1.bf16.msra.mxu0 0
        %2986 = vmatprep.subr.bf16.mxu0 0
        %2987 = vmatpush1.bf16.msra.mxu0 %v2967
        %2988 = vmatprep.subr.bf16.mxu0 0
        %2989 = vmatpush2.bf16.msra.mxu0 0
        %2990 = vmatprep.subr.bf16.mxu0 0
        %2991 = vmatpush2.bf16.msra.mxu0 0
        %2992 = vmatprep.subr.bf16.mxu0 0
        %2993 = vmatpush2.bf16.msra.mxu0 0
        %2994 = vmatprep.subr.bf16.mxu0 0
        %2995 = vmatpush2.bf16.msra.mxu0 0
        %2996 = vmatprep.subr.bf16.mxu0 0
        %2997 = vmatpush2.bf16.msra.mxu0 0
        %2998 = vmatprep.subr.bf16.mxu0 0
        %2999 = vmatpush2.bf16.msra.mxu0 0
        %3000 = vmatprep.subr.bf16.mxu0 0
        %3001 = vmatpush2.bf16.msra.mxu0 0
        %3002 = vmatprep.subr.bf16.mxu0 0
        %3003 = vmatpush2.bf16.msra.mxu0 0
        %3004 = vmatprep.mubr.bf16.mxu0 0
        %3005 = vmatmul.mubr.bf16.gmra.mxu0 %v2970
        %v3006 = vpop.f32.mrf.mxu0
        %v3007 = vadd.f32 0.0, %v3006
        %v3008 = vpop.f32.mrf.mxu0
        %v3009 = vpop.f32.mrf.mxu0
        %v3010 = vadd.f32 0.0, %v3009
        %v3011 = vpop.f32.mrf.mxu0
        %3012 = vdwg.mxu0
        %3013 = vrot.lane.b32.xlu0 %v2396, 32
        %v3014 = vpop.permute.xlu0 %3013
        %3015 = vrot.lane.b32.xlu0 %v2399, 32
        %v3016 = vpop.permute.xlu0 %3015
        %3017 = vrot.lane.b32.xlu0 %v2525, 32
        %v3018 = vpop.permute.xlu0 %3017
        %3019 = vrot.lane.b32.xlu0 %v2529, 32
        %v3020 = vpop.permute.xlu0 %3019
        %v3021 = vsel %vm2534, %v3014, 0
        %v3023 = vsel %vm2534, %v3016, 0
        %v3025 = vsel %vm2534, %v3018, 0
        %v3027 = vsel %vm2534, %v3020, 0
        %3029 = vmatprep.subr.mxu0 0.0
        %3030 = vmatpush1.xpose.msra.mxu0 0.0
        %3031 = vmatprep.subr.mxu0 0.0
        %3032 = vmatpush1.xpose.msra.mxu0 0.0
        %3033 = vmatprep.subr.mxu0 0.0
        %3034 = vmatpush1.xpose.msra.mxu0 0.0
        %3035 = vmatprep.subr.mxu0 0.0
        %3036 = vmatpush1.xpose.msra.mxu0 0.0
        %3037 = vmatprep.subr.mxu0 0.0
        %3038 = vmatpush1.xpose.msra.mxu0 0.0
        %3039 = vmatprep.subr.mxu0 0.0
        %3040 = vmatpush1.xpose.msra.mxu0 0.0
        %3041 = vmatprep.subr.mxu0 0.0
        %3042 = vmatpush1.xpose.msra.mxu0 0.0
        %3043 = vmatprep.subr.mxu0 0.0
        %3044 = vmatpush1.xpose.msra.mxu0 0.0
        %3045 = vmatprep.subr.mxu0 0.0
        %3046 = vmatpush1.xpose.msra.mxu0 0.0
        %3047 = vmatprep.subr.mxu0 0.0
        %3048 = vmatpush1.xpose.msra.mxu0 0.0
        %3049 = vmatprep.subr.mxu0 0.0
        %3050 = vmatpush1.xpose.msra.mxu0 0.0
        %3051 = vmatprep.subr.mxu0 0.0
        %3052 = vmatpush1.xpose.msra.mxu0 0.0
        %3053 = vmatprep.subr.mxu0 0.0
        %3054 = vmatpush1.xpose.msra.mxu0 0.0
        %3055 = vmatprep.subr.mxu0 0.0
        %3056 = vmatpush1.xpose.msra.mxu0 0.0
        %3057 = vmatprep.subr.mxu0 0.0
        %3058 = vmatpush1.xpose.msra.mxu0 %v3027
        %3059 = vmatprep.subr.mxu0 0.0
        %3060 = vmatpush1.xpose.msra.mxu0 %v3025
        %3061 = vmatprep.subr.mxu0 0.0
        %3062 = vmatpush2.xpose.msra.mxu0 0.0
        %3063 = vmatprep.subr.mxu0 0.0
        %3064 = vmatpush2.xpose.msra.mxu0 0.0
        %3065 = vmatprep.subr.mxu0 0.0
        %3066 = vmatpush2.xpose.msra.mxu0 0.0
        %3067 = vmatprep.subr.mxu0 0.0
        %3068 = vmatpush2.xpose.msra.mxu0 0.0
        %3069 = vmatprep.subr.mxu0 0.0
        %3070 = vmatpush2.xpose.msra.mxu0 0.0
        %3071 = vmatprep.subr.mxu0 0.0
        %3072 = vmatpush2.xpose.msra.mxu0 0.0
        %3073 = vmatprep.subr.mxu0 0.0
        %3074 = vmatpush2.xpose.msra.mxu0 0.0
        %3075 = vmatprep.subr.mxu0 0.0
        %3076 = vmatpush2.xpose.msra.mxu0 0.0
        %3077 = vmatprep.subr.mxu0 0.0
        %3078 = vmatpush2.xpose.msra.mxu0 0.0
        %3079 = vmatprep.subr.mxu0 0.0
        %3080 = vmatpush2.xpose.msra.mxu0 0.0
        %3081 = vmatprep.subr.mxu0 0.0
        %3082 = vmatpush2.xpose.msra.mxu0 0.0
        %3083 = vmatprep.subr.mxu0 0.0
        %3084 = vmatpush2.xpose.msra.mxu0 0.0
        %3085 = vmatprep.subr.mxu0 0.0
        %3086 = vmatpush2.xpose.msra.mxu0 0.0
        %3087 = vmatprep.subr.mxu0 0.0
        %3088 = vmatpush2.xpose.msra.mxu0 0.0
        %3089 = vmatprep.subr.mxu0 0.0
        %3090 = vmatpush2.xpose.msra.mxu0 0.0
        %3091 = vmatprep.subr.mxu0 0.0
        %3092 = vmatpush2.xpose.msra.mxu0 0.0
        %3093 = vmatprep.mubr.f32.mxu0 0.0
        %3094 = vmatmul.mubr.f32.gmra.mxu0 %v3021
        %v3095 = vpop.f32.mrf.mxu0
        %v3096 = vadd.f32 0.0, %v3095
        %v3097 = vpop.f32.mrf.mxu0
        %3098 = vmatprep.mubr.f32.mxu0 0.0
        %3099 = vmatmul.mubr.f32.gmra.mxu0 %v3023
        %v3100 = vpop.f32.mrf.mxu0
        %v3101 = vadd.f32 0.0, %v3100
        %v3102 = vpop.f32.mrf.mxu0
        %3103 = vdwg.mxu0
        %v3104 = vsel %vm2622, %v3096, -inf
        %3105 = vmax.xlane.f32.xlu0 %v3104
        %v3106 = vpop.xlane.xlu0 %3105
        %v3107 = vsel %vm2622, %v3101, -inf
        %3108 = vmax.xlane.f32.xlu0 %v3107
        %v3109 = vpop.xlane.xlu0 %3108
        %v3110 = vsub.f32 %v3096, %v3106
        %v3111 = vsub.f32 %v3101, %v3109
        %v3112 = vmul.f32 %v3110, 1.442695
        %v3113 = vpow.pop %v3112
        %v3114 = vmul.f32 %v3111, 1.442695
        %v3115 = vpow.pop %v3114
        %v3116 = vsel %vm2622, %v3113, 0.0
        %3117 = vadd.xlane.f32.xlu0 %v3116
        %v3118 = vpop.xlane.xlu0 %3117
        %v3119 = vsel %vm2622, %v3115, 0.0
        %3120 = vadd.xlane.f32.xlu0 %v3119
        %v3121 = vpop.xlane.xlu0 %3120
        %v3122 = vrcp.pop %v3118
        %v3123 = vrcp.pop %v3121
        %v3124 = vmul.f32 %v3113, %v3122
        %v3125 = vmul.f32 %v3115, %v3123
        %v3126 = vpack.c.bf16 %v3125, %v3124
        %3127 = vrot.lane.b32.xlu0 %v2533, 32
        %v3128 = vpop.permute.xlu0 %3127
        %v3131 = vsel %vm2622, %v3126, 0
        %3133 = vmatprep.subr.bf16.mxu0 0
        %3134 = vmatpush1.bf16.msra.mxu0 0
        %3135 = vmatprep.subr.bf16.mxu0 0
        %3136 = vmatpush1.bf16.msra.mxu0 0
        %3137 = vmatprep.subr.bf16.mxu0 0
        %3138 = vmatpush1.bf16.msra.mxu0 0
        %3139 = vmatprep.subr.bf16.mxu0 0
        %3140 = vmatpush1.bf16.msra.mxu0 0
        %3141 = vmatprep.subr.bf16.mxu0 0
        %3142 = vmatpush1.bf16.msra.mxu0 0
        %3143 = vmatprep.subr.bf16.mxu0 0
        %3144 = vmatpush1.bf16.msra.mxu0 0
        %3145 = vmatprep.subr.bf16.mxu0 0
        %3146 = vmatpush1.bf16.msra.mxu0 0
        %3147 = vmatprep.subr.bf16.mxu0 0
        %3148 = vmatpush1.bf16.msra.mxu0 %v3128
        %3149 = vmatprep.subr.bf16.mxu0 0
        %3150 = vmatpush2.bf16.msra.mxu0 0
        %3151 = vmatprep.subr.bf16.mxu0 0
        %3152 = vmatpush2.bf16.msra.mxu0 0
        %3153 = vmatprep.subr.bf16.mxu0 0
        %3154 = vmatpush2.bf16.msra.mxu0 0
        %3155 = vmatprep.subr.bf16.mxu0 0
        %3156 = vmatpush2.bf16.msra.mxu0 0
        %3157 = vmatprep.subr.bf16.mxu0 0
        %3158 = vmatpush2.bf16.msra.mxu0 0
        %3159 = vmatprep.subr.bf16.mxu0 0
        %3160 = vmatpush2.bf16.msra.mxu0 0
        %3161 = vmatprep.subr.bf16.mxu0 0
        %3162 = vmatpush2.bf16.msra.mxu0 0
        %3163 = vmatprep.subr.bf16.mxu0 0
        %3164 = vmatpush2.bf16.msra.mxu0 0
        %3165 = vmatprep.mubr.bf16.mxu0 0
        %3166 = vmatmul.mubr.bf16.gmra.mxu0 %v3131
        %v3167 = vpop.f32.mrf.mxu0
        %v3168 = vadd.f32 0.0, %v3167
        %v3169 = vpop.f32.mrf.mxu0
        %v3170 = vpop.f32.mrf.mxu0
        %v3171 = vadd.f32 0.0, %v3170
        %v3172 = vpop.f32.mrf.mxu0
        %3173 = vdwg.mxu0
        %3176 = vrot.lane.b32.xlu0 %v2846, 32
        %v3177 = vpop.permute.xlu0 %3176
        %3178 = vrot.lane.b32.xlu0 %v2849, 32
        %v3179 = vpop.permute.xlu0 %3178
        %3184 = vrot.lane.b32.xlu0 %v3007, 64
        %v3185 = vpop.permute.xlu0 %3184
        %3186 = vrot.lane.b32.xlu0 %v3010, 64
        %v3187 = vpop.permute.xlu0 %3186
        %3192 = vrot.lane.b32.xlu0 %v3168, 96
        %v3193 = vpop.permute.xlu0 %3192
        %3194 = vrot.lane.b32.xlu0 %v3171, 96
        %v3195 = vpop.permute.xlu0 %3194
        %v3198 = vsel %vm2534, %v2684, %v3177
        %v3199 = vsel %vm2534, %v2687, %v3179
        %vm3200 = vcmask 523264
        %v3201 = vsel %vm3200, %v3198, %v3185
        %v3202 = vsel %vm3200, %v3199, %v3187
        %vm3203 = vcmask 785408
        %v3204 = vsel %vm3203, %v3201, %v3193
        %v3205 = vsel %vm3203, %v3202, %v3195
        %v3206 = vpack.c.bf16 %v3205, %v3204
        %v3207 = vlaneseq
        %v3208 = vshrl.u32 %v3207, 7
        %v3209 = vsub.s32 4, %v3208
        %v3210 = vrot.slane %v461, %v3209
        %v3227 = vunpack.c.l.b16 %v2292
        %v3228 = vunpack.c.l.b16 %v2293
        %v3229 = vunpack.c.l.b16 %v2294
        %v3230 = vunpack.c.l.b16 %v2295
        %v3231 = vunpack.c.l.b16 %v2296
        %v3232 = vunpack.c.l.b16 %v2297
        %v3233 = vunpack.c.l.b16 %v2298
        %v3234 = vunpack.c.l.b16 %v2299
        %v3235 = vunpack.c.l.b16 %v2300
        %v3236 = vunpack.c.l.b16 %v2301
        %v3237 = vunpack.c.l.b16 %v2302
        %v3238 = vunpack.c.l.b16 %v2303
        %v3239 = vunpack.c.l.b16 %v2304
        %v3240 = vunpack.c.l.b16 %v2305
        %v3241 = vunpack.c.l.b16 %v2306
        %v3242 = vunpack.c.l.b16 %v2307
        %v3243 = vpack.c.b16 %v3228, %v3227
        %v3244 = vpack.c.b16 %v3230, %v3229
        %v3245 = vpack.c.b16 %v3232, %v3231
        %v3246 = vpack.c.b16 %v3234, %v3233
        %v3247 = vpack.c.b16 %v3236, %v3235
        %v3248 = vpack.c.b16 %v3238, %v3237
        %v3249 = vpack.c.b16 %v3240, %v3239
        %v3250 = vpack.c.b16 %v3242, %v3241
        %3259 = vmatprep.subr.bf16.mxu0 0
        %3260 = vmatpush1.bf16.msra.mxu0 %v3250
        %3261 = vmatprep.subr.bf16.mxu0 0
        %3262 = vmatpush1.bf16.msra.mxu0 %v3249
        %3263 = vmatprep.subr.bf16.mxu0 0
        %3264 = vmatpush1.bf16.msra.mxu0 %v3248
        %3265 = vmatprep.subr.bf16.mxu0 0
        %3266 = vmatpush1.bf16.msra.mxu0 %v3247
        %3267 = vmatprep.subr.bf16.mxu0 0
        %3268 = vmatpush1.bf16.msra.mxu0 %v3246
        %3269 = vmatprep.subr.bf16.mxu0 0
        %3270 = vmatpush1.bf16.msra.mxu0 %v3245
        %3271 = vmatprep.subr.bf16.mxu0 0
        %3272 = vmatpush1.bf16.msra.mxu0 %v3244
        %3273 = vmatprep.subr.bf16.mxu0 0
        %3274 = vmatpush1.bf16.msra.mxu0 %v3243
        %3275 = vmatprep.subr.bf16.mxu0 0
        %3276 = vmatpush2.bf16.msra.mxu0 0
        %3277 = vmatprep.subr.bf16.mxu0 0
        %3278 = vmatpush2.bf16.msra.mxu0 0
        %3279 = vmatprep.subr.bf16.mxu0 0
        %3280 = vmatpush2.bf16.msra.mxu0 0
        %3281 = vmatprep.subr.bf16.mxu0 0
        %3282 = vmatpush2.bf16.msra.mxu0 0
        %3283 = vmatprep.subr.bf16.mxu0 0
        %3284 = vmatpush2.bf16.msra.mxu0 0
        %3285 = vmatprep.subr.bf16.mxu0 0
        %3286 = vmatpush2.bf16.msra.mxu0 0
        %3287 = vmatprep.subr.bf16.mxu0 0
        %3288 = vmatpush2.bf16.msra.mxu0 0
        %3289 = vmatprep.subr.bf16.mxu0 0
        %3290 = vmatpush2.bf16.msra.mxu0 0
        %3291 = vmatprep.mubr.bf16.mxu0 0
        %3292 = vmatmul.mubr.bf16.gmra.mxu0 %v3206
        %v3293 = vpop.f32.mrf.mxu0
        %v3294 = vadd.f32 %v3210, %v3293
        %v3295 = vpop.f32.mrf.mxu0
        %v3296 = vpop.f32.mrf.mxu0
        %v3297 = vadd.f32 %v3210, %v3296
        %v3298 = vpop.f32.mrf.mxu0
        %3299 = vdwg.mxu0
        %v3300 = vadd.f32 %v2256, %v3294
        %v3301 = vadd.f32 %v2257, %v3297
        %3302 = vadd.xlane.f32.xlu0 %v3300
        %v3303 = vpop.xlane.xlu0 %3302
        %3304 = vadd.xlane.f32.xlu0 %v3301
        %v3305 = vpop.xlane.xlu0 %3304
        %v3306 = vmul.f32 %v3303, %v2227
        %v3307 = vmul.f32 %v3305, %v2227
        %v3308 = vsub.f32 %v3300, %v3306
        %v3309 = vsub.f32 %v3301, %v3307
        %v3310 = vmul.f32 %v3308, %v3308
        %v3311 = vmul.f32 %v3309, %v3309
        %3312 = vadd.xlane.f32.xlu0 %v3310
        %v3313 = vpop.xlane.xlu0 %3312
        %3314 = vadd.xlane.f32.xlu0 %v3311
        %v3315 = vpop.xlane.xlu0 %3314
        %v3316 = vmul.f32 %v3313, %v2227
        %v3317 = vmul.f32 %v3315, %v2227
        %v3318 = vadd.f32 %v3316, 1e-05
        %v3319 = vadd.f32 %v3317, 1e-05
        %v3320 = vrsqrt.pop %v3318
        %v3321 = vrsqrt.pop %v3319
        %v3322 = vmul.f32 %v3308, %v3320
        %v3323 = vmul.f32 %v3309, %v3321
        %v3324 = vlaneseq
        %v3325 = vshrl.u32 %v3324, 7
        %v3326 = vsub.s32 5, %v3325
        %v3327 = vrot.slane %v461, %v3326
        %v3328 = vmul.f32 %v3322, %v3327
        %v3329 = vmul.f32 %v3323, %v3327
        %v3330 = vlaneseq
        %v3331 = vshrl.u32 %v3330, 7
        %v3332 = vsub.s32 6, %v3331
        %v3333 = vrot.slane %v461, %v3332
        %v3334 = vadd.f32 %v3328, %v3333
        %v3335 = vadd.f32 %v3329, %v3333
        %s3336 = scalar_lea.vmem [#allocation8], 128
        %v3337 = vld [vmem:[%s3336] sm:$0xf]
        %v3338 = vld [vmem:[%s3336 + $0x4] sm:$0xf]
        %v3339 = vld [vmem:[%s3336 + $0x8] sm:$0xf]
        %v3340 = vld [vmem:[%s3336 + $0xc] sm:$0xf]
        %v3341 = vld [vmem:[%s3336 + $0x10] sm:$0xf]
        %v3342 = vld [vmem:[%s3336 + $0x14] sm:$0xf]
        %v3343 = vld [vmem:[%s3336 + $0x18] sm:$0xf]
        %v3344 = vld [vmem:[%s3336 + $0x1c] sm:$0xf]
        %v3345 = vld [vmem:[%s3336 + $0x20] sm:$0xf]
        %v3346 = vld [vmem:[%s3336 + $0x24] sm:$0xf]
        %v3347 = vld [vmem:[%s3336 + $0x28] sm:$0xf]
        %v3348 = vld [vmem:[%s3336 + $0x2c] sm:$0xf]
        %v3349 = vld [vmem:[%s3336 + $0x30] sm:$0xf]
        %v3350 = vld [vmem:[%s3336 + $0x34] sm:$0xf]
        %v3351 = vld [vmem:[%s3336 + $0x38] sm:$0xf]
        %v3352 = vld [vmem:[%s3336 + $0x3c] sm:$0xf]
        %s3353 = scalar_lea.vmem [#allocation10], 128
        %v3354 = vld [vmem:[%s3353] sm:$0xff]
        %v3355 = vld [vmem:[%s3353 + $0x8] sm:$0xff]
        %v3356 = vld [vmem:[%s3353 + $0x10] sm:$0xff]
        %v3357 = vld [vmem:[%s3353 + $0x18] sm:$0xff]
        %v3358 = vld [vmem:[%s3353 + $0x20] sm:$0xff]
        %v3359 = vld [vmem:[%s3353 + $0x28] sm:$0xff]
        %v3360 = vld [vmem:[%s3353 + $0x30] sm:$0xff]
        %v3361 = vld [vmem:[%s3353 + $0x38] sm:$0xff]
        %v3362 = vld [vmem:[%s3353 + $0x40] sm:$0xff]
        %v3363 = vld [vmem:[%s3353 + $0x48] sm:$0xff]
        %v3364 = vld [vmem:[%s3353 + $0x50] sm:$0xff]
        %v3365 = vld [vmem:[%s3353 + $0x58] sm:$0xff]
        %v3366 = vld [vmem:[%s3353 + $0x60] sm:$0xff]
        %v3367 = vld [vmem:[%s3353 + $0x68] sm:$0xff]
        %v3368 = vld [vmem:[%s3353 + $0x70] sm:$0xff]
        %v3369 = vld [vmem:[%s3353 + $0x78] sm:$0xff]
        %s3370 = scalar_lea.vmem [#allocation8], 192
        %v3371 = vld [vmem:[%s3370] sm:$0xf]
        %v3372 = vld [vmem:[%s3370 + $0x4] sm:$0xf]
        %v3373 = vld [vmem:[%s3370 + $0x8] sm:$0xf]
        %v3374 = vld [vmem:[%s3370 + $0xc] sm:$0xf]
        %v3375 = vld [vmem:[%s3370 + $0x10] sm:$0xf]
        %v3376 = vld [vmem:[%s3370 + $0x14] sm:$0xf]
        %v3377 = vld [vmem:[%s3370 + $0x18] sm:$0xf]
        %v3378 = vld [vmem:[%s3370 + $0x1c] sm:$0xf]
        %v3379 = vld [vmem:[%s3370 + $0x20] sm:$0xf]
        %v3380 = vld [vmem:[%s3370 + $0x24] sm:$0xf]
        %v3381 = vld [vmem:[%s3370 + $0x28] sm:$0xf]
        %v3382 = vld [vmem:[%s3370 + $0x2c] sm:$0xf]
        %v3383 = vld [vmem:[%s3370 + $0x30] sm:$0xf]
        %v3384 = vld [vmem:[%s3370 + $0x34] sm:$0xf]
        %v3385 = vld [vmem:[%s3370 + $0x38] sm:$0xf]
        %v3386 = vld [vmem:[%s3370 + $0x3c] sm:$0xf]
        %v3387 = vpack.c.bf16 %v2258, %v2258
        %v3388 = vlaneseq
        %v3389 = vshrl.u32 %v3388, 7
        %v3390 = vsub.s32 7, %v3389
        %v3391 = vrot.slane %v461, %v3390
        %v3408 = vunpack.c.l.b16 %v3337
        %v3409 = vunpack.c.l.b16 %v3338
        %v3410 = vunpack.c.l.b16 %v3339
        %v3411 = vunpack.c.l.b16 %v3340
        %v3412 = vunpack.c.l.b16 %v3341
        %v3413 = vunpack.c.l.b16 %v3342
        %v3414 = vunpack.c.l.b16 %v3343
        %v3415 = vunpack.c.l.b16 %v3344
        %v3416 = vunpack.c.l.b16 %v3345
        %v3417 = vunpack.c.l.b16 %v3346
        %v3418 = vunpack.c.l.b16 %v3347
        %v3419 = vunpack.c.l.b16 %v3348
        %v3420 = vunpack.c.l.b16 %v3349
        %v3421 = vunpack.c.l.b16 %v3350
        %v3422 = vunpack.c.l.b16 %v3351
        %v3423 = vunpack.c.l.b16 %v3352
        %v3424 = vpack.c.b16 %v3409, %v3408
        %v3425 = vpack.c.b16 %v3411, %v3410
        %v3426 = vpack.c.b16 %v3413, %v3412
        %v3427 = vpack.c.b16 %v3415, %v3414
        %v3428 = vpack.c.b16 %v3417, %v3416
        %v3429 = vpack.c.b16 %v3419, %v3418
        %v3430 = vpack.c.b16 %v3421, %v3420
        %v3431 = vpack.c.b16 %v3423, %v3422
        %3440 = vmatprep.subr.bf16.mxu0 0
        %3441 = vmatpush1.bf16.msra.mxu0 %v3431
        %3442 = vmatprep.subr.bf16.mxu0 0
        %3443 = vmatpush1.bf16.msra.mxu0 %v3430
        %3444 = vmatprep.subr.bf16.mxu0 0
        %3445 = vmatpush1.bf16.msra.mxu0 %v3429
        %3446 = vmatprep.subr.bf16.mxu0 0
        %3447 = vmatpush1.bf16.msra.mxu0 %v3428
        %3448 = vmatprep.subr.bf16.mxu0 0
        %3449 = vmatpush1.bf16.msra.mxu0 %v3427
        %3450 = vmatprep.subr.bf16.mxu0 0
        %3451 = vmatpush1.bf16.msra.mxu0 %v3426
        %3452 = vmatprep.subr.bf16.mxu0 0
        %3453 = vmatpush1.bf16.msra.mxu0 %v3425
        %3454 = vmatprep.subr.bf16.mxu0 0
        %3455 = vmatpush1.bf16.msra.mxu0 %v3424
        %3456 = vmatprep.subr.bf16.mxu0 0
        %3457 = vmatpush2.bf16.msra.mxu0 0
        %3458 = vmatprep.subr.bf16.mxu0 0
        %3459 = vmatpush2.bf16.msra.mxu0 0
        %3460 = vmatprep.subr.bf16.mxu0 0
        %3461 = vmatpush2.bf16.msra.mxu0 0
        %3462 = vmatprep.subr.bf16.mxu0 0
        %3463 = vmatpush2.bf16.msra.mxu0 0
        %3464 = vmatprep.subr.bf16.mxu0 0
        %3465 = vmatpush2.bf16.msra.mxu0 0
        %3466 = vmatprep.subr.bf16.mxu0 0
        %3467 = vmatpush2.bf16.msra.mxu0 0
        %3468 = vmatprep.subr.bf16.mxu0 0
        %3469 = vmatpush2.bf16.msra.mxu0 0
        %3470 = vmatprep.subr.bf16.mxu0 0
        %3471 = vmatpush2.bf16.msra.mxu0 0
        %3472 = vmatprep.mubr.bf16.mxu0 0
        %3473 = vmatmul.mubr.bf16.gmra.mxu0 %v3387
        %v3474 = vpop.f32.mrf.mxu0
        %v3475 = vadd.f32 %v3391, %v3474
        %v3476 = vpop.f32.mrf.mxu0
        %v3477 = vpop.f32.mrf.mxu0
        %v3478 = vpop.f32.mrf.mxu0
        %3479 = vdwg.mxu0
        %v3480 = vlaneseq
        %v3481 = vshrl.u32 %v3480, 7
        %v3482 = vsub.s32 1, %v3481
        %v3483 = vrot.slane %v465, %v3482
        %v3484 = vlaneseq
        %v3485 = vshrl.u32 %v3484, 7
        %v3486 = vsub.s32 1, %v3485
        %v3487 = vrot.slane %v466, %v3486
        %v3504 = vunpack.c.l.b16 %v3354
        %v3505 = vunpack.c.h.b16 %v3354
        %v3506 = vunpack.c.l.b16 %v3355
        %v3507 = vunpack.c.h.b16 %v3355
        %v3508 = vunpack.c.l.b16 %v3356
        %v3509 = vunpack.c.h.b16 %v3356
        %v3510 = vunpack.c.l.b16 %v3357
        %v3511 = vunpack.c.h.b16 %v3357
        %v3512 = vunpack.c.l.b16 %v3358
        %v3513 = vunpack.c.h.b16 %v3358
        %v3514 = vunpack.c.l.b16 %v3359
        %v3515 = vunpack.c.h.b16 %v3359
        %v3516 = vunpack.c.l.b16 %v3360
        %v3517 = vunpack.c.h.b16 %v3360
        %v3518 = vunpack.c.l.b16 %v3361
        %v3519 = vunpack.c.h.b16 %v3361
        %v3520 = vunpack.c.l.b16 %v3362
        %v3521 = vunpack.c.h.b16 %v3362
        %v3522 = vunpack.c.l.b16 %v3363
        %v3523 = vunpack.c.h.b16 %v3363
        %v3524 = vunpack.c.l.b16 %v3364
        %v3525 = vunpack.c.h.b16 %v3364
        %v3526 = vunpack.c.l.b16 %v3365
        %v3527 = vunpack.c.h.b16 %v3365
        %v3528 = vunpack.c.l.b16 %v3366
        %v3529 = vunpack.c.h.b16 %v3366
        %v3530 = vunpack.c.l.b16 %v3367
        %v3531 = vunpack.c.h.b16 %v3367
        %v3532 = vunpack.c.l.b16 %v3368
        %v3533 = vunpack.c.h.b16 %v3368
        %v3534 = vunpack.c.l.b16 %v3369
        %v3535 = vunpack.c.h.b16 %v3369
        %v3536 = vpack.c.b16 %v3506, %v3504
        %v3537 = vpack.c.b16 %v3507, %v3505
        %v3538 = vpack.c.b16 %v3510, %v3508
        %v3539 = vpack.c.b16 %v3511, %v3509
        %v3540 = vpack.c.b16 %v3514, %v3512
        %v3541 = vpack.c.b16 %v3515, %v3513
        %v3542 = vpack.c.b16 %v3518, %v3516
        %v3543 = vpack.c.b16 %v3519, %v3517
        %v3544 = vpack.c.b16 %v3522, %v3520
        %v3545 = vpack.c.b16 %v3523, %v3521
        %v3546 = vpack.c.b16 %v3526, %v3524
        %v3547 = vpack.c.b16 %v3527, %v3525
        %v3548 = vpack.c.b16 %v3530, %v3528
        %v3549 = vpack.c.b16 %v3531, %v3529
        %v3550 = vpack.c.b16 %v3534, %v3532
        %v3551 = vpack.c.b16 %v3535, %v3533
        %3568 = vmatprep.subr.bf16.mxu0 %v3551
        %3569 = vmatpush1.bf16.msra.mxu0 %v3550
        %3570 = vmatprep.subr.bf16.mxu0 %v3549
        %3571 = vmatpush1.bf16.msra.mxu0 %v3548
        %3572 = vmatprep.subr.bf16.mxu0 %v3547
        %3573 = vmatpush1.bf16.msra.mxu0 %v3546
        %3574 = vmatprep.subr.bf16.mxu0 %v3545
        %3575 = vmatpush1.bf16.msra.mxu0 %v3544
        %3576 = vmatprep.subr.bf16.mxu0 %v3543
        %3577 = vmatpush1.bf16.msra.mxu0 %v3542
        %3578 = vmatprep.subr.bf16.mxu0 %v3541
        %3579 = vmatpush1.bf16.msra.mxu0 %v3540
        %3580 = vmatprep.subr.bf16.mxu0 %v3539
        %3581 = vmatpush1.bf16.msra.mxu0 %v3538
        %3582 = vmatprep.subr.bf16.mxu0 %v3537
        %3583 = vmatpush1.bf16.msra.mxu0 %v3536
        %3584 = vmatprep.subr.bf16.mxu0 0
        %3585 = vmatpush2.bf16.msra.mxu0 0
        %3586 = vmatprep.subr.bf16.mxu0 0
        %3587 = vmatpush2.bf16.msra.mxu0 0
        %3588 = vmatprep.subr.bf16.mxu0 0
        %3589 = vmatpush2.bf16.msra.mxu0 0
        %3590 = vmatprep.subr.bf16.mxu0 0
        %3591 = vmatpush2.bf16.msra.mxu0 0
        %3592 = vmatprep.subr.bf16.mxu0 0
        %3593 = vmatpush2.bf16.msra.mxu0 0
        %3594 = vmatprep.subr.bf16.mxu0 0
        %3595 = vmatpush2.bf16.msra.mxu0 0
        %3596 = vmatprep.subr.bf16.mxu0 0
        %3597 = vmatpush2.bf16.msra.mxu0 0
        %3598 = vmatprep.subr.bf16.mxu0 0
        %3599 = vmatpush2.bf16.msra.mxu0 0
        %3600 = vmatprep.mubr.bf16.mxu0 0
        %3601 = vmatmul.mubr.bf16.gmra.mxu0 %v2308
        %v3602 = vpop.f32.mrf.mxu0
        %v3603 = vadd.f32 %v3483, %v3602
        %v3604 = vpop.f32.mrf.mxu0
        %v3605 = vadd.f32 %v3487, %v3604
        %v3606 = vpop.f32.mrf.mxu0
        %v3607 = vadd.f32 %v3483, %v3606
        %v3608 = vpop.f32.mrf.mxu0
        %v3609 = vadd.f32 %v3487, %v3608
        %3610 = vdwg.mxu0
        %v3611 = vpack.c.bf16 %v3609, %v3605
        %v3613 = vsel %vm2534, %v3475, 0
        %v3616 = vsel %vm2534, %v3603, 0
        %v3619 = vsel %vm2534, %v3607, 0
        %3621 = vmatprep.subr.mxu0 0.0
        %3622 = vmatpush1.xpose.msra.mxu0 0.0
        %3623 = vmatprep.subr.mxu0 0.0
        %3624 = vmatpush1.xpose.msra.mxu0 0.0
        %3625 = vmatprep.subr.mxu0 0.0
        %3626 = vmatpush1.xpose.msra.mxu0 0.0
        %3627 = vmatprep.subr.mxu0 0.0
        %3628 = vmatpush1.xpose.msra.mxu0 0.0
        %3629 = vmatprep.subr.mxu0 0.0
        %3630 = vmatpush1.xpose.msra.mxu0 0.0
        %3631 = vmatprep.subr.mxu0 0.0
        %3632 = vmatpush1.xpose.msra.mxu0 0.0
        %3633 = vmatprep.subr.mxu0 0.0
        %3634 = vmatpush1.xpose.msra.mxu0 0.0
        %3635 = vmatprep.subr.mxu0 0.0
        %3636 = vmatpush1.xpose.msra.mxu0 0.0
        %3637 = vmatprep.subr.mxu0 0.0
        %3638 = vmatpush1.xpose.msra.mxu0 0.0
        %3639 = vmatprep.subr.mxu0 0.0
        %3640 = vmatpush1.xpose.msra.mxu0 0.0
        %3641 = vmatprep.subr.mxu0 0.0
        %3642 = vmatpush1.xpose.msra.mxu0 0.0
        %3643 = vmatprep.subr.mxu0 0.0
        %3644 = vmatpush1.xpose.msra.mxu0 0.0
        %3645 = vmatprep.subr.mxu0 0.0
        %3646 = vmatpush1.xpose.msra.mxu0 0.0
        %3647 = vmatprep.subr.mxu0 0.0
        %3648 = vmatpush1.xpose.msra.mxu0 0.0
        %3649 = vmatprep.subr.mxu0 0.0
        %3650 = vmatpush1.xpose.msra.mxu0 %v3619
        %3651 = vmatprep.subr.mxu0 0.0
        %3652 = vmatpush1.xpose.msra.mxu0 %v3616
        %3653 = vmatprep.subr.mxu0 0.0
        %3654 = vmatpush2.xpose.msra.mxu0 0.0
        %3655 = vmatprep.subr.mxu0 0.0
        %3656 = vmatpush2.xpose.msra.mxu0 0.0
        %3657 = vmatprep.subr.mxu0 0.0
        %3658 = vmatpush2.xpose.msra.mxu0 0.0
        %3659 = vmatprep.subr.mxu0 0.0
        %3660 = vmatpush2.xpose.msra.mxu0 0.0
        %3661 = vmatprep.subr.mxu0 0.0
        %3662 = vmatpush2.xpose.msra.mxu0 0.0
        %3663 = vmatprep.subr.mxu0 0.0
        %3664 = vmatpush2.xpose.msra.mxu0 0.0
        %3665 = vmatprep.subr.mxu0 0.0
        %3666 = vmatpush2.xpose.msra.mxu0 0.0
        %3667 = vmatprep.subr.mxu0 0.0
        %3668 = vmatpush2.xpose.msra.mxu0 0.0
        %3669 = vmatprep.subr.mxu0 0.0
        %3670 = vmatpush2.xpose.msra.mxu0 0.0
        %3671 = vmatprep.subr.mxu0 0.0
        %3672 = vmatpush2.xpose.msra.mxu0 0.0
        %3673 = vmatprep.subr.mxu0 0.0
        %3674 = vmatpush2.xpose.msra.mxu0 0.0
        %3675 = vmatprep.subr.mxu0 0.0
        %3676 = vmatpush2.xpose.msra.mxu0 0.0
        %3677 = vmatprep.subr.mxu0 0.0
        %3678 = vmatpush2.xpose.msra.mxu0 0.0
        %3679 = vmatprep.subr.mxu0 0.0
        %3680 = vmatpush2.xpose.msra.mxu0 0.0
        %3681 = vmatprep.subr.mxu0 0.0
        %3682 = vmatpush2.xpose.msra.mxu0 0.0
        %3683 = vmatprep.subr.mxu0 0.0
        %3684 = vmatpush2.xpose.msra.mxu0 0.0
        %3685 = vmatprep.mubr.f32.mxu0 0.0
        %3686 = vmatmul.mubr.f32.gmra.mxu0 %v3613
        %v3687 = vpop.f32.mrf.mxu0
        %v3688 = vadd.f32 0.0, %v3687
        %v3689 = vpop.f32.mrf.mxu0
        %3690 = vdwg.mxu0
        %v3691 = vsel %vm2622, %v3688, -inf
        %3692 = vmax.xlane.f32.xlu0 %v3691
        %v3693 = vpop.xlane.xlu0 %3692
        %v3694 = vsub.f32 %v3688, %v3693
        %v3695 = vmul.f32 %v3694, 1.442695
        %v3696 = vpow.pop %v3695
        %v3697 = vsel %vm2622, %v3696, 0.0
        %3698 = vadd.xlane.f32.xlu0 %v3697
        %v3699 = vpop.xlane.xlu0 %3698
        %v3700 = vrcp.pop %v3699
        %v3701 = vmul.f32 %v3696, %v3700
        %v3702 = vpack.c.bf16 %v3701, %v3701
        %v3704 = vsel %vm2622, %v3702, 0
        %3706 = vmatprep.subr.bf16.mxu0 0
        %3707 = vmatpush1.bf16.msra.mxu0 0
        %3708 = vmatprep.subr.bf16.mxu0 0
        %3709 = vmatpush1.bf16.msra.mxu0 0
        %3710 = vmatprep.subr.bf16.mxu0 0
        %3711 = vmatpush1.bf16.msra.mxu0 0
        %3712 = vmatprep.subr.bf16.mxu0 0
        %3713 = vmatpush1.bf16.msra.mxu0 0
        %3714 = vmatprep.subr.bf16.mxu0 0
        %3715 = vmatpush1.bf16.msra.mxu0 0
        %3716 = vmatprep.subr.bf16.mxu0 0
        %3717 = vmatpush1.bf16.msra.mxu0 0
        %3718 = vmatprep.subr.bf16.mxu0 0
        %3719 = vmatpush1.bf16.msra.mxu0 0
        %3720 = vmatprep.subr.bf16.mxu0 0
        %3721 = vmatpush1.bf16.msra.mxu0 %v3611
        %3722 = vmatprep.subr.bf16.mxu0 0
        %3723 = vmatpush2.bf16.msra.mxu0 0
        %3724 = vmatprep.subr.bf16.mxu0 0
        %3725 = vmatpush2.bf16.msra.mxu0 0
        %3726 = vmatprep.subr.bf16.mxu0 0
        %3727 = vmatpush2.bf16.msra.mxu0 0
        %3728 = vmatprep.subr.bf16.mxu0 0
        %3729 = vmatpush2.bf16.msra.mxu0 0
        %3730 = vmatprep.subr.bf16.mxu0 0
        %3731 = vmatpush2.bf16.msra.mxu0 0
        %3732 = vmatprep.subr.bf16.mxu0 0
        %3733 = vmatpush2.bf16.msra.mxu0 0
        %3734 = vmatprep.subr.bf16.mxu0 0
        %3735 = vmatpush2.bf16.msra.mxu0 0
        %3736 = vmatprep.subr.bf16.mxu0 0
        %3737 = vmatpush2.bf16.msra.mxu0 0
        %3738 = vmatprep.mubr.bf16.mxu0 0
        %3739 = vmatmul.mubr.bf16.gmra.mxu0 %v3704
        %v3740 = vpop.f32.mrf.mxu0
        %v3741 = vadd.f32 0.0, %v3740
        %v3742 = vpop.f32.mrf.mxu0
        %v3743 = vpop.f32.mrf.mxu0
        %v3744 = vpop.f32.mrf.mxu0
        %3745 = vdwg.mxu0
        %3746 = vrot.lane.b32.xlu0 %v3475, 96
        %v3747 = vpop.permute.xlu0 %3746
        %3748 = vrot.lane.b32.xlu0 %v3603, 96
        %v3749 = vpop.permute.xlu0 %3748
        %3750 = vrot.lane.b32.xlu0 %v3607, 96
        %v3751 = vpop.permute.xlu0 %3750
        %v3752 = vsel %vm2534, %v3747, 0
        %v3754 = vsel %vm2534, %v3749, 0
        %v3756 = vsel %vm2534, %v3751, 0
        %3758 = vmatprep.subr.mxu0 0.0
        %3759 = vmatpush1.xpose.msra.mxu0 0.0
        %3760 = vmatprep.subr.mxu0 0.0
        %3761 = vmatpush1.xpose.msra.mxu0 0.0
        %3762 = vmatprep.subr.mxu0 0.0
        %3763 = vmatpush1.xpose.msra.mxu0 0.0
        %3764 = vmatprep.subr.mxu0 0.0
        %3765 = vmatpush1.xpose.msra.mxu0 0.0
        %3766 = vmatprep.subr.mxu0 0.0
        %3767 = vmatpush1.xpose.msra.mxu0 0.0
        %3768 = vmatprep.subr.mxu0 0.0
        %3769 = vmatpush1.xpose.msra.mxu0 0.0
        %3770 = vmatprep.subr.mxu0 0.0
        %3771 = vmatpush1.xpose.msra.mxu0 0.0
        %3772 = vmatprep.subr.mxu0 0.0
        %3773 = vmatpush1.xpose.msra.mxu0 0.0
        %3774 = vmatprep.subr.mxu0 0.0
        %3775 = vmatpush1.xpose.msra.mxu0 0.0
        %3776 = vmatprep.subr.mxu0 0.0
        %3777 = vmatpush1.xpose.msra.mxu0 0.0
        %3778 = vmatprep.subr.mxu0 0.0
        %3779 = vmatpush1.xpose.msra.mxu0 0.0
        %3780 = vmatprep.subr.mxu0 0.0
        %3781 = vmatpush1.xpose.msra.mxu0 0.0
        %3782 = vmatprep.subr.mxu0 0.0
        %3783 = vmatpush1.xpose.msra.mxu0 0.0
        %3784 = vmatprep.subr.mxu0 0.0
        %3785 = vmatpush1.xpose.msra.mxu0 0.0
        %3786 = vmatprep.subr.mxu0 0.0
        %3787 = vmatpush1.xpose.msra.mxu0 %v3756
        %3788 = vmatprep.subr.mxu0 0.0
        %3789 = vmatpush1.xpose.msra.mxu0 %v3754
        %3790 = vmatprep.subr.mxu0 0.0
        %3791 = vmatpush2.xpose.msra.mxu0 0.0
        %3792 = vmatprep.subr.mxu0 0.0
        %3793 = vmatpush2.xpose.msra.mxu0 0.0
        %3794 = vmatprep.subr.mxu0 0.0
        %3795 = vmatpush2.xpose.msra.mxu0 0.0
        %3796 = vmatprep.subr.mxu0 0.0
        %3797 = vmatpush2.xpose.msra.mxu0 0.0
        %3798 = vmatprep.subr.mxu0 0.0
        %3799 = vmatpush2.xpose.msra.mxu0 0.0
        %3800 = vmatprep.subr.mxu0 0.0
        %3801 = vmatpush2.xpose.msra.mxu0 0.0
        %3802 = vmatprep.subr.mxu0 0.0
        %3803 = vmatpush2.xpose.msra.mxu0 0.0
        %3804 = vmatprep.subr.mxu0 0.0
        %3805 = vmatpush2.xpose.msra.mxu0 0.0
        %3806 = vmatprep.subr.mxu0 0.0
        %3807 = vmatpush2.xpose.msra.mxu0 0.0
        %3808 = vmatprep.subr.mxu0 0.0
        %3809 = vmatpush2.xpose.msra.mxu0 0.0
        %3810 = vmatprep.subr.mxu0 0.0
        %3811 = vmatpush2.xpose.msra.mxu0 0.0
        %3812 = vmatprep.subr.mxu0 0.0
        %3813 = vmatpush2.xpose.msra.mxu0 0.0
        %3814 = vmatprep.subr.mxu0 0.0
        %3815 = vmatpush2.xpose.msra.mxu0 0.0
        %3816 = vmatprep.subr.mxu0 0.0
        %3817 = vmatpush2.xpose.msra.mxu0 0.0
        %3818 = vmatprep.subr.mxu0 0.0
        %3819 = vmatpush2.xpose.msra.mxu0 0.0
        %3820 = vmatprep.subr.mxu0 0.0
        %3821 = vmatpush2.xpose.msra.mxu0 0.0
        %3822 = vmatprep.mubr.f32.mxu0 0.0
        %3823 = vmatmul.mubr.f32.gmra.mxu0 %v3752
        %v3824 = vpop.f32.mrf.mxu0
        %v3825 = vadd.f32 0.0, %v3824
        %v3826 = vpop.f32.mrf.mxu0
        %3827 = vdwg.mxu0
        %v3828 = vsel %vm2622, %v3825, -inf
        %3829 = vmax.xlane.f32.xlu0 %v3828
        %v3830 = vpop.xlane.xlu0 %3829
        %v3831 = vsub.f32 %v3825, %v3830
        %v3832 = vmul.f32 %v3831, 1.442695
        %v3833 = vpow.pop %v3832
        %v3834 = vsel %vm2622, %v3833, 0.0
        %3835 = vadd.xlane.f32.xlu0 %v3834
        %v3836 = vpop.xlane.xlu0 %3835
        %v3837 = vrcp.pop %v3836
        %v3838 = vmul.f32 %v3833, %v3837
        %v3839 = vpack.c.bf16 %v3838, %v3838
        %3841 = vrot.lane.b32.xlu0 %v3611, 96
        %v3842 = vpop.permute.xlu0 %3841
        %v3845 = vsel %vm2622, %v3839, 0
        %3847 = vmatprep.subr.bf16.mxu0 0
        %3848 = vmatpush1.bf16.msra.mxu0 0
        %3849 = vmatprep.subr.bf16.mxu0 0
        %3850 = vmatpush1.bf16.msra.mxu0 0
        %3851 = vmatprep.subr.bf16.mxu0 0
        %3852 = vmatpush1.bf16.msra.mxu0 0
        %3853 = vmatprep.subr.bf16.mxu0 0
        %3854 = vmatpush1.bf16.msra.mxu0 0
        %3855 = vmatprep.subr.bf16.mxu0 0
        %3856 = vmatpush1.bf16.msra.mxu0 0
        %3857 = vmatprep.subr.bf16.mxu0 0
        %3858 = vmatpush1.bf16.msra.mxu0 0
        %3859 = vmatprep.subr.bf16.mxu0 0
        %3860 = vmatpush1.bf16.msra.mxu0 0
        %3861 = vmatprep.subr.bf16.mxu0 0
        %3862 = vmatpush1.bf16.msra.mxu0 %v3842
        %3863 = vmatprep.subr.bf16.mxu0 0
        %3864 = vmatpush2.bf16.msra.mxu0 0
        %3865 = vmatprep.subr.bf16.mxu0 0
        %3866 = vmatpush2.bf16.msra.mxu0 0
        %3867 = vmatprep.subr.bf16.mxu0 0
        %3868 = vmatpush2.bf16.msra.mxu0 0
        %3869 = vmatprep.subr.bf16.mxu0 0
        %3870 = vmatpush2.bf16.msra.mxu0 0
        %3871 = vmatprep.subr.bf16.mxu0 0
        %3872 = vmatpush2.bf16.msra.mxu0 0
        %3873 = vmatprep.subr.bf16.mxu0 0
        %3874 = vmatpush2.bf16.msra.mxu0 0
        %3875 = vmatprep.subr.bf16.mxu0 0
        %3876 = vmatpush2.bf16.msra.mxu0 0
        %3877 = vmatprep.subr.bf16.mxu0 0
        %3878 = vmatpush2.bf16.msra.mxu0 0
        %3879 = vmatprep.mubr.bf16.mxu0 0
        %3880 = vmatmul.mubr.bf16.gmra.mxu0 %v3845
        %v3881 = vpop.f32.mrf.mxu0
        %v3882 = vadd.f32 0.0, %v3881
        %v3883 = vpop.f32.mrf.mxu0
        %v3884 = vpop.f32.mrf.mxu0
        %v3885 = vpop.f32.mrf.mxu0
        %3886 = vdwg.mxu0
        %3887 = vrot.lane.b32.xlu0 %v3475, 64
        %v3888 = vpop.permute.xlu0 %3887
        %3889 = vrot.lane.b32.xlu0 %v3603, 64
        %v3890 = vpop.permute.xlu0 %3889
        %3891 = vrot.lane.b32.xlu0 %v3607, 64
        %v3892 = vpop.permute.xlu0 %3891
        %v3893 = vsel %vm2534, %v3888, 0
        %v3895 = vsel %vm2534, %v3890, 0
        %v3897 = vsel %vm2534, %v3892, 0
        %3899 = vmatprep.subr.mxu0 0.0
        %3900 = vmatpush1.xpose.msra.mxu0 0.0
        %3901 = vmatprep.subr.mxu0 0.0
        %3902 = vmatpush1.xpose.msra.mxu0 0.0
        %3903 = vmatprep.subr.mxu0 0.0
        %3904 = vmatpush1.xpose.msra.mxu0 0.0
        %3905 = vmatprep.subr.mxu0 0.0
        %3906 = vmatpush1.xpose.msra.mxu0 0.0
        %3907 = vmatprep.subr.mxu0 0.0
        %3908 = vmatpush1.xpose.msra.mxu0 0.0
        %3909 = vmatprep.subr.mxu0 0.0
        %3910 = vmatpush1.xpose.msra.mxu0 0.0
        %3911 = vmatprep.subr.mxu0 0.0
        %3912 = vmatpush1.xpose.msra.mxu0 0.0
        %3913 = vmatprep.subr.mxu0 0.0
        %3914 = vmatpush1.xpose.msra.mxu0 0.0
        %3915 = vmatprep.subr.mxu0 0.0
        %3916 = vmatpush1.xpose.msra.mxu0 0.0
        %3917 = vmatprep.subr.mxu0 0.0
        %3918 = vmatpush1.xpose.msra.mxu0 0.0
        %3919 = vmatprep.subr.mxu0 0.0
        %3920 = vmatpush1.xpose.msra.mxu0 0.0
        %3921 = vmatprep.subr.mxu0 0.0
        %3922 = vmatpush1.xpose.msra.mxu0 0.0
        %3923 = vmatprep.subr.mxu0 0.0
        %3924 = vmatpush1.xpose.msra.mxu0 0.0
        %3925 = vmatprep.subr.mxu0 0.0
        %3926 = vmatpush1.xpose.msra.mxu0 0.0
        %3927 = vmatprep.subr.mxu0 0.0
        %3928 = vmatpush1.xpose.msra.mxu0 %v3897
        %3929 = vmatprep.subr.mxu0 0.0
        %3930 = vmatpush1.xpose.msra.mxu0 %v3895
        %3931 = vmatprep.subr.mxu0 0.0
        %3932 = vmatpush2.xpose.msra.mxu0 0.0
        %3933 = vmatprep.subr.mxu0 0.0
        %3934 = vmatpush2.xpose.msra.mxu0 0.0
        %3935 = vmatprep.subr.mxu0 0.0
        %3936 = vmatpush2.xpose.msra.mxu0 0.0
        %3937 = vmatprep.subr.mxu0 0.0
        %3938 = vmatpush2.xpose.msra.mxu0 0.0
        %3939 = vmatprep.subr.mxu0 0.0
        %3940 = vmatpush2.xpose.msra.mxu0 0.0
        %3941 = vmatprep.subr.mxu0 0.0
        %3942 = vmatpush2.xpose.msra.mxu0 0.0
        %3943 = vmatprep.subr.mxu0 0.0
        %3944 = vmatpush2.xpose.msra.mxu0 0.0
        %3945 = vmatprep.subr.mxu0 0.0
        %3946 = vmatpush2.xpose.msra.mxu0 0.0
        %3947 = vmatprep.subr.mxu0 0.0
        %3948 = vmatpush2.xpose.msra.mxu0 0.0
        %3949 = vmatprep.subr.mxu0 0.0
        %3950 = vmatpush2.xpose.msra.mxu0 0.0
        %3951 = vmatprep.subr.mxu0 0.0
        %3952 = vmatpush2.xpose.msra.mxu0 0.0
        %3953 = vmatprep.subr.mxu0 0.0
        %3954 = vmatpush2.xpose.msra.mxu0 0.0
        %3955 = vmatprep.subr.mxu0 0.0
        %3956 = vmatpush2.xpose.msra.mxu0 0.0
        %3957 = vmatprep.subr.mxu0 0.0
        %3958 = vmatpush2.xpose.msra.mxu0 0.0
        %3959 = vmatprep.subr.mxu0 0.0
        %3960 = vmatpush2.xpose.msra.mxu0 0.0
        %3961 = vmatprep.subr.mxu0 0.0
        %3962 = vmatpush2.xpose.msra.mxu0 0.0
        %3963 = vmatprep.mubr.f32.mxu0 0.0
        %3964 = vmatmul.mubr.f32.gmra.mxu0 %v3893
        %v3965 = vpop.f32.mrf.mxu0
        %v3966 = vadd.f32 0.0, %v3965
        %v3967 = vpop.f32.mrf.mxu0
        %3968 = vdwg.mxu0
        %v3969 = vsel %vm2622, %v3966, -inf
        %3970 = vmax.xlane.f32.xlu0 %v3969
        %v3971 = vpop.xlane.xlu0 %3970
        %v3972 = vsub.f32 %v3966, %v3971
        %v3973 = vmul.f32 %v3972, 1.442695
        %v3974 = vpow.pop %v3973
        %v3975 = vsel %vm2622, %v3974, 0.0
        %3976 = vadd.xlane.f32.xlu0 %v3975
        %v3977 = vpop.xlane.xlu0 %3976
        %v3978 = vrcp.pop %v3977
        %v3979 = vmul.f32 %v3974, %v3978
        %v3980 = vpack.c.bf16 %v3979, %v3979
        %3981 = vrot.lane.b32.xlu0 %v3611, 64
        %v3982 = vpop.permute.xlu0 %3981
        %v3985 = vsel %vm2622, %v3980, 0
        %3987 = vmatprep.subr.bf16.mxu0 0
        %3988 = vmatpush1.bf16.msra.mxu0 0
        %3989 = vmatprep.subr.bf16.mxu0 0
        %3990 = vmatpush1.bf16.msra.mxu0 0
        %3991 = vmatprep.subr.bf16.mxu0 0
        %3992 = vmatpush1.bf16.msra.mxu0 0
        %3993 = vmatprep.subr.bf16.mxu0 0
        %3994 = vmatpush1.bf16.msra.mxu0 0
        %3995 = vmatprep.subr.bf16.mxu0 0
        %3996 = vmatpush1.bf16.msra.mxu0 0
        %3997 = vmatprep.subr.bf16.mxu0 0
        %3998 = vmatpush1.bf16.msra.mxu0 0
        %3999 = vmatprep.subr.bf16.mxu0 0
        %4000 = vmatpush1.bf16.msra.mxu0 0
        %4001 = vmatprep.subr.bf16.mxu0 0
        %4002 = vmatpush1.bf16.msra.mxu0 %v3982
        %4003 = vmatprep.subr.bf16.mxu0 0
        %4004 = vmatpush2.bf16.msra.mxu0 0
        %4005 = vmatprep.subr.bf16.mxu0 0
        %4006 = vmatpush2.bf16.msra.mxu0 0
        %4007 = vmatprep.subr.bf16.mxu0 0
        %4008 = vmatpush2.bf16.msra.mxu0 0
        %4009 = vmatprep.subr.bf16.mxu0 0
        %4010 = vmatpush2.bf16.msra.mxu0 0
        %4011 = vmatprep.subr.bf16.mxu0 0
        %4012 = vmatpush2.bf16.msra.mxu0 0
        %4013 = vmatprep.subr.bf16.mxu0 0
        %4014 = vmatpush2.bf16.msra.mxu0 0
        %4015 = vmatprep.subr.bf16.mxu0 0
        %4016 = vmatpush2.bf16.msra.mxu0 0
        %4017 = vmatprep.subr.bf16.mxu0 0
        %4018 = vmatpush2.bf16.msra.mxu0 0
        %4019 = vmatprep.mubr.bf16.mxu0 0
        %4020 = vmatmul.mubr.bf16.gmra.mxu0 %v3985
        %v4021 = vpop.f32.mrf.mxu0
        %v4022 = vadd.f32 0.0, %v4021
        %v4023 = vpop.f32.mrf.mxu0
        %v4024 = vpop.f32.mrf.mxu0
        %v4025 = vpop.f32.mrf.mxu0
        %4026 = vdwg.mxu0
        %4027 = vrot.lane.b32.xlu0 %v3475, 32
        %v4028 = vpop.permute.xlu0 %4027
        %4029 = vrot.lane.b32.xlu0 %v3603, 32
        %v4030 = vpop.permute.xlu0 %4029
        %4031 = vrot.lane.b32.xlu0 %v3607, 32
        %v4032 = vpop.permute.xlu0 %4031
        %v4033 = vsel %vm2534, %v4028, 0
        %v4035 = vsel %vm2534, %v4030, 0
        %v4037 = vsel %vm2534, %v4032, 0
        %4039 = vmatprep.subr.mxu0 0.0
        %4040 = vmatpush1.xpose.msra.mxu0 0.0
        %4041 = vmatprep.subr.mxu0 0.0
        %4042 = vmatpush1.xpose.msra.mxu0 0.0
        %4043 = vmatprep.subr.mxu0 0.0
        %4044 = vmatpush1.xpose.msra.mxu0 0.0
        %4045 = vmatprep.subr.mxu0 0.0
        %4046 = vmatpush1.xpose.msra.mxu0 0.0
        %4047 = vmatprep.subr.mxu0 0.0
        %4048 = vmatpush1.xpose.msra.mxu0 0.0
        %4049 = vmatprep.subr.mxu0 0.0
        %4050 = vmatpush1.xpose.msra.mxu0 0.0
        %4051 = vmatprep.subr.mxu0 0.0
        %4052 = vmatpush1.xpose.msra.mxu0 0.0
        %4053 = vmatprep.subr.mxu0 0.0
        %4054 = vmatpush1.xpose.msra.mxu0 0.0
        %4055 = vmatprep.subr.mxu0 0.0
        %4056 = vmatpush1.xpose.msra.mxu0 0.0
        %4057 = vmatprep.subr.mxu0 0.0
        %4058 = vmatpush1.xpose.msra.mxu0 0.0
        %4059 = vmatprep.subr.mxu0 0.0
        %4060 = vmatpush1.xpose.msra.mxu0 0.0
        %4061 = vmatprep.subr.mxu0 0.0
        %4062 = vmatpush1.xpose.msra.mxu0 0.0
        %4063 = vmatprep.subr.mxu0 0.0
        %4064 = vmatpush1.xpose.msra.mxu0 0.0
        %4065 = vmatprep.subr.mxu0 0.0
        %4066 = vmatpush1.xpose.msra.mxu0 0.0
        %4067 = vmatprep.subr.mxu0 0.0
        %4068 = vmatpush1.xpose.msra.mxu0 %v4037
        %4069 = vmatprep.subr.mxu0 0.0
        %4070 = vmatpush1.xpose.msra.mxu0 %v4035
        %4071 = vmatprep.subr.mxu0 0.0
        %4072 = vmatpush2.xpose.msra.mxu0 0.0
        %4073 = vmatprep.subr.mxu0 0.0
        %4074 = vmatpush2.xpose.msra.mxu0 0.0
        %4075 = vmatprep.subr.mxu0 0.0
        %4076 = vmatpush2.xpose.msra.mxu0 0.0
        %4077 = vmatprep.subr.mxu0 0.0
        %4078 = vmatpush2.xpose.msra.mxu0 0.0
        %4079 = vmatprep.subr.mxu0 0.0
        %4080 = vmatpush2.xpose.msra.mxu0 0.0
        %4081 = vmatprep.subr.mxu0 0.0
        %4082 = vmatpush2.xpose.msra.mxu0 0.0
        %4083 = vmatprep.subr.mxu0 0.0
        %4084 = vmatpush2.xpose.msra.mxu0 0.0
        %4085 = vmatprep.subr.mxu0 0.0
        %4086 = vmatpush2.xpose.msra.mxu0 0.0
        %4087 = vmatprep.subr.mxu0 0.0
        %4088 = vmatpush2.xpose.msra.mxu0 0.0
        %4089 = vmatprep.subr.mxu0 0.0
        %4090 = vmatpush2.xpose.msra.mxu0 0.0
        %4091 = vmatprep.subr.mxu0 0.0
        %4092 = vmatpush2.xpose.msra.mxu0 0.0
        %4093 = vmatprep.subr.mxu0 0.0
        %4094 = vmatpush2.xpose.msra.mxu0 0.0
        %4095 = vmatprep.subr.mxu0 0.0
        %4096 = vmatpush2.xpose.msra.mxu0 0.0
        %4097 = vmatprep.subr.mxu0 0.0
        %4098 = vmatpush2.xpose.msra.mxu0 0.0
        %4099 = vmatprep.subr.mxu0 0.0
        %4100 = vmatpush2.xpose.msra.mxu0 0.0
        %4101 = vmatprep.subr.mxu0 0.0
        %4102 = vmatpush2.xpose.msra.mxu0 0.0
        %4103 = vmatprep.mubr.f32.mxu0 0.0
        %4104 = vmatmul.mubr.f32.gmra.mxu0 %v4033
        %v4105 = vpop.f32.mrf.mxu0
        %v4106 = vadd.f32 0.0, %v4105
        %v4107 = vpop.f32.mrf.mxu0
        %4108 = vdwg.mxu0
        %v4109 = vsel %vm2622, %v4106, -inf
        %4110 = vmax.xlane.f32.xlu0 %v4109
        %v4111 = vpop.xlane.xlu0 %4110
        %v4112 = vsub.f32 %v4106, %v4111
        %v4113 = vmul.f32 %v4112, 1.442695
        %v4114 = vpow.pop %v4113
        %v4115 = vsel %vm2622, %v4114, 0.0
        %4116 = vadd.xlane.f32.xlu0 %v4115
        %v4117 = vpop.xlane.xlu0 %4116
        %v4118 = vrcp.pop %v4117
        %v4119 = vmul.f32 %v4114, %v4118
        %v4120 = vpack.c.bf16 %v4119, %v4119
        %4121 = vrot.lane.b32.xlu0 %v3611, 32
        %v4122 = vpop.permute.xlu0 %4121
        %v4125 = vsel %vm2622, %v4120, 0
        %4127 = vmatprep.subr.bf16.mxu0 0
        %4128 = vmatpush1.bf16.msra.mxu0 0
        %4129 = vmatprep.subr.bf16.mxu0 0
        %4130 = vmatpush1.bf16.msra.mxu0 0
        %4131 = vmatprep.subr.bf16.mxu0 0
        %4132 = vmatpush1.bf16.msra.mxu0 0
        %4133 = vmatprep.subr.bf16.mxu0 0
        %4134 = vmatpush1.bf16.msra.mxu0 0
        %4135 = vmatprep.subr.bf16.mxu0 0
        %4136 = vmatpush1.bf16.msra.mxu0 0
        %4137 = vmatprep.subr.bf16.mxu0 0
        %4138 = vmatpush1.bf16.msra.mxu0 0
        %4139 = vmatprep.subr.bf16.mxu0 0
        %4140 = vmatpush1.bf16.msra.mxu0 0
        %4141 = vmatprep.subr.bf16.mxu0 0
        %4142 = vmatpush1.bf16.msra.mxu0 %v4122
        %4143 = vmatprep.subr.bf16.mxu0 0
        %4144 = vmatpush2.bf16.msra.mxu0 0
        %4145 = vmatprep.subr.bf16.mxu0 0
        %4146 = vmatpush2.bf16.msra.mxu0 0
        %4147 = vmatprep.subr.bf16.mxu0 0
        %4148 = vmatpush2.bf16.msra.mxu0 0
        %4149 = vmatprep.subr.bf16.mxu0 0
        %4150 = vmatpush2.bf16.msra.mxu0 0
        %4151 = vmatprep.subr.bf16.mxu0 0
        %4152 = vmatpush2.bf16.msra.mxu0 0
        %4153 = vmatprep.subr.bf16.mxu0 0
        %4154 = vmatpush2.bf16.msra.mxu0 0
        %4155 = vmatprep.subr.bf16.mxu0 0
        %4156 = vmatpush2.bf16.msra.mxu0 0
        %4157 = vmatprep.subr.bf16.mxu0 0
        %4158 = vmatpush2.bf16.msra.mxu0 0
        %4159 = vmatprep.mubr.bf16.mxu0 0
        %4160 = vmatmul.mubr.bf16.gmra.mxu0 %v4125
        %v4161 = vpop.f32.mrf.mxu0
        %v4162 = vadd.f32 0.0, %v4161
        %v4163 = vpop.f32.mrf.mxu0
        %v4164 = vpop.f32.mrf.mxu0
        %v4165 = vpop.f32.mrf.mxu0
        %4166 = vdwg.mxu0
        %4168 = vrot.lane.b32.xlu0 %v3882, 32
        %v4169 = vpop.permute.xlu0 %4168
        %4172 = vrot.lane.b32.xlu0 %v4022, 64
        %v4173 = vpop.permute.xlu0 %4172
        %4176 = vrot.lane.b32.xlu0 %v4162, 96
        %v4177 = vpop.permute.xlu0 %4176
        %v4179 = vsel %vm2534, %v3741, %v4169
        %v4180 = vsel %vm3200, %v4179, %v4173
        %v4181 = vsel %vm3203, %v4180, %v4177
        %v4182 = vpack.c.bf16 %v4181, %v4181
        %v4183 = vlaneseq
        %v4184 = vshrl.u32 %v4183, 7
        %v4185 = vsub.s32 0, %v4184
        %v4186 = vrot.slane %v462, %v4185
        %v4203 = vunpack.c.l.b16 %v3371
        %v4204 = vunpack.c.l.b16 %v3372
        %v4205 = vunpack.c.l.b16 %v3373
        %v4206 = vunpack.c.l.b16 %v3374
        %v4207 = vunpack.c.l.b16 %v3375
        %v4208 = vunpack.c.l.b16 %v3376
        %v4209 = vunpack.c.l.b16 %v3377
        %v4210 = vunpack.c.l.b16 %v3378
        %v4211 = vunpack.c.l.b16 %v3379
        %v4212 = vunpack.c.l.b16 %v3380
        %v4213 = vunpack.c.l.b16 %v3381
        %v4214 = vunpack.c.l.b16 %v3382
        %v4215 = vunpack.c.l.b16 %v3383
        %v4216 = vunpack.c.l.b16 %v3384
        %v4217 = vunpack.c.l.b16 %v3385
        %v4218 = vunpack.c.l.b16 %v3386
        %v4219 = vpack.c.b16 %v4204, %v4203
        %v4220 = vpack.c.b16 %v4206, %v4205
        %v4221 = vpack.c.b16 %v4208, %v4207
        %v4222 = vpack.c.b16 %v4210, %v4209
        %v4223 = vpack.c.b16 %v4212, %v4211
        %v4224 = vpack.c.b16 %v4214, %v4213
        %v4225 = vpack.c.b16 %v4216, %v4215
        %v4226 = vpack.c.b16 %v4218, %v4217
        %4235 = vmatprep.subr.bf16.mxu0 0
        %4236 = vmatpush1.bf16.msra.mxu0 %v4226
        %4237 = vmatprep.subr.bf16.mxu0 0
        %4238 = vmatpush1.bf16.msra.mxu0 %v4225
        %4239 = vmatprep.subr.bf16.mxu0 0
        %4240 = vmatpush1.bf16.msra.mxu0 %v4224
        %4241 = vmatprep.subr.bf16.mxu0 0
        %4242 = vmatpush1.bf16.msra.mxu0 %v4223
        %4243 = vmatprep.subr.bf16.mxu0 0
        %4244 = vmatpush1.bf16.msra.mxu0 %v4222
        %4245 = vmatprep.subr.bf16.mxu0 0
        %4246 = vmatpush1.bf16.msra.mxu0 %v4221
        %4247 = vmatprep.subr.bf16.mxu0 0
        %4248 = vmatpush1.bf16.msra.mxu0 %v4220
        %4249 = vmatprep.subr.bf16.mxu0 0
        %4250 = vmatpush1.bf16.msra.mxu0 %v4219
        %4251 = vmatprep.subr.bf16.mxu0 0
        %4252 = vmatpush2.bf16.msra.mxu0 0
        %4253 = vmatprep.subr.bf16.mxu0 0
        %4254 = vmatpush2.bf16.msra.mxu0 0
        %4255 = vmatprep.subr.bf16.mxu0 0
        %4256 = vmatpush2.bf16.msra.mxu0 0
        %4257 = vmatprep.subr.bf16.mxu0 0
        %4258 = vmatpush2.bf16.msra.mxu0 0
        %4259 = vmatprep.subr.bf16.mxu0 0
        %4260 = vmatpush2.bf16.msra.mxu0 0
        %4261 = vmatprep.subr.bf16.mxu0 0
        %4262 = vmatpush2.bf16.msra.mxu0 0
        %4263 = vmatprep.subr.bf16.mxu0 0
        %4264 = vmatpush2.bf16.msra.mxu0 0
        %4265 = vmatprep.subr.bf16.mxu0 0
        %4266 = vmatpush2.bf16.msra.mxu0 0
        %4267 = vmatprep.mubr.bf16.mxu0 0
        %4268 = vmatmul.mubr.bf16.gmra.mxu0 %v4182
        %v4269 = vpop.f32.mrf.mxu0
        %v4270 = vadd.f32 %v4186, %v4269
        %v4271 = vpop.f32.mrf.mxu0
        %v4272 = vpop.f32.mrf.mxu0
        %v4273 = vpop.f32.mrf.mxu0
        %4274 = vdwg.mxu0
        %v4275 = vadd.f32 %v2258, %v4270
        %4276 = vadd.xlane.f32.xlu0 %v4275
        %v4277 = vpop.xlane.xlu0 %4276
        %v4278 = vmul.f32 %v4277, %v2227
        %v4279 = vsub.f32 %v4275, %v4278
        %v4280 = vmul.f32 %v4279, %v4279
        %4281 = vadd.xlane.f32.xlu0 %v4280
        %v4282 = vpop.xlane.xlu0 %4281
        %v4283 = vmul.f32 %v4282, %v2227
        %v4284 = vadd.f32 %v4283, 1e-05
        %v4285 = vrsqrt.pop %v4284
        %v4286 = vmul.f32 %v4279, %v4285
        %v4287 = vlaneseq
        %v4288 = vshrl.u32 %v4287, 7
        %v4289 = vsub.s32 1, %v4288
        %v4290 = vrot.slane %v462, %v4289
        %v4291 = vmul.f32 %v4286, %v4290
        %v4292 = vlaneseq
        %v4293 = vshrl.u32 %v4292, 7
        %v4294 = vsub.s32 2, %v4293
        %v4295 = vrot.slane %v462, %v4294
        %v4296 = vadd.f32 %v4291, %v4295
        %s4297 = scalar_lea.vmem [#allocation10], 256
        %v4298 = vld [vmem:[%s4297] sm:$0xff]
        %v4299 = vld [vmem:[%s4297 + $0x8] sm:$0xff]
        %v4300 = vld [vmem:[%s4297 + $0x10] sm:$0xff]
        %v4301 = vld [vmem:[%s4297 + $0x18] sm:$0xff]
        %v4302 = vld [vmem:[%s4297 + $0x20] sm:$0xff]
        %v4303 = vld [vmem:[%s4297 + $0x28] sm:$0xff]
        %v4304 = vld [vmem:[%s4297 + $0x30] sm:$0xff]
        %v4305 = vld [vmem:[%s4297 + $0x38] sm:$0xff]
        %v4306 = vld [vmem:[%s4297 + $0x40] sm:$0xff]
        %v4307 = vld [vmem:[%s4297 + $0x48] sm:$0xff]
        %v4308 = vld [vmem:[%s4297 + $0x50] sm:$0xff]
        %v4309 = vld [vmem:[%s4297 + $0x58] sm:$0xff]
        %v4310 = vld [vmem:[%s4297 + $0x60] sm:$0xff]
        %v4311 = vld [vmem:[%s4297 + $0x68] sm:$0xff]
        %v4312 = vld [vmem:[%s4297 + $0x70] sm:$0xff]
        %v4313 = vld [vmem:[%s4297 + $0x78] sm:$0xff]
        %v4314 = vld [vmem:[#allocation11] sm:$0xf]
        %v4315 = vld [vmem:[#allocation11 + $0x4] sm:$0xf]
        %v4316 = vld [vmem:[#allocation11 + $0x8] sm:$0xf]
        %v4317 = vld [vmem:[#allocation11 + $0xc] sm:$0xf]
        %v4318 = vld [vmem:[#allocation11 + $0x10] sm:$0xf]
        %v4319 = vld [vmem:[#allocation11 + $0x14] sm:$0xf]
        %v4320 = vld [vmem:[#allocation11 + $0x18] sm:$0xf]
        %v4321 = vld [vmem:[#allocation11 + $0x1c] sm:$0xf]
        %v4322 = vld [vmem:[#allocation11 + $0x20] sm:$0xf]
        %v4323 = vld [vmem:[#allocation11 + $0x24] sm:$0xf]
        %v4324 = vld [vmem:[#allocation11 + $0x28] sm:$0xf]
        %v4325 = vld [vmem:[#allocation11 + $0x2c] sm:$0xf]
        %v4326 = vld [vmem:[#allocation11 + $0x30] sm:$0xf]
        %v4327 = vld [vmem:[#allocation11 + $0x34] sm:$0xf]
        %v4328 = vld [vmem:[#allocation11 + $0x38] sm:$0xf]
        %v4329 = vld [vmem:[#allocation11 + $0x3c] sm:$0xf]
        %v4330 = vld [vmem:[#allocation11 + $0x40] sm:$0xf]
        %v4331 = vld [vmem:[#allocation11 + $0x44] sm:$0xf]
        %v4332 = vld [vmem:[#allocation11 + $0x48] sm:$0xf]
        %v4333 = vld [vmem:[#allocation11 + $0x4c] sm:$0xf]
        %v4334 = vld [vmem:[#allocation11 + $0x50] sm:$0xf]
        %v4335 = vld [vmem:[#allocation11 + $0x54] sm:$0xf]
        %v4336 = vld [vmem:[#allocation11 + $0x58] sm:$0xf]
        %v4337 = vld [vmem:[#allocation11 + $0x5c] sm:$0xf]
        %v4338 = vld [vmem:[#allocation11 + $0x60] sm:$0xf]
        %v4339 = vld [vmem:[#allocation11 + $0x64] sm:$0xf]
        %v4340 = vld [vmem:[#allocation11 + $0x68] sm:$0xf]
        %v4341 = vld [vmem:[#allocation11 + $0x6c] sm:$0xf]
        %v4342 = vld [vmem:[#allocation11 + $0x70] sm:$0xf]
        %v4343 = vld [vmem:[#allocation11 + $0x74] sm:$0xf]
        %v4344 = vld [vmem:[#allocation11 + $0x78] sm:$0xf]
        %v4345 = vld [vmem:[#allocation11 + $0x7c] sm:$0xf]
        %v4346 = vpack.c.bf16 %v3335, %v3334
        %v4347 = vlaneseq
        %v4348 = vshrl.u32 %v4347, 7
        %v4349 = vsub.s32 2, %v4348
        %v4350 = vrot.slane %v465, %v4349
        %v4351 = vlaneseq
        %v4352 = vshrl.u32 %v4351, 7
        %v4353 = vsub.s32 2, %v4352
        %v4354 = vrot.slane %v466, %v4353
        %v4371 = vunpack.c.l.b16 %v4298
        %v4372 = vunpack.c.h.b16 %v4298
        %v4373 = vunpack.c.l.b16 %v4299
        %v4374 = vunpack.c.h.b16 %v4299
        %v4375 = vunpack.c.l.b16 %v4300
        %v4376 = vunpack.c.h.b16 %v4300
        %v4377 = vunpack.c.l.b16 %v4301
        %v4378 = vunpack.c.h.b16 %v4301
        %v4379 = vunpack.c.l.b16 %v4302
        %v4380 = vunpack.c.h.b16 %v4302
        %v4381 = vunpack.c.l.b16 %v4303
        %v4382 = vunpack.c.h.b16 %v4303
        %v4383 = vunpack.c.l.b16 %v4304
        %v4384 = vunpack.c.h.b16 %v4304
        %v4385 = vunpack.c.l.b16 %v4305
        %v4386 = vunpack.c.h.b16 %v4305
        %v4387 = vunpack.c.l.b16 %v4306
        %v4388 = vunpack.c.h.b16 %v4306
        %v4389 = vunpack.c.l.b16 %v4307
        %v4390 = vunpack.c.h.b16 %v4307
        %v4391 = vunpack.c.l.b16 %v4308
        %v4392 = vunpack.c.h.b16 %v4308
        %v4393 = vunpack.c.l.b16 %v4309
        %v4394 = vunpack.c.h.b16 %v4309
        %v4395 = vunpack.c.l.b16 %v4310
        %v4396 = vunpack.c.h.b16 %v4310
        %v4397 = vunpack.c.l.b16 %v4311
        %v4398 = vunpack.c.h.b16 %v4311
        %v4399 = vunpack.c.l.b16 %v4312
        %v4400 = vunpack.c.h.b16 %v4312
        %v4401 = vunpack.c.l.b16 %v4313
        %v4402 = vunpack.c.h.b16 %v4313
        %v4403 = vpack.c.b16 %v4373, %v4371
        %v4404 = vpack.c.b16 %v4374, %v4372
        %v4405 = vpack.c.b16 %v4377, %v4375
        %v4406 = vpack.c.b16 %v4378, %v4376
        %v4407 = vpack.c.b16 %v4381, %v4379
        %v4408 = vpack.c.b16 %v4382, %v4380
        %v4409 = vpack.c.b16 %v4385, %v4383
        %v4410 = vpack.c.b16 %v4386, %v4384
        %v4411 = vpack.c.b16 %v4389, %v4387
        %v4412 = vpack.c.b16 %v4390, %v4388
        %v4413 = vpack.c.b16 %v4393, %v4391
        %v4414 = vpack.c.b16 %v4394, %v4392
        %v4415 = vpack.c.b16 %v4397, %v4395
        %v4416 = vpack.c.b16 %v4398, %v4396
        %v4417 = vpack.c.b16 %v4401, %v4399
        %v4418 = vpack.c.b16 %v4402, %v4400
        %4435 = vmatprep.subr.bf16.mxu0 %v4418
        %4436 = vmatpush1.bf16.msra.mxu0 %v4417
        %4437 = vmatprep.subr.bf16.mxu0 %v4416
        %4438 = vmatpush1.bf16.msra.mxu0 %v4415
        %4439 = vmatprep.subr.bf16.mxu0 %v4414
        %4440 = vmatpush1.bf16.msra.mxu0 %v4413
        %4441 = vmatprep.subr.bf16.mxu0 %v4412
        %4442 = vmatpush1.bf16.msra.mxu0 %v4411
        %4443 = vmatprep.subr.bf16.mxu0 %v4410
        %4444 = vmatpush1.bf16.msra.mxu0 %v4409
        %4445 = vmatprep.subr.bf16.mxu0 %v4408
        %4446 = vmatpush1.bf16.msra.mxu0 %v4407
        %4447 = vmatprep.subr.bf16.mxu0 %v4406
        %4448 = vmatpush1.bf16.msra.mxu0 %v4405
        %4449 = vmatprep.subr.bf16.mxu0 %v4404
        %4450 = vmatpush1.bf16.msra.mxu0 %v4403
        %4451 = vmatprep.subr.bf16.mxu0 0
        %4452 = vmatpush2.bf16.msra.mxu0 0
        %4453 = vmatprep.subr.bf16.mxu0 0
        %4454 = vmatpush2.bf16.msra.mxu0 0
        %4455 = vmatprep.subr.bf16.mxu0 0
        %4456 = vmatpush2.bf16.msra.mxu0 0
        %4457 = vmatprep.subr.bf16.mxu0 0
        %4458 = vmatpush2.bf16.msra.mxu0 0
        %4459 = vmatprep.subr.bf16.mxu0 0
        %4460 = vmatpush2.bf16.msra.mxu0 0
        %4461 = vmatprep.subr.bf16.mxu0 0
        %4462 = vmatpush2.bf16.msra.mxu0 0
        %4463 = vmatprep.subr.bf16.mxu0 0
        %4464 = vmatpush2.bf16.msra.mxu0 0
        %4465 = vmatprep.subr.bf16.mxu0 0
        %4466 = vmatpush2.bf16.msra.mxu0 0
        %4467 = vmatprep.mubr.bf16.mxu0 0
        %4468 = vmatmul.mubr.bf16.gmra.mxu0 %v4346
        %v4469 = vpop.f32.mrf.mxu0
        %v4470 = vadd.f32 %v4350, %v4469
        %v4471 = vpop.f32.mrf.mxu0
        %v4472 = vadd.f32 %v4354, %v4471
        %v4473 = vpop.f32.mrf.mxu0
        %v4474 = vadd.f32 %v4350, %v4473
        %v4475 = vpop.f32.mrf.mxu0
        %v4476 = vadd.f32 %v4354, %v4475
        %4477 = vdwg.mxu0
        %v4478 = vmax.f32 %v4470, 0.0
        %v4479 = vmax.f32 %v4472, 0.0
        %v4480 = vmax.f32 %v4474, 0.0
        %v4481 = vmax.f32 %v4476, 0.0
        %v4482 = vpack.c.bf16 %v4480, %v4478
        %v4483 = vpack.c.bf16 %v4481, %v4479
        %v4484 = vlaneseq
        %v4485 = vshrl.u32 %v4484, 7
        %v4486 = vsub.s32 3, %v4485
        %v4487 = vrot.slane %v462, %v4486
        %v4520 = vunpack.c.l.b16 %v4314
        %v4521 = vunpack.c.l.b16 %v4315
        %v4522 = vunpack.c.l.b16 %v4316
        %v4523 = vunpack.c.l.b16 %v4317
        %v4524 = vunpack.c.l.b16 %v4318
        %v4525 = vunpack.c.l.b16 %v4319
        %v4526 = vunpack.c.l.b16 %v4320
        %v4527 = vunpack.c.l.b16 %v4321
        %v4528 = vunpack.c.l.b16 %v4322
        %v4529 = vunpack.c.l.b16 %v4323
        %v4530 = vunpack.c.l.b16 %v4324
        %v4531 = vunpack.c.l.b16 %v4325
        %v4532 = vunpack.c.l.b16 %v4326
        %v4533 = vunpack.c.l.b16 %v4327
        %v4534 = vunpack.c.l.b16 %v4328
        %v4535 = vunpack.c.l.b16 %v4329
        %v4536 = vunpack.c.l.b16 %v4330
        %v4537 = vunpack.c.l.b16 %v4331
        %v4538 = vunpack.c.l.b16 %v4332
        %v4539 = vunpack.c.l.b16 %v4333
        %v4540 = vunpack.c.l.b16 %v4334
        %v4541 = vunpack.c.l.b16 %v4335
        %v4542 = vunpack.c.l.b16 %v4336
        %v4543 = vunpack.c.l.b16 %v4337
        %v4544 = vunpack.c.l.b16 %v4338
        %v4545 = vunpack.c.l.b16 %v4339
        %v4546 = vunpack.c.l.b16 %v4340
        %v4547 = vunpack.c.l.b16 %v4341
        %v4548 = vunpack.c.l.b16 %v4342
        %v4549 = vunpack.c.l.b16 %v4343
        %v4550 = vunpack.c.l.b16 %v4344
        %v4551 = vunpack.c.l.b16 %v4345
        %v4552 = vpack.c.b16 %v4521, %v4520
        %v4553 = vpack.c.b16 %v4523, %v4522
        %v4554 = vpack.c.b16 %v4525, %v4524
        %v4555 = vpack.c.b16 %v4527, %v4526
        %v4556 = vpack.c.b16 %v4529, %v4528
        %v4557 = vpack.c.b16 %v4531, %v4530
        %v4558 = vpack.c.b16 %v4533, %v4532
        %v4559 = vpack.c.b16 %v4535, %v4534
        %v4560 = vpack.c.b16 %v4537, %v4536
        %v4561 = vpack.c.b16 %v4539, %v4538
        %v4562 = vpack.c.b16 %v4541, %v4540
        %v4563 = vpack.c.b16 %v4543, %v4542
        %v4564 = vpack.c.b16 %v4545, %v4544
        %v4565 = vpack.c.b16 %v4547, %v4546
        %v4566 = vpack.c.b16 %v4549, %v4548
        %v4567 = vpack.c.b16 %v4551, %v4550
        %4584 = vmatprep.subr.bf16.mxu0 0
        %4585 = vmatpush1.bf16.msra.mxu0 %v4559
        %4586 = vmatprep.subr.bf16.mxu0 0
        %4587 = vmatpush1.bf16.msra.mxu0 %v4558
        %4588 = vmatprep.subr.bf16.mxu0 0
        %4589 = vmatpush1.bf16.msra.mxu0 %v4557
        %4590 = vmatprep.subr.bf16.mxu0 0
        %4591 = vmatpush1.bf16.msra.mxu0 %v4556
        %4592 = vmatprep.subr.bf16.mxu0 0
        %4593 = vmatpush1.bf16.msra.mxu0 %v4555
        %4594 = vmatprep.subr.bf16.mxu0 0
        %4595 = vmatpush1.bf16.msra.mxu0 %v4554
        %4596 = vmatprep.subr.bf16.mxu0 0
        %4597 = vmatpush1.bf16.msra.mxu0 %v4553
        %4598 = vmatprep.subr.bf16.mxu0 0
        %4599 = vmatpush1.bf16.msra.mxu0 %v4552
        %4600 = vmatprep.subr.bf16.mxu0 0
        %4601 = vmatpush2.bf16.msra.mxu0 %v4567
        %4602 = vmatprep.subr.bf16.mxu0 0
        %4603 = vmatpush2.bf16.msra.mxu0 %v4566
        %4604 = vmatprep.subr.bf16.mxu0 0
        %4605 = vmatpush2.bf16.msra.mxu0 %v4565
        %4606 = vmatprep.subr.bf16.mxu0 0
        %4607 = vmatpush2.bf16.msra.mxu0 %v4564
        %4608 = vmatprep.subr.bf16.mxu0 0
        %4609 = vmatpush2.bf16.msra.mxu0 %v4563
        %4610 = vmatprep.subr.bf16.mxu0 0
        %4611 = vmatpush2.bf16.msra.mxu0 %v4562
        %4612 = vmatprep.subr.bf16.mxu0 0
        %4613 = vmatpush2.bf16.msra.mxu0 %v4561
        %4614 = vmatprep.subr.bf16.mxu0 0
        %4615 = vmatpush2.bf16.msra.mxu0 %v4560
        %4616 = vmatprep.mubr.bf16.mxu0 %v4483
        %4617 = vmatmul.mubr.bf16.gmra.mxu0 %v4482
        %v4618 = vpop.f32.mrf.mxu0
        %v4619 = vadd.f32 %v4487, %v4618
        %v4620 = vpop.f32.mrf.mxu0
        %v4621 = vpop.f32.mrf.mxu0
        %v4622 = vadd.f32 %v4487, %v4621
        %v4623 = vpop.f32.mrf.mxu0
        %4624 = vdwg.mxu0
        %v4625 = vadd.f32 %v3334, %v4619
        %v4626 = vadd.f32 %v3335, %v4622
        %4627 = vadd.xlane.f32.xlu0 %v4625
        %v4628 = vpop.xlane.xlu0 %4627
        %4629 = vadd.xlane.f32.xlu0 %v4626
        %v4630 = vpop.xlane.xlu0 %4629
        %v4631 = vmul.f32 %v4628, %v2227
        %v4632 = vmul.f32 %v4630, %v2227
        %v4633 = vsub.f32 %v4625, %v4631
        %v4634 = vsub.f32 %v4626, %v4632
        %v4635 = vmul.f32 %v4633, %v4633
        %v4636 = vmul.f32 %v4634, %v4634
        %4637 = vadd.xlane.f32.xlu0 %v4635
        %v4638 = vpop.xlane.xlu0 %4637
        %4639 = vadd.xlane.f32.xlu0 %v4636
        %v4640 = vpop.xlane.xlu0 %4639
        %v4641 = vmul.f32 %v4638, %v2227
        %v4642 = vmul.f32 %v4640, %v2227
        %v4643 = vadd.f32 %v4641, 1e-05
        %v4644 = vadd.f32 %v4642, 1e-05
        %v4645 = vrsqrt.pop %v4643
        %v4646 = vrsqrt.pop %v4644
        %v4647 = vmul.f32 %v4633, %v4645
        %v4648 = vmul.f32 %v4634, %v4646
        %v4649 = vlaneseq
        %v4650 = vshrl.u32 %v4649, 7
        %v4651 = vsub.s32 4, %v4650
        %v4652 = vrot.slane %v462, %v4651
        %v4653 = vmul.f32 %v4647, %v4652
        %v4654 = vmul.f32 %v4648, %v4652
        %v4655 = vlaneseq
        %v4656 = vshrl.u32 %v4655, 7
        %v4657 = vsub.s32 5, %v4656
        %v4658 = vrot.slane %v462, %v4657
        %v4659 = vadd.f32 %v4653, %v4658
        %v4660 = vadd.f32 %v4654, %v4658
        %s4661 = scalar_lea.vmem [#allocation10], 384
        %v4662 = vld [vmem:[%s4661] sm:$0xff]
        %v4663 = vld [vmem:[%s4661 + $0x8] sm:$0xff]
        %v4664 = vld [vmem:[%s4661 + $0x10] sm:$0xff]
        %v4665 = vld [vmem:[%s4661 + $0x18] sm:$0xff]
        %v4666 = vld [vmem:[%s4661 + $0x20] sm:$0xff]
        %v4667 = vld [vmem:[%s4661 + $0x28] sm:$0xff]
        %v4668 = vld [vmem:[%s4661 + $0x30] sm:$0xff]
        %v4669 = vld [vmem:[%s4661 + $0x38] sm:$0xff]
        %v4670 = vld [vmem:[%s4661 + $0x40] sm:$0xff]
        %v4671 = vld [vmem:[%s4661 + $0x48] sm:$0xff]
        %v4672 = vld [vmem:[%s4661 + $0x50] sm:$0xff]
        %v4673 = vld [vmem:[%s4661 + $0x58] sm:$0xff]
        %v4674 = vld [vmem:[%s4661 + $0x60] sm:$0xff]
        %v4675 = vld [vmem:[%s4661 + $0x68] sm:$0xff]
        %v4676 = vld [vmem:[%s4661 + $0x70] sm:$0xff]
        %v4677 = vld [vmem:[%s4661 + $0x78] sm:$0xff]
        %s4678 = scalar_lea.vmem [#allocation11], 128
        %v4679 = vld [vmem:[%s4678] sm:$0xf]
        %v4680 = vld [vmem:[%s4678 + $0x4] sm:$0xf]
        %v4681 = vld [vmem:[%s4678 + $0x8] sm:$0xf]
        %v4682 = vld [vmem:[%s4678 + $0xc] sm:$0xf]
        %v4683 = vld [vmem:[%s4678 + $0x10] sm:$0xf]
        %v4684 = vld [vmem:[%s4678 + $0x14] sm:$0xf]
        %v4685 = vld [vmem:[%s4678 + $0x18] sm:$0xf]
        %v4686 = vld [vmem:[%s4678 + $0x1c] sm:$0xf]
        %v4687 = vld [vmem:[%s4678 + $0x20] sm:$0xf]
        %v4688 = vld [vmem:[%s4678 + $0x24] sm:$0xf]
        %v4689 = vld [vmem:[%s4678 + $0x28] sm:$0xf]
        %v4690 = vld [vmem:[%s4678 + $0x2c] sm:$0xf]
        %v4691 = vld [vmem:[%s4678 + $0x30] sm:$0xf]
        %v4692 = vld [vmem:[%s4678 + $0x34] sm:$0xf]
        %v4693 = vld [vmem:[%s4678 + $0x38] sm:$0xf]
        %v4694 = vld [vmem:[%s4678 + $0x3c] sm:$0xf]
        %v4695 = vld [vmem:[%s4678 + $0x40] sm:$0xf]
        %v4696 = vld [vmem:[%s4678 + $0x44] sm:$0xf]
        %v4697 = vld [vmem:[%s4678 + $0x48] sm:$0xf]
        %v4698 = vld [vmem:[%s4678 + $0x4c] sm:$0xf]
        %v4699 = vld [vmem:[%s4678 + $0x50] sm:$0xf]
        %v4700 = vld [vmem:[%s4678 + $0x54] sm:$0xf]
        %v4701 = vld [vmem:[%s4678 + $0x58] sm:$0xf]
        %v4702 = vld [vmem:[%s4678 + $0x5c] sm:$0xf]
        %v4703 = vld [vmem:[%s4678 + $0x60] sm:$0xf]
        %v4704 = vld [vmem:[%s4678 + $0x64] sm:$0xf]
        %v4705 = vld [vmem:[%s4678 + $0x68] sm:$0xf]
        %v4706 = vld [vmem:[%s4678 + $0x6c] sm:$0xf]
        %v4707 = vld [vmem:[%s4678 + $0x70] sm:$0xf]
        %v4708 = vld [vmem:[%s4678 + $0x74] sm:$0xf]
        %v4709 = vld [vmem:[%s4678 + $0x78] sm:$0xf]
        %v4710 = vld [vmem:[%s4678 + $0x7c] sm:$0xf]
        %v4711 = vpack.c.bf16 %v4296, %v4296
        %v4712 = vlaneseq
        %v4713 = vshrl.u32 %v4712, 7
        %v4714 = vsub.s32 3, %v4713
        %v4715 = vrot.slane %v465, %v4714
        %v4716 = vlaneseq
        %v4717 = vshrl.u32 %v4716, 7
        %v4718 = vsub.s32 3, %v4717
        %v4719 = vrot.slane %v466, %v4718
        %v4736 = vunpack.c.l.b16 %v4662
        %v4737 = vunpack.c.h.b16 %v4662
        %v4738 = vunpack.c.l.b16 %v4663
        %v4739 = vunpack.c.h.b16 %v4663
        %v4740 = vunpack.c.l.b16 %v4664
        %v4741 = vunpack.c.h.b16 %v4664
        %v4742 = vunpack.c.l.b16 %v4665
        %v4743 = vunpack.c.h.b16 %v4665
        %v4744 = vunpack.c.l.b16 %v4666
        %v4745 = vunpack.c.h.b16 %v4666
        %v4746 = vunpack.c.l.b16 %v4667
        %v4747 = vunpack.c.h.b16 %v4667
        %v4748 = vunpack.c.l.b16 %v4668
        %v4749 = vunpack.c.h.b16 %v4668
        %v4750 = vunpack.c.l.b16 %v4669
        %v4751 = vunpack.c.h.b16 %v4669
        %v4752 = vunpack.c.l.b16 %v4670
        %v4753 = vunpack.c.h.b16 %v4670
        %v4754 = vunpack.c.l.b16 %v4671
        %v4755 = vunpack.c.h.b16 %v4671
        %v4756 = vunpack.c.l.b16 %v4672
        %v4757 = vunpack.c.h.b16 %v4672
        %v4758 = vunpack.c.l.b16 %v4673
        %v4759 = vunpack.c.h.b16 %v4673
        %v4760 = vunpack.c.l.b16 %v4674
        %v4761 = vunpack.c.h.b16 %v4674
        %v4762 = vunpack.c.l.b16 %v4675
        %v4763 = vunpack.c.h.b16 %v4675
        %v4764 = vunpack.c.l.b16 %v4676
        %v4765 = vunpack.c.h.b16 %v4676
        %v4766 = vunpack.c.l.b16 %v4677
        %v4767 = vunpack.c.h.b16 %v4677
        %v4768 = vpack.c.b16 %v4738, %v4736
        %v4769 = vpack.c.b16 %v4739, %v4737
        %v4770 = vpack.c.b16 %v4742, %v4740
        %v4771 = vpack.c.b16 %v4743, %v4741
        %v4772 = vpack.c.b16 %v4746, %v4744
        %v4773 = vpack.c.b16 %v4747, %v4745
        %v4774 = vpack.c.b16 %v4750, %v4748
        %v4775 = vpack.c.b16 %v4751, %v4749
        %v4776 = vpack.c.b16 %v4754, %v4752
        %v4777 = vpack.c.b16 %v4755, %v4753
        %v4778 = vpack.c.b16 %v4758, %v4756
        %v4779 = vpack.c.b16 %v4759, %v4757
        %v4780 = vpack.c.b16 %v4762, %v4760
        %v4781 = vpack.c.b16 %v4763, %v4761
        %v4782 = vpack.c.b16 %v4766, %v4764
        %v4783 = vpack.c.b16 %v4767, %v4765
        %4800 = vmatprep.subr.bf16.mxu0 %v4783
        %4801 = vmatpush1.bf16.msra.mxu0 %v4782
        %4802 = vmatprep.subr.bf16.mxu0 %v4781
        %4803 = vmatpush1.bf16.msra.mxu0 %v4780
        %4804 = vmatprep.subr.bf16.mxu0 %v4779
        %4805 = vmatpush1.bf16.msra.mxu0 %v4778
        %4806 = vmatprep.subr.bf16.mxu0 %v4777
        %4807 = vmatpush1.bf16.msra.mxu0 %v4776
        %4808 = vmatprep.subr.bf16.mxu0 %v4775
        %4809 = vmatpush1.bf16.msra.mxu0 %v4774
        %4810 = vmatprep.subr.bf16.mxu0 %v4773
        %4811 = vmatpush1.bf16.msra.mxu0 %v4772
        %4812 = vmatprep.subr.bf16.mxu0 %v4771
        %4813 = vmatpush1.bf16.msra.mxu0 %v4770
        %4814 = vmatprep.subr.bf16.mxu0 %v4769
        %4815 = vmatpush1.bf16.msra.mxu0 %v4768
        %4816 = vmatprep.subr.bf16.mxu0 0
        %4817 = vmatpush2.bf16.msra.mxu0 0
        %4818 = vmatprep.subr.bf16.mxu0 0
        %4819 = vmatpush2.bf16.msra.mxu0 0
        %4820 = vmatprep.subr.bf16.mxu0 0
        %4821 = vmatpush2.bf16.msra.mxu0 0
        %4822 = vmatprep.subr.bf16.mxu0 0
        %4823 = vmatpush2.bf16.msra.mxu0 0
        %4824 = vmatprep.subr.bf16.mxu0 0
        %4825 = vmatpush2.bf16.msra.mxu0 0
        %4826 = vmatprep.subr.bf16.mxu0 0
        %4827 = vmatpush2.bf16.msra.mxu0 0
        %4828 = vmatprep.subr.bf16.mxu0 0
        %4829 = vmatpush2.bf16.msra.mxu0 0
        %4830 = vmatprep.subr.bf16.mxu0 0
        %4831 = vmatpush2.bf16.msra.mxu0 0
        %4832 = vmatprep.mubr.bf16.mxu0 0
        %4833 = vmatmul.mubr.bf16.gmra.mxu0 %v4711
        %v4834 = vpop.f32.mrf.mxu0
        %v4835 = vadd.f32 %v4715, %v4834
        %v4836 = vpop.f32.mrf.mxu0
        %v4837 = vadd.f32 %v4719, %v4836
        %v4838 = vpop.f32.mrf.mxu0
        %v4839 = vpop.f32.mrf.mxu0
        %4840 = vdwg.mxu0
        %v4841 = vmax.f32 %v4835, 0.0
        %v4842 = vmax.f32 %v4837, 0.0
        %v4843 = vpack.c.bf16 %v4841, %v4841
        %v4844 = vpack.c.bf16 %v4842, %v4842
        %v4845 = vlaneseq
        %v4846 = vshrl.u32 %v4845, 7
        %v4847 = vsub.s32 6, %v4846
        %v4848 = vrot.slane %v462, %v4847
        %v4881 = vunpack.c.l.b16 %v4679
        %v4882 = vunpack.c.l.b16 %v4680
        %v4883 = vunpack.c.l.b16 %v4681
        %v4884 = vunpack.c.l.b16 %v4682
        %v4885 = vunpack.c.l.b16 %v4683
        %v4886 = vunpack.c.l.b16 %v4684
        %v4887 = vunpack.c.l.b16 %v4685
        %v4888 = vunpack.c.l.b16 %v4686
        %v4889 = vunpack.c.l.b16 %v4687
        %v4890 = vunpack.c.l.b16 %v4688
        %v4891 = vunpack.c.l.b16 %v4689
        %v4892 = vunpack.c.l.b16 %v4690
        %v4893 = vunpack.c.l.b16 %v4691
        %v4894 = vunpack.c.l.b16 %v4692
        %v4895 = vunpack.c.l.b16 %v4693
        %v4896 = vunpack.c.l.b16 %v4694
        %v4897 = vunpack.c.l.b16 %v4695
        %v4898 = vunpack.c.l.b16 %v4696
        %v4899 = vunpack.c.l.b16 %v4697
        %v4900 = vunpack.c.l.b16 %v4698
        %v4901 = vunpack.c.l.b16 %v4699
        %v4902 = vunpack.c.l.b16 %v4700
        %v4903 = vunpack.c.l.b16 %v4701
        %v4904 = vunpack.c.l.b16 %v4702
        %v4905 = vunpack.c.l.b16 %v4703
        %v4906 = vunpack.c.l.b16 %v4704
        %v4907 = vunpack.c.l.b16 %v4705
        %v4908 = vunpack.c.l.b16 %v4706
        %v4909 = vunpack.c.l.b16 %v4707
        %v4910 = vunpack.c.l.b16 %v4708
        %v4911 = vunpack.c.l.b16 %v4709
        %v4912 = vunpack.c.l.b16 %v4710
        %v4913 = vpack.c.b16 %v4882, %v4881
        %v4914 = vpack.c.b16 %v4884, %v4883
        %v4915 = vpack.c.b16 %v4886, %v4885
        %v4916 = vpack.c.b16 %v4888, %v4887
        %v4917 = vpack.c.b16 %v4890, %v4889
        %v4918 = vpack.c.b16 %v4892, %v4891
        %v4919 = vpack.c.b16 %v4894, %v4893
        %v4920 = vpack.c.b16 %v4896, %v4895
        %v4921 = vpack.c.b16 %v4898, %v4897
        %v4922 = vpack.c.b16 %v4900, %v4899
        %v4923 = vpack.c.b16 %v4902, %v4901
        %v4924 = vpack.c.b16 %v4904, %v4903
        %v4925 = vpack.c.b16 %v4906, %v4905
        %v4926 = vpack.c.b16 %v4908, %v4907
        %v4927 = vpack.c.b16 %v4910, %v4909
        %v4928 = vpack.c.b16 %v4912, %v4911
        %4945 = vmatprep.subr.bf16.mxu0 0
        %4946 = vmatpush1.bf16.msra.mxu0 %v4920
        %4947 = vmatprep.subr.bf16.mxu0 0
        %4948 = vmatpush1.bf16.msra.mxu0 %v4919
        %4949 = vmatprep.subr.bf16.mxu0 0
        %4950 = vmatpush1.bf16.msra.mxu0 %v4918
        %4951 = vmatprep.subr.bf16.mxu0 0
        %4952 = vmatpush1.bf16.msra.mxu0 %v4917
        %4953 = vmatprep.subr.bf16.mxu0 0
        %4954 = vmatpush1.bf16.msra.mxu0 %v4916
        %4955 = vmatprep.subr.bf16.mxu0 0
        %4956 = vmatpush1.bf16.msra.mxu0 %v4915
        %4957 = vmatprep.subr.bf16.mxu0 0
        %4958 = vmatpush1.bf16.msra.mxu0 %v4914
        %4959 = vmatprep.subr.bf16.mxu0 0
        %4960 = vmatpush1.bf16.msra.mxu0 %v4913
        %4961 = vmatprep.subr.bf16.mxu0 0
        %4962 = vmatpush2.bf16.msra.mxu0 %v4928
        %4963 = vmatprep.subr.bf16.mxu0 0
        %4964 = vmatpush2.bf16.msra.mxu0 %v4927
        %4965 = vmatprep.subr.bf16.mxu0 0
        %4966 = vmatpush2.bf16.msra.mxu0 %v4926
        %4967 = vmatprep.subr.bf16.mxu0 0
        %4968 = vmatpush2.bf16.msra.mxu0 %v4925
        %4969 = vmatprep.subr.bf16.mxu0 0
        %4970 = vmatpush2.bf16.msra.mxu0 %v4924
        %4971 = vmatprep.subr.bf16.mxu0 0
        %4972 = vmatpush2.bf16.msra.mxu0 %v4923
        %4973 = vmatprep.subr.bf16.mxu0 0
        %4974 = vmatpush2.bf16.msra.mxu0 %v4922
        %4975 = vmatprep.subr.bf16.mxu0 0
        %4976 = vmatpush2.bf16.msra.mxu0 %v4921
        %4977 = vmatprep.mubr.bf16.mxu0 %v4844
        %4978 = vmatmul.mubr.bf16.gmra.mxu0 %v4843
        %v4979 = vpop.f32.mrf.mxu0
        %v4980 = vadd.f32 %v4848, %v4979
        %v4981 = vpop.f32.mrf.mxu0
        %v4982 = vpop.f32.mrf.mxu0
        %v4983 = vpop.f32.mrf.mxu0
        %4984 = vdwg.mxu0
        %v4985 = vadd.f32 %v4296, %v4980
        %4986 = vadd.xlane.f32.xlu0 %v4985
        %v4987 = vpop.xlane.xlu0 %4986
        %v4988 = vmul.f32 %v4987, %v2227
        %v4989 = vsub.f32 %v4985, %v4988
        %v4990 = vmul.f32 %v4989, %v4989
        %4991 = vadd.xlane.f32.xlu0 %v4990
        %v4992 = vpop.xlane.xlu0 %4991
        %v4993 = vmul.f32 %v4992, %v2227
        %v4994 = vadd.f32 %v4993, 1e-05
        %v4995 = vrsqrt.pop %v4994
        %v4996 = vmul.f32 %v4989, %v4995
        %v4997 = vlaneseq
        %v4998 = vshrl.u32 %v4997, 7
        %v4999 = vsub.s32 7, %v4998
        %v5000 = vrot.slane %v462, %v4999
        %v5001 = vmul.f32 %v4996, %v5000
        %v5002 = vlaneseq
        %v5003 = vshrl.u32 %v5002, 7
        %v5004 = vsub.s32 0, %v5003
        %v5005 = vrot.slane %v463, %v5004
        %v5006 = vadd.f32 %v5001, %v5005
        %s5007 = scalar_lea.vmem [#allocation8], 256
        %v5008 = vld [vmem:[%s5007] sm:$0xf]
        %v5009 = vld [vmem:[%s5007 + $0x4] sm:$0xf]
        %v5010 = vld [vmem:[%s5007 + $0x8] sm:$0xf]
        %v5011 = vld [vmem:[%s5007 + $0xc] sm:$0xf]
        %v5012 = vld [vmem:[%s5007 + $0x10] sm:$0xf]
        %v5013 = vld [vmem:[%s5007 + $0x14] sm:$0xf]
        %v5014 = vld [vmem:[%s5007 + $0x18] sm:$0xf]
        %v5015 = vld [vmem:[%s5007 + $0x1c] sm:$0xf]
        %v5016 = vld [vmem:[%s5007 + $0x20] sm:$0xf]
        %v5017 = vld [vmem:[%s5007 + $0x24] sm:$0xf]
        %v5018 = vld [vmem:[%s5007 + $0x28] sm:$0xf]
        %v5019 = vld [vmem:[%s5007 + $0x2c] sm:$0xf]
        %v5020 = vld [vmem:[%s5007 + $0x30] sm:$0xf]
        %v5021 = vld [vmem:[%s5007 + $0x34] sm:$0xf]
        %v5022 = vld [vmem:[%s5007 + $0x38] sm:$0xf]
        %v5023 = vld [vmem:[%s5007 + $0x3c] sm:$0xf]
        %s5024 = scalar_lea.vmem [#allocation10], 512
        %v5025 = vld [vmem:[%s5024] sm:$0xff]
        %v5026 = vld [vmem:[%s5024 + $0x8] sm:$0xff]
        %v5027 = vld [vmem:[%s5024 + $0x10] sm:$0xff]
        %v5028 = vld [vmem:[%s5024 + $0x18] sm:$0xff]
        %v5029 = vld [vmem:[%s5024 + $0x20] sm:$0xff]
        %v5030 = vld [vmem:[%s5024 + $0x28] sm:$0xff]
        %v5031 = vld [vmem:[%s5024 + $0x30] sm:$0xff]
        %v5032 = vld [vmem:[%s5024 + $0x38] sm:$0xff]
        %v5033 = vld [vmem:[%s5024 + $0x40] sm:$0xff]
        %v5034 = vld [vmem:[%s5024 + $0x48] sm:$0xff]
        %v5035 = vld [vmem:[%s5024 + $0x50] sm:$0xff]
        %v5036 = vld [vmem:[%s5024 + $0x58] sm:$0xff]
        %v5037 = vld [vmem:[%s5024 + $0x60] sm:$0xff]
        %v5038 = vld [vmem:[%s5024 + $0x68] sm:$0xff]
        %v5039 = vld [vmem:[%s5024 + $0x70] sm:$0xff]
        %v5040 = vld [vmem:[%s5024 + $0x78] sm:$0xff]
        %s5041 = scalar_lea.vmem [#allocation8], 320
        %v5042 = vld [vmem:[%s5041] sm:$0xf]
        %v5043 = vld [vmem:[%s5041 + $0x4] sm:$0xf]
        %v5044 = vld [vmem:[%s5041 + $0x8] sm:$0xf]
        %v5045 = vld [vmem:[%s5041 + $0xc] sm:$0xf]
        %v5046 = vld [vmem:[%s5041 + $0x10] sm:$0xf]
        %v5047 = vld [vmem:[%s5041 + $0x14] sm:$0xf]
        %v5048 = vld [vmem:[%s5041 + $0x18] sm:$0xf]
        %v5049 = vld [vmem:[%s5041 + $0x1c] sm:$0xf]
        %v5050 = vld [vmem:[%s5041 + $0x20] sm:$0xf]
        %v5051 = vld [vmem:[%s5041 + $0x24] sm:$0xf]
        %v5052 = vld [vmem:[%s5041 + $0x28] sm:$0xf]
        %v5053 = vld [vmem:[%s5041 + $0x2c] sm:$0xf]
        %v5054 = vld [vmem:[%s5041 + $0x30] sm:$0xf]
        %v5055 = vld [vmem:[%s5041 + $0x34] sm:$0xf]
        %v5056 = vld [vmem:[%s5041 + $0x38] sm:$0xf]
        %v5057 = vld [vmem:[%s5041 + $0x3c] sm:$0xf]
        %v5058 = vpack.c.bf16 %v4660, %v4659
        %v5059 = vlaneseq
        %v5060 = vshrl.u32 %v5059, 7
        %v5061 = vsub.s32 1, %v5060
        %v5062 = vrot.slane %v463, %v5061
        %v5079 = vunpack.c.l.b16 %v5008
        %v5080 = vunpack.c.l.b16 %v5009
        %v5081 = vunpack.c.l.b16 %v5010
        %v5082 = vunpack.c.l.b16 %v5011
        %v5083 = vunpack.c.l.b16 %v5012
        %v5084 = vunpack.c.l.b16 %v5013
        %v5085 = vunpack.c.l.b16 %v5014
        %v5086 = vunpack.c.l.b16 %v5015
        %v5087 = vunpack.c.l.b16 %v5016
        %v5088 = vunpack.c.l.b16 %v5017
        %v5089 = vunpack.c.l.b16 %v5018
        %v5090 = vunpack.c.l.b16 %v5019
        %v5091 = vunpack.c.l.b16 %v5020
        %v5092 = vunpack.c.l.b16 %v5021
        %v5093 = vunpack.c.l.b16 %v5022
        %v5094 = vunpack.c.l.b16 %v5023
        %v5095 = vpack.c.b16 %v5080, %v5079
        %v5096 = vpack.c.b16 %v5082, %v5081
        %v5097 = vpack.c.b16 %v5084, %v5083
        %v5098 = vpack.c.b16 %v5086, %v5085
        %v5099 = vpack.c.b16 %v5088, %v5087
        %v5100 = vpack.c.b16 %v5090, %v5089
        %v5101 = vpack.c.b16 %v5092, %v5091
        %v5102 = vpack.c.b16 %v5094, %v5093
        %5111 = vmatprep.subr.bf16.mxu0 0
        %5112 = vmatpush1.bf16.msra.mxu0 %v5102
        %5113 = vmatprep.subr.bf16.mxu0 0
        %5114 = vmatpush1.bf16.msra.mxu0 %v5101
        %5115 = vmatprep.subr.bf16.mxu0 0
        %5116 = vmatpush1.bf16.msra.mxu0 %v5100
        %5117 = vmatprep.subr.bf16.mxu0 0
        %5118 = vmatpush1.bf16.msra.mxu0 %v5099
        %5119 = vmatprep.subr.bf16.mxu0 0
        %5120 = vmatpush1.bf16.msra.mxu0 %v5098
        %5121 = vmatprep.subr.bf16.mxu0 0
        %5122 = vmatpush1.bf16.msra.mxu0 %v5097
        %5123 = vmatprep.subr.bf16.mxu0 0
        %5124 = vmatpush1.bf16.msra.mxu0 %v5096
        %5125 = vmatprep.subr.bf16.mxu0 0
        %5126 = vmatpush1.bf16.msra.mxu0 %v5095
        %5127 = vmatprep.subr.bf16.mxu0 0
        %5128 = vmatpush2.bf16.msra.mxu0 0
        %5129 = vmatprep.subr.bf16.mxu0 0
        %5130 = vmatpush2.bf16.msra.mxu0 0
        %5131 = vmatprep.subr.bf16.mxu0 0
        %5132 = vmatpush2.bf16.msra.mxu0 0
        %5133 = vmatprep.subr.bf16.mxu0 0
        %5134 = vmatpush2.bf16.msra.mxu0 0
        %5135 = vmatprep.subr.bf16.mxu0 0
        %5136 = vmatpush2.bf16.msra.mxu0 0
        %5137 = vmatprep.subr.bf16.mxu0 0
        %5138 = vmatpush2.bf16.msra.mxu0 0
        %5139 = vmatprep.subr.bf16.mxu0 0
        %5140 = vmatpush2.bf16.msra.mxu0 0
        %5141 = vmatprep.subr.bf16.mxu0 0
        %5142 = vmatpush2.bf16.msra.mxu0 0
        %5143 = vmatprep.mubr.bf16.mxu0 0
        %5144 = vmatmul.mubr.bf16.gmra.mxu0 %v5058
        %v5145 = vpop.f32.mrf.mxu0
        %v5146 = vadd.f32 %v5062, %v5145
        %v5147 = vpop.f32.mrf.mxu0
        %v5148 = vpop.f32.mrf.mxu0
        %v5149 = vadd.f32 %v5062, %v5148
        %v5150 = vpop.f32.mrf.mxu0
        %5151 = vdwg.mxu0
        %v5152 = vlaneseq
        %v5153 = vshrl.u32 %v5152, 7
        %v5154 = vsub.s32 4, %v5153
        %v5155 = vrot.slane %v465, %v5154
        %v5156 = vlaneseq
        %v5157 = vshrl.u32 %v5156, 7
        %v5158 = vsub.s32 4, %v5157
        %v5159 = vrot.slane %v466, %v5158
        %v5176 = vunpack.c.l.b16 %v5025
        %v5177 = vunpack.c.h.b16 %v5025
        %v5178 = vunpack.c.l.b16 %v5026
        %v5179 = vunpack.c.h.b16 %v5026
        %v5180 = vunpack.c.l.b16 %v5027
        %v5181 = vunpack.c.h.b16 %v5027
        %v5182 = vunpack.c.l.b16 %v5028
        %v5183 = vunpack.c.h.b16 %v5028
        %v5184 = vunpack.c.l.b16 %v5029
        %v5185 = vunpack.c.h.b16 %v5029
        %v5186 = vunpack.c.l.b16 %v5030
        %v5187 = vunpack.c.h.b16 %v5030
        %v5188 = vunpack.c.l.b16 %v5031
        %v5189 = vunpack.c.h.b16 %v5031
        %v5190 = vunpack.c.l.b16 %v5032
        %v5191 = vunpack.c.h.b16 %v5032
        %v5192 = vunpack.c.l.b16 %v5033
        %v5193 = vunpack.c.h.b16 %v5033
        %v5194 = vunpack.c.l.b16 %v5034
        %v5195 = vunpack.c.h.b16 %v5034
        %v5196 = vunpack.c.l.b16 %v5035
        %v5197 = vunpack.c.h.b16 %v5035
        %v5198 = vunpack.c.l.b16 %v5036
        %v5199 = vunpack.c.h.b16 %v5036
        %v5200 = vunpack.c.l.b16 %v5037
        %v5201 = vunpack.c.h.b16 %v5037
        %v5202 = vunpack.c.l.b16 %v5038
        %v5203 = vunpack.c.h.b16 %v5038
        %v5204 = vunpack.c.l.b16 %v5039
        %v5205 = vunpack.c.h.b16 %v5039
        %v5206 = vunpack.c.l.b16 %v5040
        %v5207 = vunpack.c.h.b16 %v5040
        %v5208 = vpack.c.b16 %v5178, %v5176
        %v5209 = vpack.c.b16 %v5179, %v5177
        %v5210 = vpack.c.b16 %v5182, %v5180
        %v5211 = vpack.c.b16 %v5183, %v5181
        %v5212 = vpack.c.b16 %v5186, %v5184
        %v5213 = vpack.c.b16 %v5187, %v5185
        %v5214 = vpack.c.b16 %v5190, %v5188
        %v5215 = vpack.c.b16 %v5191, %v5189
        %v5216 = vpack.c.b16 %v5194, %v5192
        %v5217 = vpack.c.b16 %v5195, %v5193
        %v5218 = vpack.c.b16 %v5198, %v5196
        %v5219 = vpack.c.b16 %v5199, %v5197
        %v5220 = vpack.c.b16 %v5202, %v5200
        %v5221 = vpack.c.b16 %v5203, %v5201
        %v5222 = vpack.c.b16 %v5206, %v5204
        %v5223 = vpack.c.b16 %v5207, %v5205
        %5240 = vmatprep.subr.bf16.mxu0 %v5223
        %5241 = vmatpush1.bf16.msra.mxu0 %v5222
        %5242 = vmatprep.subr.bf16.mxu0 %v5221
        %5243 = vmatpush1.bf16.msra.mxu0 %v5220
        %5244 = vmatprep.subr.bf16.mxu0 %v5219
        %5245 = vmatpush1.bf16.msra.mxu0 %v5218
        %5246 = vmatprep.subr.bf16.mxu0 %v5217
        %5247 = vmatpush1.bf16.msra.mxu0 %v5216
        %5248 = vmatprep.subr.bf16.mxu0 %v5215
        %5249 = vmatpush1.bf16.msra.mxu0 %v5214
        %5250 = vmatprep.subr.bf16.mxu0 %v5213
        %5251 = vmatpush1.bf16.msra.mxu0 %v5212
        %5252 = vmatprep.subr.bf16.mxu0 %v5211
        %5253 = vmatpush1.bf16.msra.mxu0 %v5210
        %5254 = vmatprep.subr.bf16.mxu0 %v5209
        %5255 = vmatpush1.bf16.msra.mxu0 %v5208
        %5256 = vmatprep.subr.bf16.mxu0 0
        %5257 = vmatpush2.bf16.msra.mxu0 0
        %5258 = vmatprep.subr.bf16.mxu0 0
        %5259 = vmatpush2.bf16.msra.mxu0 0
        %5260 = vmatprep.subr.bf16.mxu0 0
        %5261 = vmatpush2.bf16.msra.mxu0 0
        %5262 = vmatprep.subr.bf16.mxu0 0
        %5263 = vmatpush2.bf16.msra.mxu0 0
        %5264 = vmatprep.subr.bf16.mxu0 0
        %5265 = vmatpush2.bf16.msra.mxu0 0
        %5266 = vmatprep.subr.bf16.mxu0 0
        %5267 = vmatpush2.bf16.msra.mxu0 0
        %5268 = vmatprep.subr.bf16.mxu0 0
        %5269 = vmatpush2.bf16.msra.mxu0 0
        %5270 = vmatprep.subr.bf16.mxu0 0
        %5271 = vmatpush2.bf16.msra.mxu0 0
        %5272 = vmatprep.mubr.bf16.mxu0 0
        %5273 = vmatmul.mubr.bf16.gmra.mxu0 %v5058
        %v5274 = vpop.f32.mrf.mxu0
        %v5275 = vadd.f32 %v5155, %v5274
        %v5276 = vpop.f32.mrf.mxu0
        %v5277 = vadd.f32 %v5159, %v5276
        %v5278 = vpop.f32.mrf.mxu0
        %v5279 = vadd.f32 %v5155, %v5278
        %v5280 = vpop.f32.mrf.mxu0
        %v5281 = vadd.f32 %v5159, %v5280
        %5282 = vdwg.mxu0
        %v5283 = vpack.c.bf16 %v5281, %v5277
        %v5285 = vsel %vm2534, %v5146, 0
        %v5288 = vsel %vm2534, %v5149, 0
        %v5291 = vsel %vm2534, %v5275, 0
        %v5294 = vsel %vm2534, %v5279, 0
        %5296 = vmatprep.subr.mxu0 0.0
        %5297 = vmatpush1.xpose.msra.mxu0 0.0
        %5298 = vmatprep.subr.mxu0 0.0
        %5299 = vmatpush1.xpose.msra.mxu0 0.0
        %5300 = vmatprep.subr.mxu0 0.0
        %5301 = vmatpush1.xpose.msra.mxu0 0.0
        %5302 = vmatprep.subr.mxu0 0.0
        %5303 = vmatpush1.xpose.msra.mxu0 0.0
        %5304 = vmatprep.subr.mxu0 0.0
        %5305 = vmatpush1.xpose.msra.mxu0 0.0
        %5306 = vmatprep.subr.mxu0 0.0
        %5307 = vmatpush1.xpose.msra.mxu0 0.0
        %5308 = vmatprep.subr.mxu0 0.0
        %5309 = vmatpush1.xpose.msra.mxu0 0.0
        %5310 = vmatprep.subr.mxu0 0.0
        %5311 = vmatpush1.xpose.msra.mxu0 0.0
        %5312 = vmatprep.subr.mxu0 0.0
        %5313 = vmatpush1.xpose.msra.mxu0 0.0
        %5314 = vmatprep.subr.mxu0 0.0
        %5315 = vmatpush1.xpose.msra.mxu0 0.0
        %5316 = vmatprep.subr.mxu0 0.0
        %5317 = vmatpush1.xpose.msra.mxu0 0.0
        %5318 = vmatprep.subr.mxu0 0.0
        %5319 = vmatpush1.xpose.msra.mxu0 0.0
        %5320 = vmatprep.subr.mxu0 0.0
        %5321 = vmatpush1.xpose.msra.mxu0 0.0
        %5322 = vmatprep.subr.mxu0 0.0
        %5323 = vmatpush1.xpose.msra.mxu0 0.0
        %5324 = vmatprep.subr.mxu0 0.0
        %5325 = vmatpush1.xpose.msra.mxu0 %v5294
        %5326 = vmatprep.subr.mxu0 0.0
        %5327 = vmatpush1.xpose.msra.mxu0 %v5291
        %5328 = vmatprep.subr.mxu0 0.0
        %5329 = vmatpush2.xpose.msra.mxu0 0.0
        %5330 = vmatprep.subr.mxu0 0.0
        %5331 = vmatpush2.xpose.msra.mxu0 0.0
        %5332 = vmatprep.subr.mxu0 0.0
        %5333 = vmatpush2.xpose.msra.mxu0 0.0
        %5334 = vmatprep.subr.mxu0 0.0
        %5335 = vmatpush2.xpose.msra.mxu0 0.0
        %5336 = vmatprep.subr.mxu0 0.0
        %5337 = vmatpush2.xpose.msra.mxu0 0.0
        %5338 = vmatprep.subr.mxu0 0.0
        %5339 = vmatpush2.xpose.msra.mxu0 0.0
        %5340 = vmatprep.subr.mxu0 0.0
        %5341 = vmatpush2.xpose.msra.mxu0 0.0
        %5342 = vmatprep.subr.mxu0 0.0
        %5343 = vmatpush2.xpose.msra.mxu0 0.0
        %5344 = vmatprep.subr.mxu0 0.0
        %5345 = vmatpush2.xpose.msra.mxu0 0.0
        %5346 = vmatprep.subr.mxu0 0.0
        %5347 = vmatpush2.xpose.msra.mxu0 0.0
        %5348 = vmatprep.subr.mxu0 0.0
        %5349 = vmatpush2.xpose.msra.mxu0 0.0
        %5350 = vmatprep.subr.mxu0 0.0
        %5351 = vmatpush2.xpose.msra.mxu0 0.0
        %5352 = vmatprep.subr.mxu0 0.0
        %5353 = vmatpush2.xpose.msra.mxu0 0.0
        %5354 = vmatprep.subr.mxu0 0.0
        %5355 = vmatpush2.xpose.msra.mxu0 0.0
        %5356 = vmatprep.subr.mxu0 0.0
        %5357 = vmatpush2.xpose.msra.mxu0 0.0
        %5358 = vmatprep.subr.mxu0 0.0
        %5359 = vmatpush2.xpose.msra.mxu0 0.0
        %5360 = vmatprep.mubr.f32.mxu0 0.0
        %5361 = vmatmul.mubr.f32.gmra.mxu0 %v5285
        %v5362 = vpop.f32.mrf.mxu0
        %v5363 = vadd.f32 0.0, %v5362
        %v5364 = vpop.f32.mrf.mxu0
        %5365 = vmatprep.mubr.f32.mxu0 0.0
        %5366 = vmatmul.mubr.f32.gmra.mxu0 %v5288
        %v5367 = vpop.f32.mrf.mxu0
        %v5368 = vadd.f32 0.0, %v5367
        %v5369 = vpop.f32.mrf.mxu0
        %5370 = vdwg.mxu0
        %v5371 = vsel %vm2622, %v5363, -inf
        %5372 = vmax.xlane.f32.xlu0 %v5371
        %v5373 = vpop.xlane.xlu0 %5372
        %v5374 = vsel %vm2622, %v5368, -inf
        %5375 = vmax.xlane.f32.xlu0 %v5374
        %v5376 = vpop.xlane.xlu0 %5375
        %v5377 = vsub.f32 %v5363, %v5373
        %v5378 = vsub.f32 %v5368, %v5376
        %v5379 = vmul.f32 %v5377, 1.442695
        %v5380 = vpow.pop %v5379
        %v5381 = vmul.f32 %v5378, 1.442695
        %v5382 = vpow.pop %v5381
        %v5383 = vsel %vm2622, %v5380, 0.0
        %5384 = vadd.xlane.f32.xlu0 %v5383
        %v5385 = vpop.xlane.xlu0 %5384
        %v5386 = vsel %vm2622, %v5382, 0.0
        %5387 = vadd.xlane.f32.xlu0 %v5386
        %v5388 = vpop.xlane.xlu0 %5387
        %v5389 = vrcp.pop %v5385
        %v5390 = vrcp.pop %v5388
        %v5391 = vmul.f32 %v5380, %v5389
        %v5392 = vmul.f32 %v5382, %v5390
        %v5393 = vpack.c.bf16 %v5392, %v5391
        %v5395 = vsel %vm2622, %v5393, 0
        %5397 = vmatprep.subr.bf16.mxu0 0
        %5398 = vmatpush1.bf16.msra.mxu0 0
        %5399 = vmatprep.subr.bf16.mxu0 0
        %5400 = vmatpush1.bf16.msra.mxu0 0
        %5401 = vmatprep.subr.bf16.mxu0 0
        %5402 = vmatpush1.bf16.msra.mxu0 0
        %5403 = vmatprep.subr.bf16.mxu0 0
        %5404 = vmatpush1.bf16.msra.mxu0 0
        %5405 = vmatprep.subr.bf16.mxu0 0
        %5406 = vmatpush1.bf16.msra.mxu0 0
        %5407 = vmatprep.subr.bf16.mxu0 0
        %5408 = vmatpush1.bf16.msra.mxu0 0
        %5409 = vmatprep.subr.bf16.mxu0 0
        %5410 = vmatpush1.bf16.msra.mxu0 0
        %5411 = vmatprep.subr.bf16.mxu0 0
        %5412 = vmatpush1.bf16.msra.mxu0 %v5283
        %5413 = vmatprep.subr.bf16.mxu0 0
        %5414 = vmatpush2.bf16.msra.mxu0 0
        %5415 = vmatprep.subr.bf16.mxu0 0
        %5416 = vmatpush2.bf16.msra.mxu0 0
        %5417 = vmatprep.subr.bf16.mxu0 0
        %5418 = vmatpush2.bf16.msra.mxu0 0
        %5419 = vmatprep.subr.bf16.mxu0 0
        %5420 = vmatpush2.bf16.msra.mxu0 0
        %5421 = vmatprep.subr.bf16.mxu0 0
        %5422 = vmatpush2.bf16.msra.mxu0 0
        %5423 = vmatprep.subr.bf16.mxu0 0
        %5424 = vmatpush2.bf16.msra.mxu0 0
        %5425 = vmatprep.subr.bf16.mxu0 0
        %5426 = vmatpush2.bf16.msra.mxu0 0
        %5427 = vmatprep.subr.bf16.mxu0 0
        %5428 = vmatpush2.bf16.msra.mxu0 0
        %5429 = vmatprep.mubr.bf16.mxu0 0
        %5430 = vmatmul.mubr.bf16.gmra.mxu0 %v5395
        %v5431 = vpop.f32.mrf.mxu0
        %v5432 = vadd.f32 0.0, %v5431
        %v5433 = vpop.f32.mrf.mxu0
        %v5434 = vpop.f32.mrf.mxu0
        %v5435 = vadd.f32 0.0, %v5434
        %v5436 = vpop.f32.mrf.mxu0
        %5437 = vdwg.mxu0
        %5438 = vrot.lane.b32.xlu0 %v5146, 96
        %v5439 = vpop.permute.xlu0 %5438
        %5440 = vrot.lane.b32.xlu0 %v5149, 96
        %v5441 = vpop.permute.xlu0 %5440
        %5442 = vrot.lane.b32.xlu0 %v5275, 96
        %v5443 = vpop.permute.xlu0 %5442
        %5444 = vrot.lane.b32.xlu0 %v5279, 96
        %v5445 = vpop.permute.xlu0 %5444
        %v5446 = vsel %vm2534, %v5439, 0
        %v5448 = vsel %vm2534, %v5441, 0
        %v5450 = vsel %vm2534, %v5443, 0
        %v5452 = vsel %vm2534, %v5445, 0
        %5454 = vmatprep.subr.mxu0 0.0
        %5455 = vmatpush1.xpose.msra.mxu0 0.0
        %5456 = vmatprep.subr.mxu0 0.0
        %5457 = vmatpush1.xpose.msra.mxu0 0.0
        %5458 = vmatprep.subr.mxu0 0.0
        %5459 = vmatpush1.xpose.msra.mxu0 0.0
        %5460 = vmatprep.subr.mxu0 0.0
        %5461 = vmatpush1.xpose.msra.mxu0 0.0
        %5462 = vmatprep.subr.mxu0 0.0
        %5463 = vmatpush1.xpose.msra.mxu0 0.0
        %5464 = vmatprep.subr.mxu0 0.0
        %5465 = vmatpush1.xpose.msra.mxu0 0.0
        %5466 = vmatprep.subr.mxu0 0.0
        %5467 = vmatpush1.xpose.msra.mxu0 0.0
        %5468 = vmatprep.subr.mxu0 0.0
        %5469 = vmatpush1.xpose.msra.mxu0 0.0
        %5470 = vmatprep.subr.mxu0 0.0
        %5471 = vmatpush1.xpose.msra.mxu0 0.0
        %5472 = vmatprep.subr.mxu0 0.0
        %5473 = vmatpush1.xpose.msra.mxu0 0.0
        %5474 = vmatprep.subr.mxu0 0.0
        %5475 = vmatpush1.xpose.msra.mxu0 0.0
        %5476 = vmatprep.subr.mxu0 0.0
        %5477 = vmatpush1.xpose.msra.mxu0 0.0
        %5478 = vmatprep.subr.mxu0 0.0
        %5479 = vmatpush1.xpose.msra.mxu0 0.0
        %5480 = vmatprep.subr.mxu0 0.0
        %5481 = vmatpush1.xpose.msra.mxu0 0.0
        %5482 = vmatprep.subr.mxu0 0.0
        %5483 = vmatpush1.xpose.msra.mxu0 %v5452
        %5484 = vmatprep.subr.mxu0 0.0
        %5485 = vmatpush1.xpose.msra.mxu0 %v5450
        %5486 = vmatprep.subr.mxu0 0.0
        %5487 = vmatpush2.xpose.msra.mxu0 0.0
        %5488 = vmatprep.subr.mxu0 0.0
        %5489 = vmatpush2.xpose.msra.mxu0 0.0
        %5490 = vmatprep.subr.mxu0 0.0
        %5491 = vmatpush2.xpose.msra.mxu0 0.0
        %5492 = vmatprep.subr.mxu0 0.0
        %5493 = vmatpush2.xpose.msra.mxu0 0.0
        %5494 = vmatprep.subr.mxu0 0.0
        %5495 = vmatpush2.xpose.msra.mxu0 0.0
        %5496 = vmatprep.subr.mxu0 0.0
        %5497 = vmatpush2.xpose.msra.mxu0 0.0
        %5498 = vmatprep.subr.mxu0 0.0
        %5499 = vmatpush2.xpose.msra.mxu0 0.0
        %5500 = vmatprep.subr.mxu0 0.0
        %5501 = vmatpush2.xpose.msra.mxu0 0.0
        %5502 = vmatprep.subr.mxu0 0.0
        %5503 = vmatpush2.xpose.msra.mxu0 0.0
        %5504 = vmatprep.subr.mxu0 0.0
        %5505 = vmatpush2.xpose.msra.mxu0 0.0
        %5506 = vmatprep.subr.mxu0 0.0
        %5507 = vmatpush2.xpose.msra.mxu0 0.0
        %5508 = vmatprep.subr.mxu0 0.0
        %5509 = vmatpush2.xpose.msra.mxu0 0.0
        %5510 = vmatprep.subr.mxu0 0.0
        %5511 = vmatpush2.xpose.msra.mxu0 0.0
        %5512 = vmatprep.subr.mxu0 0.0
        %5513 = vmatpush2.xpose.msra.mxu0 0.0
        %5514 = vmatprep.subr.mxu0 0.0
        %5515 = vmatpush2.xpose.msra.mxu0 0.0
        %5516 = vmatprep.subr.mxu0 0.0
        %5517 = vmatpush2.xpose.msra.mxu0 0.0
        %5518 = vmatprep.mubr.f32.mxu0 0.0
        %5519 = vmatmul.mubr.f32.gmra.mxu0 %v5446
        %v5520 = vpop.f32.mrf.mxu0
        %v5521 = vadd.f32 0.0, %v5520
        %v5522 = vpop.f32.mrf.mxu0
        %5523 = vmatprep.mubr.f32.mxu0 0.0
        %5524 = vmatmul.mubr.f32.gmra.mxu0 %v5448
        %v5525 = vpop.f32.mrf.mxu0
        %v5526 = vadd.f32 0.0, %v5525
        %v5527 = vpop.f32.mrf.mxu0
        %5528 = vdwg.mxu0
        %v5529 = vsel %vm2622, %v5521, -inf
        %5530 = vmax.xlane.f32.xlu0 %v5529
        %v5531 = vpop.xlane.xlu0 %5530
        %v5532 = vsel %vm2622, %v5526, -inf
        %5533 = vmax.xlane.f32.xlu0 %v5532
        %v5534 = vpop.xlane.xlu0 %5533
        %v5535 = vsub.f32 %v5521, %v5531
        %v5536 = vsub.f32 %v5526, %v5534
        %v5537 = vmul.f32 %v5535, 1.442695
        %v5538 = vpow.pop %v5537
        %v5539 = vmul.f32 %v5536, 1.442695
        %v5540 = vpow.pop %v5539
        %v5541 = vsel %vm2622, %v5538, 0.0
        %5542 = vadd.xlane.f32.xlu0 %v5541
        %v5543 = vpop.xlane.xlu0 %5542
        %v5544 = vsel %vm2622, %v5540, 0.0
        %5545 = vadd.xlane.f32.xlu0 %v5544
        %v5546 = vpop.xlane.xlu0 %5545
        %v5547 = vrcp.pop %v5543
        %v5548 = vrcp.pop %v5546
        %v5549 = vmul.f32 %v5538, %v5547
        %v5550 = vmul.f32 %v5540, %v5548
        %v5551 = vpack.c.bf16 %v5550, %v5549
        %5553 = vrot.lane.b32.xlu0 %v5283, 96
        %v5554 = vpop.permute.xlu0 %5553
        %v5557 = vsel %vm2622, %v5551, 0
        %5559 = vmatprep.subr.bf16.mxu0 0
        %5560 = vmatpush1.bf16.msra.mxu0 0
        %5561 = vmatprep.subr.bf16.mxu0 0
        %5562 = vmatpush1.bf16.msra.mxu0 0
        %5563 = vmatprep.subr.bf16.mxu0 0
        %5564 = vmatpush1.bf16.msra.mxu0 0
        %5565 = vmatprep.subr.bf16.mxu0 0
        %5566 = vmatpush1.bf16.msra.mxu0 0
        %5567 = vmatprep.subr.bf16.mxu0 0
        %5568 = vmatpush1.bf16.msra.mxu0 0
        %5569 = vmatprep.subr.bf16.mxu0 0
        %5570 = vmatpush1.bf16.msra.mxu0 0
        %5571 = vmatprep.subr.bf16.mxu0 0
        %5572 = vmatpush1.bf16.msra.mxu0 0
        %5573 = vmatprep.subr.bf16.mxu0 0
        %5574 = vmatpush1.bf16.msra.mxu0 %v5554
        %5575 = vmatprep.subr.bf16.mxu0 0
        %5576 = vmatpush2.bf16.msra.mxu0 0
        %5577 = vmatprep.subr.bf16.mxu0 0
        %5578 = vmatpush2.bf16.msra.mxu0 0
        %5579 = vmatprep.subr.bf16.mxu0 0
        %5580 = vmatpush2.bf16.msra.mxu0 0
        %5581 = vmatprep.subr.bf16.mxu0 0
        %5582 = vmatpush2.bf16.msra.mxu0 0
        %5583 = vmatprep.subr.bf16.mxu0 0
        %5584 = vmatpush2.bf16.msra.mxu0 0
        %5585 = vmatprep.subr.bf16.mxu0 0
        %5586 = vmatpush2.bf16.msra.mxu0 0
        %5587 = vmatprep.subr.bf16.mxu0 0
        %5588 = vmatpush2.bf16.msra.mxu0 0
        %5589 = vmatprep.subr.bf16.mxu0 0
        %5590 = vmatpush2.bf16.msra.mxu0 0
        %5591 = vmatprep.mubr.bf16.mxu0 0
        %5592 = vmatmul.mubr.bf16.gmra.mxu0 %v5557
        %v5593 = vpop.f32.mrf.mxu0
        %v5594 = vadd.f32 0.0, %v5593
        %v5595 = vpop.f32.mrf.mxu0
        %v5596 = vpop.f32.mrf.mxu0
        %v5597 = vadd.f32 0.0, %v5596
        %v5598 = vpop.f32.mrf.mxu0
        %5599 = vdwg.mxu0
        %5600 = vrot.lane.b32.xlu0 %v5146, 64
        %v5601 = vpop.permute.xlu0 %5600
        %5602 = vrot.lane.b32.xlu0 %v5149, 64
        %v5603 = vpop.permute.xlu0 %5602
        %5604 = vrot.lane.b32.xlu0 %v5275, 64
        %v5605 = vpop.permute.xlu0 %5604
        %5606 = vrot.lane.b32.xlu0 %v5279, 64
        %v5607 = vpop.permute.xlu0 %5606
        %v5608 = vsel %vm2534, %v5601, 0
        %v5610 = vsel %vm2534, %v5603, 0
        %v5612 = vsel %vm2534, %v5605, 0
        %v5614 = vsel %vm2534, %v5607, 0
        %5616 = vmatprep.subr.mxu0 0.0
        %5617 = vmatpush1.xpose.msra.mxu0 0.0
        %5618 = vmatprep.subr.mxu0 0.0
        %5619 = vmatpush1.xpose.msra.mxu0 0.0
        %5620 = vmatprep.subr.mxu0 0.0
        %5621 = vmatpush1.xpose.msra.mxu0 0.0
        %5622 = vmatprep.subr.mxu0 0.0
        %5623 = vmatpush1.xpose.msra.mxu0 0.0
        %5624 = vmatprep.subr.mxu0 0.0
        %5625 = vmatpush1.xpose.msra.mxu0 0.0
        %5626 = vmatprep.subr.mxu0 0.0
        %5627 = vmatpush1.xpose.msra.mxu0 0.0
        %5628 = vmatprep.subr.mxu0 0.0
        %5629 = vmatpush1.xpose.msra.mxu0 0.0
        %5630 = vmatprep.subr.mxu0 0.0
        %5631 = vmatpush1.xpose.msra.mxu0 0.0
        %5632 = vmatprep.subr.mxu0 0.0
        %5633 = vmatpush1.xpose.msra.mxu0 0.0
        %5634 = vmatprep.subr.mxu0 0.0
        %5635 = vmatpush1.xpose.msra.mxu0 0.0
        %5636 = vmatprep.subr.mxu0 0.0
        %5637 = vmatpush1.xpose.msra.mxu0 0.0
        %5638 = vmatprep.subr.mxu0 0.0
        %5639 = vmatpush1.xpose.msra.mxu0 0.0
        %5640 = vmatprep.subr.mxu0 0.0
        %5641 = vmatpush1.xpose.msra.mxu0 0.0
        %5642 = vmatprep.subr.mxu0 0.0
        %5643 = vmatpush1.xpose.msra.mxu0 0.0
        %5644 = vmatprep.subr.mxu0 0.0
        %5645 = vmatpush1.xpose.msra.mxu0 %v5614
        %5646 = vmatprep.subr.mxu0 0.0
        %5647 = vmatpush1.xpose.msra.mxu0 %v5612
        %5648 = vmatprep.subr.mxu0 0.0
        %5649 = vmatpush2.xpose.msra.mxu0 0.0
        %5650 = vmatprep.subr.mxu0 0.0
        %5651 = vmatpush2.xpose.msra.mxu0 0.0
        %5652 = vmatprep.subr.mxu0 0.0
        %5653 = vmatpush2.xpose.msra.mxu0 0.0
        %5654 = vmatprep.subr.mxu0 0.0
        %5655 = vmatpush2.xpose.msra.mxu0 0.0
        %5656 = vmatprep.subr.mxu0 0.0
        %5657 = vmatpush2.xpose.msra.mxu0 0.0
        %5658 = vmatprep.subr.mxu0 0.0
        %5659 = vmatpush2.xpose.msra.mxu0 0.0
        %5660 = vmatprep.subr.mxu0 0.0
        %5661 = vmatpush2.xpose.msra.mxu0 0.0
        %5662 = vmatprep.subr.mxu0 0.0
        %5663 = vmatpush2.xpose.msra.mxu0 0.0
        %5664 = vmatprep.subr.mxu0 0.0
        %5665 = vmatpush2.xpose.msra.mxu0 0.0
        %5666 = vmatprep.subr.mxu0 0.0
        %5667 = vmatpush2.xpose.msra.mxu0 0.0
        %5668 = vmatprep.subr.mxu0 0.0
        %5669 = vmatpush2.xpose.msra.mxu0 0.0
        %5670 = vmatprep.subr.mxu0 0.0
        %5671 = vmatpush2.xpose.msra.mxu0 0.0
        %5672 = vmatprep.subr.mxu0 0.0
        %5673 = vmatpush2.xpose.msra.mxu0 0.0
        %5674 = vmatprep.subr.mxu0 0.0
        %5675 = vmatpush2.xpose.msra.mxu0 0.0
        %5676 = vmatprep.subr.mxu0 0.0
        %5677 = vmatpush2.xpose.msra.mxu0 0.0
        %5678 = vmatprep.subr.mxu0 0.0
        %5679 = vmatpush2.xpose.msra.mxu0 0.0
        %5680 = vmatprep.mubr.f32.mxu0 0.0
        %5681 = vmatmul.mubr.f32.gmra.mxu0 %v5608
        %v5682 = vpop.f32.mrf.mxu0
        %v5683 = vadd.f32 0.0, %v5682
        %v5684 = vpop.f32.mrf.mxu0
        %5685 = vmatprep.mubr.f32.mxu0 0.0
        %5686 = vmatmul.mubr.f32.gmra.mxu0 %v5610
        %v5687 = vpop.f32.mrf.mxu0
        %v5688 = vadd.f32 0.0, %v5687
        %v5689 = vpop.f32.mrf.mxu0
        %5690 = vdwg.mxu0
        %v5691 = vsel %vm2622, %v5683, -inf
        %5692 = vmax.xlane.f32.xlu0 %v5691
        %v5693 = vpop.xlane.xlu0 %5692
        %v5694 = vsel %vm2622, %v5688, -inf
        %5695 = vmax.xlane.f32.xlu0 %v5694
        %v5696 = vpop.xlane.xlu0 %5695
        %v5697 = vsub.f32 %v5683, %v5693
        %v5698 = vsub.f32 %v5688, %v5696
        %v5699 = vmul.f32 %v5697, 1.442695
        %v5700 = vpow.pop %v5699
        %v5701 = vmul.f32 %v5698, 1.442695
        %v5702 = vpow.pop %v5701
        %v5703 = vsel %vm2622, %v5700, 0.0
        %5704 = vadd.xlane.f32.xlu0 %v5703
        %v5705 = vpop.xlane.xlu0 %5704
        %v5706 = vsel %vm2622, %v5702, 0.0
        %5707 = vadd.xlane.f32.xlu0 %v5706
        %v5708 = vpop.xlane.xlu0 %5707
        %v5709 = vrcp.pop %v5705
        %v5710 = vrcp.pop %v5708
        %v5711 = vmul.f32 %v5700, %v5709
        %v5712 = vmul.f32 %v5702, %v5710
        %v5713 = vpack.c.bf16 %v5712, %v5711
        %5714 = vrot.lane.b32.xlu0 %v5283, 64
        %v5715 = vpop.permute.xlu0 %5714
        %v5718 = vsel %vm2622, %v5713, 0
        %5720 = vmatprep.subr.bf16.mxu0 0
        %5721 = vmatpush1.bf16.msra.mxu0 0
        %5722 = vmatprep.subr.bf16.mxu0 0
        %5723 = vmatpush1.bf16.msra.mxu0 0
        %5724 = vmatprep.subr.bf16.mxu0 0
        %5725 = vmatpush1.bf16.msra.mxu0 0
        %5726 = vmatprep.subr.bf16.mxu0 0
        %5727 = vmatpush1.bf16.msra.mxu0 0
        %5728 = vmatprep.subr.bf16.mxu0 0
        %5729 = vmatpush1.bf16.msra.mxu0 0
        %5730 = vmatprep.subr.bf16.mxu0 0
        %5731 = vmatpush1.bf16.msra.mxu0 0
        %5732 = vmatprep.subr.bf16.mxu0 0
        %5733 = vmatpush1.bf16.msra.mxu0 0
        %5734 = vmatprep.subr.bf16.mxu0 0
        %5735 = vmatpush1.bf16.msra.mxu0 %v5715
        %5736 = vmatprep.subr.bf16.mxu0 0
        %5737 = vmatpush2.bf16.msra.mxu0 0
        %5738 = vmatprep.subr.bf16.mxu0 0
        %5739 = vmatpush2.bf16.msra.mxu0 0
        %5740 = vmatprep.subr.bf16.mxu0 0
        %5741 = vmatpush2.bf16.msra.mxu0 0
        %5742 = vmatprep.subr.bf16.mxu0 0
        %5743 = vmatpush2.bf16.msra.mxu0 0
        %5744 = vmatprep.subr.bf16.mxu0 0
        %5745 = vmatpush2.bf16.msra.mxu0 0
        %5746 = vmatprep.subr.bf16.mxu0 0
        %5747 = vmatpush2.bf16.msra.mxu0 0
        %5748 = vmatprep.subr.bf16.mxu0 0
        %5749 = vmatpush2.bf16.msra.mxu0 0
        %5750 = vmatprep.subr.bf16.mxu0 0
        %5751 = vmatpush2.bf16.msra.mxu0 0
        %5752 = vmatprep.mubr.bf16.mxu0 0
        %5753 = vmatmul.mubr.bf16.gmra.mxu0 %v5718
        %v5754 = vpop.f32.mrf.mxu0
        %v5755 = vadd.f32 0.0, %v5754
        %v5756 = vpop.f32.mrf.mxu0
        %v5757 = vpop.f32.mrf.mxu0
        %v5758 = vadd.f32 0.0, %v5757
        %v5759 = vpop.f32.mrf.mxu0
        %5760 = vdwg.mxu0
        %5761 = vrot.lane.b32.xlu0 %v5146, 32
        %v5762 = vpop.permute.xlu0 %5761
        %5763 = vrot.lane.b32.xlu0 %v5149, 32
        %v5764 = vpop.permute.xlu0 %5763
        %5765 = vrot.lane.b32.xlu0 %v5275, 32
        %v5766 = vpop.permute.xlu0 %5765
        %5767 = vrot.lane.b32.xlu0 %v5279, 32
        %v5768 = vpop.permute.xlu0 %5767
        %v5769 = vsel %vm2534, %v5762, 0
        %v5771 = vsel %vm2534, %v5764, 0
        %v5773 = vsel %vm2534, %v5766, 0
        %v5775 = vsel %vm2534, %v5768, 0
        %5777 = vmatprep.subr.mxu0 0.0
        %5778 = vmatpush1.xpose.msra.mxu0 0.0
        %5779 = vmatprep.subr.mxu0 0.0
        %5780 = vmatpush1.xpose.msra.mxu0 0.0
        %5781 = vmatprep.subr.mxu0 0.0
        %5782 = vmatpush1.xpose.msra.mxu0 0.0
        %5783 = vmatprep.subr.mxu0 0.0
        %5784 = vmatpush1.xpose.msra.mxu0 0.0
        %5785 = vmatprep.subr.mxu0 0.0
        %5786 = vmatpush1.xpose.msra.mxu0 0.0
        %5787 = vmatprep.subr.mxu0 0.0
        %5788 = vmatpush1.xpose.msra.mxu0 0.0
        %5789 = vmatprep.subr.mxu0 0.0
        %5790 = vmatpush1.xpose.msra.mxu0 0.0
        %5791 = vmatprep.subr.mxu0 0.0
        %5792 = vmatpush1.xpose.msra.mxu0 0.0
        %5793 = vmatprep.subr.mxu0 0.0
        %5794 = vmatpush1.xpose.msra.mxu0 0.0
        %5795 = vmatprep.subr.mxu0 0.0
        %5796 = vmatpush1.xpose.msra.mxu0 0.0
        %5797 = vmatprep.subr.mxu0 0.0
        %5798 = vmatpush1.xpose.msra.mxu0 0.0
        %5799 = vmatprep.subr.mxu0 0.0
        %5800 = vmatpush1.xpose.msra.mxu0 0.0
        %5801 = vmatprep.subr.mxu0 0.0
        %5802 = vmatpush1.xpose.msra.mxu0 0.0
        %5803 = vmatprep.subr.mxu0 0.0
        %5804 = vmatpush1.xpose.msra.mxu0 0.0
        %5805 = vmatprep.subr.mxu0 0.0
        %5806 = vmatpush1.xpose.msra.mxu0 %v5775
        %5807 = vmatprep.subr.mxu0 0.0
        %5808 = vmatpush1.xpose.msra.mxu0 %v5773
        %5809 = vmatprep.subr.mxu0 0.0
        %5810 = vmatpush2.xpose.msra.mxu0 0.0
        %5811 = vmatprep.subr.mxu0 0.0
        %5812 = vmatpush2.xpose.msra.mxu0 0.0
        %5813 = vmatprep.subr.mxu0 0.0
        %5814 = vmatpush2.xpose.msra.mxu0 0.0
        %5815 = vmatprep.subr.mxu0 0.0
        %5816 = vmatpush2.xpose.msra.mxu0 0.0
        %5817 = vmatprep.subr.mxu0 0.0
        %5818 = vmatpush2.xpose.msra.mxu0 0.0
        %5819 = vmatprep.subr.mxu0 0.0
        %5820 = vmatpush2.xpose.msra.mxu0 0.0
        %5821 = vmatprep.subr.mxu0 0.0
        %5822 = vmatpush2.xpose.msra.mxu0 0.0
        %5823 = vmatprep.subr.mxu0 0.0
        %5824 = vmatpush2.xpose.msra.mxu0 0.0
        %5825 = vmatprep.subr.mxu0 0.0
        %5826 = vmatpush2.xpose.msra.mxu0 0.0
        %5827 = vmatprep.subr.mxu0 0.0
        %5828 = vmatpush2.xpose.msra.mxu0 0.0
        %5829 = vmatprep.subr.mxu0 0.0
        %5830 = vmatpush2.xpose.msra.mxu0 0.0
        %5831 = vmatprep.subr.mxu0 0.0
        %5832 = vmatpush2.xpose.msra.mxu0 0.0
        %5833 = vmatprep.subr.mxu0 0.0
        %5834 = vmatpush2.xpose.msra.mxu0 0.0
        %5835 = vmatprep.subr.mxu0 0.0
        %5836 = vmatpush2.xpose.msra.mxu0 0.0
        %5837 = vmatprep.subr.mxu0 0.0
        %5838 = vmatpush2.xpose.msra.mxu0 0.0
        %5839 = vmatprep.subr.mxu0 0.0
        %5840 = vmatpush2.xpose.msra.mxu0 0.0
        %5841 = vmatprep.mubr.f32.mxu0 0.0
        %5842 = vmatmul.mubr.f32.gmra.mxu0 %v5769
        %v5843 = vpop.f32.mrf.mxu0
        %v5844 = vadd.f32 0.0, %v5843
        %v5845 = vpop.f32.mrf.mxu0
        %5846 = vmatprep.mubr.f32.mxu0 0.0
        %5847 = vmatmul.mubr.f32.gmra.mxu0 %v5771
        %v5848 = vpop.f32.mrf.mxu0
        %v5849 = vadd.f32 0.0, %v5848
        %v5850 = vpop.f32.mrf.mxu0
        %5851 = vdwg.mxu0
        %v5852 = vsel %vm2622, %v5844, -inf
        %5853 = vmax.xlane.f32.xlu0 %v5852
        %v5854 = vpop.xlane.xlu0 %5853
        %v5855 = vsel %vm2622, %v5849, -inf
        %5856 = vmax.xlane.f32.xlu0 %v5855
        %v5857 = vpop.xlane.xlu0 %5856
        %v5858 = vsub.f32 %v5844, %v5854
        %v5859 = vsub.f32 %v5849, %v5857
        %v5860 = vmul.f32 %v5858, 1.442695
        %v5861 = vpow.pop %v5860
        %v5862 = vmul.f32 %v5859, 1.442695
        %v5863 = vpow.pop %v5862
        %v5864 = vsel %vm2622, %v5861, 0.0
        %5865 = vadd.xlane.f32.xlu0 %v5864
        %v5866 = vpop.xlane.xlu0 %5865
        %v5867 = vsel %vm2622, %v5863, 0.0
        %5868 = vadd.xlane.f32.xlu0 %v5867
        %v5869 = vpop.xlane.xlu0 %5868
        %v5870 = vrcp.pop %v5866
        %v5871 = vrcp.pop %v5869
        %v5872 = vmul.f32 %v5861, %v5870
        %v5873 = vmul.f32 %v5863, %v5871
        %v5874 = vpack.c.bf16 %v5873, %v5872
        %5875 = vrot.lane.b32.xlu0 %v5283, 32
        %v5876 = vpop.permute.xlu0 %5875
        %v5879 = vsel %vm2622, %v5874, 0
        %5881 = vmatprep.subr.bf16.mxu0 0
        %5882 = vmatpush1.bf16.msra.mxu0 0
        %5883 = vmatprep.subr.bf16.mxu0 0
        %5884 = vmatpush1.bf16.msra.mxu0 0
        %5885 = vmatprep.subr.bf16.mxu0 0
        %5886 = vmatpush1.bf16.msra.mxu0 0
        %5887 = vmatprep.subr.bf16.mxu0 0
        %5888 = vmatpush1.bf16.msra.mxu0 0
        %5889 = vmatprep.subr.bf16.mxu0 0
        %5890 = vmatpush1.bf16.msra.mxu0 0
        %5891 = vmatprep.subr.bf16.mxu0 0
        %5892 = vmatpush1.bf16.msra.mxu0 0
        %5893 = vmatprep.subr.bf16.mxu0 0
        %5894 = vmatpush1.bf16.msra.mxu0 0
        %5895 = vmatprep.subr.bf16.mxu0 0
        %5896 = vmatpush1.bf16.msra.mxu0 %v5876
        %5897 = vmatprep.subr.bf16.mxu0 0
        %5898 = vmatpush2.bf16.msra.mxu0 0
        %5899 = vmatprep.subr.bf16.mxu0 0
        %5900 = vmatpush2.bf16.msra.mxu0 0
        %5901 = vmatprep.subr.bf16.mxu0 0
        %5902 = vmatpush2.bf16.msra.mxu0 0
        %5903 = vmatprep.subr.bf16.mxu0 0
        %5904 = vmatpush2.bf16.msra.mxu0 0
        %5905 = vmatprep.subr.bf16.mxu0 0
        %5906 = vmatpush2.bf16.msra.mxu0 0
        %5907 = vmatprep.subr.bf16.mxu0 0
        %5908 = vmatpush2.bf16.msra.mxu0 0
        %5909 = vmatprep.subr.bf16.mxu0 0
        %5910 = vmatpush2.bf16.msra.mxu0 0
        %5911 = vmatprep.subr.bf16.mxu0 0
        %5912 = vmatpush2.bf16.msra.mxu0 0
        %5913 = vmatprep.mubr.bf16.mxu0 0
        %5914 = vmatmul.mubr.bf16.gmra.mxu0 %v5879
        %v5915 = vpop.f32.mrf.mxu0
        %v5916 = vadd.f32 0.0, %v5915
        %v5917 = vpop.f32.mrf.mxu0
        %v5918 = vpop.f32.mrf.mxu0
        %v5919 = vadd.f32 0.0, %v5918
        %v5920 = vpop.f32.mrf.mxu0
        %5921 = vdwg.mxu0
        %5924 = vrot.lane.b32.xlu0 %v5594, 32
        %v5925 = vpop.permute.xlu0 %5924
        %5926 = vrot.lane.b32.xlu0 %v5597, 32
        %v5927 = vpop.permute.xlu0 %5926
        %5932 = vrot.lane.b32.xlu0 %v5755, 64
        %v5933 = vpop.permute.xlu0 %5932
        %5934 = vrot.lane.b32.xlu0 %v5758, 64
        %v5935 = vpop.permute.xlu0 %5934
        %5940 = vrot.lane.b32.xlu0 %v5916, 96
        %v5941 = vpop.permute.xlu0 %5940
        %5942 = vrot.lane.b32.xlu0 %v5919, 96
        %v5943 = vpop.permute.xlu0 %5942
        %v5946 = vsel %vm2534, %v5432, %v5925
        %v5947 = vsel %vm2534, %v5435, %v5927
        %v5948 = vsel %vm3200, %v5946, %v5933
        %v5949 = vsel %vm3200, %v5947, %v5935
        %v5950 = vsel %vm3203, %v5948, %v5941
        %v5951 = vsel %vm3203, %v5949, %v5943
        %v5952 = vpack.c.bf16 %v5951, %v5950
        %v5953 = vlaneseq
        %v5954 = vshrl.u32 %v5953, 7
        %v5955 = vsub.s32 2, %v5954
        %v5956 = vrot.slane %v463, %v5955
        %v5973 = vunpack.c.l.b16 %v5042
        %v5974 = vunpack.c.l.b16 %v5043
        %v5975 = vunpack.c.l.b16 %v5044
        %v5976 = vunpack.c.l.b16 %v5045
        %v5977 = vunpack.c.l.b16 %v5046
        %v5978 = vunpack.c.l.b16 %v5047
        %v5979 = vunpack.c.l.b16 %v5048
        %v5980 = vunpack.c.l.b16 %v5049
        %v5981 = vunpack.c.l.b16 %v5050
        %v5982 = vunpack.c.l.b16 %v5051
        %v5983 = vunpack.c.l.b16 %v5052
        %v5984 = vunpack.c.l.b16 %v5053
        %v5985 = vunpack.c.l.b16 %v5054
        %v5986 = vunpack.c.l.b16 %v5055
        %v5987 = vunpack.c.l.b16 %v5056
        %v5988 = vunpack.c.l.b16 %v5057
        %v5989 = vpack.c.b16 %v5974, %v5973
        %v5990 = vpack.c.b16 %v5976, %v5975
        %v5991 = vpack.c.b16 %v5978, %v5977
        %v5992 = vpack.c.b16 %v5980, %v5979
        %v5993 = vpack.c.b16 %v5982, %v5981
        %v5994 = vpack.c.b16 %v5984, %v5983
        %v5995 = vpack.c.b16 %v5986, %v5985
        %v5996 = vpack.c.b16 %v5988, %v5987
        %6005 = vmatprep.subr.bf16.mxu0 0
        %6006 = vmatpush1.bf16.msra.mxu0 %v5996
        %6007 = vmatprep.subr.bf16.mxu0 0
        %6008 = vmatpush1.bf16.msra.mxu0 %v5995
        %6009 = vmatprep.subr.bf16.mxu0 0
        %6010 = vmatpush1.bf16.msra.mxu0 %v5994
        %6011 = vmatprep.subr.bf16.mxu0 0
        %6012 = vmatpush1.bf16.msra.mxu0 %v5993
        %6013 = vmatprep.subr.bf16.mxu0 0
        %6014 = vmatpush1.bf16.msra.mxu0 %v5992
        %6015 = vmatprep.subr.bf16.mxu0 0
        %6016 = vmatpush1.bf16.msra.mxu0 %v5991
        %6017 = vmatprep.subr.bf16.mxu0 0
        %6018 = vmatpush1.bf16.msra.mxu0 %v5990
        %6019 = vmatprep.subr.bf16.mxu0 0
        %6020 = vmatpush1.bf16.msra.mxu0 %v5989
        %6021 = vmatprep.subr.bf16.mxu0 0
        %6022 = vmatpush2.bf16.msra.mxu0 0
        %6023 = vmatprep.subr.bf16.mxu0 0
        %6024 = vmatpush2.bf16.msra.mxu0 0
        %6025 = vmatprep.subr.bf16.mxu0 0
        %6026 = vmatpush2.bf16.msra.mxu0 0
        %6027 = vmatprep.subr.bf16.mxu0 0
        %6028 = vmatpush2.bf16.msra.mxu0 0
        %6029 = vmatprep.subr.bf16.mxu0 0
        %6030 = vmatpush2.bf16.msra.mxu0 0
        %6031 = vmatprep.subr.bf16.mxu0 0
        %6032 = vmatpush2.bf16.msra.mxu0 0
        %6033 = vmatprep.subr.bf16.mxu0 0
        %6034 = vmatpush2.bf16.msra.mxu0 0
        %6035 = vmatprep.subr.bf16.mxu0 0
        %6036 = vmatpush2.bf16.msra.mxu0 0
        %6037 = vmatprep.mubr.bf16.mxu0 0
        %6038 = vmatmul.mubr.bf16.gmra.mxu0 %v5952
        %v6039 = vpop.f32.mrf.mxu0
        %v6040 = vadd.f32 %v5956, %v6039
        %v6041 = vpop.f32.mrf.mxu0
        %v6042 = vpop.f32.mrf.mxu0
        %v6043 = vadd.f32 %v5956, %v6042
        %v6044 = vpop.f32.mrf.mxu0
        %6045 = vdwg.mxu0
        %v6046 = vadd.f32 %v4659, %v6040
        %v6047 = vadd.f32 %v4660, %v6043
        %6048 = vadd.xlane.f32.xlu0 %v6046
        %v6049 = vpop.xlane.xlu0 %6048
        %6050 = vadd.xlane.f32.xlu0 %v6047
        %v6051 = vpop.xlane.xlu0 %6050
        %v6052 = vmul.f32 %v6049, %v2227
        %v6053 = vmul.f32 %v6051, %v2227
        %v6054 = vsub.f32 %v6046, %v6052
        %v6055 = vsub.f32 %v6047, %v6053
        %v6056 = vmul.f32 %v6054, %v6054
        %v6057 = vmul.f32 %v6055, %v6055
        %6058 = vadd.xlane.f32.xlu0 %v6056
        %v6059 = vpop.xlane.xlu0 %6058
        %6060 = vadd.xlane.f32.xlu0 %v6057
        %v6061 = vpop.xlane.xlu0 %6060
        %v6062 = vmul.f32 %v6059, %v2227
        %v6063 = vmul.f32 %v6061, %v2227
        %v6064 = vadd.f32 %v6062, 1e-05
        %v6065 = vadd.f32 %v6063, 1e-05
        %v6066 = vrsqrt.pop %v6064
        %v6067 = vrsqrt.pop %v6065
        %v6068 = vmul.f32 %v6054, %v6066
        %v6069 = vmul.f32 %v6055, %v6067
        %v6070 = vlaneseq
        %v6071 = vshrl.u32 %v6070, 7
        %v6072 = vsub.s32 3, %v6071
        %v6073 = vrot.slane %v463, %v6072
        %v6074 = vmul.f32 %v6068, %v6073
        %v6075 = vmul.f32 %v6069, %v6073
        %v6076 = vlaneseq
        %v6077 = vshrl.u32 %v6076, 7
        %v6078 = vsub.s32 4, %v6077
        %v6079 = vrot.slane %v463, %v6078
        %v6080 = vadd.f32 %v6074, %v6079
        %v6081 = vadd.f32 %v6075, %v6079
        %s6082 = scalar_lea.vmem [#allocation8], 384
        %v6083 = vld [vmem:[%s6082] sm:$0xf]
        %v6084 = vld [vmem:[%s6082 + $0x4] sm:$0xf]
        %v6085 = vld [vmem:[%s6082 + $0x8] sm:$0xf]
        %v6086 = vld [vmem:[%s6082 + $0xc] sm:$0xf]
        %v6087 = vld [vmem:[%s6082 + $0x10] sm:$0xf]
        %v6088 = vld [vmem:[%s6082 + $0x14] sm:$0xf]
        %v6089 = vld [vmem:[%s6082 + $0x18] sm:$0xf]
        %v6090 = vld [vmem:[%s6082 + $0x1c] sm:$0xf]
        %v6091 = vld [vmem:[%s6082 + $0x20] sm:$0xf]
        %v6092 = vld [vmem:[%s6082 + $0x24] sm:$0xf]
        %v6093 = vld [vmem:[%s6082 + $0x28] sm:$0xf]
        %v6094 = vld [vmem:[%s6082 + $0x2c] sm:$0xf]
        %v6095 = vld [vmem:[%s6082 + $0x30] sm:$0xf]
        %v6096 = vld [vmem:[%s6082 + $0x34] sm:$0xf]
        %v6097 = vld [vmem:[%s6082 + $0x38] sm:$0xf]
        %v6098 = vld [vmem:[%s6082 + $0x3c] sm:$0xf]
        %s6099 = scalar_lea.vmem [#allocation10], 640
        %v6100 = vld [vmem:[%s6099] sm:$0xff]
        %v6101 = vld [vmem:[%s6099 + $0x8] sm:$0xff]
        %v6102 = vld [vmem:[%s6099 + $0x10] sm:$0xff]
        %v6103 = vld [vmem:[%s6099 + $0x18] sm:$0xff]
        %v6104 = vld [vmem:[%s6099 + $0x20] sm:$0xff]
        %v6105 = vld [vmem:[%s6099 + $0x28] sm:$0xff]
        %v6106 = vld [vmem:[%s6099 + $0x30] sm:$0xff]
        %v6107 = vld [vmem:[%s6099 + $0x38] sm:$0xff]
        %v6108 = vld [vmem:[%s6099 + $0x40] sm:$0xff]
        %v6109 = vld [vmem:[%s6099 + $0x48] sm:$0xff]
        %v6110 = vld [vmem:[%s6099 + $0x50] sm:$0xff]
        %v6111 = vld [vmem:[%s6099 + $0x58] sm:$0xff]
        %v6112 = vld [vmem:[%s6099 + $0x60] sm:$0xff]
        %v6113 = vld [vmem:[%s6099 + $0x68] sm:$0xff]
        %v6114 = vld [vmem:[%s6099 + $0x70] sm:$0xff]
        %v6115 = vld [vmem:[%s6099 + $0x78] sm:$0xff]
        %s6116 = scalar_lea.vmem [#allocation8], 448
        %v6117 = vld [vmem:[%s6116] sm:$0xf]
        %v6118 = vld [vmem:[%s6116 + $0x4] sm:$0xf]
        %v6119 = vld [vmem:[%s6116 + $0x8] sm:$0xf]
        %v6120 = vld [vmem:[%s6116 + $0xc] sm:$0xf]
        %v6121 = vld [vmem:[%s6116 + $0x10] sm:$0xf]
        %v6122 = vld [vmem:[%s6116 + $0x14] sm:$0xf]
        %v6123 = vld [vmem:[%s6116 + $0x18] sm:$0xf]
        %v6124 = vld [vmem:[%s6116 + $0x1c] sm:$0xf]
        %v6125 = vld [vmem:[%s6116 + $0x20] sm:$0xf]
        %v6126 = vld [vmem:[%s6116 + $0x24] sm:$0xf]
        %v6127 = vld [vmem:[%s6116 + $0x28] sm:$0xf]
        %v6128 = vld [vmem:[%s6116 + $0x2c] sm:$0xf]
        %v6129 = vld [vmem:[%s6116 + $0x30] sm:$0xf]
        %v6130 = vld [vmem:[%s6116 + $0x34] sm:$0xf]
        %v6131 = vld [vmem:[%s6116 + $0x38] sm:$0xf]
        %v6132 = vld [vmem:[%s6116 + $0x3c] sm:$0xf]
        %v6133 = vpack.c.bf16 %v5006, %v5006
        %v6134 = vlaneseq
        %v6135 = vshrl.u32 %v6134, 7
        %v6136 = vsub.s32 5, %v6135
        %v6137 = vrot.slane %v463, %v6136
        %v6154 = vunpack.c.l.b16 %v6083
        %v6155 = vunpack.c.l.b16 %v6084
        %v6156 = vunpack.c.l.b16 %v6085
        %v6157 = vunpack.c.l.b16 %v6086
        %v6158 = vunpack.c.l.b16 %v6087
        %v6159 = vunpack.c.l.b16 %v6088
        %v6160 = vunpack.c.l.b16 %v6089
        %v6161 = vunpack.c.l.b16 %v6090
        %v6162 = vunpack.c.l.b16 %v6091
        %v6163 = vunpack.c.l.b16 %v6092
        %v6164 = vunpack.c.l.b16 %v6093
        %v6165 = vunpack.c.l.b16 %v6094
        %v6166 = vunpack.c.l.b16 %v6095
        %v6167 = vunpack.c.l.b16 %v6096
        %v6168 = vunpack.c.l.b16 %v6097
        %v6169 = vunpack.c.l.b16 %v6098
        %v6170 = vpack.c.b16 %v6155, %v6154
        %v6171 = vpack.c.b16 %v6157, %v6156
        %v6172 = vpack.c.b16 %v6159, %v6158
        %v6173 = vpack.c.b16 %v6161, %v6160
        %v6174 = vpack.c.b16 %v6163, %v6162
        %v6175 = vpack.c.b16 %v6165, %v6164
        %v6176 = vpack.c.b16 %v6167, %v6166
        %v6177 = vpack.c.b16 %v6169, %v6168
        %6186 = vmatprep.subr.bf16.mxu0 0
        %6187 = vmatpush1.bf16.msra.mxu0 %v6177
        %6188 = vmatprep.subr.bf16.mxu0 0
        %6189 = vmatpush1.bf16.msra.mxu0 %v6176
        %6190 = vmatprep.subr.bf16.mxu0 0
        %6191 = vmatpush1.bf16.msra.mxu0 %v6175
        %6192 = vmatprep.subr.bf16.mxu0 0
        %6193 = vmatpush1.bf16.msra.mxu0 %v6174
        %6194 = vmatprep.subr.bf16.mxu0 0
        %6195 = vmatpush1.bf16.msra.mxu0 %v6173
        %6196 = vmatprep.subr.bf16.mxu0 0
        %6197 = vmatpush1.bf16.msra.mxu0 %v6172
        %6198 = vmatprep.subr.bf16.mxu0 0
        %6199 = vmatpush1.bf16.msra.mxu0 %v6171
        %6200 = vmatprep.subr.bf16.mxu0 0
        %6201 = vmatpush1.bf16.msra.mxu0 %v6170
        %6202 = vmatprep.subr.bf16.mxu0 0
        %6203 = vmatpush2.bf16.msra.mxu0 0
        %6204 = vmatprep.subr.bf16.mxu0 0
        %6205 = vmatpush2.bf16.msra.mxu0 0
        %6206 = vmatprep.subr.bf16.mxu0 0
        %6207 = vmatpush2.bf16.msra.mxu0 0
        %6208 = vmatprep.subr.bf16.mxu0 0
        %6209 = vmatpush2.bf16.msra.mxu0 0
        %6210 = vmatprep.subr.bf16.mxu0 0
        %6211 = vmatpush2.bf16.msra.mxu0 0
        %6212 = vmatprep.subr.bf16.mxu0 0
        %6213 = vmatpush2.bf16.msra.mxu0 0
        %6214 = vmatprep.subr.bf16.mxu0 0
        %6215 = vmatpush2.bf16.msra.mxu0 0
        %6216 = vmatprep.subr.bf16.mxu0 0
        %6217 = vmatpush2.bf16.msra.mxu0 0
        %6218 = vmatprep.mubr.bf16.mxu0 0
        %6219 = vmatmul.mubr.bf16.gmra.mxu0 %v6133
        %v6220 = vpop.f32.mrf.mxu0
        %v6221 = vadd.f32 %v6137, %v6220
        %v6222 = vpop.f32.mrf.mxu0
        %v6223 = vpop.f32.mrf.mxu0
        %v6224 = vpop.f32.mrf.mxu0
        %6225 = vdwg.mxu0
        %v6226 = vlaneseq
        %v6227 = vshrl.u32 %v6226, 7
        %v6228 = vsub.s32 5, %v6227
        %v6229 = vrot.slane %v465, %v6228
        %v6230 = vlaneseq
        %v6231 = vshrl.u32 %v6230, 7
        %v6232 = vsub.s32 5, %v6231
        %v6233 = vrot.slane %v466, %v6232
        %v6250 = vunpack.c.l.b16 %v6100
        %v6251 = vunpack.c.h.b16 %v6100
        %v6252 = vunpack.c.l.b16 %v6101
        %v6253 = vunpack.c.h.b16 %v6101
        %v6254 = vunpack.c.l.b16 %v6102
        %v6255 = vunpack.c.h.b16 %v6102
        %v6256 = vunpack.c.l.b16 %v6103
        %v6257 = vunpack.c.h.b16 %v6103
        %v6258 = vunpack.c.l.b16 %v6104
        %v6259 = vunpack.c.h.b16 %v6104
        %v6260 = vunpack.c.l.b16 %v6105
        %v6261 = vunpack.c.h.b16 %v6105
        %v6262 = vunpack.c.l.b16 %v6106
        %v6263 = vunpack.c.h.b16 %v6106
        %v6264 = vunpack.c.l.b16 %v6107
        %v6265 = vunpack.c.h.b16 %v6107
        %v6266 = vunpack.c.l.b16 %v6108
        %v6267 = vunpack.c.h.b16 %v6108
        %v6268 = vunpack.c.l.b16 %v6109
        %v6269 = vunpack.c.h.b16 %v6109
        %v6270 = vunpack.c.l.b16 %v6110
        %v6271 = vunpack.c.h.b16 %v6110
        %v6272 = vunpack.c.l.b16 %v6111
        %v6273 = vunpack.c.h.b16 %v6111
        %v6274 = vunpack.c.l.b16 %v6112
        %v6275 = vunpack.c.h.b16 %v6112
        %v6276 = vunpack.c.l.b16 %v6113
        %v6277 = vunpack.c.h.b16 %v6113
        %v6278 = vunpack.c.l.b16 %v6114
        %v6279 = vunpack.c.h.b16 %v6114
        %v6280 = vunpack.c.l.b16 %v6115
        %v6281 = vunpack.c.h.b16 %v6115
        %v6282 = vpack.c.b16 %v6252, %v6250
        %v6283 = vpack.c.b16 %v6253, %v6251
        %v6284 = vpack.c.b16 %v6256, %v6254
        %v6285 = vpack.c.b16 %v6257, %v6255
        %v6286 = vpack.c.b16 %v6260, %v6258
        %v6287 = vpack.c.b16 %v6261, %v6259
        %v6288 = vpack.c.b16 %v6264, %v6262
        %v6289 = vpack.c.b16 %v6265, %v6263
        %v6290 = vpack.c.b16 %v6268, %v6266
        %v6291 = vpack.c.b16 %v6269, %v6267
        %v6292 = vpack.c.b16 %v6272, %v6270
        %v6293 = vpack.c.b16 %v6273, %v6271
        %v6294 = vpack.c.b16 %v6276, %v6274
        %v6295 = vpack.c.b16 %v6277, %v6275
        %v6296 = vpack.c.b16 %v6280, %v6278
        %v6297 = vpack.c.b16 %v6281, %v6279
        %6314 = vmatprep.subr.bf16.mxu0 %v6297
        %6315 = vmatpush1.bf16.msra.mxu0 %v6296
        %6316 = vmatprep.subr.bf16.mxu0 %v6295
        %6317 = vmatpush1.bf16.msra.mxu0 %v6294
        %6318 = vmatprep.subr.bf16.mxu0 %v6293
        %6319 = vmatpush1.bf16.msra.mxu0 %v6292
        %6320 = vmatprep.subr.bf16.mxu0 %v6291
        %6321 = vmatpush1.bf16.msra.mxu0 %v6290
        %6322 = vmatprep.subr.bf16.mxu0 %v6289
        %6323 = vmatpush1.bf16.msra.mxu0 %v6288
        %6324 = vmatprep.subr.bf16.mxu0 %v6287
        %6325 = vmatpush1.bf16.msra.mxu0 %v6286
        %6326 = vmatprep.subr.bf16.mxu0 %v6285
        %6327 = vmatpush1.bf16.msra.mxu0 %v6284
        %6328 = vmatprep.subr.bf16.mxu0 %v6283
        %6329 = vmatpush1.bf16.msra.mxu0 %v6282
        %6330 = vmatprep.subr.bf16.mxu0 0
        %6331 = vmatpush2.bf16.msra.mxu0 0
        %6332 = vmatprep.subr.bf16.mxu0 0
        %6333 = vmatpush2.bf16.msra.mxu0 0
        %6334 = vmatprep.subr.bf16.mxu0 0
        %6335 = vmatpush2.bf16.msra.mxu0 0
        %6336 = vmatprep.subr.bf16.mxu0 0
        %6337 = vmatpush2.bf16.msra.mxu0 0
        %6338 = vmatprep.subr.bf16.mxu0 0
        %6339 = vmatpush2.bf16.msra.mxu0 0
        %6340 = vmatprep.subr.bf16.mxu0 0
        %6341 = vmatpush2.bf16.msra.mxu0 0
        %6342 = vmatprep.subr.bf16.mxu0 0
        %6343 = vmatpush2.bf16.msra.mxu0 0
        %6344 = vmatprep.subr.bf16.mxu0 0
        %6345 = vmatpush2.bf16.msra.mxu0 0
        %6346 = vmatprep.mubr.bf16.mxu0 0
        %6347 = vmatmul.mubr.bf16.gmra.mxu0 %v5058
        %v6348 = vpop.f32.mrf.mxu0
        %v6349 = vadd.f32 %v6229, %v6348
        %v6350 = vpop.f32.mrf.mxu0
        %v6351 = vadd.f32 %v6233, %v6350
        %v6352 = vpop.f32.mrf.mxu0
        %v6353 = vadd.f32 %v6229, %v6352
        %v6354 = vpop.f32.mrf.mxu0
        %v6355 = vadd.f32 %v6233, %v6354
        %6356 = vdwg.mxu0
        %v6357 = vpack.c.bf16 %v6355, %v6351
        %v6359 = vsel %vm2534, %v6221, 0
        %v6362 = vsel %vm2534, %v6349, 0
        %v6365 = vsel %vm2534, %v6353, 0
        %6367 = vmatprep.subr.mxu0 0.0
        %6368 = vmatpush1.xpose.msra.mxu0 0.0
        %6369 = vmatprep.subr.mxu0 0.0
        %6370 = vmatpush1.xpose.msra.mxu0 0.0
        %6371 = vmatprep.subr.mxu0 0.0
        %6372 = vmatpush1.xpose.msra.mxu0 0.0
        %6373 = vmatprep.subr.mxu0 0.0
        %6374 = vmatpush1.xpose.msra.mxu0 0.0
        %6375 = vmatprep.subr.mxu0 0.0
        %6376 = vmatpush1.xpose.msra.mxu0 0.0
        %6377 = vmatprep.subr.mxu0 0.0
        %6378 = vmatpush1.xpose.msra.mxu0 0.0
        %6379 = vmatprep.subr.mxu0 0.0
        %6380 = vmatpush1.xpose.msra.mxu0 0.0
        %6381 = vmatprep.subr.mxu0 0.0
        %6382 = vmatpush1.xpose.msra.mxu0 0.0
        %6383 = vmatprep.subr.mxu0 0.0
        %6384 = vmatpush1.xpose.msra.mxu0 0.0
        %6385 = vmatprep.subr.mxu0 0.0
        %6386 = vmatpush1.xpose.msra.mxu0 0.0
        %6387 = vmatprep.subr.mxu0 0.0
        %6388 = vmatpush1.xpose.msra.mxu0 0.0
        %6389 = vmatprep.subr.mxu0 0.0
        %6390 = vmatpush1.xpose.msra.mxu0 0.0
        %6391 = vmatprep.subr.mxu0 0.0
        %6392 = vmatpush1.xpose.msra.mxu0 0.0
        %6393 = vmatprep.subr.mxu0 0.0
        %6394 = vmatpush1.xpose.msra.mxu0 0.0
        %6395 = vmatprep.subr.mxu0 0.0
        %6396 = vmatpush1.xpose.msra.mxu0 %v6365
        %6397 = vmatprep.subr.mxu0 0.0
        %6398 = vmatpush1.xpose.msra.mxu0 %v6362
        %6399 = vmatprep.subr.mxu0 0.0
        %6400 = vmatpush2.xpose.msra.mxu0 0.0
        %6401 = vmatprep.subr.mxu0 0.0
        %6402 = vmatpush2.xpose.msra.mxu0 0.0
        %6403 = vmatprep.subr.mxu0 0.0
        %6404 = vmatpush2.xpose.msra.mxu0 0.0
        %6405 = vmatprep.subr.mxu0 0.0
        %6406 = vmatpush2.xpose.msra.mxu0 0.0
        %6407 = vmatprep.subr.mxu0 0.0
        %6408 = vmatpush2.xpose.msra.mxu0 0.0
        %6409 = vmatprep.subr.mxu0 0.0
        %6410 = vmatpush2.xpose.msra.mxu0 0.0
        %6411 = vmatprep.subr.mxu0 0.0
        %6412 = vmatpush2.xpose.msra.mxu0 0.0
        %6413 = vmatprep.subr.mxu0 0.0
        %6414 = vmatpush2.xpose.msra.mxu0 0.0
        %6415 = vmatprep.subr.mxu0 0.0
        %6416 = vmatpush2.xpose.msra.mxu0 0.0
        %6417 = vmatprep.subr.mxu0 0.0
        %6418 = vmatpush2.xpose.msra.mxu0 0.0
        %6419 = vmatprep.subr.mxu0 0.0
        %6420 = vmatpush2.xpose.msra.mxu0 0.0
        %6421 = vmatprep.subr.mxu0 0.0
        %6422 = vmatpush2.xpose.msra.mxu0 0.0
        %6423 = vmatprep.subr.mxu0 0.0
        %6424 = vmatpush2.xpose.msra.mxu0 0.0
        %6425 = vmatprep.subr.mxu0 0.0
        %6426 = vmatpush2.xpose.msra.mxu0 0.0
        %6427 = vmatprep.subr.mxu0 0.0
        %6428 = vmatpush2.xpose.msra.mxu0 0.0
        %6429 = vmatprep.subr.mxu0 0.0
        %6430 = vmatpush2.xpose.msra.mxu0 0.0
        %6431 = vmatprep.mubr.f32.mxu0 0.0
        %6432 = vmatmul.mubr.f32.gmra.mxu0 %v6359
        %v6433 = vpop.f32.mrf.mxu0
        %v6434 = vadd.f32 0.0, %v6433
        %v6435 = vpop.f32.mrf.mxu0
        %6436 = vdwg.mxu0
        %v6437 = vsel %vm2622, %v6434, -inf
        %6438 = vmax.xlane.f32.xlu0 %v6437
        %v6439 = vpop.xlane.xlu0 %6438
        %v6440 = vsub.f32 %v6434, %v6439
        %v6441 = vmul.f32 %v6440, 1.442695
        %v6442 = vpow.pop %v6441
        %v6443 = vsel %vm2622, %v6442, 0.0
        %6444 = vadd.xlane.f32.xlu0 %v6443
        %v6445 = vpop.xlane.xlu0 %6444
        %v6446 = vrcp.pop %v6445
        %v6447 = vmul.f32 %v6442, %v6446
        %v6448 = vpack.c.bf16 %v6447, %v6447
        %v6450 = vsel %vm2622, %v6448, 0
        %6452 = vmatprep.subr.bf16.mxu0 0
        %6453 = vmatpush1.bf16.msra.mxu0 0
        %6454 = vmatprep.subr.bf16.mxu0 0
        %6455 = vmatpush1.bf16.msra.mxu0 0
        %6456 = vmatprep.subr.bf16.mxu0 0
        %6457 = vmatpush1.bf16.msra.mxu0 0
        %6458 = vmatprep.subr.bf16.mxu0 0
        %6459 = vmatpush1.bf16.msra.mxu0 0
        %6460 = vmatprep.subr.bf16.mxu0 0
        %6461 = vmatpush1.bf16.msra.mxu0 0
        %6462 = vmatprep.subr.bf16.mxu0 0
        %6463 = vmatpush1.bf16.msra.mxu0 0
        %6464 = vmatprep.subr.bf16.mxu0 0
        %6465 = vmatpush1.bf16.msra.mxu0 0
        %6466 = vmatprep.subr.bf16.mxu0 0
        %6467 = vmatpush1.bf16.msra.mxu0 %v6357
        %6468 = vmatprep.subr.bf16.mxu0 0
        %6469 = vmatpush2.bf16.msra.mxu0 0
        %6470 = vmatprep.subr.bf16.mxu0 0
        %6471 = vmatpush2.bf16.msra.mxu0 0
        %6472 = vmatprep.subr.bf16.mxu0 0
        %6473 = vmatpush2.bf16.msra.mxu0 0
        %6474 = vmatprep.subr.bf16.mxu0 0
        %6475 = vmatpush2.bf16.msra.mxu0 0
        %6476 = vmatprep.subr.bf16.mxu0 0
        %6477 = vmatpush2.bf16.msra.mxu0 0
        %6478 = vmatprep.subr.bf16.mxu0 0
        %6479 = vmatpush2.bf16.msra.mxu0 0
        %6480 = vmatprep.subr.bf16.mxu0 0
        %6481 = vmatpush2.bf16.msra.mxu0 0
        %6482 = vmatprep.subr.bf16.mxu0 0
        %6483 = vmatpush2.bf16.msra.mxu0 0
        %6484 = vmatprep.mubr.bf16.mxu0 0
        %6485 = vmatmul.mubr.bf16.gmra.mxu0 %v6450
        %v6486 = vpop.f32.mrf.mxu0
        %v6487 = vadd.f32 0.0, %v6486
        %v6488 = vpop.f32.mrf.mxu0
        %v6489 = vpop.f32.mrf.mxu0
        %v6490 = vpop.f32.mrf.mxu0
        %6491 = vdwg.mxu0
        %6492 = vrot.lane.b32.xlu0 %v6221, 96
        %v6493 = vpop.permute.xlu0 %6492
        %6494 = vrot.lane.b32.xlu0 %v6349, 96
        %v6495 = vpop.permute.xlu0 %6494
        %6496 = vrot.lane.b32.xlu0 %v6353, 96
        %v6497 = vpop.permute.xlu0 %6496
        %v6498 = vsel %vm2534, %v6493, 0
        %v6500 = vsel %vm2534, %v6495, 0
        %v6502 = vsel %vm2534, %v6497, 0
        %6504 = vmatprep.subr.mxu0 0.0
        %6505 = vmatpush1.xpose.msra.mxu0 0.0
        %6506 = vmatprep.subr.mxu0 0.0
        %6507 = vmatpush1.xpose.msra.mxu0 0.0
        %6508 = vmatprep.subr.mxu0 0.0
        %6509 = vmatpush1.xpose.msra.mxu0 0.0
        %6510 = vmatprep.subr.mxu0 0.0
        %6511 = vmatpush1.xpose.msra.mxu0 0.0
        %6512 = vmatprep.subr.mxu0 0.0
        %6513 = vmatpush1.xpose.msra.mxu0 0.0
        %6514 = vmatprep.subr.mxu0 0.0
        %6515 = vmatpush1.xpose.msra.mxu0 0.0
        %6516 = vmatprep.subr.mxu0 0.0
        %6517 = vmatpush1.xpose.msra.mxu0 0.0
        %6518 = vmatprep.subr.mxu0 0.0
        %6519 = vmatpush1.xpose.msra.mxu0 0.0
        %6520 = vmatprep.subr.mxu0 0.0
        %6521 = vmatpush1.xpose.msra.mxu0 0.0
        %6522 = vmatprep.subr.mxu0 0.0
        %6523 = vmatpush1.xpose.msra.mxu0 0.0
        %6524 = vmatprep.subr.mxu0 0.0
        %6525 = vmatpush1.xpose.msra.mxu0 0.0
        %6526 = vmatprep.subr.mxu0 0.0
        %6527 = vmatpush1.xpose.msra.mxu0 0.0
        %6528 = vmatprep.subr.mxu0 0.0
        %6529 = vmatpush1.xpose.msra.mxu0 0.0
        %6530 = vmatprep.subr.mxu0 0.0
        %6531 = vmatpush1.xpose.msra.mxu0 0.0
        %6532 = vmatprep.subr.mxu0 0.0
        %6533 = vmatpush1.xpose.msra.mxu0 %v6502
        %6534 = vmatprep.subr.mxu0 0.0
        %6535 = vmatpush1.xpose.msra.mxu0 %v6500
        %6536 = vmatprep.subr.mxu0 0.0
        %6537 = vmatpush2.xpose.msra.mxu0 0.0
        %6538 = vmatprep.subr.mxu0 0.0
        %6539 = vmatpush2.xpose.msra.mxu0 0.0
        %6540 = vmatprep.subr.mxu0 0.0
        %6541 = vmatpush2.xpose.msra.mxu0 0.0
        %6542 = vmatprep.subr.mxu0 0.0
        %6543 = vmatpush2.xpose.msra.mxu0 0.0
        %6544 = vmatprep.subr.mxu0 0.0
        %6545 = vmatpush2.xpose.msra.mxu0 0.0
        %6546 = vmatprep.subr.mxu0 0.0
        %6547 = vmatpush2.xpose.msra.mxu0 0.0
        %6548 = vmatprep.subr.mxu0 0.0
        %6549 = vmatpush2.xpose.msra.mxu0 0.0
        %6550 = vmatprep.subr.mxu0 0.0
        %6551 = vmatpush2.xpose.msra.mxu0 0.0
        %6552 = vmatprep.subr.mxu0 0.0
        %6553 = vmatpush2.xpose.msra.mxu0 0.0
        %6554 = vmatprep.subr.mxu0 0.0
        %6555 = vmatpush2.xpose.msra.mxu0 0.0
        %6556 = vmatprep.subr.mxu0 0.0
        %6557 = vmatpush2.xpose.msra.mxu0 0.0
        %6558 = vmatprep.subr.mxu0 0.0
        %6559 = vmatpush2.xpose.msra.mxu0 0.0
        %6560 = vmatprep.subr.mxu0 0.0
        %6561 = vmatpush2.xpose.msra.mxu0 0.0
        %6562 = vmatprep.subr.mxu0 0.0
        %6563 = vmatpush2.xpose.msra.mxu0 0.0
        %6564 = vmatprep.subr.mxu0 0.0
        %6565 = vmatpush2.xpose.msra.mxu0 0.0
        %6566 = vmatprep.subr.mxu0 0.0
        %6567 = vmatpush2.xpose.msra.mxu0 0.0
        %6568 = vmatprep.mubr.f32.mxu0 0.0
        %6569 = vmatmul.mubr.f32.gmra.mxu0 %v6498
        %v6570 = vpop.f32.mrf.mxu0
        %v6571 = vadd.f32 0.0, %v6570
        %v6572 = vpop.f32.mrf.mxu0
        %6573 = vdwg.mxu0
        %v6574 = vsel %vm2622, %v6571, -inf
        %6575 = vmax.xlane.f32.xlu0 %v6574
        %v6576 = vpop.xlane.xlu0 %6575
        %v6577 = vsub.f32 %v6571, %v6576
        %v6578 = vmul.f32 %v6577, 1.442695
        %v6579 = vpow.pop %v6578
        %v6580 = vsel %vm2622, %v6579, 0.0
        %6581 = vadd.xlane.f32.xlu0 %v6580
        %v6582 = vpop.xlane.xlu0 %6581
        %v6583 = vrcp.pop %v6582
        %v6584 = vmul.f32 %v6579, %v6583
        %v6585 = vpack.c.bf16 %v6584, %v6584
        %6587 = vrot.lane.b32.xlu0 %v6357, 96
        %v6588 = vpop.permute.xlu0 %6587
        %v6591 = vsel %vm2622, %v6585, 0
        %6593 = vmatprep.subr.bf16.mxu0 0
        %6594 = vmatpush1.bf16.msra.mxu0 0
        %6595 = vmatprep.subr.bf16.mxu0 0
        %6596 = vmatpush1.bf16.msra.mxu0 0
        %6597 = vmatprep.subr.bf16.mxu0 0
        %6598 = vmatpush1.bf16.msra.mxu0 0
        %6599 = vmatprep.subr.bf16.mxu0 0
        %6600 = vmatpush1.bf16.msra.mxu0 0
        %6601 = vmatprep.subr.bf16.mxu0 0
        %6602 = vmatpush1.bf16.msra.mxu0 0
        %6603 = vmatprep.subr.bf16.mxu0 0
        %6604 = vmatpush1.bf16.msra.mxu0 0
        %6605 = vmatprep.subr.bf16.mxu0 0
        %6606 = vmatpush1.bf16.msra.mxu0 0
        %6607 = vmatprep.subr.bf16.mxu0 0
        %6608 = vmatpush1.bf16.msra.mxu0 %v6588
        %6609 = vmatprep.subr.bf16.mxu0 0
        %6610 = vmatpush2.bf16.msra.mxu0 0
        %6611 = vmatprep.subr.bf16.mxu0 0
        %6612 = vmatpush2.bf16.msra.mxu0 0
        %6613 = vmatprep.subr.bf16.mxu0 0
        %6614 = vmatpush2.bf16.msra.mxu0 0
        %6615 = vmatprep.subr.bf16.mxu0 0
        %6616 = vmatpush2.bf16.msra.mxu0 0
        %6617 = vmatprep.subr.bf16.mxu0 0
        %6618 = vmatpush2.bf16.msra.mxu0 0
        %6619 = vmatprep.subr.bf16.mxu0 0
        %6620 = vmatpush2.bf16.msra.mxu0 0
        %6621 = vmatprep.subr.bf16.mxu0 0
        %6622 = vmatpush2.bf16.msra.mxu0 0
        %6623 = vmatprep.subr.bf16.mxu0 0
        %6624 = vmatpush2.bf16.msra.mxu0 0
        %6625 = vmatprep.mubr.bf16.mxu0 0
        %6626 = vmatmul.mubr.bf16.gmra.mxu0 %v6591
        %v6627 = vpop.f32.mrf.mxu0
        %v6628 = vadd.f32 0.0, %v6627
        %v6629 = vpop.f32.mrf.mxu0
        %v6630 = vpop.f32.mrf.mxu0
        %v6631 = vpop.f32.mrf.mxu0
        %6632 = vdwg.mxu0
        %6633 = vrot.lane.b32.xlu0 %v6221, 64
        %v6634 = vpop.permute.xlu0 %6633
        %6635 = vrot.lane.b32.xlu0 %v6349, 64
        %v6636 = vpop.permute.xlu0 %6635
        %6637 = vrot.lane.b32.xlu0 %v6353, 64
        %v6638 = vpop.permute.xlu0 %6637
        %v6639 = vsel %vm2534, %v6634, 0
        %v6641 = vsel %vm2534, %v6636, 0
        %v6643 = vsel %vm2534, %v6638, 0
        %6645 = vmatprep.subr.mxu0 0.0
        %6646 = vmatpush1.xpose.msra.mxu0 0.0
        %6647 = vmatprep.subr.mxu0 0.0
        %6648 = vmatpush1.xpose.msra.mxu0 0.0
        %6649 = vmatprep.subr.mxu0 0.0
        %6650 = vmatpush1.xpose.msra.mxu0 0.0
        %6651 = vmatprep.subr.mxu0 0.0
        %6652 = vmatpush1.xpose.msra.mxu0 0.0
        %6653 = vmatprep.subr.mxu0 0.0
        %6654 = vmatpush1.xpose.msra.mxu0 0.0
        %6655 = vmatprep.subr.mxu0 0.0
        %6656 = vmatpush1.xpose.msra.mxu0 0.0
        %6657 = vmatprep.subr.mxu0 0.0
        %6658 = vmatpush1.xpose.msra.mxu0 0.0
        %6659 = vmatprep.subr.mxu0 0.0
        %6660 = vmatpush1.xpose.msra.mxu0 0.0
        %6661 = vmatprep.subr.mxu0 0.0
        %6662 = vmatpush1.xpose.msra.mxu0 0.0
        %6663 = vmatprep.subr.mxu0 0.0
        %6664 = vmatpush1.xpose.msra.mxu0 0.0
        %6665 = vmatprep.subr.mxu0 0.0
        %6666 = vmatpush1.xpose.msra.mxu0 0.0
        %6667 = vmatprep.subr.mxu0 0.0
        %6668 = vmatpush1.xpose.msra.mxu0 0.0
        %6669 = vmatprep.subr.mxu0 0.0
        %6670 = vmatpush1.xpose.msra.mxu0 0.0
        %6671 = vmatprep.subr.mxu0 0.0
        %6672 = vmatpush1.xpose.msra.mxu0 0.0
        %6673 = vmatprep.subr.mxu0 0.0
        %6674 = vmatpush1.xpose.msra.mxu0 %v6643
        %6675 = vmatprep.subr.mxu0 0.0
        %6676 = vmatpush1.xpose.msra.mxu0 %v6641
        %6677 = vmatprep.subr.mxu0 0.0
        %6678 = vmatpush2.xpose.msra.mxu0 0.0
        %6679 = vmatprep.subr.mxu0 0.0
        %6680 = vmatpush2.xpose.msra.mxu0 0.0
        %6681 = vmatprep.subr.mxu0 0.0
        %6682 = vmatpush2.xpose.msra.mxu0 0.0
        %6683 = vmatprep.subr.mxu0 0.0
        %6684 = vmatpush2.xpose.msra.mxu0 0.0
        %6685 = vmatprep.subr.mxu0 0.0
        %6686 = vmatpush2.xpose.msra.mxu0 0.0
        %6687 = vmatprep.subr.mxu0 0.0
        %6688 = vmatpush2.xpose.msra.mxu0 0.0
        %6689 = vmatprep.subr.mxu0 0.0
        %6690 = vmatpush2.xpose.msra.mxu0 0.0
        %6691 = vmatprep.subr.mxu0 0.0
        %6692 = vmatpush2.xpose.msra.mxu0 0.0
        %6693 = vmatprep.subr.mxu0 0.0
        %6694 = vmatpush2.xpose.msra.mxu0 0.0
        %6695 = vmatprep.subr.mxu0 0.0
        %6696 = vmatpush2.xpose.msra.mxu0 0.0
        %6697 = vmatprep.subr.mxu0 0.0
        %6698 = vmatpush2.xpose.msra.mxu0 0.0
        %6699 = vmatprep.subr.mxu0 0.0
        %6700 = vmatpush2.xpose.msra.mxu0 0.0
        %6701 = vmatprep.subr.mxu0 0.0
        %6702 = vmatpush2.xpose.msra.mxu0 0.0
        %6703 = vmatprep.subr.mxu0 0.0
        %6704 = vmatpush2.xpose.msra.mxu0 0.0
        %6705 = vmatprep.subr.mxu0 0.0
        %6706 = vmatpush2.xpose.msra.mxu0 0.0
        %6707 = vmatprep.subr.mxu0 0.0
        %6708 = vmatpush2.xpose.msra.mxu0 0.0
        %6709 = vmatprep.mubr.f32.mxu0 0.0
        %6710 = vmatmul.mubr.f32.gmra.mxu0 %v6639
        %v6711 = vpop.f32.mrf.mxu0
        %v6712 = vadd.f32 0.0, %v6711
        %v6713 = vpop.f32.mrf.mxu0
        %6714 = vdwg.mxu0
        %v6715 = vsel %vm2622, %v6712, -inf
        %6716 = vmax.xlane.f32.xlu0 %v6715
        %v6717 = vpop.xlane.xlu0 %6716
        %v6718 = vsub.f32 %v6712, %v6717
        %v6719 = vmul.f32 %v6718, 1.442695
        %v6720 = vpow.pop %v6719
        %v6721 = vsel %vm2622, %v6720, 0.0
        %6722 = vadd.xlane.f32.xlu0 %v6721
        %v6723 = vpop.xlane.xlu0 %6722
        %v6724 = vrcp.pop %v6723
        %v6725 = vmul.f32 %v6720, %v6724
        %v6726 = vpack.c.bf16 %v6725, %v6725
        %6727 = vrot.lane.b32.xlu0 %v6357, 64
        %v6728 = vpop.permute.xlu0 %6727
        %v6731 = vsel %vm2622, %v6726, 0
        %6733 = vmatprep.subr.bf16.mxu0 0
        %6734 = vmatpush1.bf16.msra.mxu0 0
        %6735 = vmatprep.subr.bf16.mxu0 0
        %6736 = vmatpush1.bf16.msra.mxu0 0
        %6737 = vmatprep.subr.bf16.mxu0 0
        %6738 = vmatpush1.bf16.msra.mxu0 0
        %6739 = vmatprep.subr.bf16.mxu0 0
        %6740 = vmatpush1.bf16.msra.mxu0 0
        %6741 = vmatprep.subr.bf16.mxu0 0
        %6742 = vmatpush1.bf16.msra.mxu0 0
        %6743 = vmatprep.subr.bf16.mxu0 0
        %6744 = vmatpush1.bf16.msra.mxu0 0
        %6745 = vmatprep.subr.bf16.mxu0 0
        %6746 = vmatpush1.bf16.msra.mxu0 0
        %6747 = vmatprep.subr.bf16.mxu0 0
        %6748 = vmatpush1.bf16.msra.mxu0 %v6728
        %6749 = vmatprep.subr.bf16.mxu0 0
        %6750 = vmatpush2.bf16.msra.mxu0 0
        %6751 = vmatprep.subr.bf16.mxu0 0
        %6752 = vmatpush2.bf16.msra.mxu0 0
        %6753 = vmatprep.subr.bf16.mxu0 0
        %6754 = vmatpush2.bf16.msra.mxu0 0
        %6755 = vmatprep.subr.bf16.mxu0 0
        %6756 = vmatpush2.bf16.msra.mxu0 0
        %6757 = vmatprep.subr.bf16.mxu0 0
        %6758 = vmatpush2.bf16.msra.mxu0 0
        %6759 = vmatprep.subr.bf16.mxu0 0
        %6760 = vmatpush2.bf16.msra.mxu0 0
        %6761 = vmatprep.subr.bf16.mxu0 0
        %6762 = vmatpush2.bf16.msra.mxu0 0
        %6763 = vmatprep.subr.bf16.mxu0 0
        %6764 = vmatpush2.bf16.msra.mxu0 0
        %6765 = vmatprep.mubr.bf16.mxu0 0
        %6766 = vmatmul.mubr.bf16.gmra.mxu0 %v6731
        %v6767 = vpop.f32.mrf.mxu0
        %v6768 = vadd.f32 0.0, %v6767
        %v6769 = vpop.f32.mrf.mxu0
        %v6770 = vpop.f32.mrf.mxu0
        %v6771 = vpop.f32.mrf.mxu0
        %6772 = vdwg.mxu0
        %6773 = vrot.lane.b32.xlu0 %v6221, 32
        %v6774 = vpop.permute.xlu0 %6773
        %6775 = vrot.lane.b32.xlu0 %v6349, 32
        %v6776 = vpop.permute.xlu0 %6775
        %6777 = vrot.lane.b32.xlu0 %v6353, 32
        %v6778 = vpop.permute.xlu0 %6777
        %v6779 = vsel %vm2534, %v6774, 0
        %v6781 = vsel %vm2534, %v6776, 0
        %v6783 = vsel %vm2534, %v6778, 0
        %6785 = vmatprep.subr.mxu0 0.0
        %6786 = vmatpush1.xpose.msra.mxu0 0.0
        %6787 = vmatprep.subr.mxu0 0.0
        %6788 = vmatpush1.xpose.msra.mxu0 0.0
        %6789 = vmatprep.subr.mxu0 0.0
        %6790 = vmatpush1.xpose.msra.mxu0 0.0
        %6791 = vmatprep.subr.mxu0 0.0
        %6792 = vmatpush1.xpose.msra.mxu0 0.0
        %6793 = vmatprep.subr.mxu0 0.0
        %6794 = vmatpush1.xpose.msra.mxu0 0.0
        %6795 = vmatprep.subr.mxu0 0.0
        %6796 = vmatpush1.xpose.msra.mxu0 0.0
        %6797 = vmatprep.subr.mxu0 0.0
        %6798 = vmatpush1.xpose.msra.mxu0 0.0
        %6799 = vmatprep.subr.mxu0 0.0
        %6800 = vmatpush1.xpose.msra.mxu0 0.0
        %6801 = vmatprep.subr.mxu0 0.0
        %6802 = vmatpush1.xpose.msra.mxu0 0.0
        %6803 = vmatprep.subr.mxu0 0.0
        %6804 = vmatpush1.xpose.msra.mxu0 0.0
        %6805 = vmatprep.subr.mxu0 0.0
        %6806 = vmatpush1.xpose.msra.mxu0 0.0
        %6807 = vmatprep.subr.mxu0 0.0
        %6808 = vmatpush1.xpose.msra.mxu0 0.0
        %6809 = vmatprep.subr.mxu0 0.0
        %6810 = vmatpush1.xpose.msra.mxu0 0.0
        %6811 = vmatprep.subr.mxu0 0.0
        %6812 = vmatpush1.xpose.msra.mxu0 0.0
        %6813 = vmatprep.subr.mxu0 0.0
        %6814 = vmatpush1.xpose.msra.mxu0 %v6783
        %6815 = vmatprep.subr.mxu0 0.0
        %6816 = vmatpush1.xpose.msra.mxu0 %v6781
        %6817 = vmatprep.subr.mxu0 0.0
        %6818 = vmatpush2.xpose.msra.mxu0 0.0
        %6819 = vmatprep.subr.mxu0 0.0
        %6820 = vmatpush2.xpose.msra.mxu0 0.0
        %6821 = vmatprep.subr.mxu0 0.0
        %6822 = vmatpush2.xpose.msra.mxu0 0.0
        %6823 = vmatprep.subr.mxu0 0.0
        %6824 = vmatpush2.xpose.msra.mxu0 0.0
        %6825 = vmatprep.subr.mxu0 0.0
        %6826 = vmatpush2.xpose.msra.mxu0 0.0
        %6827 = vmatprep.subr.mxu0 0.0
        %6828 = vmatpush2.xpose.msra.mxu0 0.0
        %6829 = vmatprep.subr.mxu0 0.0
        %6830 = vmatpush2.xpose.msra.mxu0 0.0
        %6831 = vmatprep.subr.mxu0 0.0
        %6832 = vmatpush2.xpose.msra.mxu0 0.0
        %6833 = vmatprep.subr.mxu0 0.0
        %6834 = vmatpush2.xpose.msra.mxu0 0.0
        %6835 = vmatprep.subr.mxu0 0.0
        %6836 = vmatpush2.xpose.msra.mxu0 0.0
        %6837 = vmatprep.subr.mxu0 0.0
        %6838 = vmatpush2.xpose.msra.mxu0 0.0
        %6839 = vmatprep.subr.mxu0 0.0
        %6840 = vmatpush2.xpose.msra.mxu0 0.0
        %6841 = vmatprep.subr.mxu0 0.0
        %6842 = vmatpush2.xpose.msra.mxu0 0.0
        %6843 = vmatprep.subr.mxu0 0.0
        %6844 = vmatpush2.xpose.msra.mxu0 0.0
        %6845 = vmatprep.subr.mxu0 0.0
        %6846 = vmatpush2.xpose.msra.mxu0 0.0
        %6847 = vmatprep.subr.mxu0 0.0
        %6848 = vmatpush2.xpose.msra.mxu0 0.0
        %6849 = vmatprep.mubr.f32.mxu0 0.0
        %6850 = vmatmul.mubr.f32.gmra.mxu0 %v6779
        %v6851 = vpop.f32.mrf.mxu0
        %v6852 = vadd.f32 0.0, %v6851
        %v6853 = vpop.f32.mrf.mxu0
        %6854 = vdwg.mxu0
        %v6855 = vsel %vm2622, %v6852, -inf
        %6856 = vmax.xlane.f32.xlu0 %v6855
        %v6857 = vpop.xlane.xlu0 %6856
        %v6858 = vsub.f32 %v6852, %v6857
        %v6859 = vmul.f32 %v6858, 1.442695
        %v6860 = vpow.pop %v6859
        %v6861 = vsel %vm2622, %v6860, 0.0
        %6862 = vadd.xlane.f32.xlu0 %v6861
        %v6863 = vpop.xlane.xlu0 %6862
        %v6864 = vrcp.pop %v6863
        %v6865 = vmul.f32 %v6860, %v6864
        %v6866 = vpack.c.bf16 %v6865, %v6865
        %6867 = vrot.lane.b32.xlu0 %v6357, 32
        %v6868 = vpop.permute.xlu0 %6867
        %v6871 = vsel %vm2622, %v6866, 0
        %6873 = vmatprep.subr.bf16.mxu0 0
        %6874 = vmatpush1.bf16.msra.mxu0 0
        %6875 = vmatprep.subr.bf16.mxu0 0
        %6876 = vmatpush1.bf16.msra.mxu0 0
        %6877 = vmatprep.subr.bf16.mxu0 0
        %6878 = vmatpush1.bf16.msra.mxu0 0
        %6879 = vmatprep.subr.bf16.mxu0 0
        %6880 = vmatpush1.bf16.msra.mxu0 0
        %6881 = vmatprep.subr.bf16.mxu0 0
        %6882 = vmatpush1.bf16.msra.mxu0 0
        %6883 = vmatprep.subr.bf16.mxu0 0
        %6884 = vmatpush1.bf16.msra.mxu0 0
        %6885 = vmatprep.subr.bf16.mxu0 0
        %6886 = vmatpush1.bf16.msra.mxu0 0
        %6887 = vmatprep.subr.bf16.mxu0 0
        %6888 = vmatpush1.bf16.msra.mxu0 %v6868
        %6889 = vmatprep.subr.bf16.mxu0 0
        %6890 = vmatpush2.bf16.msra.mxu0 0
        %6891 = vmatprep.subr.bf16.mxu0 0
        %6892 = vmatpush2.bf16.msra.mxu0 0
        %6893 = vmatprep.subr.bf16.mxu0 0
        %6894 = vmatpush2.bf16.msra.mxu0 0
        %6895 = vmatprep.subr.bf16.mxu0 0
        %6896 = vmatpush2.bf16.msra.mxu0 0
        %6897 = vmatprep.subr.bf16.mxu0 0
        %6898 = vmatpush2.bf16.msra.mxu0 0
        %6899 = vmatprep.subr.bf16.mxu0 0
        %6900 = vmatpush2.bf16.msra.mxu0 0
        %6901 = vmatprep.subr.bf16.mxu0 0
        %6902 = vmatpush2.bf16.msra.mxu0 0
        %6903 = vmatprep.subr.bf16.mxu0 0
        %6904 = vmatpush2.bf16.msra.mxu0 0
        %6905 = vmatprep.mubr.bf16.mxu0 0
        %6906 = vmatmul.mubr.bf16.gmra.mxu0 %v6871
        %v6907 = vpop.f32.mrf.mxu0
        %v6908 = vadd.f32 0.0, %v6907
        %v6909 = vpop.f32.mrf.mxu0
        %v6910 = vpop.f32.mrf.mxu0
        %v6911 = vpop.f32.mrf.mxu0
        %6912 = vdwg.mxu0
        %6914 = vrot.lane.b32.xlu0 %v6628, 32
        %v6915 = vpop.permute.xlu0 %6914
        %6918 = vrot.lane.b32.xlu0 %v6768, 64
        %v6919 = vpop.permute.xlu0 %6918
        %6922 = vrot.lane.b32.xlu0 %v6908, 96
        %v6923 = vpop.permute.xlu0 %6922
        %v6925 = vsel %vm2534, %v6487, %v6915
        %v6926 = vsel %vm3200, %v6925, %v6919
        %v6927 = vsel %vm3203, %v6926, %v6923
        %v6928 = vpack.c.bf16 %v6927, %v6927
        %v6929 = vlaneseq
        %v6930 = vshrl.u32 %v6929, 7
        %v6931 = vsub.s32 6, %v6930
        %v6932 = vrot.slane %v463, %v6931
        %v6949 = vunpack.c.l.b16 %v6117
        %v6950 = vunpack.c.l.b16 %v6118
        %v6951 = vunpack.c.l.b16 %v6119
        %v6952 = vunpack.c.l.b16 %v6120
        %v6953 = vunpack.c.l.b16 %v6121
        %v6954 = vunpack.c.l.b16 %v6122
        %v6955 = vunpack.c.l.b16 %v6123
        %v6956 = vunpack.c.l.b16 %v6124
        %v6957 = vunpack.c.l.b16 %v6125
        %v6958 = vunpack.c.l.b16 %v6126
        %v6959 = vunpack.c.l.b16 %v6127
        %v6960 = vunpack.c.l.b16 %v6128
        %v6961 = vunpack.c.l.b16 %v6129
        %v6962 = vunpack.c.l.b16 %v6130
        %v6963 = vunpack.c.l.b16 %v6131
        %v6964 = vunpack.c.l.b16 %v6132
        %v6965 = vpack.c.b16 %v6950, %v6949
        %v6966 = vpack.c.b16 %v6952, %v6951
        %v6967 = vpack.c.b16 %v6954, %v6953
        %v6968 = vpack.c.b16 %v6956, %v6955
        %v6969 = vpack.c.b16 %v6958, %v6957
        %v6970 = vpack.c.b16 %v6960, %v6959
        %v6971 = vpack.c.b16 %v6962, %v6961
        %v6972 = vpack.c.b16 %v6964, %v6963
        %6981 = vmatprep.subr.bf16.mxu0 0
        %6982 = vmatpush1.bf16.msra.mxu0 %v6972
        %6983 = vmatprep.subr.bf16.mxu0 0
        %6984 = vmatpush1.bf16.msra.mxu0 %v6971
        %6985 = vmatprep.subr.bf16.mxu0 0
        %6986 = vmatpush1.bf16.msra.mxu0 %v6970
        %6987 = vmatprep.subr.bf16.mxu0 0
        %6988 = vmatpush1.bf16.msra.mxu0 %v6969
        %6989 = vmatprep.subr.bf16.mxu0 0
        %6990 = vmatpush1.bf16.msra.mxu0 %v6968
        %6991 = vmatprep.subr.bf16.mxu0 0
        %6992 = vmatpush1.bf16.msra.mxu0 %v6967
        %6993 = vmatprep.subr.bf16.mxu0 0
        %6994 = vmatpush1.bf16.msra.mxu0 %v6966
        %6995 = vmatprep.subr.bf16.mxu0 0
        %6996 = vmatpush1.bf16.msra.mxu0 %v6965
        %6997 = vmatprep.subr.bf16.mxu0 0
        %6998 = vmatpush2.bf16.msra.mxu0 0
        %6999 = vmatprep.subr.bf16.mxu0 0
        %7000 = vmatpush2.bf16.msra.mxu0 0
        %7001 = vmatprep.subr.bf16.mxu0 0
        %7002 = vmatpush2.bf16.msra.mxu0 0
        %7003 = vmatprep.subr.bf16.mxu0 0
        %7004 = vmatpush2.bf16.msra.mxu0 0
        %7005 = vmatprep.subr.bf16.mxu0 0
        %7006 = vmatpush2.bf16.msra.mxu0 0
        %7007 = vmatprep.subr.bf16.mxu0 0
        %7008 = vmatpush2.bf16.msra.mxu0 0
        %7009 = vmatprep.subr.bf16.mxu0 0
        %7010 = vmatpush2.bf16.msra.mxu0 0
        %7011 = vmatprep.subr.bf16.mxu0 0
        %7012 = vmatpush2.bf16.msra.mxu0 0
        %7013 = vmatprep.mubr.bf16.mxu0 0
        %7014 = vmatmul.mubr.bf16.gmra.mxu0 %v6928
        %v7015 = vpop.f32.mrf.mxu0
        %v7016 = vadd.f32 %v6932, %v7015
        %v7017 = vpop.f32.mrf.mxu0
        %v7018 = vpop.f32.mrf.mxu0
        %v7019 = vpop.f32.mrf.mxu0
        %7020 = vdwg.mxu0
        %v7021 = vadd.f32 %v5006, %v7016
        %7022 = vadd.xlane.f32.xlu0 %v7021
        %v7023 = vpop.xlane.xlu0 %7022
        %v7024 = vmul.f32 %v7023, %v2227
        %v7025 = vsub.f32 %v7021, %v7024
        %v7026 = vmul.f32 %v7025, %v7025
        %7027 = vadd.xlane.f32.xlu0 %v7026
        %v7028 = vpop.xlane.xlu0 %7027
        %v7029 = vmul.f32 %v7028, %v2227
        %v7030 = vadd.f32 %v7029, 1e-05
        %v7031 = vrsqrt.pop %v7030
        %v7032 = vmul.f32 %v7025, %v7031
        %v7033 = vlaneseq
        %v7034 = vshrl.u32 %v7033, 7
        %v7035 = vsub.s32 7, %v7034
        %v7036 = vrot.slane %v463, %v7035
        %v7037 = vmul.f32 %v7032, %v7036
        %v7038 = vlaneseq
        %v7039 = vshrl.u32 %v7038, 7
        %v7040 = vsub.s32 0, %v7039
        %v7041 = vrot.slane %v464, %v7040
        %v7042 = vadd.f32 %v7037, %v7041
        %s7043 = scalar_lea.vmem [#allocation10], 768
        %v7044 = vld [vmem:[%s7043] sm:$0xff]
        %v7045 = vld [vmem:[%s7043 + $0x8] sm:$0xff]
        %v7046 = vld [vmem:[%s7043 + $0x10] sm:$0xff]
        %v7047 = vld [vmem:[%s7043 + $0x18] sm:$0xff]
        %v7048 = vld [vmem:[%s7043 + $0x20] sm:$0xff]
        %v7049 = vld [vmem:[%s7043 + $0x28] sm:$0xff]
        %v7050 = vld [vmem:[%s7043 + $0x30] sm:$0xff]
        %v7051 = vld [vmem:[%s7043 + $0x38] sm:$0xff]
        %v7052 = vld [vmem:[%s7043 + $0x40] sm:$0xff]
        %v7053 = vld [vmem:[%s7043 + $0x48] sm:$0xff]
        %v7054 = vld [vmem:[%s7043 + $0x50] sm:$0xff]
        %v7055 = vld [vmem:[%s7043 + $0x58] sm:$0xff]
        %v7056 = vld [vmem:[%s7043 + $0x60] sm:$0xff]
        %v7057 = vld [vmem:[%s7043 + $0x68] sm:$0xff]
        %v7058 = vld [vmem:[%s7043 + $0x70] sm:$0xff]
        %v7059 = vld [vmem:[%s7043 + $0x78] sm:$0xff]
        %s7060 = scalar_lea.vmem [#allocation11], 256
        %v7061 = vld [vmem:[%s7060] sm:$0xf]
        %v7062 = vld [vmem:[%s7060 + $0x4] sm:$0xf]
        %v7063 = vld [vmem:[%s7060 + $0x8] sm:$0xf]
        %v7064 = vld [vmem:[%s7060 + $0xc] sm:$0xf]
        %v7065 = vld [vmem:[%s7060 + $0x10] sm:$0xf]
        %v7066 = vld [vmem:[%s7060 + $0x14] sm:$0xf]
        %v7067 = vld [vmem:[%s7060 + $0x18] sm:$0xf]
        %v7068 = vld [vmem:[%s7060 + $0x1c] sm:$0xf]
        %v7069 = vld [vmem:[%s7060 + $0x20] sm:$0xf]
        %v7070 = vld [vmem:[%s7060 + $0x24] sm:$0xf]
        %v7071 = vld [vmem:[%s7060 + $0x28] sm:$0xf]
        %v7072 = vld [vmem:[%s7060 + $0x2c] sm:$0xf]
        %v7073 = vld [vmem:[%s7060 + $0x30] sm:$0xf]
        %v7074 = vld [vmem:[%s7060 + $0x34] sm:$0xf]
        %v7075 = vld [vmem:[%s7060 + $0x38] sm:$0xf]
        %v7076 = vld [vmem:[%s7060 + $0x3c] sm:$0xf]
        %v7077 = vld [vmem:[%s7060 + $0x40] sm:$0xf]
        %v7078 = vld [vmem:[%s7060 + $0x44] sm:$0xf]
        %v7079 = vld [vmem:[%s7060 + $0x48] sm:$0xf]
        %v7080 = vld [vmem:[%s7060 + $0x4c] sm:$0xf]
        %v7081 = vld [vmem:[%s7060 + $0x50] sm:$0xf]
        %v7082 = vld [vmem:[%s7060 + $0x54] sm:$0xf]
        %v7083 = vld [vmem:[%s7060 + $0x58] sm:$0xf]
        %v7084 = vld [vmem:[%s7060 + $0x5c] sm:$0xf]
        %v7085 = vld [vmem:[%s7060 + $0x60] sm:$0xf]
        %v7086 = vld [vmem:[%s7060 + $0x64] sm:$0xf]
        %v7087 = vld [vmem:[%s7060 + $0x68] sm:$0xf]
        %v7088 = vld [vmem:[%s7060 + $0x6c] sm:$0xf]
        %v7089 = vld [vmem:[%s7060 + $0x70] sm:$0xf]
        %v7090 = vld [vmem:[%s7060 + $0x74] sm:$0xf]
        %v7091 = vld [vmem:[%s7060 + $0x78] sm:$0xf]
        %v7092 = vld [vmem:[%s7060 + $0x7c] sm:$0xf]
        %v7093 = vpack.c.bf16 %v6081, %v6080
        %v7094 = vlaneseq
        %v7095 = vshrl.u32 %v7094, 7
        %v7096 = vsub.s32 6, %v7095
        %v7097 = vrot.slane %v465, %v7096
        %v7098 = vlaneseq
        %v7099 = vshrl.u32 %v7098, 7
        %v7100 = vsub.s32 6, %v7099
        %v7101 = vrot.slane %v466, %v7100
        %v7118 = vunpack.c.l.b16 %v7044
        %v7119 = vunpack.c.h.b16 %v7044
        %v7120 = vunpack.c.l.b16 %v7045
        %v7121 = vunpack.c.h.b16 %v7045
        %v7122 = vunpack.c.l.b16 %v7046
        %v7123 = vunpack.c.h.b16 %v7046
        %v7124 = vunpack.c.l.b16 %v7047
        %v7125 = vunpack.c.h.b16 %v7047
        %v7126 = vunpack.c.l.b16 %v7048
        %v7127 = vunpack.c.h.b16 %v7048
        %v7128 = vunpack.c.l.b16 %v7049
        %v7129 = vunpack.c.h.b16 %v7049
        %v7130 = vunpack.c.l.b16 %v7050
        %v7131 = vunpack.c.h.b16 %v7050
        %v7132 = vunpack.c.l.b16 %v7051
        %v7133 = vunpack.c.h.b16 %v7051
        %v7134 = vunpack.c.l.b16 %v7052
        %v7135 = vunpack.c.h.b16 %v7052
        %v7136 = vunpack.c.l.b16 %v7053
        %v7137 = vunpack.c.h.b16 %v7053
        %v7138 = vunpack.c.l.b16 %v7054
        %v7139 = vunpack.c.h.b16 %v7054
        %v7140 = vunpack.c.l.b16 %v7055
        %v7141 = vunpack.c.h.b16 %v7055
        %v7142 = vunpack.c.l.b16 %v7056
        %v7143 = vunpack.c.h.b16 %v7056
        %v7144 = vunpack.c.l.b16 %v7057
        %v7145 = vunpack.c.h.b16 %v7057
        %v7146 = vunpack.c.l.b16 %v7058
        %v7147 = vunpack.c.h.b16 %v7058
        %v7148 = vunpack.c.l.b16 %v7059
        %v7149 = vunpack.c.h.b16 %v7059
        %v7150 = vpack.c.b16 %v7120, %v7118
        %v7151 = vpack.c.b16 %v7121, %v7119
        %v7152 = vpack.c.b16 %v7124, %v7122
        %v7153 = vpack.c.b16 %v7125, %v7123
        %v7154 = vpack.c.b16 %v7128, %v7126
        %v7155 = vpack.c.b16 %v7129, %v7127
        %v7156 = vpack.c.b16 %v7132, %v7130
        %v7157 = vpack.c.b16 %v7133, %v7131
        %v7158 = vpack.c.b16 %v7136, %v7134
        %v7159 = vpack.c.b16 %v7137, %v7135
        %v7160 = vpack.c.b16 %v7140, %v7138
        %v7161 = vpack.c.b16 %v7141, %v7139
        %v7162 = vpack.c.b16 %v7144, %v7142
        %v7163 = vpack.c.b16 %v7145, %v7143
        %v7164 = vpack.c.b16 %v7148, %v7146
        %v7165 = vpack.c.b16 %v7149, %v7147
        %7182 = vmatprep.subr.bf16.mxu0 %v7165
        %7183 = vmatpush1.bf16.msra.mxu0 %v7164
        %7184 = vmatprep.subr.bf16.mxu0 %v7163
        %7185 = vmatpush1.bf16.msra.mxu0 %v7162
        %7186 = vmatprep.subr.bf16.mxu0 %v7161
        %7187 = vmatpush1.bf16.msra.mxu0 %v7160
        %7188 = vmatprep.subr.bf16.mxu0 %v7159
        %7189 = vmatpush1.bf16.msra.mxu0 %v7158
        %7190 = vmatprep.subr.bf16.mxu0 %v7157
        %7191 = vmatpush1.bf16.msra.mxu0 %v7156
        %7192 = vmatprep.subr.bf16.mxu0 %v7155
        %7193 = vmatpush1.bf16.msra.mxu0 %v7154
        %7194 = vmatprep.subr.bf16.mxu0 %v7153
        %7195 = vmatpush1.bf16.msra.mxu0 %v7152
        %7196 = vmatprep.subr.bf16.mxu0 %v7151
        %7197 = vmatpush1.bf16.msra.mxu0 %v7150
        %7198 = vmatprep.subr.bf16.mxu0 0
        %7199 = vmatpush2.bf16.msra.mxu0 0
        %7200 = vmatprep.subr.bf16.mxu0 0
        %7201 = vmatpush2.bf16.msra.mxu0 0
        %7202 = vmatprep.subr.bf16.mxu0 0
        %7203 = vmatpush2.bf16.msra.mxu0 0
        %7204 = vmatprep.subr.bf16.mxu0 0
        %7205 = vmatpush2.bf16.msra.mxu0 0
        %7206 = vmatprep.subr.bf16.mxu0 0
        %7207 = vmatpush2.bf16.msra.mxu0 0
        %7208 = vmatprep.subr.bf16.mxu0 0
        %7209 = vmatpush2.bf16.msra.mxu0 0
        %7210 = vmatprep.subr.bf16.mxu0 0
        %7211 = vmatpush2.bf16.msra.mxu0 0
        %7212 = vmatprep.subr.bf16.mxu0 0
        %7213 = vmatpush2.bf16.msra.mxu0 0
        %7214 = vmatprep.mubr.bf16.mxu0 0
        %7215 = vmatmul.mubr.bf16.gmra.mxu0 %v7093
        %v7216 = vpop.f32.mrf.mxu0
        %v7217 = vadd.f32 %v7097, %v7216
        %v7218 = vpop.f32.mrf.mxu0
        %v7219 = vadd.f32 %v7101, %v7218
        %v7220 = vpop.f32.mrf.mxu0
        %v7221 = vadd.f32 %v7097, %v7220
        %v7222 = vpop.f32.mrf.mxu0
        %v7223 = vadd.f32 %v7101, %v7222
        %7224 = vdwg.mxu0
        %v7225 = vmax.f32 %v7217, 0.0
        %v7226 = vmax.f32 %v7219, 0.0
        %v7227 = vmax.f32 %v7221, 0.0
        %v7228 = vmax.f32 %v7223, 0.0
        %v7229 = vpack.c.bf16 %v7227, %v7225
        %v7230 = vpack.c.bf16 %v7228, %v7226
        %v7231 = vlaneseq
        %v7232 = vshrl.u32 %v7231, 7
        %v7233 = vsub.s32 1, %v7232
        %v7234 = vrot.slane %v464, %v7233
        %v7267 = vunpack.c.l.b16 %v7061
        %v7268 = vunpack.c.l.b16 %v7062
        %v7269 = vunpack.c.l.b16 %v7063
        %v7270 = vunpack.c.l.b16 %v7064
        %v7271 = vunpack.c.l.b16 %v7065
        %v7272 = vunpack.c.l.b16 %v7066
        %v7273 = vunpack.c.l.b16 %v7067
        %v7274 = vunpack.c.l.b16 %v7068
        %v7275 = vunpack.c.l.b16 %v7069
        %v7276 = vunpack.c.l.b16 %v7070
        %v7277 = vunpack.c.l.b16 %v7071
        %v7278 = vunpack.c.l.b16 %v7072
        %v7279 = vunpack.c.l.b16 %v7073
        %v7280 = vunpack.c.l.b16 %v7074
        %v7281 = vunpack.c.l.b16 %v7075
        %v7282 = vunpack.c.l.b16 %v7076
        %v7283 = vunpack.c.l.b16 %v7077
        %v7284 = vunpack.c.l.b16 %v7078
        %v7285 = vunpack.c.l.b16 %v7079
        %v7286 = vunpack.c.l.b16 %v7080
        %v7287 = vunpack.c.l.b16 %v7081
        %v7288 = vunpack.c.l.b16 %v7082
        %v7289 = vunpack.c.l.b16 %v7083
        %v7290 = vunpack.c.l.b16 %v7084
        %v7291 = vunpack.c.l.b16 %v7085
        %v7292 = vunpack.c.l.b16 %v7086
        %v7293 = vunpack.c.l.b16 %v7087
        %v7294 = vunpack.c.l.b16 %v7088
        %v7295 = vunpack.c.l.b16 %v7089
        %v7296 = vunpack.c.l.b16 %v7090
        %v7297 = vunpack.c.l.b16 %v7091
        %v7298 = vunpack.c.l.b16 %v7092
        %v7299 = vpack.c.b16 %v7268, %v7267
        %v7300 = vpack.c.b16 %v7270, %v7269
        %v7301 = vpack.c.b16 %v7272, %v7271
        %v7302 = vpack.c.b16 %v7274, %v7273
        %v7303 = vpack.c.b16 %v7276, %v7275
        %v7304 = vpack.c.b16 %v7278, %v7277
        %v7305 = vpack.c.b16 %v7280, %v7279
        %v7306 = vpack.c.b16 %v7282, %v7281
        %v7307 = vpack.c.b16 %v7284, %v7283
        %v7308 = vpack.c.b16 %v7286, %v7285
        %v7309 = vpack.c.b16 %v7288, %v7287
        %v7310 = vpack.c.b16 %v7290, %v7289
        %v7311 = vpack.c.b16 %v7292, %v7291
        %v7312 = vpack.c.b16 %v7294, %v7293
        %v7313 = vpack.c.b16 %v7296, %v7295
        %v7314 = vpack.c.b16 %v7298, %v7297
        %7331 = vmatprep.subr.bf16.mxu0 0
        %7332 = vmatpush1.bf16.msra.mxu0 %v7306
        %7333 = vmatprep.subr.bf16.mxu0 0
        %7334 = vmatpush1.bf16.msra.mxu0 %v7305
        %7335 = vmatprep.subr.bf16.mxu0 0
        %7336 = vmatpush1.bf16.msra.mxu0 %v7304
        %7337 = vmatprep.subr.bf16.mxu0 0
        %7338 = vmatpush1.bf16.msra.mxu0 %v7303
        %7339 = vmatprep.subr.bf16.mxu0 0
        %7340 = vmatpush1.bf16.msra.mxu0 %v7302
        %7341 = vmatprep.subr.bf16.mxu0 0
        %7342 = vmatpush1.bf16.msra.mxu0 %v7301
        %7343 = vmatprep.subr.bf16.mxu0 0
        %7344 = vmatpush1.bf16.msra.mxu0 %v7300
        %7345 = vmatprep.subr.bf16.mxu0 0
        %7346 = vmatpush1.bf16.msra.mxu0 %v7299
        %7347 = vmatprep.subr.bf16.mxu0 0
        %7348 = vmatpush2.bf16.msra.mxu0 %v7314
        %7349 = vmatprep.subr.bf16.mxu0 0
        %7350 = vmatpush2.bf16.msra.mxu0 %v7313
        %7351 = vmatprep.subr.bf16.mxu0 0
        %7352 = vmatpush2.bf16.msra.mxu0 %v7312
        %7353 = vmatprep.subr.bf16.mxu0 0
        %7354 = vmatpush2.bf16.msra.mxu0 %v7311
        %7355 = vmatprep.subr.bf16.mxu0 0
        %7356 = vmatpush2.bf16.msra.mxu0 %v7310
        %7357 = vmatprep.subr.bf16.mxu0 0
        %7358 = vmatpush2.bf16.msra.mxu0 %v7309
        %7359 = vmatprep.subr.bf16.mxu0 0
        %7360 = vmatpush2.bf16.msra.mxu0 %v7308
        %7361 = vmatprep.subr.bf16.mxu0 0
        %7362 = vmatpush2.bf16.msra.mxu0 %v7307
        %7363 = vmatprep.mubr.bf16.mxu0 %v7230
        %7364 = vmatmul.mubr.bf16.gmra.mxu0 %v7229
        %v7365 = vpop.f32.mrf.mxu0
        %v7366 = vadd.f32 %v7234, %v7365
        %v7367 = vpop.f32.mrf.mxu0
        %v7368 = vpop.f32.mrf.mxu0
        %v7369 = vadd.f32 %v7234, %v7368
        %v7370 = vpop.f32.mrf.mxu0
        %7371 = vdwg.mxu0
        %v7372 = vadd.f32 %v6080, %v7366
        %v7373 = vadd.f32 %v6081, %v7369
        %7374 = vadd.xlane.f32.xlu0 %v7372
        %v7375 = vpop.xlane.xlu0 %7374
        %7376 = vadd.xlane.f32.xlu0 %v7373
        %v7377 = vpop.xlane.xlu0 %7376
        %v7378 = vmul.f32 %v7375, %v2227
        %v7379 = vmul.f32 %v7377, %v2227
        %v7380 = vsub.f32 %v7372, %v7378
        %v7381 = vsub.f32 %v7373, %v7379
        %v7382 = vmul.f32 %v7380, %v7380
        %v7383 = vmul.f32 %v7381, %v7381
        %7384 = vadd.xlane.f32.xlu0 %v7382
        %v7385 = vpop.xlane.xlu0 %7384
        %7386 = vadd.xlane.f32.xlu0 %v7383
        %v7387 = vpop.xlane.xlu0 %7386
        %v7388 = vmul.f32 %v7385, %v2227
        %v7389 = vmul.f32 %v7387, %v2227
        %v7390 = vadd.f32 %v7388, 1e-05
        %v7391 = vadd.f32 %v7389, 1e-05
        %v7392 = vrsqrt.pop %v7390
        %v7393 = vrsqrt.pop %v7391
        %v7394 = vmul.f32 %v7380, %v7392
        %v7395 = vmul.f32 %v7381, %v7393
        %v7396 = vlaneseq
        %v7397 = vshrl.u32 %v7396, 7
        %v7398 = vsub.s32 2, %v7397
        %v7399 = vrot.slane %v464, %v7398
        %v7400 = vmul.f32 %v7394, %v7399
        %v7401 = vmul.f32 %v7395, %v7399
        %v7402 = vlaneseq
        %v7403 = vshrl.u32 %v7402, 7
        %v7404 = vsub.s32 3, %v7403
        %v7405 = vrot.slane %v464, %v7404
        %v7406 = vadd.f32 %v7400, %v7405
        %v7407 = vadd.f32 %v7401, %v7405
        %s7408 = scalar_lea.vmem [#allocation10], 896
        %v7409 = vld [vmem:[%s7408] sm:$0xff]
        %v7410 = vld [vmem:[%s7408 + $0x8] sm:$0xff]
        %v7411 = vld [vmem:[%s7408 + $0x10] sm:$0xff]
        %v7412 = vld [vmem:[%s7408 + $0x18] sm:$0xff]
        %v7413 = vld [vmem:[%s7408 + $0x20] sm:$0xff]
        %v7414 = vld [vmem:[%s7408 + $0x28] sm:$0xff]
        %v7415 = vld [vmem:[%s7408 + $0x30] sm:$0xff]
        %v7416 = vld [vmem:[%s7408 + $0x38] sm:$0xff]
        %v7417 = vld [vmem:[%s7408 + $0x40] sm:$0xff]
        %v7418 = vld [vmem:[%s7408 + $0x48] sm:$0xff]
        %v7419 = vld [vmem:[%s7408 + $0x50] sm:$0xff]
        %v7420 = vld [vmem:[%s7408 + $0x58] sm:$0xff]
        %v7421 = vld [vmem:[%s7408 + $0x60] sm:$0xff]
        %v7422 = vld [vmem:[%s7408 + $0x68] sm:$0xff]
        %v7423 = vld [vmem:[%s7408 + $0x70] sm:$0xff]
        %v7424 = vld [vmem:[%s7408 + $0x78] sm:$0xff]
        %s7425 = scalar_lea.vmem [#allocation11], 384
        %v7426 = vld [vmem:[%s7425] sm:$0xf]
        %v7427 = vld [vmem:[%s7425 + $0x4] sm:$0xf]
        %v7428 = vld [vmem:[%s7425 + $0x8] sm:$0xf]
        %v7429 = vld [vmem:[%s7425 + $0xc] sm:$0xf]
        %v7430 = vld [vmem:[%s7425 + $0x10] sm:$0xf]
        %v7431 = vld [vmem:[%s7425 + $0x14] sm:$0xf]
        %v7432 = vld [vmem:[%s7425 + $0x18] sm:$0xf]
        %v7433 = vld [vmem:[%s7425 + $0x1c] sm:$0xf]
        %v7434 = vld [vmem:[%s7425 + $0x20] sm:$0xf]
        %v7435 = vld [vmem:[%s7425 + $0x24] sm:$0xf]
        %v7436 = vld [vmem:[%s7425 + $0x28] sm:$0xf]
        %v7437 = vld [vmem:[%s7425 + $0x2c] sm:$0xf]
        %v7438 = vld [vmem:[%s7425 + $0x30] sm:$0xf]
        %v7439 = vld [vmem:[%s7425 + $0x34] sm:$0xf]
        %v7440 = vld [vmem:[%s7425 + $0x38] sm:$0xf]
        %v7441 = vld [vmem:[%s7425 + $0x3c] sm:$0xf]
        %v7442 = vld [vmem:[%s7425 + $0x40] sm:$0xf]
        %v7443 = vld [vmem:[%s7425 + $0x44] sm:$0xf]
        %v7444 = vld [vmem:[%s7425 + $0x48] sm:$0xf]
        %v7445 = vld [vmem:[%s7425 + $0x4c] sm:$0xf]
        %v7446 = vld [vmem:[%s7425 + $0x50] sm:$0xf]
        %v7447 = vld [vmem:[%s7425 + $0x54] sm:$0xf]
        %v7448 = vld [vmem:[%s7425 + $0x58] sm:$0xf]
        %v7449 = vld [vmem:[%s7425 + $0x5c] sm:$0xf]
        %v7450 = vld [vmem:[%s7425 + $0x60] sm:$0xf]
        %v7451 = vld [vmem:[%s7425 + $0x64] sm:$0xf]
        %v7452 = vld [vmem:[%s7425 + $0x68] sm:$0xf]
        %v7453 = vld [vmem:[%s7425 + $0x6c] sm:$0xf]
        %v7454 = vld [vmem:[%s7425 + $0x70] sm:$0xf]
        %v7455 = vld [vmem:[%s7425 + $0x74] sm:$0xf]
        %v7456 = vld [vmem:[%s7425 + $0x78] sm:$0xf]
        %v7457 = vld [vmem:[%s7425 + $0x7c] sm:$0xf]
        %v7458 = vpack.c.bf16 %v7042, %v7042
        %v7459 = vlaneseq
        %v7460 = vshrl.u32 %v7459, 7
        %v7461 = vsub.s32 7, %v7460
        %v7462 = vrot.slane %v465, %v7461
        %v7463 = vlaneseq
        %v7464 = vshrl.u32 %v7463, 7
        %v7465 = vsub.s32 7, %v7464
        %v7466 = vrot.slane %v466, %v7465
        %v7483 = vunpack.c.l.b16 %v7409
        %v7484 = vunpack.c.h.b16 %v7409
        %v7485 = vunpack.c.l.b16 %v7410
        %v7486 = vunpack.c.h.b16 %v7410
        %v7487 = vunpack.c.l.b16 %v7411
        %v7488 = vunpack.c.h.b16 %v7411
        %v7489 = vunpack.c.l.b16 %v7412
        %v7490 = vunpack.c.h.b16 %v7412
        %v7491 = vunpack.c.l.b16 %v7413
        %v7492 = vunpack.c.h.b16 %v7413
        %v7493 = vunpack.c.l.b16 %v7414
        %v7494 = vunpack.c.h.b16 %v7414
        %v7495 = vunpack.c.l.b16 %v7415
        %v7496 = vunpack.c.h.b16 %v7415
        %v7497 = vunpack.c.l.b16 %v7416
        %v7498 = vunpack.c.h.b16 %v7416
        %v7499 = vunpack.c.l.b16 %v7417
        %v7500 = vunpack.c.h.b16 %v7417
        %v7501 = vunpack.c.l.b16 %v7418
        %v7502 = vunpack.c.h.b16 %v7418
        %v7503 = vunpack.c.l.b16 %v7419
        %v7504 = vunpack.c.h.b16 %v7419
        %v7505 = vunpack.c.l.b16 %v7420
        %v7506 = vunpack.c.h.b16 %v7420
        %v7507 = vunpack.c.l.b16 %v7421
        %v7508 = vunpack.c.h.b16 %v7421
        %v7509 = vunpack.c.l.b16 %v7422
        %v7510 = vunpack.c.h.b16 %v7422
        %v7511 = vunpack.c.l.b16 %v7423
        %v7512 = vunpack.c.h.b16 %v7423
        %v7513 = vunpack.c.l.b16 %v7424
        %v7514 = vunpack.c.h.b16 %v7424
        %v7515 = vpack.c.b16 %v7485, %v7483
        %v7516 = vpack.c.b16 %v7486, %v7484
        %v7517 = vpack.c.b16 %v7489, %v7487
        %v7518 = vpack.c.b16 %v7490, %v7488
        %v7519 = vpack.c.b16 %v7493, %v7491
        %v7520 = vpack.c.b16 %v7494, %v7492
        %v7521 = vpack.c.b16 %v7497, %v7495
        %v7522 = vpack.c.b16 %v7498, %v7496
        %v7523 = vpack.c.b16 %v7501, %v7499
        %v7524 = vpack.c.b16 %v7502, %v7500
        %v7525 = vpack.c.b16 %v7505, %v7503
        %v7526 = vpack.c.b16 %v7506, %v7504
        %v7527 = vpack.c.b16 %v7509, %v7507
        %v7528 = vpack.c.b16 %v7510, %v7508
        %v7529 = vpack.c.b16 %v7513, %v7511
        %v7530 = vpack.c.b16 %v7514, %v7512
        %7547 = vmatprep.subr.bf16.mxu0 %v7530
        %7548 = vmatpush1.bf16.msra.mxu0 %v7529
        %7549 = vmatprep.subr.bf16.mxu0 %v7528
        %7550 = vmatpush1.bf16.msra.mxu0 %v7527
        %7551 = vmatprep.subr.bf16.mxu0 %v7526
        %7552 = vmatpush1.bf16.msra.mxu0 %v7525
        %7553 = vmatprep.subr.bf16.mxu0 %v7524
        %7554 = vmatpush1.bf16.msra.mxu0 %v7523
        %7555 = vmatprep.subr.bf16.mxu0 %v7522
        %7556 = vmatpush1.bf16.msra.mxu0 %v7521
        %7557 = vmatprep.subr.bf16.mxu0 %v7520
        %7558 = vmatpush1.bf16.msra.mxu0 %v7519
        %7559 = vmatprep.subr.bf16.mxu0 %v7518
        %7560 = vmatpush1.bf16.msra.mxu0 %v7517
        %7561 = vmatprep.subr.bf16.mxu0 %v7516
        %7562 = vmatpush1.bf16.msra.mxu0 %v7515
        %7563 = vmatprep.subr.bf16.mxu0 0
        %7564 = vmatpush2.bf16.msra.mxu0 0
        %7565 = vmatprep.subr.bf16.mxu0 0
        %7566 = vmatpush2.bf16.msra.mxu0 0
        %7567 = vmatprep.subr.bf16.mxu0 0
        %7568 = vmatpush2.bf16.msra.mxu0 0
        %7569 = vmatprep.subr.bf16.mxu0 0
        %7570 = vmatpush2.bf16.msra.mxu0 0
        %7571 = vmatprep.subr.bf16.mxu0 0
        %7572 = vmatpush2.bf16.msra.mxu0 0
        %7573 = vmatprep.subr.bf16.mxu0 0
        %7574 = vmatpush2.bf16.msra.mxu0 0
        %7575 = vmatprep.subr.bf16.mxu0 0
        %7576 = vmatpush2.bf16.msra.mxu0 0
        %7577 = vmatprep.subr.bf16.mxu0 0
        %7578 = vmatpush2.bf16.msra.mxu0 0
        %7579 = vmatprep.mubr.bf16.mxu0 0
        %7580 = vmatmul.mubr.bf16.gmra.mxu0 %v7458
        %v7581 = vpop.f32.mrf.mxu0
        %v7582 = vadd.f32 %v7462, %v7581
        %v7583 = vpop.f32.mrf.mxu0
        %v7584 = vadd.f32 %v7466, %v7583
        %v7585 = vpop.f32.mrf.mxu0
        %v7586 = vpop.f32.mrf.mxu0
        %7587 = vdwg.mxu0
        %v7588 = vmax.f32 %v7582, 0.0
        %v7589 = vmax.f32 %v7584, 0.0
        %v7590 = vpack.c.bf16 %v7588, %v7588
        %v7591 = vpack.c.bf16 %v7589, %v7589
        %v7592 = vlaneseq
        %v7593 = vshrl.u32 %v7592, 7
        %v7594 = vsub.s32 4, %v7593
        %v7595 = vrot.slane %v464, %v7594
        %v7628 = vunpack.c.l.b16 %v7426
        %v7629 = vunpack.c.l.b16 %v7427
        %v7630 = vunpack.c.l.b16 %v7428
        %v7631 = vunpack.c.l.b16 %v7429
        %v7632 = vunpack.c.l.b16 %v7430
        %v7633 = vunpack.c.l.b16 %v7431
        %v7634 = vunpack.c.l.b16 %v7432
        %v7635 = vunpack.c.l.b16 %v7433
        %v7636 = vunpack.c.l.b16 %v7434
        %v7637 = vunpack.c.l.b16 %v7435
        %v7638 = vunpack.c.l.b16 %v7436
        %v7639 = vunpack.c.l.b16 %v7437
        %v7640 = vunpack.c.l.b16 %v7438
        %v7641 = vunpack.c.l.b16 %v7439
        %v7642 = vunpack.c.l.b16 %v7440
        %v7643 = vunpack.c.l.b16 %v7441
        %v7644 = vunpack.c.l.b16 %v7442
        %v7645 = vunpack.c.l.b16 %v7443
        %v7646 = vunpack.c.l.b16 %v7444
        %v7647 = vunpack.c.l.b16 %v7445
        %v7648 = vunpack.c.l.b16 %v7446
        %v7649 = vunpack.c.l.b16 %v7447
        %v7650 = vunpack.c.l.b16 %v7448
        %v7651 = vunpack.c.l.b16 %v7449
        %v7652 = vunpack.c.l.b16 %v7450
        %v7653 = vunpack.c.l.b16 %v7451
        %v7654 = vunpack.c.l.b16 %v7452
        %v7655 = vunpack.c.l.b16 %v7453
        %v7656 = vunpack.c.l.b16 %v7454
        %v7657 = vunpack.c.l.b16 %v7455
        %v7658 = vunpack.c.l.b16 %v7456
        %v7659 = vunpack.c.l.b16 %v7457
        %v7660 = vpack.c.b16 %v7629, %v7628
        %v7661 = vpack.c.b16 %v7631, %v7630
        %v7662 = vpack.c.b16 %v7633, %v7632
        %v7663 = vpack.c.b16 %v7635, %v7634
        %v7664 = vpack.c.b16 %v7637, %v7636
        %v7665 = vpack.c.b16 %v7639, %v7638
        %v7666 = vpack.c.b16 %v7641, %v7640
        %v7667 = vpack.c.b16 %v7643, %v7642
        %v7668 = vpack.c.b16 %v7645, %v7644
        %v7669 = vpack.c.b16 %v7647, %v7646
        %v7670 = vpack.c.b16 %v7649, %v7648
        %v7671 = vpack.c.b16 %v7651, %v7650
        %v7672 = vpack.c.b16 %v7653, %v7652
        %v7673 = vpack.c.b16 %v7655, %v7654
        %v7674 = vpack.c.b16 %v7657, %v7656
        %v7675 = vpack.c.b16 %v7659, %v7658
        %7692 = vmatprep.subr.bf16.mxu0 0
        %7693 = vmatpush1.bf16.msra.mxu0 %v7667
        %7694 = vmatprep.subr.bf16.mxu0 0
        %7695 = vmatpush1.bf16.msra.mxu0 %v7666
        %7696 = vmatprep.subr.bf16.mxu0 0
        %7697 = vmatpush1.bf16.msra.mxu0 %v7665
        %7698 = vmatprep.subr.bf16.mxu0 0
        %7699 = vmatpush1.bf16.msra.mxu0 %v7664
        %7700 = vmatprep.subr.bf16.mxu0 0
        %7701 = vmatpush1.bf16.msra.mxu0 %v7663
        %7702 = vmatprep.subr.bf16.mxu0 0
        %7703 = vmatpush1.bf16.msra.mxu0 %v7662
        %7704 = vmatprep.subr.bf16.mxu0 0
        %7705 = vmatpush1.bf16.msra.mxu0 %v7661
        %7706 = vmatprep.subr.bf16.mxu0 0
        %7707 = vmatpush1.bf16.msra.mxu0 %v7660
        %7708 = vmatprep.subr.bf16.mxu0 0
        %7709 = vmatpush2.bf16.msra.mxu0 %v7675
        %7710 = vmatprep.subr.bf16.mxu0 0
        %7711 = vmatpush2.bf16.msra.mxu0 %v7674
        %7712 = vmatprep.subr.bf16.mxu0 0
        %7713 = vmatpush2.bf16.msra.mxu0 %v7673
        %7714 = vmatprep.subr.bf16.mxu0 0
        %7715 = vmatpush2.bf16.msra.mxu0 %v7672
        %7716 = vmatprep.subr.bf16.mxu0 0
        %7717 = vmatpush2.bf16.msra.mxu0 %v7671
        %7718 = vmatprep.subr.bf16.mxu0 0
        %7719 = vmatpush2.bf16.msra.mxu0 %v7670
        %7720 = vmatprep.subr.bf16.mxu0 0
        %7721 = vmatpush2.bf16.msra.mxu0 %v7669
        %7722 = vmatprep.subr.bf16.mxu0 0
        %7723 = vmatpush2.bf16.msra.mxu0 %v7668
        %7724 = vmatprep.mubr.bf16.mxu0 %v7591
        %7725 = vmatmul.mubr.bf16.gmra.mxu0 %v7590
        %v7726 = vpop.f32.mrf.mxu0
        %v7727 = vadd.f32 %v7595, %v7726
        %v7728 = vpop.f32.mrf.mxu0
        %v7729 = vpop.f32.mrf.mxu0
        %v7730 = vpop.f32.mrf.mxu0
        %7731 = vdwg.mxu0
        %v7732 = vadd.f32 %v7042, %v7727
        %7733 = vadd.xlane.f32.xlu0 %v7732
        %v7734 = vpop.xlane.xlu0 %7733
        %v7735 = vmul.f32 %v7734, %v2227
        %v7736 = vsub.f32 %v7732, %v7735
        %v7737 = vmul.f32 %v7736, %v7736
        %7738 = vadd.xlane.f32.xlu0 %v7737
        %v7739 = vpop.xlane.xlu0 %7738
        %v7740 = vmul.f32 %v7739, %v2227
        %v7741 = vadd.f32 %v7740, 1e-05
        %v7742 = vrsqrt.pop %v7741
        %v7743 = vmul.f32 %v7736, %v7742
        %v7744 = vlaneseq
        %v7745 = vshrl.u32 %v7744, 7
        %v7746 = vsub.s32 5, %v7745
        %v7747 = vrot.slane %v464, %v7746
        %v7748 = vmul.f32 %v7743, %v7747
        %v7749 = vlaneseq
        %v7750 = vshrl.u32 %v7749, 7
        %v7751 = vsub.s32 6, %v7750
        %v7752 = vrot.slane %v464, %v7751
        %v7753 = vadd.f32 %v7748, %v7752
        %7754 = vst [vmem:[%s452] sm:$0xff] %v7406
        %7755 = vst [vmem:[%s452 + $0x8] sm:$0xff] %v7407
        %7756 = vst [vmem:[%s459] sm:$0xff] %v7753
        %s7757 = sand.u32 %s215, 1
        %s7758 = scalar_lea.sflag [#allocation4], %s7757
        %s7759 = sand.u32 %s215, 1
        %s7760 = smul.addr %s7759, 16
        %s7761 = scalar_lea.vmem [#allocation16], %s7760
        %s7762 = sand.u32 %s241, 1
        %s7763 = scalar_lea.sflag [#allocation18], %s7762
        %s7764 = sand.u32 %s241, 1
        %s7765 = smul.addr %s7764, 8
        %s7766 = scalar_lea.vmem [#allocation17], %s7765
        // Predicated region
        $region85: #{transformer_encoder.1} parent=51 // pred_check
          %p7767 = pneg %p225
        $region86: #{transformer_encoder.1} parent=51 // pred_check_branch
          %7769 = sbr.rel (%p7767) target = $region88
        $region87: #{transformer_encoder.1} parent=51 // pred_region
          %s7771 = ssub.s32 256, 256
          %7772 = vsyncadd %s7758, %s7771
          %s7773 = smul.addr %s34, 2
          %s7774 = smul.addr %s7773, 128
          %s7775 = scalar_lea.hbm %s8, %s7774
          %s7776 = sshll.u32 %s7761, 4
          %s7777 = int_to_ptr.vmem [resolvable:$true] %s7776
          %7782 = dma.vmem_to_hbm [thread:$0]  %s7777, 256, %s7775, %s7758, 128, 128, 8
        $region88: #{transformer_encoder.1} parent=51 // pred_fallthru
          _
        // Predicated region
        $region89: #{transformer_encoder.1} parent=51 // pred_check
          %p7783 = pneg %p251
        $region90: #{transformer_encoder.1} parent=51 // pred_check_branch
          %7785 = sbr.rel (%p7783) target = $region92
        $region91: #{transformer_encoder.1} parent=51 // pred_region
          %s7787 = ssub.s32 128, 128
          %7788 = vsyncadd %s7763, %s7787
          %s7789 = smul.addr %s34, 128
          %s7790 = scalar_lea.hbm %s9, %s7789
          %s7792 = sshll.u32 %s7766, 4
          %s7793 = int_to_ptr.vmem [resolvable:$true] %s7792
          %7795 = dma.vmem_to_hbm [thread:$0]  %s7793, 128, %s7790, %s7763
        $region92: #{transformer_encoder.1} parent=51 // pred_fallthru
          _
      $region52: #{transformer_encoder.1} parent=5 // pred_fallthru
        _
      %p7796 = scmp.le.s32.totalorder 2, %s29
      // Predicated region
      $region93: #{transformer_encoder.1} parent=5 // pred_check
        %p7797 = pneg %p7796
      $region94: #{transformer_encoder.1} parent=5 // pred_check_branch
        %7799 = sbr.rel (%p7797) target = $region96
      $region95: #{transformer_encoder.1} parent=5 // pred_region
        %s7800 = ssub.s32 %s29, 2
        // Predicated region
        $region97: #{transformer_encoder.1} parent=95 // pred_check
          %p7801 = pneg %p231
        $region98: #{transformer_encoder.1} parent=95 // pred_check_branch
          %7803 = sbr.rel (%p7801) target = $region100
        $region99: #{transformer_encoder.1} parent=95 // pred_region
          %s7804 = sand.u32 %s216, 1
          %s7805 = scalar_lea.sflag [#allocation4], %s7804
          %s7806 = sand.u32 %s216, 1
          %s7807 = smul.addr %s7806, 16
          %s7808 = scalar_lea.vmem [#allocation16], %s7807
          %7809 = dma.done %s7805, 256
        $region100: #{transformer_encoder.1} parent=95 // pred_fallthru
          _
        // Predicated region
        $region101: #{transformer_encoder.1} parent=95 // pred_check
          %p7810 = pneg %p257
        $region102: #{transformer_encoder.1} parent=95 // pred_check_branch
          %7812 = sbr.rel (%p7810) target = $region104
        $region103: #{transformer_encoder.1} parent=95 // pred_region
          %s7813 = sand.u32 %s242, 1
          %s7814 = scalar_lea.sflag [#allocation18], %s7813
          %s7815 = sand.u32 %s242, 1
          %s7816 = smul.addr %s7815, 8
          %s7817 = scalar_lea.vmem [#allocation17], %s7816
          %7818 = dma.done %s7814, 128
        $region104: #{transformer_encoder.1} parent=95 // pred_fallthru
          _
      $region96: #{transformer_encoder.1} parent=5 // pred_fallthru
        _
    $region6: #{transformer_encoder.1} parent=1 // loop_footer
      %s33 = sadd.s32 1, %s29
    $region7: #{transformer_encoder.1} parent=1 // loop_footer_branch
      %28 = sbr.rel target = $region3
    $region8: #{transformer_encoder.1} parent=1 // loop_exit
      _
    %7819 = vsyncpa [#allocation3], 1
    %s7820 = scalar_lea.sflag [#allocation3], 1
    %7821 = vsyncpa %s7820, 1
    %7822 = vsyncpa [#allocation6], 1
    %7823 = vsyncpa [#allocation9], 1
    %7824 = vsyncpa [#allocation12], 1
    %7825 = vsyncpa [#allocation15], 1
    %7826 = vsyncpa [#allocation4], 1
    %s7827 = scalar_lea.sflag [#allocation4], 1
    %7828 = vsyncpa %s7827, 1
    %7829 = vsyncpa [#allocation18], 1
    %s7830 = scalar_lea.sflag [#allocation18], 1
    %7831 = vsyncpa %s7830, 1

</llo_original>
